<compile_context>
chip_gen: v7x
topology: tpu7x:2x2x1
jax: 0.10.0
libtpu: 0.0.40
codegen_flags: <defaults>
</compile_context>

<pallas_src>
import functools

import jax
import jax.numpy as jnp
from jax import lax
from jax.experimental import pallas as pl
from jax.experimental.pallas import tpu as pltpu

# Conv geometry of the PyTorch module.
K1, C1, K2, C2 = 5, 200, 3, 32
C1P = 256          # conv1 output channels zero-padded 200 -> 256 (lane-dense)


def _dims(H, W):
    HO1, WO1 = H - K1 + 1, W - K1 + 1          # conv1 'VALID' output
    assert HO1 % 2 == 0 and WO1 % 2 == 0
    HP1, WP1 = HO1 // 2, WO1 // 2              # after 2x2 max pool
    HO2, WO2 = HP1 - K2 + 1, WP1 - K2 + 1      # conv2 'VALID' output
    assert HO2 % 2 == 0 and WO2 % 2 == 0
    HP2, WP2 = HO2 // 2, WO2 // 2              # after 2x2 max pool
    return HO1, WO1, HP1, WP1, HO2, WO2, HP2, WP2


def _round_up(a, b):
    return (a + b - 1) // b * b


# ------------------------------ fused kernel --------------------------------

def _lenet_kernel(x_ref, w1_ref, b1_ref, w2_ref, b2_ref, o_ref, p1_ref, *,
                  Nb, WP1, HO2, HP2, WP2, col_chunk):
    half1 = WP1 * C1P          # conv1 pooled row width, columns (q, c)
    half2 = WP2 * C2           # conv2 pooled row width, columns (q2, c)

    # conv1 LHS for both row parities; M rows ordered (pooled-row p, image n).
    lhs = [x_ref[t, 0] for t in range(2)]                    # (HP1*Nb, K1*W) bf16

    # ---- conv1 + bias + 2x2 max-pool + ReLU, in 512-lane column chunks ------
    # Weight columns are ordered (col-parity s, pooled-col q, channel c), so
    # both pooling reductions are plain elementwise maxima of GEMM results.
    for j in range(0, half1, col_chunk):
        r = None
        for s in range(2):                                   # conv col parity
            w_s = w1_ref[:, s * half1 + j: s * half1 + j + col_chunk]
            for t in range(2):                               # conv row parity
                part = jnp.dot(lhs[t], w_s,
                               preferred_element_type=jnp.float32)
                r = part if r is None else jnp.maximum(r, part)
        p1_ref[:, j:j + col_chunk] = jnp.maximum(
            r + b1_ref[:, j:j + col_chunk], 0.0).astype(p1_ref.dtype)

    # ---- conv2: 3 accumulated lane-dense GEMMs over contiguous p1 windows ---
    c2 = None
    for ky in range(K2):
        lhs2 = p1_ref[ky * Nb:(ky + HO2) * Nb, :]            # (HO2*Nb, WP1*C1P)
        part = jnp.dot(lhs2, w2_ref[ky], preferred_element_type=jnp.float32)
        c2 = part if c2 is None else c2 + part               # (HO2*Nb, 2*half2)

    # Pool over conv2 col parity (contiguous halves), then row parity
    # (contiguous Nb-row slabs), add bias, ReLU.
    cw = jnp.maximum(c2[:, :half2], c2[:, half2:])           # (HO2*Nb, half2)
    outs = []
    for p2 in range(HP2):
        a = cw[(2 * p2) * Nb:(2 * p2 + 1) * Nb, :]
        b = cw[(2 * p2 + 1) * Nb:(2 * p2 + 2) * Nb, :]
        outs.append(jnp.maximum(jnp.maximum(a, b) + b2_ref[...], 0.0))

    # Single unmasked 128-lane store per image block, columns (p2, q2, c).
    o_ref[...] = jnp.concatenate(outs, axis=-1)


# --------------------------- parameter folding ------------------------------

def prepare_params(w1, b1, w2, b2, H, W):
    """One-time weight folding (banding + channel padding + bf16 cast).

    w1: (5, 5, 1, 200) HWIO   b1: (200,)
    w2: (3, 3, 200, 32) HWIO  b2: (32,)
    """
    _, WO1, _, WP1, _, WO2, _, WP2 = _dims(H, W)
    w1 = w1.astype(jnp.float32)
    w2 = w2.astype(jnp.float32)

    # conv1: rows (ky, iw) = K1*W, cols (s, q, c); padded channels stay exactly
    # 0 through bias (padded with 0), ReLU and pooling, and get zero conv2
    # weights below, so they never contribute.
    blocks = []
    for s in range(2):
        for q in range(WP1):
            j = 2 * q + s
            blk = jnp.pad(w1[:, :, 0, :],
                          ((0, 0), (j, W - K1 - j), (0, C1P - C1)))  # (K1,W,C1P)
            blocks.append(blk)
    w1f = jnp.concatenate(blocks, axis=-1).reshape(K1 * W, WO1 * C1P)
    b1h = jnp.tile(jnp.pad(b1.astype(jnp.float32), (0, C1P - C1)),
                   (WP1,)).reshape(1, WP1 * C1P)

    # conv2: (K2, WP1*C1P, WO2*C2): rows (q, ci padded to 256), cols (s2, q2, c).
    w2p = jnp.pad(w2, ((0, 0), (0, 0), (0, C1P - C1), (0, 0)))      # (3,3,256,32)
    blocks2 = []
    for s2 in range(2):
        for q2 in range(WP2):
            j2 = 2 * q2 + s2
            blk = jnp.pad(w2p, ((0, 0), (j2, WP1 - K2 - j2), (0, 0), (0, 0)))
            blocks2.append(blk.reshape(K2, WP1 * C1P, C2))
    w2b = jnp.concatenate(blocks2, axis=-1)                         # (3,1536,128)
    b2h = jnp.tile(b2.astype(jnp.float32), (WP2,)).reshape(1, WP2 * C2)

    # bf16 GEMM operands; f32 accumulation / epilogue inside the kernel.
    return (w1f.astype(jnp.bfloat16), b1h, w2b.astype(jnp.bfloat16), b2h)


# ------------------------------ fused forward -------------------------------

@functools.partial(jax.jit, static_argnames=("block_n",))
def lenet_apply(x, w1f, b1h, w2b, b2h, *, block_n=32):
    """x: (N, H, W) float32 + folded params -> (N, 32, H', W') NCHW."""
    N, H, W = x.shape
    _, WO1, HP1, WP1, HO2, WO2, HP2, WP2 = _dims(H, W)

    assert block_n % 16 == 0
    Nb = min(block_n, _round_up(N, 16))       # batch block (multiple of 16)
    Npad = _round_up(N, Nb)
    G = Npad // Nb

    # Row-only im2col of the tiny input, laid out so the kernel's GEMM M dim is
    # (pooled-row p, image n): xim[t, g, p*Nb + n, ky*W + iw] = x[n, 2p+t+ky, iw].
    rows = (2 * jnp.arange(HP1)[:, None, None] + jnp.arange(2)[None, :, None]
            + jnp.arange(K1)[None, None, :])                  # (HP1, 2, K1)
    xg = x.astype(jnp.float32)[:, rows, :]                    # (N, HP1, 2, K1, W)
    xim = xg.transpose(2, 1, 0, 3, 4).reshape(2, HP1, N, K1 * W)
    xim = jnp.pad(xim, ((0, 0), (0, 0), (0, Npad - N), (0, 0)))
    xim = (xim.reshape(2, HP1, G, Nb, K1 * W).transpose(0, 2, 1, 3, 4)
              .reshape(2, G, HP1 * Nb, K1 * W).astype(jnp.bfloat16))

    half1 = WP1 * C1P
    col_chunk = 512 if half1 % 512 == 0 else C1P

    kernel = functools.partial(_lenet_kernel, Nb=Nb, WP1=WP1, HO2=HO2,
                               HP2=HP2, WP2=WP2, col_chunk=col_chunk)

    out = pl.pallas_call(
        kernel,
        out_shape=jax.ShapeDtypeStruct((Npad, HP2 * WP2 * C2), jnp.float32),
        grid=(G,),
        in_specs=[
            pl.BlockSpec((2, 1, HP1 * Nb, K1 * W), lambda g: (0, g, 0, 0)),
            pl.BlockSpec((K1 * W, WO1 * C1P), lambda g: (0, 0)),
            pl.BlockSpec((1, WP1 * C1P), lambda g: (0, 0)),
            pl.BlockSpec((K2, WP1 * C1P, WO2 * C2), lambda g: (0, 0, 0)),
            pl.BlockSpec((1, WP2 * C2), lambda g: (0, 0)),
        ],
        out_specs=pl.BlockSpec((Nb, HP2 * WP2 * C2), lambda g: (g, 0)),
        scratch_shapes=[pltpu.VMEM((HP1 * Nb, WP1 * C1P), jnp.bfloat16)],
        compiler_params=pltpu.CompilerParams(
            dimension_semantics=("parallel",)),
    )(xim, w1f, b1h, w2b, b2h)

    out = out[:N].reshape(N, HP2, WP2, C2)
    return jnp.transpose(out, (0, 3, 1, 2))          # NCHW, matches PyTorch


def lenet_forward(x, w1, b1, w2, b2):
    """Convenience: full forward from raw HWIO params (prep folded in)."""
    _, H, W = x.shape
    return lenet_apply(x, *prepare_params(w1, b1, w2, b2, H, W))


# -------------------------------- reference ---------------------------------

def lenet_reference(x, w1, b1, w2, b2):
    xc = x[:, :, :, None]
    dn = ('NHWC', 'HWIO', 'NHWC')

    def pool(y):
        return lax.reduce_window(y, -jnp.inf, lax.max,
                                 (1, 2, 2, 1), (1, 2, 2, 1), 'VALID')

    y1 = lax.conv_general_dilated(xc, w1, (1, 1), 'VALID', dimension_numbers=dn,
                                  precision=lax.Precision.HIGHEST) + b1
    y1 = jnp.maximum(pool(y1), 0.0)
    y2 = lax.conv_general_dilated(y1, w2, (1, 1), 'VALID', dimension_numbers=dn,
                                  precision=lax.Precision.HIGHEST) + b2
    y2 = jnp.maximum(pool(y2), 0.0)
    return jnp.transpose(y2, (0, 3, 1, 2))


# ----------------------------------- main ------------------------------------

if __name__ == "__main__":
    key = jax.random.PRNGKey(0)
    kx, k1, kb1, k2, kb2 = jax.random.split(key, 5)

    # Small input consistent with forward(): (N, H, W); unsqueeze adds channel.
    # N = 64 with Nb = 32 -> grid of 2 steps (both v7x TensorCores get work).
    N, H, W = 64, 16, 16
    x = jax.random.normal(kx, (N, H, W), dtype=jnp.float32)

    # Deterministic synthetic parameters (HWIO layout).
    w1 = jax.random.normal(k1, (K1, K1, 1, C1), dtype=jnp.float32) * 0.1     # conv1
    b1 = jax.random.normal(kb1, (C1,), dtype=jnp.float32) * 0.01
    w2 = jax.random.normal(k2, (K2, K2, C1, C2), dtype=jnp.float32) * 0.02   # conv2
    b2 = jax.random.normal(kb2, (C2,), dtype=jnp.float32) * 0.01
    # TODO(synk): fc1 (Linear 18496->100) and Dropout2d exist in __init__ but are
    # unused in forward(), so they are intentionally not implemented.

    # One-time weight folding, then the single fused Pallas kernel.
    params = prepare_params(w1, b1, w2, b2, H, W)
    out = lenet_apply(x, *params)
    out = jax.block_until_ready(out)

    ref = lenet_reference(x, w1, b1, w2, b2)
    assert out.shape == (N, C2, 2, 2), out.shape
    # bf16 GEMM operands with f32 accumulation -> loosened tolerance vs f32 ref.
    err = float(jnp.max(jnp.abs(out - ref)))
    assert jnp.allclose(out, ref, atol=3e-2, rtol=3e-2), err

    print("KERNEL_OK")
</pallas_src>

<mosaic_0001>
module attributes {stable_mosaic.version = 11 : i64} {
  func.func @_lenet_kernel(%arg0: i32, %arg1: memref<2x1x192x80xbf16, #tpu.memory_space<vmem>>, %arg2: memref<80x3072xbf16, #tpu.memory_space<vmem>>, %arg3: memref<1x1536xf32, #tpu.memory_space<vmem>>, %arg4: memref<3x1536x128xbf16, #tpu.memory_space<vmem>>, %arg5: memref<1x64xf32, #tpu.memory_space<vmem>>, %arg6: memref<32x128xf32, #tpu.memory_space<vmem>>, %arg7: memref<192x1536xbf16, #tpu.memory_space<vmem>>) attributes {dimension_semantics = [#tpu.dimension_semantics<parallel>], iteration_bounds = array<i64: 2>, scalar_prefetch = 0 : i64, scratch_operands = 1 : i64, tpu.core_type = #tpu.core_type<tc>, window_params = [{transform_indices = @transform_0, window_bounds = array<i64: 2, 1, 192, 80>}, {pipeline_mode = #tpu.pipeline_mode<synchronous>, transform_indices = @transform_1, window_bounds = array<i64: 80, 3072>}, {pipeline_mode = #tpu.pipeline_mode<synchronous>, transform_indices = @transform_2, window_bounds = array<i64: 1, 1536>}, {pipeline_mode = #tpu.pipeline_mode<synchronous>, transform_indices = @transform_3, window_bounds = array<i64: 3, 1536, 128>}, {pipeline_mode = #tpu.pipeline_mode<synchronous>, transform_indices = @transform_4, window_bounds = array<i64: 1, 64>}, {transform_indices = @transform_5, window_bounds = array<i64: 32, 128>}]} {
    %c0 = arith.constant 0 : index
    %c0_0 = arith.constant 0 : index
    %c0_1 = arith.constant 0 : index
    %c0_2 = arith.constant 0 : index
    %0 = vector.load %arg1[%c0, %c0_0, %c0_1, %c0_2] : memref<2x1x192x80xbf16, #tpu.memory_space<vmem>>, vector<1x1x192x80xbf16>
    %1 = vector.shape_cast %0 : vector<1x1x192x80xbf16> to vector<192x80xbf16>
    %c1 = arith.constant 1 : index
    %c0_3 = arith.constant 0 : index
    %c0_4 = arith.constant 0 : index
    %c0_5 = arith.constant 0 : index
    %2 = vector.load %arg1[%c1, %c0_3, %c0_4, %c0_5] : memref<2x1x192x80xbf16, #tpu.memory_space<vmem>>, vector<1x1x192x80xbf16>
    %3 = vector.shape_cast %2 : vector<1x1x192x80xbf16> to vector<192x80xbf16>
    %c0_6 = arith.constant 0 : index
    %c0_7 = arith.constant 0 : index
    %4 = vector.load %arg2[%c0_6, %c0_7] : memref<80x3072xbf16, #tpu.memory_space<vmem>>, vector<80x512xbf16>
    %cst = arith.constant dense<0.000000e+00> : vector<192x512xf32>
    %5 = tpu.matmul %1, %4, %cst {dimension_numbers = #tpu.dot_dimension_numbers<[1], [0], [0], [1], [0, 0, 1, 1], [], []>} : vector<192x80xbf16>, vector<80x512xbf16>, vector<192x512xf32> -> vector<192x512xf32>
    %cst_8 = arith.constant dense<0.000000e+00> : vector<192x512xf32>
    %6 = tpu.matmul %3, %4, %cst_8 {dimension_numbers = #tpu.dot_dimension_numbers<[1], [0], [0], [1], [0, 0, 1, 1], [], []>} : vector<192x80xbf16>, vector<80x512xbf16>, vector<192x512xf32> -> vector<192x512xf32>
    %7 = arith.maximumf %5, %6 : vector<192x512xf32>
    %c0_9 = arith.constant 0 : index
    %c1536 = arith.constant 1536 : index
    %8 = vector.load %arg2[%c0_9, %c1536] : memref<80x3072xbf16, #tpu.memory_space<vmem>>, vector<80x512xbf16>
    %cst_10 = arith.constant dense<0.000000e+00> : vector<192x512xf32>
    %9 = tpu.matmul %1, %8, %cst_10 {dimension_numbers = #tpu.dot_dimension_numbers<[1], [0], [0], [1], [0, 0, 1, 1], [], []>} : vector<192x80xbf16>, vector<80x512xbf16>, vector<192x512xf32> -> vector<192x512xf32>
    %10 = arith.maximumf %7, %9 : vector<192x512xf32>
    %cst_11 = arith.constant dense<0.000000e+00> : vector<192x512xf32>
    %11 = tpu.matmul %3, %8, %cst_11 {dimension_numbers = #tpu.dot_dimension_numbers<[1], [0], [0], [1], [0, 0, 1, 1], [], []>} : vector<192x80xbf16>, vector<80x512xbf16>, vector<192x512xf32> -> vector<192x512xf32>
    %12 = arith.maximumf %10, %11 : vector<192x512xf32>
    %c0_12 = arith.constant 0 : index
    %c0_13 = arith.constant 0 : index
    %13 = vector.load %arg3[%c0_12, %c0_13] : memref<1x1536xf32, #tpu.memory_space<vmem>>, vector<1x512xf32>
    %14 = vector.broadcast %13 : vector<1x512xf32> to vector<192x512xf32>
    %15 = arith.addf %12, %14 : vector<192x512xf32>
    %cst_14 = arith.constant 0.000000e+00 : f32
    %16 = vector.broadcast %cst_14 : f32 to vector<192x512xf32>
    %17 = arith.maximumf %15, %16 : vector<192x512xf32>
    %18 = arith.truncf %17 : vector<192x512xf32> to vector<192x512xbf16>
    %c0_15 = arith.constant 0 : index
    %c0_16 = arith.constant 0 : index
    %19 = vector.load %arg7[%c0_15, %c0_16] : memref<192x1536xbf16, #tpu.memory_space<vmem>>, vector<192x512xbf16>
    tpu.vector_store %arg7[%c0_15, %c0_16], %18 {strides = array<i32>} : memref<192x1536xbf16, #tpu.memory_space<vmem>>, vector<192x512xbf16>,
    %c0_17 = arith.constant 0 : index
    %c512 = arith.constant 512 : index
    %20 = vector.load %arg2[%c0_17, %c512] : memref<80x3072xbf16, #tpu.memory_space<vmem>>, vector<80x512xbf16>
    %cst_18 = arith.constant dense<0.000000e+00> : vector<192x512xf32>
    %21 = tpu.matmul %1, %20, %cst_18 {dimension_numbers = #tpu.dot_dimension_numbers<[1], [0], [0], [1], [0, 0, 1, 1], [], []>} : vector<192x80xbf16>, vector<80x512xbf16>, vector<192x512xf32> -> vector<192x512xf32>
    %cst_19 = arith.constant dense<0.000000e+00> : vector<192x512xf32>
    %22 = tpu.matmul %3, %20, %cst_19 {dimension_numbers = #tpu.dot_dimension_numbers<[1], [0], [0], [1], [0, 0, 1, 1], [], []>} : vector<192x80xbf16>, vector<80x512xbf16>, vector<192x512xf32> -> vector<192x512xf32>
    %23 = arith.maximumf %21, %22 : vector<192x512xf32>
    %c0_20 = arith.constant 0 : index
    %c2048 = arith.constant 2048 : index
    %24 = vector.load %arg2[%c0_20, %c2048] : memref<80x3072xbf16, #tpu.memory_space<vmem>>, vector<80x512xbf16>
    %cst_21 = arith.constant dense<0.000000e+00> : vector<192x512xf32>
    %25 = tpu.matmul %1, %24, %cst_21 {dimension_numbers = #tpu.dot_dimension_numbers<[1], [0], [0], [1], [0, 0, 1, 1], [], []>} : vector<192x80xbf16>, vector<80x512xbf16>, vector<192x512xf32> -> vector<192x512xf32>
    %26 = arith.maximumf %23, %25 : vector<192x512xf32>
    %cst_22 = arith.constant dense<0.000000e+00> : vector<192x512xf32>
    %27 = tpu.matmul %3, %24, %cst_22 {dimension_numbers = #tpu.dot_dimension_numbers<[1], [0], [0], [1], [0, 0, 1, 1], [], []>} : vector<192x80xbf16>, vector<80x512xbf16>, vector<192x512xf32> -> vector<192x512xf32>
    %28 = arith.maximumf %26, %27 : vector<192x512xf32>
    %c0_23 = arith.constant 0 : index
    %c512_24 = arith.constant 512 : index
    %29 = vector.load %arg3[%c0_23, %c512_24] : memref<1x1536xf32, #tpu.memory_space<vmem>>, vector<1x512xf32>
    %30 = vector.broadcast %29 : vector<1x512xf32> to vector<192x512xf32>
    %31 = arith.addf %28, %30 : vector<192x512xf32>
    %cst_25 = arith.constant 0.000000e+00 : f32
    %32 = vector.broadcast %cst_25 : f32 to vector<192x512xf32>
    %33 = arith.maximumf %31, %32 : vector<192x512xf32>
    %34 = arith.truncf %33 : vector<192x512xf32> to vector<192x512xbf16>
    %c0_26 = arith.constant 0 : index
    %c512_27 = arith.constant 512 : index
    %35 = vector.load %arg7[%c0_26, %c512_27] : memref<192x1536xbf16, #tpu.memory_space<vmem>>, vector<192x512xbf16>
    tpu.vector_store %arg7[%c0_26, %c512_27], %34 {strides = array<i32>} : memref<192x1536xbf16, #tpu.memory_space<vmem>>, vector<192x512xbf16>,
    %c0_28 = arith.constant 0 : index
    %c1024 = arith.constant 1024 : index
    %36 = vector.load %arg2[%c0_28, %c1024] : memref<80x3072xbf16, #tpu.memory_space<vmem>>, vector<80x512xbf16>
    %cst_29 = arith.constant dense<0.000000e+00> : vector<192x512xf32>
    %37 = tpu.matmul %1, %36, %cst_29 {dimension_numbers = #tpu.dot_dimension_numbers<[1], [0], [0], [1], [0, 0, 1, 1], [], []>} : vector<192x80xbf16>, vector<80x512xbf16>, vector<192x512xf32> -> vector<192x512xf32>
    %cst_30 = arith.constant dense<0.000000e+00> : vector<192x512xf32>
    %38 = tpu.matmul %3, %36, %cst_30 {dimension_numbers = #tpu.dot_dimension_numbers<[1], [0], [0], [1], [0, 0, 1, 1], [], []>} : vector<192x80xbf16>, vector<80x512xbf16>, vector<192x512xf32> -> vector<192x512xf32>
    %39 = arith.maximumf %37, %38 : vector<192x512xf32>
    %c0_31 = arith.constant 0 : index
    %c2560 = arith.constant 2560 : index
    %40 = vector.load %arg2[%c0_31, %c2560] : memref<80x3072xbf16, #tpu.memory_space<vmem>>, vector<80x512xbf16>
    %cst_32 = arith.constant dense<0.000000e+00> : vector<192x512xf32>
    %41 = tpu.matmul %1, %40, %cst_32 {dimension_numbers = #tpu.dot_dimension_numbers<[1], [0], [0], [1], [0, 0, 1, 1], [], []>} : vector<192x80xbf16>, vector<80x512xbf16>, vector<192x512xf32> -> vector<192x512xf32>
    %42 = arith.maximumf %39, %41 : vector<192x512xf32>
    %cst_33 = arith.constant dense<0.000000e+00> : vector<192x512xf32>
    %43 = tpu.matmul %3, %40, %cst_33 {dimension_numbers = #tpu.dot_dimension_numbers<[1], [0], [0], [1], [0, 0, 1, 1], [], []>} : vector<192x80xbf16>, vector<80x512xbf16>, vector<192x512xf32> -> vector<192x512xf32>
    %44 = arith.maximumf %42, %43 : vector<192x512xf32>
    %c0_34 = arith.constant 0 : index
    %c1024_35 = arith.constant 1024 : index
    %45 = vector.load %arg3[%c0_34, %c1024_35] : memref<1x1536xf32, #tpu.memory_space<vmem>>, vector<1x512xf32>
    %46 = vector.broadcast %45 : vector<1x512xf32> to vector<192x512xf32>
    %47 = arith.addf %44, %46 : vector<192x512xf32>
    %cst_36 = arith.constant 0.000000e+00 : f32
    %48 = vector.broadcast %cst_36 : f32 to vector<192x512xf32>
    %49 = arith.maximumf %47, %48 : vector<192x512xf32>
    %50 = arith.truncf %49 : vector<192x512xf32> to vector<192x512xbf16>
    %c0_37 = arith.constant 0 : index
    %c1024_38 = arith.constant 1024 : index
    %51 = vector.load %arg7[%c0_37, %c1024_38] : memref<192x1536xbf16, #tpu.memory_space<vmem>>, vector<192x512xbf16>
    tpu.vector_store %arg7[%c0_37, %c1024_38], %50 {strides = array<i32>} : memref<192x1536xbf16, #tpu.memory_space<vmem>>, vector<192x512xbf16>,
    %c0_39 = arith.constant 0 : index
    %c0_40 = arith.constant 0 : index
    %52 = vector.load %arg7[%c0_39, %c0_40] : memref<192x1536xbf16, #tpu.memory_space<vmem>>, vector<128x1536xbf16>
    %c0_41 = arith.constant 0 : index
    %c0_42 = arith.constant 0 : index
    %c0_43 = arith.constant 0 : index
    %53 = vector.load %arg4[%c0_41, %c0_42, %c0_43] : memref<3x1536x128xbf16, #tpu.memory_space<vmem>>, vector<1x1536x128xbf16>
    %54 = vector.shape_cast %53 : vector<1x1536x128xbf16> to vector<1536x128xbf16>
    %cst_44 = arith.constant dense<0.000000e+00> : vector<128x128xf32>
    %55 = tpu.matmul %52, %54, %cst_44 {dimension_numbers = #tpu.dot_dimension_numbers<[1], [0], [0], [1], [0, 0, 1, 1], [], []>} : vector<128x1536xbf16>, vector<1536x128xbf16>, vector<128x128xf32> -> vector<128x128xf32>
    %c32 = arith.constant 32 : index
    %c0_45 = arith.constant 0 : index
    %56 = vector.load %arg7[%c32, %c0_45] : memref<192x1536xbf16, #tpu.memory_space<vmem>>, vector<128x1536xbf16>
    %c1_46 = arith.constant 1 : index
    %c0_47 = arith.constant 0 : index
    %c0_48 = arith.constant 0 : index
    %57 = vector.load %arg4[%c1_46, %c0_47, %c0_48] : memref<3x1536x128xbf16, #tpu.memory_space<vmem>>, vector<1x1536x128xbf16>
    %58 = vector.shape_cast %57 : vector<1x1536x128xbf16> to vector<1536x128xbf16>
    %cst_49 = arith.constant dense<0.000000e+00> : vector<128x128xf32>
    %59 = tpu.matmul %56, %58, %cst_49 {dimension_numbers = #tpu.dot_dimension_numbers<[1], [0], [0], [1], [0, 0, 1, 1], [], []>} : vector<128x1536xbf16>, vector<1536x128xbf16>, vector<128x128xf32> -> vector<128x128xf32>
    %60 = arith.addf %55, %59 : vector<128x128xf32>
    %c64 = arith.constant 64 : index
    %c0_50 = arith.constant 0 : index
    %61 = vector.load %arg7[%c64, %c0_50] : memref<192x1536xbf16, #tpu.memory_space<vmem>>, vector<128x1536xbf16>
    %c2 = arith.constant 2 : index
    %c0_51 = arith.constant 0 : index
    %c0_52 = arith.constant 0 : index
    %62 = vector.load %arg4[%c2, %c0_51, %c0_52] : memref<3x1536x128xbf16, #tpu.memory_space<vmem>>, vector<1x1536x128xbf16>
    %63 = vector.shape_cast %62 : vector<1x1536x128xbf16> to vector<1536x128xbf16>
    %cst_53 = arith.constant dense<0.000000e+00> : vector<128x128xf32>
    %64 = tpu.matmul %61, %63, %cst_53 {dimension_numbers = #tpu.dot_dimension_numbers<[1], [0], [0], [1], [0, 0, 1, 1], [], []>} : vector<128x1536xbf16>, vector<1536x128xbf16>, vector<128x128xf32> -> vector<128x128xf32>
    %65 = arith.addf %60, %64 : vector<128x128xf32>
    %66 = vector.extract_strided_slice %65 {offsets = [0, 0], sizes = [128, 64], strides = [1, 1]} : vector<128x128xf32> to vector<128x64xf32>
    %67 = vector.extract_strided_slice %65 {offsets = [0, 64], sizes = [128, 64], strides = [1, 1]} : vector<128x128xf32> to vector<128x64xf32>
    %68 = arith.maximumf %66, %67 : vector<128x64xf32>
    %69 = vector.extract_strided_slice %68 {offsets = [0, 0], sizes = [32, 64], strides = [1, 1]} : vector<128x64xf32> to vector<32x64xf32>
    %70 = vector.extract_strided_slice %68 {offsets = [32, 0], sizes = [32, 64], strides = [1, 1]} : vector<128x64xf32> to vector<32x64xf32>
    %71 = arith.maximumf %69, %70 : vector<32x64xf32>
    %c0_54 = arith.constant 0 : index
    %c0_55 = arith.constant 0 : index
    %72 = vector.load %arg5[%c0_54, %c0_55] : memref<1x64xf32, #tpu.memory_space<vmem>>, vector<1x64xf32>
    %73 = vector.broadcast %72 : vector<1x64xf32> to vector<32x64xf32>
    %74 = arith.addf %71, %73 : vector<32x64xf32>
    %cst_56 = arith.constant 0.000000e+00 : f32
    %75 = vector.broadcast %cst_56 : f32 to vector<32x64xf32>
    %76 = arith.maximumf %74, %75 : vector<32x64xf32>
    %77 = vector.extract_strided_slice %68 {offsets = [64, 0], sizes = [32, 64], strides = [1, 1]} : vector<128x64xf32> to vector<32x64xf32>
    %78 = vector.extract_strided_slice %68 {offsets = [96, 0], sizes = [32, 64], strides = [1, 1]} : vector<128x64xf32> to vector<32x64xf32>
    %79 = arith.maximumf %77, %78 : vector<32x64xf32>
    %c0_57 = arith.constant 0 : index
    %c0_58 = arith.constant 0 : index
    %80 = vector.load %arg5[%c0_57, %c0_58] : memref<1x64xf32, #tpu.memory_space<vmem>>, vector<1x64xf32>
    %81 = vector.broadcast %80 : vector<1x64xf32> to vector<32x64xf32>
    %82 = arith.addf %79, %81 : vector<32x64xf32>
    %cst_59 = arith.constant 0.000000e+00 : f32
    %83 = vector.broadcast %cst_59 : f32 to vector<32x64xf32>
    %84 = arith.maximumf %82, %83 : vector<32x64xf32>
    %85 = tpu.concatenate %76, %84 in 1 : vector<32x64xf32>, vector<32x64xf32> -> vector<32x128xf32>
    %c0_60 = arith.constant 0 : index
    %c0_61 = arith.constant 0 : index
    %86 = vector.load %arg6[%c0_60, %c0_61] : memref<32x128xf32, #tpu.memory_space<vmem>>, vector<32x128xf32>
    tpu.vector_store %arg6[%c0_60, %c0_61], %85 {strides = array<i32>} : memref<32x128xf32, #tpu.memory_space<vmem>>, vector<32x128xf32>,
    return
  }
  func.func @transform_0(%arg0: i32) -> (i32, i32, i32, i32) {
    %c0_i32 = arith.constant 0 : i32
    %c0_i32_0 = arith.constant 0 : i32
    %c0_i32_1 = arith.constant 0 : i32
    %c0_i32_2 = arith.constant 0 : i32
    return %c0_i32, %arg0, %c0_i32_0, %c0_i32_1 : i32, i32, i32, i32
  }
  func.func @transform_1(%arg0: i32) -> (i32, i32) {
    %c0_i32 = arith.constant 0 : i32
    %c0_i32_0 = arith.constant 0 : i32
    %c0_i32_1 = arith.constant 0 : i32
    return %c0_i32, %c0_i32_0 : i32, i32
  }
  func.func @transform_2(%arg0: i32) -> (i32, i32) {
    %c0_i32 = arith.constant 0 : i32
    %c0_i32_0 = arith.constant 0 : i32
    %c0_i32_1 = arith.constant 0 : i32
    return %c0_i32, %c0_i32_0 : i32, i32
  }
  func.func @transform_3(%arg0: i32) -> (i32, i32, i32) {
    %c0_i32 = arith.constant 0 : i32
    %c0_i32_0 = arith.constant 0 : i32
    %c0_i32_1 = arith.constant 0 : i32
    %c0_i32_2 = arith.constant 0 : i32
    return %c0_i32, %c0_i32_0, %c0_i32_1 : i32, i32, i32
  }
  func.func @transform_4(%arg0: i32) -> (i32, i32) {
    %c0_i32 = arith.constant 0 : i32
    %c0_i32_0 = arith.constant 0 : i32
    %c0_i32_1 = arith.constant 0 : i32
    return %c0_i32, %c0_i32_0 : i32, i32
  }
  func.func @transform_5(%arg0: i32) -> (i32, i32) {
    %c0_i32 = arith.constant 0 : i32
    %c0_i32_0 = arith.constant 0 : i32
    return %arg0, %c0_i32 : i32, i32
  }
}

</mosaic_0001>

<llo_original>
// kernel: lenet_apply.1
$region0: #{lenet_apply.1}
  #allocation0 [shape = 'u32[]', space=smem, size = 0x4, offset = 0x4, fixed_abs, tag = 'smem constant byte address 0x4 - core index']
  #allocation1 [shape = 'u32[144,128]{1,0:T(1,128)}', space=vmem, size = 0x12000, scoped, tag = 'internal scratch']
  #allocation2 [shape = 'bf16[192,1536]{1,0:T(16,128)(2,1)}', space=vmem, size = 0x90000, scoped, tag = 'scratch operand']
  %s0 = inlined_call_operand.vmem [shape: bf16[2,2,192,80], index: 0, kind: input, shape index: {}]
  %s1 = inlined_call_operand.vmem [shape: bf16[80,3072], index: 1, kind: input, shape index: {}]
  %s2 = inlined_call_operand.vmem [shape: f32[1,1536], index: 2, kind: input, shape index: {}]
  %s3 = inlined_call_operand.vmem [shape: bf16[3,1536,128], index: 3, kind: input, shape index: {}]
  %s4 = inlined_call_operand.vmem [shape: f32[1,64], index: 4, kind: input, shape index: {}]
  %s5 = inlined_call_operand.vmem [shape: f32[64,128], index: 5, kind: output, shape index: {}]
  %s6 = sld [smem:[#allocation0]]
  $region94: #{lenet_apply.1} parent=0
    _
  %s8 = ssub.s32 1, %s6
  %s9 = scalar_select 0, %s8, %s6
  $region1: #{lenet_apply.1} parent=0
    #allocation3 [shape = 'u8[196608]{0}', space=vmem, size = 0x30000, scoped, tag = 'input window, operand 0']
    loop: start=0, step=1, limit=4
    $region2: #{lenet_apply.1} parent=1 // loop_pre_header
      _
    $region3: #{lenet_apply.1} parent=1 // loop_header
      %s11 = sphi 0, %s15
      %p12 = scmp.ge.s32.totalorder %s11, 4
      %s21 = sphi 0, %s23
      %s24 = sphi 0, %s21
      %s25 = sphi 0, %s24
      %s41 = sphi 0, %s25
      %s45 = sphi 0, %s45
      %s47 = sphi 0, %s45
      %s48 = sphi 0, %s47
      %s62 = sphi 0, %s48
      %s66 = sphi 0, %s66
      %s68 = sphi 0, %s66
      %s69 = sphi 0, %s68
      %s83 = sphi 0, %s69
      %s87 = sphi 0, %s87
      %s89 = sphi 0, %s87
      %s90 = sphi 0, %s89
      %s104 = sphi 0, %s90
      %s108 = sphi 0, %s108
      %s110 = sphi 0, %s108
      %s111 = sphi 0, %s110
      %s125 = sphi 0, %s111
      %s131 = sphi 0, %s133
      %s134 = sphi 0, %s131
      %s135 = sphi 0, %s134
      %s151 = sphi 0, %s135
    $region4: #{lenet_apply.1} parent=1 // loop_header_branch
      %14 = sbr.rel (%p12) target = $region8
    $region5: #{lenet_apply.1} parent=1 // loop_body
      %s16 = ssub.s32 %s11, 1
      %s17 = ssub.s32 %s11, 2
      %s18 = sadd.s32 %s11, 1
      %s19 = ssub.s32 %s11, %s18
      %p20 = scmp.eq.s32.totalorder %s19, 0
      %s22 = sadd.s32 %s21, 1
      %s23 = scalar_select %p20, %s21, %s22
      %p26 = pneg %p20
      %p27 = scmp.eq.s32.totalorder %s11, 1
      %p28 = por %p26, %p27
      %p29 = scmp.ne.s32.totalorder %s21, %s24
      %p30 = scmp.eq.s32.totalorder %s11, 0
      %p31 = por %p29, %p30
      %p32 = scmp.ne.s32.totalorder %s21, %s24
      %p33 = scmp.eq.s32.totalorder %s16, 1
      %p34 = por %p32, %p33
      %p35 = scmp.ne.s32.totalorder %s24, %s25
      %p36 = scmp.eq.s32.totalorder %s16, 0
      %p37 = por %p35, %p36
      %p38 = scmp.ne.s32.totalorder %s24, %s25
      %p39 = scmp.eq.s32.totalorder %s17, 1
      %p40 = por %p38, %p39
      %p42 = scmp.ne.s32.totalorder %s25, %s41
      %p43 = scmp.eq.s32.totalorder %s17, 0
      %p44 = por %p42, %p43
      %s46 = sadd.s32 %s45, 1
      %p49 = scmp.eq.s32.totalorder %s11, 1
      %p50 = scmp.ne.s32.totalorder %s45, %s47
      %p51 = scmp.eq.s32.totalorder %s11, 0
      %p52 = por %p50, %p51
      %p53 = scmp.ne.s32.totalorder %s45, %s47
      %p54 = scmp.eq.s32.totalorder %s16, 1
      %p55 = por %p53, %p54
      %p56 = scmp.ne.s32.totalorder %s47, %s48
      %p57 = scmp.eq.s32.totalorder %s16, 0
      %p58 = por %p56, %p57
      %p59 = scmp.ne.s32.totalorder %s47, %s48
      %p60 = scmp.eq.s32.totalorder %s17, 1
      %p61 = por %p59, %p60
      %p63 = scmp.ne.s32.totalorder %s48, %s62
      %p64 = scmp.eq.s32.totalorder %s17, 0
      %p65 = por %p63, %p64
      %s67 = sadd.s32 %s66, 1
      %p70 = scmp.eq.s32.totalorder %s11, 1
      %p71 = scmp.ne.s32.totalorder %s66, %s68
      %p72 = scmp.eq.s32.totalorder %s11, 0
      %p73 = por %p71, %p72
      %p74 = scmp.ne.s32.totalorder %s66, %s68
      %p75 = scmp.eq.s32.totalorder %s16, 1
      %p76 = por %p74, %p75
      %p77 = scmp.ne.s32.totalorder %s68, %s69
      %p78 = scmp.eq.s32.totalorder %s16, 0
      %p79 = por %p77, %p78
      %p80 = scmp.ne.s32.totalorder %s68, %s69
      %p81 = scmp.eq.s32.totalorder %s17, 1
      %p82 = por %p80, %p81
      %p84 = scmp.ne.s32.totalorder %s69, %s83
      %p85 = scmp.eq.s32.totalorder %s17, 0
      %p86 = por %p84, %p85
      %s88 = sadd.s32 %s87, 1
      %p91 = scmp.eq.s32.totalorder %s11, 1
      %p92 = scmp.ne.s32.totalorder %s87, %s89
      %p93 = scmp.eq.s32.totalorder %s11, 0
      %p94 = por %p92, %p93
      %p95 = scmp.ne.s32.totalorder %s87, %s89
      %p96 = scmp.eq.s32.totalorder %s16, 1
      %p97 = por %p95, %p96
      %p98 = scmp.ne.s32.totalorder %s89, %s90
      %p99 = scmp.eq.s32.totalorder %s16, 0
      %p100 = por %p98, %p99
      %p101 = scmp.ne.s32.totalorder %s89, %s90
      %p102 = scmp.eq.s32.totalorder %s17, 1
      %p103 = por %p101, %p102
      %p105 = scmp.ne.s32.totalorder %s90, %s104
      %p106 = scmp.eq.s32.totalorder %s17, 0
      %p107 = por %p105, %p106
      %s109 = sadd.s32 %s108, 1
      %p112 = scmp.eq.s32.totalorder %s11, 1
      %p113 = scmp.ne.s32.totalorder %s108, %s110
      %p114 = scmp.eq.s32.totalorder %s11, 0
      %p115 = por %p113, %p114
      %p116 = scmp.ne.s32.totalorder %s108, %s110
      %p117 = scmp.eq.s32.totalorder %s16, 1
      %p118 = por %p116, %p117
      %p119 = scmp.ne.s32.totalorder %s110, %s111
      %p120 = scmp.eq.s32.totalorder %s16, 0
      %p121 = por %p119, %p120
      %p122 = scmp.ne.s32.totalorder %s110, %s111
      %p123 = scmp.eq.s32.totalorder %s17, 1
      %p124 = por %p122, %p123
      %p126 = scmp.ne.s32.totalorder %s111, %s125
      %p127 = scmp.eq.s32.totalorder %s17, 0
      %p128 = por %p126, %p127
      %s129 = ssub.s32 %s11, %s18
      %p130 = scmp.eq.s32.totalorder %s129, 0
      %s132 = sadd.s32 %s131, 1
      %s133 = scalar_select %p130, %s131, %s132
      %p136 = pneg %p130
      %p137 = scmp.eq.s32.totalorder %s11, 1
      %p138 = por %p136, %p137
      %p139 = scmp.ne.s32.totalorder %s131, %s134
      %p140 = scmp.eq.s32.totalorder %s11, 0
      %p141 = por %p139, %p140
      %p142 = scmp.ne.s32.totalorder %s131, %s134
      %p143 = scmp.eq.s32.totalorder %s16, 1
      %p144 = por %p142, %p143
      %p145 = scmp.ne.s32.totalorder %s134, %s135
      %p146 = scmp.eq.s32.totalorder %s16, 0
      %p147 = por %p145, %p146
      %p148 = scmp.ne.s32.totalorder %s134, %s135
      %p149 = scmp.eq.s32.totalorder %s17, 1
      %p150 = por %p148, %p149
      %p152 = scmp.ne.s32.totalorder %s135, %s151
      %p153 = scmp.eq.s32.totalorder %s17, 0
      %p154 = por %p152, %p153
      %p155 = scmp.le.s32.totalorder 1, %s11
      %p156 = scmp.lt.s32.totalorder %s11, 3
      %p157 = pnand %p155, %p156
      %p158 = pneg %p157
      // Predicated region
      $region9: #{lenet_apply.1} parent=5 // pred_check
        _
      $region10: #{lenet_apply.1} parent=5 // pred_check_branch
        %160 = sbr.rel (%p157) target = $region12
      $region11: #{lenet_apply.1} parent=5 // pred_region
        %s161 = ssub.s32 %s11, 1
        // Predicated region
        $region13: #{lenet_apply.1} parent=11 // pred_check
          %p162 = pneg %p58
        $region14: #{lenet_apply.1} parent=11 // pred_check_branch
          %164 = sbr.rel (%p162) target = $region16
        $region15: #{lenet_apply.1} parent=11 // pred_region
          _
        $region16: #{lenet_apply.1} parent=11 // pred_fallthru
          _
        // Predicated region
        $region17: #{lenet_apply.1} parent=11 // pred_check
          %p165 = pneg %p79
        $region18: #{lenet_apply.1} parent=11 // pred_check_branch
          %167 = sbr.rel (%p165) target = $region20
        $region19: #{lenet_apply.1} parent=11 // pred_region
          _
        $region20: #{lenet_apply.1} parent=11 // pred_fallthru
          _
        // Predicated region
        $region21: #{lenet_apply.1} parent=11 // pred_check
          %p168 = pneg %p100
        $region22: #{lenet_apply.1} parent=11 // pred_check_branch
          %170 = sbr.rel (%p168) target = $region24
        $region23: #{lenet_apply.1} parent=11 // pred_region
          _
        $region24: #{lenet_apply.1} parent=11 // pred_fallthru
          _
        // Predicated region
        $region25: #{lenet_apply.1} parent=11 // pred_check
          %p171 = pneg %p121
        $region26: #{lenet_apply.1} parent=11 // pred_check_branch
          %173 = sbr.rel (%p171) target = $region28
        $region27: #{lenet_apply.1} parent=11 // pred_region
          _
        $region28: #{lenet_apply.1} parent=11 // pred_fallthru
          _
      $region12: #{lenet_apply.1} parent=5 // pred_fallthru
        _
      %p174 = scmp.lt.s32.totalorder %s11, 2
      // Predicated region
      $region29: #{lenet_apply.1} parent=5 // pred_check
        %p175 = pneg %p174
      $region30: #{lenet_apply.1} parent=5 // pred_check_branch
        %177 = sbr.rel (%p175) target = $region32
      $region31: #{lenet_apply.1} parent=5 // pred_region
        // Predicated region
        $region33: #{lenet_apply.1} parent=31 // pred_check
          %p178 = pneg %p31
        $region34: #{lenet_apply.1} parent=31 // pred_check_branch
          %180 = sbr.rel (%p178) target = $region36
        $region35: #{lenet_apply.1} parent=31 // pred_region
          %s181 = sand.u32 %s21, 1
          %s182 = sand.u32 %s21, 1
          %s183 = smul.addr %s182, 192
          %s184 = scalar_lea.vmem [#allocation3], %s183
          %s185 = smul.addr %s11, 24
          %s186 = smul.addr %s185, 4
          %s187 = scalar_lea.vmem %s0, %s186
          // Predicated region
          $region37: #{lenet_apply.1} parent=35 // pred_check
            _
          $region38: #{lenet_apply.1} parent=35 // pred_check_branch
            %189 = sbr.rel (0) target = $region40
          $region39: #{lenet_apply.1} parent=35 // pred_region
            // Predicated region
            $region41: #{lenet_apply.1} parent=39 // pred_check
              _
            $region42: #{lenet_apply.1} parent=39 // pred_check_branch
              %191 = sbr.rel target = $region44
            $region43: #{lenet_apply.1} parent=39 // pred_region
              // Predicated region
              $region56: #{lenet_apply.1} parent=43 // pred_check
                _
              $region57: #{lenet_apply.1} parent=43 // pred_check_branch
                %300 = sbr.rel (0) target = $region59
              $region58: #{lenet_apply.1} parent=43 // pred_region
                loop: start=0, step=1, limit=1
                $region60: #{lenet_apply.1} parent=58 // loop_pre_header
                  _
                $region61: #{lenet_apply.1} parent=58 // loop_header
                  %s302 = sphi 0, %s306
                  %p303 = scmp.ge.s32.totalorder %s302, 1
                  %s307 = sphi %s187, %s187
                  %s308 = sphi %s184, %s184
                $region62: #{lenet_apply.1} parent=58 // loop_header_branch
                  %305 = sbr.rel (%p303) target = $region66
                $region63: #{lenet_apply.1} parent=58 // loop_body
                  _
                $region64: #{lenet_apply.1} parent=58 // loop_footer
                  %s306 = sadd.s32 1, %s302
                $region65: #{lenet_apply.1} parent=58 // loop_footer_branch
                  %301 = sbr.rel target = $region61
                $region66: #{lenet_apply.1} parent=58 // loop_exit
                  _
                loop: start=0, step=1, limit=1
                $region67: #{lenet_apply.1} parent=58 // loop_pre_header
                  _
                $region68: #{lenet_apply.1} parent=58 // loop_header
                  %s311 = sphi 0, %s315
                  %p312 = scmp.ge.s32.totalorder %s311, 1
                  %s316 = sphi %s187, %s187
                  %s317 = sphi %s184, %s184
                $region69: #{lenet_apply.1} parent=58 // loop_header_branch
                  %314 = sbr.rel (%p312) target = $region73
                $region70: #{lenet_apply.1} parent=58 // loop_body
                  %v318 = vld [vmem:[%s316] sm:$0xf]
                  %319 = vst [vmem:[%s317] sm:$0xf] %v318
                  %v320 = vld [vmem:[%s316 + $0x4] sm:$0xf]
                  %321 = vst [vmem:[%s317 + $0x4] sm:$0xf] %v320
                  %v322 = vld [vmem:[%s316 + $0x8] sm:$0xf]
                  %323 = vst [vmem:[%s317 + $0x8] sm:$0xf] %v322
                  %v324 = vld [vmem:[%s316 + $0xc] sm:$0xf]
                  %325 = vst [vmem:[%s317 + $0xc] sm:$0xf] %v324
                  %v326 = vld [vmem:[%s316 + $0x10] sm:$0xf]
                  %327 = vst [vmem:[%s317 + $0x10] sm:$0xf] %v326
                  %v328 = vld [vmem:[%s316 + $0x14] sm:$0xf]
                  %329 = vst [vmem:[%s317 + $0x14] sm:$0xf] %v328
                  %v330 = vld [vmem:[%s316 + $0x18] sm:$0xf]
                  %331 = vst [vmem:[%s317 + $0x18] sm:$0xf] %v330
                  %v332 = vld [vmem:[%s316 + $0x1c] sm:$0xf]
                  %333 = vst [vmem:[%s317 + $0x1c] sm:$0xf] %v332
                  %v334 = vld [vmem:[%s316 + $0x20] sm:$0xf]
                  %335 = vst [vmem:[%s317 + $0x20] sm:$0xf] %v334
                  %v336 = vld [vmem:[%s316 + $0x24] sm:$0xf]
                  %337 = vst [vmem:[%s317 + $0x24] sm:$0xf] %v336
                  %v338 = vld [vmem:[%s316 + $0x28] sm:$0xf]
                  %339 = vst [vmem:[%s317 + $0x28] sm:$0xf] %v338
                  %v340 = vld [vmem:[%s316 + $0x2c] sm:$0xf]
                  %341 = vst [vmem:[%s317 + $0x2c] sm:$0xf] %v340
                  %v342 = vld [vmem:[%s316 + $0x30] sm:$0xf]
                  %343 = vst [vmem:[%s317 + $0x30] sm:$0xf] %v342
                  %v344 = vld [vmem:[%s316 + $0x34] sm:$0xf]
                  %345 = vst [vmem:[%s317 + $0x34] sm:$0xf] %v344
                  %v346 = vld [vmem:[%s316 + $0x38] sm:$0xf]
                  %347 = vst [vmem:[%s317 + $0x38] sm:$0xf] %v346
                  %v348 = vld [vmem:[%s316 + $0x3c] sm:$0xf]
                  %349 = vst [vmem:[%s317 + $0x3c] sm:$0xf] %v348
                  %v350 = vld [vmem:[%s316 + $0x40] sm:$0xf]
                  %351 = vst [vmem:[%s317 + $0x40] sm:$0xf] %v350
                  %v352 = vld [vmem:[%s316 + $0x44] sm:$0xf]
                  %353 = vst [vmem:[%s317 + $0x44] sm:$0xf] %v352
                  %v354 = vld [vmem:[%s316 + $0x48] sm:$0xf]
                  %355 = vst [vmem:[%s317 + $0x48] sm:$0xf] %v354
                  %v356 = vld [vmem:[%s316 + $0x4c] sm:$0xf]
                  %357 = vst [vmem:[%s317 + $0x4c] sm:$0xf] %v356
                  %v358 = vld [vmem:[%s316 + $0x50] sm:$0xf]
                  %359 = vst [vmem:[%s317 + $0x50] sm:$0xf] %v358
                  %v360 = vld [vmem:[%s316 + $0x54] sm:$0xf]
                  %361 = vst [vmem:[%s317 + $0x54] sm:$0xf] %v360
                  %v362 = vld [vmem:[%s316 + $0x58] sm:$0xf]
                  %363 = vst [vmem:[%s317 + $0x58] sm:$0xf] %v362
                  %v364 = vld [vmem:[%s316 + $0x5c] sm:$0xf]
                  %365 = vst [vmem:[%s317 + $0x5c] sm:$0xf] %v364
                  %v366 = vld [vmem:[%s316 + $0xc0] sm:$0xf]
                  %367 = vst [vmem:[%s317 + $0x60] sm:$0xf] %v366
                  %v368 = vld [vmem:[%s316 + $0xc4] sm:$0xf]
                  %369 = vst [vmem:[%s317 + $0x64] sm:$0xf] %v368
                  %v370 = vld [vmem:[%s316 + $0xc8] sm:$0xf]
                  %371 = vst [vmem:[%s317 + $0x68] sm:$0xf] %v370
                  %v372 = vld [vmem:[%s316 + $0xcc] sm:$0xf]
                  %373 = vst [vmem:[%s317 + $0x6c] sm:$0xf] %v372
                  %v374 = vld [vmem:[%s316 + $0xd0] sm:$0xf]
                  %375 = vst [vmem:[%s317 + $0x70] sm:$0xf] %v374
                  %v376 = vld [vmem:[%s316 + $0xd4] sm:$0xf]
                  %377 = vst [vmem:[%s317 + $0x74] sm:$0xf] %v376
                  %v378 = vld [vmem:[%s316 + $0xd8] sm:$0xf]
                  %379 = vst [vmem:[%s317 + $0x78] sm:$0xf] %v378
                  %v380 = vld [vmem:[%s316 + $0xdc] sm:$0xf]
                  %381 = vst [vmem:[%s317 + $0x7c] sm:$0xf] %v380
                  %v382 = vld [vmem:[%s316 + $0xe0] sm:$0xf]
                  %383 = vst [vmem:[%s317 + $0x80] sm:$0xf] %v382
                  %v384 = vld [vmem:[%s316 + $0xe4] sm:$0xf]
                  %385 = vst [vmem:[%s317 + $0x84] sm:$0xf] %v384
                  %v386 = vld [vmem:[%s316 + $0xe8] sm:$0xf]
                  %387 = vst [vmem:[%s317 + $0x88] sm:$0xf] %v386
                  %v388 = vld [vmem:[%s316 + $0xec] sm:$0xf]
                  %389 = vst [vmem:[%s317 + $0x8c] sm:$0xf] %v388
                  %v390 = vld [vmem:[%s316 + $0xf0] sm:$0xf]
                  %391 = vst [vmem:[%s317 + $0x90] sm:$0xf] %v390
                  %v392 = vld [vmem:[%s316 + $0xf4] sm:$0xf]
                  %393 = vst [vmem:[%s317 + $0x94] sm:$0xf] %v392
                  %v394 = vld [vmem:[%s316 + $0xf8] sm:$0xf]
                  %395 = vst [vmem:[%s317 + $0x98] sm:$0xf] %v394
                  %v396 = vld [vmem:[%s316 + $0xfc] sm:$0xf]
                  %397 = vst [vmem:[%s317 + $0x9c] sm:$0xf] %v396
                  %v398 = vld [vmem:[%s316 + $0x100] sm:$0xf]
                  %399 = vst [vmem:[%s317 + $0xa0] sm:$0xf] %v398
                  %v400 = vld [vmem:[%s316 + $0x104] sm:$0xf]
                  %401 = vst [vmem:[%s317 + $0xa4] sm:$0xf] %v400
                  %v402 = vld [vmem:[%s316 + $0x108] sm:$0xf]
                  %403 = vst [vmem:[%s317 + $0xa8] sm:$0xf] %v402
                  %v404 = vld [vmem:[%s316 + $0x10c] sm:$0xf]
                  %405 = vst [vmem:[%s317 + $0xac] sm:$0xf] %v404
                  %v406 = vld [vmem:[%s316 + $0x110] sm:$0xf]
                  %407 = vst [vmem:[%s317 + $0xb0] sm:$0xf] %v406
                  %v408 = vld [vmem:[%s316 + $0x114] sm:$0xf]
                  %409 = vst [vmem:[%s317 + $0xb4] sm:$0xf] %v408
                  %v410 = vld [vmem:[%s316 + $0x118] sm:$0xf]
                  %411 = vst [vmem:[%s317 + $0xb8] sm:$0xf] %v410
                  %v412 = vld [vmem:[%s316 + $0x11c] sm:$0xf]
                  %413 = vst [vmem:[%s317 + $0xbc] sm:$0xf] %v412
                $region71: #{lenet_apply.1} parent=58 // loop_footer
                  %s315 = sadd.s32 1, %s311
                $region72: #{lenet_apply.1} parent=58 // loop_footer_branch
                  %310 = sbr.rel target = $region68
                $region73: #{lenet_apply.1} parent=58 // loop_exit
                  _
              $region59: #{lenet_apply.1} parent=43 // pred_fallthru
                _
            $region44: #{lenet_apply.1} parent=39 // pred_fallthru
              _
            // Predicated region
            $region45: #{lenet_apply.1} parent=39 // pred_check
              _
            $region46: #{lenet_apply.1} parent=39 // pred_check_branch
              %193 = sbr.rel (0) target = $region48
            $region47: #{lenet_apply.1} parent=39 // pred_region
              loop: start=0, step=1, limit=1
              $region49: #{lenet_apply.1} parent=47 // loop_pre_header
                _
              $region50: #{lenet_apply.1} parent=47 // loop_header
                %s196 = sphi 0, %s200
                %p197 = scmp.ge.s32.totalorder %s196, 1
                %s201 = sphi %s187, %s187
                %s202 = sphi %s184, %s184
              $region51: #{lenet_apply.1} parent=47 // loop_header_branch
                %199 = sbr.rel (%p197) target = $region55
              $region52: #{lenet_apply.1} parent=47 // loop_body
                %v203 = vld [vmem:[%s201] sm:$0xf]
                %204 = vst [vmem:[%s202] sm:$0xf] %v203
                %v205 = vld [vmem:[%s201 + $0x4] sm:$0xf]
                %206 = vst [vmem:[%s202 + $0x4] sm:$0xf] %v205
                %v207 = vld [vmem:[%s201 + $0x8] sm:$0xf]
                %208 = vst [vmem:[%s202 + $0x8] sm:$0xf] %v207
                %v209 = vld [vmem:[%s201 + $0xc] sm:$0xf]
                %210 = vst [vmem:[%s202 + $0xc] sm:$0xf] %v209
                %v211 = vld [vmem:[%s201 + $0x10] sm:$0xf]
                %212 = vst [vmem:[%s202 + $0x10] sm:$0xf] %v211
                %v213 = vld [vmem:[%s201 + $0x14] sm:$0xf]
                %214 = vst [vmem:[%s202 + $0x14] sm:$0xf] %v213
                %v215 = vld [vmem:[%s201 + $0x18] sm:$0xf]
                %216 = vst [vmem:[%s202 + $0x18] sm:$0xf] %v215
                %v217 = vld [vmem:[%s201 + $0x1c] sm:$0xf]
                %218 = vst [vmem:[%s202 + $0x1c] sm:$0xf] %v217
                %v219 = vld [vmem:[%s201 + $0x20] sm:$0xf]
                %220 = vst [vmem:[%s202 + $0x20] sm:$0xf] %v219
                %v221 = vld [vmem:[%s201 + $0x24] sm:$0xf]
                %222 = vst [vmem:[%s202 + $0x24] sm:$0xf] %v221
                %v223 = vld [vmem:[%s201 + $0x28] sm:$0xf]
                %224 = vst [vmem:[%s202 + $0x28] sm:$0xf] %v223
                %v225 = vld [vmem:[%s201 + $0x2c] sm:$0xf]
                %226 = vst [vmem:[%s202 + $0x2c] sm:$0xf] %v225
                %v227 = vld [vmem:[%s201 + $0x30] sm:$0xf]
                %228 = vst [vmem:[%s202 + $0x30] sm:$0xf] %v227
                %v229 = vld [vmem:[%s201 + $0x34] sm:$0xf]
                %230 = vst [vmem:[%s202 + $0x34] sm:$0xf] %v229
                %v231 = vld [vmem:[%s201 + $0x38] sm:$0xf]
                %232 = vst [vmem:[%s202 + $0x38] sm:$0xf] %v231
                %v233 = vld [vmem:[%s201 + $0x3c] sm:$0xf]
                %234 = vst [vmem:[%s202 + $0x3c] sm:$0xf] %v233
                %v235 = vld [vmem:[%s201 + $0x40] sm:$0xf]
                %236 = vst [vmem:[%s202 + $0x40] sm:$0xf] %v235
                %v237 = vld [vmem:[%s201 + $0x44] sm:$0xf]
                %238 = vst [vmem:[%s202 + $0x44] sm:$0xf] %v237
                %v239 = vld [vmem:[%s201 + $0x48] sm:$0xf]
                %240 = vst [vmem:[%s202 + $0x48] sm:$0xf] %v239
                %v241 = vld [vmem:[%s201 + $0x4c] sm:$0xf]
                %242 = vst [vmem:[%s202 + $0x4c] sm:$0xf] %v241
                %v243 = vld [vmem:[%s201 + $0x50] sm:$0xf]
                %244 = vst [vmem:[%s202 + $0x50] sm:$0xf] %v243
                %v245 = vld [vmem:[%s201 + $0x54] sm:$0xf]
                %246 = vst [vmem:[%s202 + $0x54] sm:$0xf] %v245
                %v247 = vld [vmem:[%s201 + $0x58] sm:$0xf]
                %248 = vst [vmem:[%s202 + $0x58] sm:$0xf] %v247
                %v249 = vld [vmem:[%s201 + $0x5c] sm:$0xf]
                %250 = vst [vmem:[%s202 + $0x5c] sm:$0xf] %v249
                %v251 = vld [vmem:[%s201 + $0xc0] sm:$0xf]
                %252 = vst [vmem:[%s202 + $0x60] sm:$0xf] %v251
                %v253 = vld [vmem:[%s201 + $0xc4] sm:$0xf]
                %254 = vst [vmem:[%s202 + $0x64] sm:$0xf] %v253
                %v255 = vld [vmem:[%s201 + $0xc8] sm:$0xf]
                %256 = vst [vmem:[%s202 + $0x68] sm:$0xf] %v255
                %v257 = vld [vmem:[%s201 + $0xcc] sm:$0xf]
                %258 = vst [vmem:[%s202 + $0x6c] sm:$0xf] %v257
                %v259 = vld [vmem:[%s201 + $0xd0] sm:$0xf]
                %260 = vst [vmem:[%s202 + $0x70] sm:$0xf] %v259
                %v261 = vld [vmem:[%s201 + $0xd4] sm:$0xf]
                %262 = vst [vmem:[%s202 + $0x74] sm:$0xf] %v261
                %v263 = vld [vmem:[%s201 + $0xd8] sm:$0xf]
                %264 = vst [vmem:[%s202 + $0x78] sm:$0xf] %v263
                %v265 = vld [vmem:[%s201 + $0xdc] sm:$0xf]
                %266 = vst [vmem:[%s202 + $0x7c] sm:$0xf] %v265
                %v267 = vld [vmem:[%s201 + $0xe0] sm:$0xf]
                %268 = vst [vmem:[%s202 + $0x80] sm:$0xf] %v267
                %v269 = vld [vmem:[%s201 + $0xe4] sm:$0xf]
                %270 = vst [vmem:[%s202 + $0x84] sm:$0xf] %v269
                %v271 = vld [vmem:[%s201 + $0xe8] sm:$0xf]
                %272 = vst [vmem:[%s202 + $0x88] sm:$0xf] %v271
                %v273 = vld [vmem:[%s201 + $0xec] sm:$0xf]
                %274 = vst [vmem:[%s202 + $0x8c] sm:$0xf] %v273
                %v275 = vld [vmem:[%s201 + $0xf0] sm:$0xf]
                %276 = vst [vmem:[%s202 + $0x90] sm:$0xf] %v275
                %v277 = vld [vmem:[%s201 + $0xf4] sm:$0xf]
                %278 = vst [vmem:[%s202 + $0x94] sm:$0xf] %v277
                %v279 = vld [vmem:[%s201 + $0xf8] sm:$0xf]
                %280 = vst [vmem:[%s202 + $0x98] sm:$0xf] %v279
                %v281 = vld [vmem:[%s201 + $0xfc] sm:$0xf]
                %282 = vst [vmem:[%s202 + $0x9c] sm:$0xf] %v281
                %v283 = vld [vmem:[%s201 + $0x100] sm:$0xf]
                %284 = vst [vmem:[%s202 + $0xa0] sm:$0xf] %v283
                %v285 = vld [vmem:[%s201 + $0x104] sm:$0xf]
                %286 = vst [vmem:[%s202 + $0xa4] sm:$0xf] %v285
                %v287 = vld [vmem:[%s201 + $0x108] sm:$0xf]
                %288 = vst [vmem:[%s202 + $0xa8] sm:$0xf] %v287
                %v289 = vld [vmem:[%s201 + $0x10c] sm:$0xf]
                %290 = vst [vmem:[%s202 + $0xac] sm:$0xf] %v289
                %v291 = vld [vmem:[%s201 + $0x110] sm:$0xf]
                %292 = vst [vmem:[%s202 + $0xb0] sm:$0xf] %v291
                %v293 = vld [vmem:[%s201 + $0x114] sm:$0xf]
                %294 = vst [vmem:[%s202 + $0xb4] sm:$0xf] %v293
                %v295 = vld [vmem:[%s201 + $0x118] sm:$0xf]
                %296 = vst [vmem:[%s202 + $0xb8] sm:$0xf] %v295
                %v297 = vld [vmem:[%s201 + $0x11c] sm:$0xf]
                %298 = vst [vmem:[%s202 + $0xbc] sm:$0xf] %v297
              $region53: #{lenet_apply.1} parent=47 // loop_footer
                %s200 = sadd.s32 1, %s196
              $region54: #{lenet_apply.1} parent=47 // loop_footer_branch
                %195 = sbr.rel target = $region50
              $region55: #{lenet_apply.1} parent=47 // loop_exit
                _
            $region48: #{lenet_apply.1} parent=39 // pred_fallthru
              _
          $region40: #{lenet_apply.1} parent=35 // pred_fallthru
            _
          %414 = vnop
        $region36: #{lenet_apply.1} parent=31 // pred_fallthru
          _
      $region32: #{lenet_apply.1} parent=5 // pred_fallthru
        _
      %p415 = scmp.le.s32.totalorder 1, %s11
      %p416 = scmp.lt.s32.totalorder %s11, 3
      %p417 = pnand %p415, %p416
      %p418 = pneg %p417
      // Predicated region
      $region74: #{lenet_apply.1} parent=5 // pred_check
        _
      $region75: #{lenet_apply.1} parent=5 // pred_check_branch
        %420 = sbr.rel (%p417) target = $region77
      $region76: #{lenet_apply.1} parent=5 // pred_region
        %s421 = ssub.s32 %s11, 1
        %s422 = sand.u32 %s24, 1
        %s423 = sand.u32 %s24, 1
        %s424 = smul.addr %s423, 192
        %s425 = scalar_lea.vmem [#allocation3], %s424
        // Predicated region
        $region78: #{lenet_apply.1} parent=76 // pred_check
          %p426 = pneg %p37
        $region79: #{lenet_apply.1} parent=76 // pred_check_branch
          %428 = sbr.rel (%p426) target = $region81
        $region80: #{lenet_apply.1} parent=76 // pred_region
          _
        $region81: #{lenet_apply.1} parent=76 // pred_fallthru
          _
        %s429 = sand.u32 %s24, 1
        %s430 = sand.u32 %s24, 1
        %s431 = smul.addr %s430, 192
        %s432 = scalar_lea.vmem [#allocation3], %s431
        %p433 = pneg %p37
        %p434 = pneg %p34
        %p435 = pneg %p58
        %p436 = pneg %p55
        %p437 = pneg %p79
        %p438 = pneg %p76
        %p439 = pneg %p100
        %p440 = pneg %p97
        %p441 = pneg %p121
        %p442 = pneg %p118
        %p443 = pneg %p147
        %p444 = pneg %p144
        %s445 = smul.u32 4, %s16
        %p446 = scmp.lt.s32.totalorder %s445, 7
        %s447 = scalar_select %p446, %s445, 7
        %s448 = smul.addr %s447, 8
        %s449 = scalar_lea.vmem %s5, %s448
        %s450 = smul.u32 4, %s16
        %p451 = scmp.lt.s32.totalorder %s450, 7
        %s452 = scalar_select %p451, %s450, 7
        %s453 = smul.addr %s452, 8
        %s454 = scalar_lea.vmem %s5, %s453
        %s455 = smul.u32 4, %s16
        %v457 = vld [vmem:[%s425] sm:$0xf]
        %v458 = vld [vmem:[%s425 + $0x4] sm:$0xf]
        %v459 = vld [vmem:[%s425 + $0x8] sm:$0xf]
        %v460 = vld [vmem:[%s425 + $0xc] sm:$0xf]
        %v461 = vld [vmem:[%s425 + $0x10] sm:$0xf]
        %v462 = vld [vmem:[%s425 + $0x14] sm:$0xf]
        %v463 = vld [vmem:[%s425 + $0x18] sm:$0xf]
        %v464 = vld [vmem:[%s425 + $0x1c] sm:$0xf]
        %v465 = vld [vmem:[%s425 + $0x20] sm:$0xf]
        %v466 = vld [vmem:[%s425 + $0x24] sm:$0xf]
        %v467 = vld [vmem:[%s425 + $0x28] sm:$0xf]
        %v468 = vld [vmem:[%s425 + $0x2c] sm:$0xf]
        %v469 = vld [vmem:[%s425 + $0x30] sm:$0xf]
        %v470 = vld [vmem:[%s425 + $0x34] sm:$0xf]
        %v471 = vld [vmem:[%s425 + $0x38] sm:$0xf]
        %v472 = vld [vmem:[%s425 + $0x3c] sm:$0xf]
        %v473 = vld [vmem:[%s425 + $0x40] sm:$0xf]
        %v474 = vld [vmem:[%s425 + $0x44] sm:$0xf]
        %v475 = vld [vmem:[%s425 + $0x48] sm:$0xf]
        %v476 = vld [vmem:[%s425 + $0x4c] sm:$0xf]
        %v477 = vld [vmem:[%s425 + $0x50] sm:$0xf]
        %v478 = vld [vmem:[%s425 + $0x54] sm:$0xf]
        %v479 = vld [vmem:[%s425 + $0x58] sm:$0xf]
        %v480 = vld [vmem:[%s425 + $0x5c] sm:$0xf]
        %s481 = scalar_lea.vmem %s425, 96 [#allocation3]
        %v482 = vld [vmem:[%s481] sm:$0xf]
        %v483 = vld [vmem:[%s481 + $0x4] sm:$0xf]
        %v484 = vld [vmem:[%s481 + $0x8] sm:$0xf]
        %v485 = vld [vmem:[%s481 + $0xc] sm:$0xf]
        %v486 = vld [vmem:[%s481 + $0x10] sm:$0xf]
        %v487 = vld [vmem:[%s481 + $0x14] sm:$0xf]
        %v488 = vld [vmem:[%s481 + $0x18] sm:$0xf]
        %v489 = vld [vmem:[%s481 + $0x1c] sm:$0xf]
        %v490 = vld [vmem:[%s481 + $0x20] sm:$0xf]
        %v491 = vld [vmem:[%s481 + $0x24] sm:$0xf]
        %v492 = vld [vmem:[%s481 + $0x28] sm:$0xf]
        %v493 = vld [vmem:[%s481 + $0x2c] sm:$0xf]
        %v494 = vld [vmem:[%s481 + $0x30] sm:$0xf]
        %v495 = vld [vmem:[%s481 + $0x34] sm:$0xf]
        %v496 = vld [vmem:[%s481 + $0x38] sm:$0xf]
        %v497 = vld [vmem:[%s481 + $0x3c] sm:$0xf]
        %v498 = vld [vmem:[%s481 + $0x40] sm:$0xf]
        %v499 = vld [vmem:[%s481 + $0x44] sm:$0xf]
        %v500 = vld [vmem:[%s481 + $0x48] sm:$0xf]
        %v501 = vld [vmem:[%s481 + $0x4c] sm:$0xf]
        %v502 = vld [vmem:[%s481 + $0x50] sm:$0xf]
        %v503 = vld [vmem:[%s481 + $0x54] sm:$0xf]
        %v504 = vld [vmem:[%s481 + $0x58] sm:$0xf]
        %v505 = vld [vmem:[%s481 + $0x5c] sm:$0xf]
        %v506 = vld [vmem:[%s1] sm:$0xff]
        %v507 = vld [vmem:[%s1 + $0x8] sm:$0xff]
        %v508 = vld [vmem:[%s1 + $0x60] sm:$0xff]
        %v509 = vld [vmem:[%s1 + $0x68] sm:$0xff]
        %v510 = vld [vmem:[%s1 + $0xc0] sm:$0xff]
        %v511 = vld [vmem:[%s1 + $0xc8] sm:$0xff]
        %v512 = vld [vmem:[%s1 + $0x120] sm:$0xff]
        %v513 = vld [vmem:[%s1 + $0x128] sm:$0xff]
        %v514 = vld [vmem:[%s1 + $0x180] sm:$0xff]
        %v515 = vld [vmem:[%s1 + $0x188] sm:$0xff]
        %v516 = vld [vmem:[%s1 + $0x1e0] sm:$0xff]
        %v517 = vld [vmem:[%s1 + $0x1e8] sm:$0xff]
        %v518 = vld [vmem:[%s1 + $0x240] sm:$0xff]
        %v519 = vld [vmem:[%s1 + $0x248] sm:$0xff]
        %v520 = vld [vmem:[%s1 + $0x2a0] sm:$0xff]
        %v521 = vld [vmem:[%s1 + $0x2a8] sm:$0xff]
        %v522 = vld [vmem:[%s1 + $0x300] sm:$0xff]
        %v523 = vld [vmem:[%s1 + $0x308] sm:$0xff]
        %v524 = vld [vmem:[%s1 + $0x360] sm:$0xff]
        %v525 = vld [vmem:[%s1 + $0x368] sm:$0xff]
        %v550 = vunpack.c.l.b16 %v457
        %v551 = vunpack.c.l.b16 %v458
        %v552 = vunpack.c.l.b16 %v459
        %v553 = vunpack.c.l.b16 %v460
        %v554 = vunpack.c.l.b16 %v461
        %v555 = vunpack.c.l.b16 %v462
        %v556 = vunpack.c.l.b16 %v463
        %v557 = vunpack.c.l.b16 %v464
        %v558 = vunpack.c.l.b16 %v465
        %v559 = vunpack.c.l.b16 %v466
        %v560 = vunpack.c.l.b16 %v467
        %v561 = vunpack.c.l.b16 %v468
        %v562 = vunpack.c.l.b16 %v469
        %v563 = vunpack.c.l.b16 %v470
        %v564 = vunpack.c.l.b16 %v471
        %v565 = vunpack.c.l.b16 %v472
        %v566 = vunpack.c.l.b16 %v473
        %v567 = vunpack.c.l.b16 %v474
        %v568 = vunpack.c.l.b16 %v475
        %v569 = vunpack.c.l.b16 %v476
        %v570 = vunpack.c.l.b16 %v477
        %v571 = vunpack.c.l.b16 %v478
        %v572 = vunpack.c.l.b16 %v479
        %v573 = vunpack.c.l.b16 %v480
        %v574 = vpack.c.b16 %v551, %v550
        %v575 = vpack.c.b16 %v553, %v552
        %v576 = vpack.c.b16 %v555, %v554
        %v577 = vpack.c.b16 %v557, %v556
        %v578 = vpack.c.b16 %v559, %v558
        %v579 = vpack.c.b16 %v561, %v560
        %v580 = vpack.c.b16 %v563, %v562
        %v581 = vpack.c.b16 %v565, %v564
        %v582 = vpack.c.b16 %v567, %v566
        %v583 = vpack.c.b16 %v569, %v568
        %v584 = vpack.c.b16 %v571, %v570
        %v585 = vpack.c.b16 %v573, %v572
        %v606 = vunpack.c.l.b16 %v506
        %v607 = vunpack.c.h.b16 %v506
        %v608 = vunpack.c.l.b16 %v507
        %v609 = vunpack.c.h.b16 %v507
        %v610 = vunpack.c.l.b16 %v508
        %v611 = vunpack.c.h.b16 %v508
        %v612 = vunpack.c.l.b16 %v509
        %v613 = vunpack.c.h.b16 %v509
        %v614 = vunpack.c.l.b16 %v510
        %v615 = vunpack.c.h.b16 %v510
        %v616 = vunpack.c.l.b16 %v511
        %v617 = vunpack.c.h.b16 %v511
        %v618 = vunpack.c.l.b16 %v512
        %v619 = vunpack.c.h.b16 %v512
        %v620 = vunpack.c.l.b16 %v513
        %v621 = vunpack.c.h.b16 %v513
        %v622 = vunpack.c.l.b16 %v514
        %v623 = vunpack.c.h.b16 %v514
        %v624 = vunpack.c.l.b16 %v515
        %v625 = vunpack.c.h.b16 %v515
        %v626 = vunpack.c.l.b16 %v516
        %v627 = vunpack.c.h.b16 %v516
        %v628 = vunpack.c.l.b16 %v517
        %v629 = vunpack.c.h.b16 %v517
        %v630 = vunpack.c.l.b16 %v518
        %v631 = vunpack.c.h.b16 %v518
        %v632 = vunpack.c.l.b16 %v519
        %v633 = vunpack.c.h.b16 %v519
        %v634 = vunpack.c.l.b16 %v520
        %v635 = vunpack.c.h.b16 %v520
        %v636 = vunpack.c.l.b16 %v521
        %v637 = vunpack.c.h.b16 %v521
        %v638 = vunpack.c.l.b16 %v522
        %v639 = vunpack.c.h.b16 %v522
        %v640 = vunpack.c.l.b16 %v523
        %v641 = vunpack.c.h.b16 %v523
        %v642 = vunpack.c.l.b16 %v524
        %v643 = vunpack.c.h.b16 %v524
        %v644 = vunpack.c.l.b16 %v525
        %v645 = vunpack.c.h.b16 %v525
        %v646 = vpack.c.b16 %v610, %v606
        %v647 = vpack.c.b16 %v611, %v607
        %v648 = vpack.c.b16 %v612, %v608
        %v649 = vpack.c.b16 %v613, %v609
        %v650 = vpack.c.b16 %v618, %v614
        %v651 = vpack.c.b16 %v619, %v615
        %v652 = vpack.c.b16 %v620, %v616
        %v653 = vpack.c.b16 %v621, %v617
        %v654 = vpack.c.b16 %v626, %v622
        %v655 = vpack.c.b16 %v627, %v623
        %v656 = vpack.c.b16 %v628, %v624
        %v657 = vpack.c.b16 %v629, %v625
        %v658 = vpack.c.b16 %v634, %v630
        %v659 = vpack.c.b16 %v635, %v631
        %v660 = vpack.c.b16 %v636, %v632
        %v661 = vpack.c.b16 %v637, %v633
        %v662 = vpack.c.b16 %v642, %v638
        %v663 = vpack.c.b16 %v643, %v639
        %v664 = vpack.c.b16 %v644, %v640
        %v665 = vpack.c.b16 %v645, %v641
        %vm686 = vcmask 654336
        %v688 = vsel %vm686, %v574, 0
        %v691 = vsel %vm686, %v575, 0
        %v694 = vsel %vm686, %v576, 0
        %v697 = vsel %vm686, %v577, 0
        %v700 = vsel %vm686, %v578, 0
        %v703 = vsel %vm686, %v579, 0
        %v706 = vsel %vm686, %v580, 0
        %v709 = vsel %vm686, %v581, 0
        %v712 = vsel %vm686, %v582, 0
        %v715 = vsel %vm686, %v583, 0
        %v718 = vsel %vm686, %v584, 0
        %v721 = vsel %vm686, %v585, 0
        %723 = vmatprep.subr.bf16.mxu0 %v647
        %724 = vmatpush1.bf16.msra.mxu0 %v646
        %725 = vmatprep.subr.bf16.mxu0 %v651
        %726 = vmatpush1.bf16.msra.mxu0 %v650
        %727 = vmatprep.subr.bf16.mxu0 %v655
        %728 = vmatpush1.bf16.msra.mxu0 %v654
        %729 = vmatprep.subr.bf16.mxu0 %v659
        %730 = vmatpush1.bf16.msra.mxu0 %v658
        %731 = vmatprep.subr.bf16.mxu0 %v663
        %732 = vmatpush1.bf16.msra.mxu0 %v662
        %733 = vmatprep.subr.bf16.mxu0 0
        %734 = vmatpush1.bf16.msra.mxu0 0
        %735 = vmatprep.subr.bf16.mxu0 0
        %736 = vmatpush1.bf16.msra.mxu0 0
        %737 = vmatprep.subr.bf16.mxu0 0
        %738 = vmatpush1.bf16.msra.mxu0 0
        %739 = vmatprep.subr.bf16.mxu0 0
        %740 = vmatpush1.bf16.msra.mxu0 0
        %741 = vmatprep.subr.bf16.mxu0 0
        %742 = vmatpush1.bf16.msra.mxu0 0
        %743 = vmatprep.subr.bf16.mxu0 0
        %744 = vmatpush1.bf16.msra.mxu0 0
        %745 = vmatprep.subr.bf16.mxu0 0
        %746 = vmatpush1.bf16.msra.mxu0 0
        %747 = vmatprep.subr.bf16.mxu0 0
        %748 = vmatpush1.bf16.msra.mxu0 0
        %749 = vmatprep.subr.bf16.mxu0 0
        %750 = vmatpush1.bf16.msra.mxu0 0
        %751 = vmatprep.subr.bf16.mxu0 0
        %752 = vmatpush1.bf16.msra.mxu0 0
        %753 = vmatprep.subr.bf16.mxu0 0
        %754 = vmatpush1.bf16.msra.mxu0 0
        %755 = vmatprep.mubr.bf16.mxu0 0
        %756 = vmatmul.mubr.bf16.gmra.mrb[0].mxu0 %v688
        %v757 = vpop.f32.mrb[0].mxu0
        %v758 = vadd.f32 0.0, %v757
        %v759 = vpop.f32.mrb[0].mxu0
        %v760 = vadd.f32 0.0, %v759
        %v761 = vpop.f32.mrb[0].mxu0
        %v762 = vadd.f32 0.0, %v761
        %v763 = vpop.f32.mrb[0].mxu0
        %v764 = vadd.f32 0.0, %v763
        %765 = vmatprep.mubr.bf16.mxu0 0
        %766 = vmatmul.mubr.bf16.gmra.mrb[0].mxu0 %v691
        %v767 = vpop.f32.mrb[0].mxu0
        %v768 = vadd.f32 0.0, %v767
        %v769 = vpop.f32.mrb[0].mxu0
        %v770 = vadd.f32 0.0, %v769
        %v771 = vpop.f32.mrb[0].mxu0
        %v772 = vadd.f32 0.0, %v771
        %v773 = vpop.f32.mrb[0].mxu0
        %v774 = vadd.f32 0.0, %v773
        %775 = vmatprep.mubr.bf16.mxu0 0
        %776 = vmatmul.mubr.bf16.gmra.mrb[0].mxu0 %v694
        %v777 = vpop.f32.mrb[0].mxu0
        %v778 = vadd.f32 0.0, %v777
        %v779 = vpop.f32.mrb[0].mxu0
        %v780 = vadd.f32 0.0, %v779
        %v781 = vpop.f32.mrb[0].mxu0
        %v782 = vadd.f32 0.0, %v781
        %v783 = vpop.f32.mrb[0].mxu0
        %v784 = vadd.f32 0.0, %v783
        %785 = vmatprep.mubr.bf16.mxu0 0
        %786 = vmatmul.mubr.bf16.gmra.mrb[0].mxu0 %v697
        %v787 = vpop.f32.mrb[0].mxu0
        %v788 = vadd.f32 0.0, %v787
        %v789 = vpop.f32.mrb[0].mxu0
        %v790 = vadd.f32 0.0, %v789
        %v791 = vpop.f32.mrb[0].mxu0
        %v792 = vadd.f32 0.0, %v791
        %v793 = vpop.f32.mrb[0].mxu0
        %v794 = vadd.f32 0.0, %v793
        %795 = vmatprep.mubr.bf16.mxu0 0
        %796 = vmatmul.mubr.bf16.gmra.mrb[0].mxu0 %v700
        %v797 = vpop.f32.mrb[0].mxu0
        %v798 = vadd.f32 0.0, %v797
        %v799 = vpop.f32.mrb[0].mxu0
        %v800 = vadd.f32 0.0, %v799
        %v801 = vpop.f32.mrb[0].mxu0
        %v802 = vadd.f32 0.0, %v801
        %v803 = vpop.f32.mrb[0].mxu0
        %v804 = vadd.f32 0.0, %v803
        %805 = vmatprep.mubr.bf16.mxu0 0
        %806 = vmatmul.mubr.bf16.gmra.mrb[0].mxu0 %v703
        %v807 = vpop.f32.mrb[0].mxu0
        %v808 = vadd.f32 0.0, %v807
        %v809 = vpop.f32.mrb[0].mxu0
        %v810 = vadd.f32 0.0, %v809
        %v811 = vpop.f32.mrb[0].mxu0
        %v812 = vadd.f32 0.0, %v811
        %v813 = vpop.f32.mrb[0].mxu0
        %v814 = vadd.f32 0.0, %v813
        %815 = vmatprep.mubr.bf16.mxu0 0
        %816 = vmatmul.mubr.bf16.gmra.mrb[0].mxu0 %v706
        %v817 = vpop.f32.mrb[0].mxu0
        %v818 = vadd.f32 0.0, %v817
        %v819 = vpop.f32.mrb[0].mxu0
        %v820 = vadd.f32 0.0, %v819
        %v821 = vpop.f32.mrb[0].mxu0
        %v822 = vadd.f32 0.0, %v821
        %v823 = vpop.f32.mrb[0].mxu0
        %v824 = vadd.f32 0.0, %v823
        %825 = vmatprep.mubr.bf16.mxu0 0
        %826 = vmatmul.mubr.bf16.gmra.mrb[0].mxu0 %v709
        %v827 = vpop.f32.mrb[0].mxu0
        %v828 = vadd.f32 0.0, %v827
        %v829 = vpop.f32.mrb[0].mxu0
        %v830 = vadd.f32 0.0, %v829
        %v831 = vpop.f32.mrb[0].mxu0
        %v832 = vadd.f32 0.0, %v831
        %v833 = vpop.f32.mrb[0].mxu0
        %v834 = vadd.f32 0.0, %v833
        %835 = vmatprep.mubr.bf16.mxu0 0
        %836 = vmatmul.mubr.bf16.gmra.mrb[0].mxu0 %v712
        %v837 = vpop.f32.mrb[0].mxu0
        %v838 = vadd.f32 0.0, %v837
        %v839 = vpop.f32.mrb[0].mxu0
        %v840 = vadd.f32 0.0, %v839
        %v841 = vpop.f32.mrb[0].mxu0
        %v842 = vadd.f32 0.0, %v841
        %v843 = vpop.f32.mrb[0].mxu0
        %v844 = vadd.f32 0.0, %v843
        %845 = vmatprep.mubr.bf16.mxu0 0
        %846 = vmatmul.mubr.bf16.gmra.mrb[0].mxu0 %v715
        %v847 = vpop.f32.mrb[0].mxu0
        %v848 = vadd.f32 0.0, %v847
        %v849 = vpop.f32.mrb[0].mxu0
        %v850 = vadd.f32 0.0, %v849
        %v851 = vpop.f32.mrb[0].mxu0
        %v852 = vadd.f32 0.0, %v851
        %v853 = vpop.f32.mrb[0].mxu0
        %v854 = vadd.f32 0.0, %v853
        %855 = vmatprep.mubr.bf16.mxu0 0
        %856 = vmatmul.mubr.bf16.gmra.mrb[0].mxu0 %v718
        %v857 = vpop.f32.mrb[0].mxu0
        %v858 = vadd.f32 0.0, %v857
        %v859 = vpop.f32.mrb[0].mxu0
        %v860 = vadd.f32 0.0, %v859
        %v861 = vpop.f32.mrb[0].mxu0
        %v862 = vadd.f32 0.0, %v861
        %v863 = vpop.f32.mrb[0].mxu0
        %v864 = vadd.f32 0.0, %v863
        %865 = vmatprep.mubr.bf16.mxu0 0
        %866 = vmatmul.mubr.bf16.gmra.mrb[0].mxu0 %v721
        %v867 = vpop.f32.mrb[0].mxu0
        %v868 = vadd.f32 0.0, %v867
        %v869 = vpop.f32.mrb[0].mxu0
        %v870 = vadd.f32 0.0, %v869
        %v871 = vpop.f32.mrb[0].mxu0
        %v872 = vadd.f32 0.0, %v871
        %v873 = vpop.f32.mrb[0].mxu0
        %v874 = vadd.f32 0.0, %v873
        %875 = vdwg.mxu0
        %876 = vmatprep.subr.bf16.mxu0 %v649
        %877 = vmatpush1.bf16.msra.mxu0 %v648
        %878 = vmatprep.subr.bf16.mxu0 %v653
        %879 = vmatpush1.bf16.msra.mxu0 %v652
        %880 = vmatprep.subr.bf16.mxu0 %v657
        %881 = vmatpush1.bf16.msra.mxu0 %v656
        %882 = vmatprep.subr.bf16.mxu0 %v661
        %883 = vmatpush1.bf16.msra.mxu0 %v660
        %884 = vmatprep.subr.bf16.mxu0 %v665
        %885 = vmatpush1.bf16.msra.mxu0 %v664
        %886 = vmatprep.subr.bf16.mxu0 0
        %887 = vmatpush1.bf16.msra.mxu0 0
        %888 = vmatprep.subr.bf16.mxu0 0
        %889 = vmatpush1.bf16.msra.mxu0 0
        %890 = vmatprep.subr.bf16.mxu0 0
        %891 = vmatpush1.bf16.msra.mxu0 0
        %892 = vmatprep.subr.bf16.mxu0 0
        %893 = vmatpush1.bf16.msra.mxu0 0
        %894 = vmatprep.subr.bf16.mxu0 0
        %895 = vmatpush1.bf16.msra.mxu0 0
        %896 = vmatprep.subr.bf16.mxu0 0
        %897 = vmatpush1.bf16.msra.mxu0 0
        %898 = vmatprep.subr.bf16.mxu0 0
        %899 = vmatpush1.bf16.msra.mxu0 0
        %900 = vmatprep.subr.bf16.mxu0 0
        %901 = vmatpush1.bf16.msra.mxu0 0
        %902 = vmatprep.subr.bf16.mxu0 0
        %903 = vmatpush1.bf16.msra.mxu0 0
        %904 = vmatprep.subr.bf16.mxu0 0
        %905 = vmatpush1.bf16.msra.mxu0 0
        %906 = vmatprep.subr.bf16.mxu0 0
        %907 = vmatpush1.bf16.msra.mxu0 0
        %908 = vmatprep.mubr.bf16.mxu0 0
        %909 = vmatmul.mubr.bf16.gmra.mrb[0].mxu0 %v688
        %v910 = vpop.f32.mrb[0].mxu0
        %v911 = vadd.f32 0.0, %v910
        %v912 = vpop.f32.mrb[0].mxu0
        %v913 = vadd.f32 0.0, %v912
        %v914 = vpop.f32.mrb[0].mxu0
        %v915 = vadd.f32 0.0, %v914
        %v916 = vpop.f32.mrb[0].mxu0
        %v917 = vadd.f32 0.0, %v916
        %918 = vmatprep.mubr.bf16.mxu0 0
        %919 = vmatmul.mubr.bf16.gmra.mrb[0].mxu0 %v691
        %v920 = vpop.f32.mrb[0].mxu0
        %v921 = vadd.f32 0.0, %v920
        %v922 = vpop.f32.mrb[0].mxu0
        %v923 = vadd.f32 0.0, %v922
        %v924 = vpop.f32.mrb[0].mxu0
        %v925 = vadd.f32 0.0, %v924
        %v926 = vpop.f32.mrb[0].mxu0
        %v927 = vadd.f32 0.0, %v926
        %928 = vmatprep.mubr.bf16.mxu0 0
        %929 = vmatmul.mubr.bf16.gmra.mrb[0].mxu0 %v694
        %v930 = vpop.f32.mrb[0].mxu0
        %v931 = vadd.f32 0.0, %v930
        %v932 = vpop.f32.mrb[0].mxu0
        %v933 = vadd.f32 0.0, %v932
        %v934 = vpop.f32.mrb[0].mxu0
        %v935 = vadd.f32 0.0, %v934
        %v936 = vpop.f32.mrb[0].mxu0
        %v937 = vadd.f32 0.0, %v936
        %938 = vmatprep.mubr.bf16.mxu0 0
        %939 = vmatmul.mubr.bf16.gmra.mrb[0].mxu0 %v697
        %v940 = vpop.f32.mrb[0].mxu0
        %v941 = vadd.f32 0.0, %v940
        %v942 = vpop.f32.mrb[0].mxu0
        %v943 = vadd.f32 0.0, %v942
        %v944 = vpop.f32.mrb[0].mxu0
        %v945 = vadd.f32 0.0, %v944
        %v946 = vpop.f32.mrb[0].mxu0
        %v947 = vadd.f32 0.0, %v946
        %948 = vmatprep.mubr.bf16.mxu0 0
        %949 = vmatmul.mubr.bf16.gmra.mrb[0].mxu0 %v700
        %v950 = vpop.f32.mrb[0].mxu0
        %v951 = vadd.f32 0.0, %v950
        %v952 = vpop.f32.mrb[0].mxu0
        %v953 = vadd.f32 0.0, %v952
        %v954 = vpop.f32.mrb[0].mxu0
        %v955 = vadd.f32 0.0, %v954
        %v956 = vpop.f32.mrb[0].mxu0
        %v957 = vadd.f32 0.0, %v956
        %958 = vmatprep.mubr.bf16.mxu0 0
        %959 = vmatmul.mubr.bf16.gmra.mrb[0].mxu0 %v703
        %v960 = vpop.f32.mrb[0].mxu0
        %v961 = vadd.f32 0.0, %v960
        %v962 = vpop.f32.mrb[0].mxu0
        %v963 = vadd.f32 0.0, %v962
        %v964 = vpop.f32.mrb[0].mxu0
        %v965 = vadd.f32 0.0, %v964
        %v966 = vpop.f32.mrb[0].mxu0
        %v967 = vadd.f32 0.0, %v966
        %968 = vmatprep.mubr.bf16.mxu0 0
        %969 = vmatmul.mubr.bf16.gmra.mrb[0].mxu0 %v706
        %v970 = vpop.f32.mrb[0].mxu0
        %v971 = vadd.f32 0.0, %v970
        %v972 = vpop.f32.mrb[0].mxu0
        %v973 = vadd.f32 0.0, %v972
        %v974 = vpop.f32.mrb[0].mxu0
        %v975 = vadd.f32 0.0, %v974
        %v976 = vpop.f32.mrb[0].mxu0
        %v977 = vadd.f32 0.0, %v976
        %978 = vmatprep.mubr.bf16.mxu0 0
        %979 = vmatmul.mubr.bf16.gmra.mrb[0].mxu0 %v709
        %v980 = vpop.f32.mrb[0].mxu0
        %v981 = vadd.f32 0.0, %v980
        %v982 = vpop.f32.mrb[0].mxu0
        %v983 = vadd.f32 0.0, %v982
        %v984 = vpop.f32.mrb[0].mxu0
        %v985 = vadd.f32 0.0, %v984
        %v986 = vpop.f32.mrb[0].mxu0
        %v987 = vadd.f32 0.0, %v986
        %988 = vmatprep.mubr.bf16.mxu0 0
        %989 = vmatmul.mubr.bf16.gmra.mrb[0].mxu0 %v712
        %v990 = vpop.f32.mrb[0].mxu0
        %v991 = vadd.f32 0.0, %v990
        %v992 = vpop.f32.mrb[0].mxu0
        %v993 = vadd.f32 0.0, %v992
        %v994 = vpop.f32.mrb[0].mxu0
        %v995 = vadd.f32 0.0, %v994
        %v996 = vpop.f32.mrb[0].mxu0
        %v997 = vadd.f32 0.0, %v996
        %998 = vmatprep.mubr.bf16.mxu0 0
        %999 = vmatmul.mubr.bf16.gmra.mrb[0].mxu0 %v715
        %v1000 = vpop.f32.mrb[0].mxu0
        %v1001 = vadd.f32 0.0, %v1000
        %v1002 = vpop.f32.mrb[0].mxu0
        %v1003 = vadd.f32 0.0, %v1002
        %v1004 = vpop.f32.mrb[0].mxu0
        %v1005 = vadd.f32 0.0, %v1004
        %v1006 = vpop.f32.mrb[0].mxu0
        %v1007 = vadd.f32 0.0, %v1006
        %1008 = vmatprep.mubr.bf16.mxu0 0
        %1009 = vmatmul.mubr.bf16.gmra.mrb[0].mxu0 %v718
        %v1010 = vpop.f32.mrb[0].mxu0
        %v1011 = vadd.f32 0.0, %v1010
        %v1012 = vpop.f32.mrb[0].mxu0
        %v1013 = vadd.f32 0.0, %v1012
        %v1014 = vpop.f32.mrb[0].mxu0
        %v1015 = vadd.f32 0.0, %v1014
        %v1016 = vpop.f32.mrb[0].mxu0
        %v1017 = vadd.f32 0.0, %v1016
        %1018 = vmatprep.mubr.bf16.mxu0 0
        %1019 = vmatmul.mubr.bf16.gmra.mrb[0].mxu0 %v721
        %v1020 = vpop.f32.mrb[0].mxu0
        %v1021 = vadd.f32 0.0, %v1020
        %v1022 = vpop.f32.mrb[0].mxu0
        %v1023 = vadd.f32 0.0, %v1022
        %v1024 = vpop.f32.mrb[0].mxu0
        %v1025 = vadd.f32 0.0, %v1024
        %v1026 = vpop.f32.mrb[0].mxu0
        %v1027 = vadd.f32 0.0, %v1026
        %1028 = vdwg.mxu0
        %v1053 = vunpack.c.l.b16 %v482
        %v1054 = vunpack.c.l.b16 %v483
        %v1055 = vunpack.c.l.b16 %v484
        %v1056 = vunpack.c.l.b16 %v485
        %v1057 = vunpack.c.l.b16 %v486
        %v1058 = vunpack.c.l.b16 %v487
        %v1059 = vunpack.c.l.b16 %v488
        %v1060 = vunpack.c.l.b16 %v489
        %v1061 = vunpack.c.l.b16 %v490
        %v1062 = vunpack.c.l.b16 %v491
        %v1063 = vunpack.c.l.b16 %v492
        %v1064 = vunpack.c.l.b16 %v493
        %v1065 = vunpack.c.l.b16 %v494
        %v1066 = vunpack.c.l.b16 %v495
        %v1067 = vunpack.c.l.b16 %v496
        %v1068 = vunpack.c.l.b16 %v497
        %v1069 = vunpack.c.l.b16 %v498
        %v1070 = vunpack.c.l.b16 %v499
        %v1071 = vunpack.c.l.b16 %v500
        %v1072 = vunpack.c.l.b16 %v501
        %v1073 = vunpack.c.l.b16 %v502
        %v1074 = vunpack.c.l.b16 %v503
        %v1075 = vunpack.c.l.b16 %v504
        %v1076 = vunpack.c.l.b16 %v505
        %v1077 = vpack.c.b16 %v1054, %v1053
        %v1078 = vpack.c.b16 %v1056, %v1055
        %v1079 = vpack.c.b16 %v1058, %v1057
        %v1080 = vpack.c.b16 %v1060, %v1059
        %v1081 = vpack.c.b16 %v1062, %v1061
        %v1082 = vpack.c.b16 %v1064, %v1063
        %v1083 = vpack.c.b16 %v1066, %v1065
        %v1084 = vpack.c.b16 %v1068, %v1067
        %v1085 = vpack.c.b16 %v1070, %v1069
        %v1086 = vpack.c.b16 %v1072, %v1071
        %v1087 = vpack.c.b16 %v1074, %v1073
        %v1088 = vpack.c.b16 %v1076, %v1075
        %v1090 = vsel %vm686, %v1077, 0
        %v1093 = vsel %vm686, %v1078, 0
        %v1096 = vsel %vm686, %v1079, 0
        %v1099 = vsel %vm686, %v1080, 0
        %v1102 = vsel %vm686, %v1081, 0
        %v1105 = vsel %vm686, %v1082, 0
        %v1108 = vsel %vm686, %v1083, 0
        %v1111 = vsel %vm686, %v1084, 0
        %v1114 = vsel %vm686, %v1085, 0
        %v1117 = vsel %vm686, %v1086, 0
        %v1120 = vsel %vm686, %v1087, 0
        %v1123 = vsel %vm686, %v1088, 0
        %1125 = vmatprep.subr.bf16.mxu0 %v647
        %1126 = vmatpush1.bf16.msra.mxu0 %v646
        %1127 = vmatprep.subr.bf16.mxu0 %v651
        %1128 = vmatpush1.bf16.msra.mxu0 %v650
        %1129 = vmatprep.subr.bf16.mxu0 %v655
        %1130 = vmatpush1.bf16.msra.mxu0 %v654
        %1131 = vmatprep.subr.bf16.mxu0 %v659
        %1132 = vmatpush1.bf16.msra.mxu0 %v658
        %1133 = vmatprep.subr.bf16.mxu0 %v663
        %1134 = vmatpush1.bf16.msra.mxu0 %v662
        %1135 = vmatprep.subr.bf16.mxu0 0
        %1136 = vmatpush1.bf16.msra.mxu0 0
        %1137 = vmatprep.subr.bf16.mxu0 0
        %1138 = vmatpush1.bf16.msra.mxu0 0
        %1139 = vmatprep.subr.bf16.mxu0 0
        %1140 = vmatpush1.bf16.msra.mxu0 0
        %1141 = vmatprep.subr.bf16.mxu0 0
        %1142 = vmatpush1.bf16.msra.mxu0 0
        %1143 = vmatprep.subr.bf16.mxu0 0
        %1144 = vmatpush1.bf16.msra.mxu0 0
        %1145 = vmatprep.subr.bf16.mxu0 0
        %1146 = vmatpush1.bf16.msra.mxu0 0
        %1147 = vmatprep.subr.bf16.mxu0 0
        %1148 = vmatpush1.bf16.msra.mxu0 0
        %1149 = vmatprep.subr.bf16.mxu0 0
        %1150 = vmatpush1.bf16.msra.mxu0 0
        %1151 = vmatprep.subr.bf16.mxu0 0
        %1152 = vmatpush1.bf16.msra.mxu0 0
        %1153 = vmatprep.subr.bf16.mxu0 0
        %1154 = vmatpush1.bf16.msra.mxu0 0
        %1155 = vmatprep.subr.bf16.mxu0 0
        %1156 = vmatpush1.bf16.msra.mxu0 0
        %1157 = vmatprep.mubr.bf16.mxu0 0
        %1158 = vmatmul.mubr.bf16.gmra.mrb[0].mxu0 %v1090
        %v1159 = vpop.f32.mrb[0].mxu0
        %v1160 = vadd.f32 0.0, %v1159
        %v1161 = vpop.f32.mrb[0].mxu0
        %v1162 = vadd.f32 0.0, %v1161
        %v1163 = vpop.f32.mrb[0].mxu0
        %v1164 = vadd.f32 0.0, %v1163
        %v1165 = vpop.f32.mrb[0].mxu0
        %v1166 = vadd.f32 0.0, %v1165
        %1167 = vmatprep.mubr.bf16.mxu0 0
        %1168 = vmatmul.mubr.bf16.gmra.mrb[0].mxu0 %v1093
        %v1169 = vpop.f32.mrb[0].mxu0
        %v1170 = vadd.f32 0.0, %v1169
        %v1171 = vpop.f32.mrb[0].mxu0
        %v1172 = vadd.f32 0.0, %v1171
        %v1173 = vpop.f32.mrb[0].mxu0
        %v1174 = vadd.f32 0.0, %v1173
        %v1175 = vpop.f32.mrb[0].mxu0
        %v1176 = vadd.f32 0.0, %v1175
        %1177 = vmatprep.mubr.bf16.mxu0 0
        %1178 = vmatmul.mubr.bf16.gmra.mrb[0].mxu0 %v1096
        %v1179 = vpop.f32.mrb[0].mxu0
        %v1180 = vadd.f32 0.0, %v1179
        %v1181 = vpop.f32.mrb[0].mxu0
        %v1182 = vadd.f32 0.0, %v1181
        %v1183 = vpop.f32.mrb[0].mxu0
        %v1184 = vadd.f32 0.0, %v1183
        %v1185 = vpop.f32.mrb[0].mxu0
        %v1186 = vadd.f32 0.0, %v1185
        %1187 = vmatprep.mubr.bf16.mxu0 0
        %1188 = vmatmul.mubr.bf16.gmra.mrb[0].mxu0 %v1099
        %v1189 = vpop.f32.mrb[0].mxu0
        %v1190 = vadd.f32 0.0, %v1189
        %v1191 = vpop.f32.mrb[0].mxu0
        %v1192 = vadd.f32 0.0, %v1191
        %v1193 = vpop.f32.mrb[0].mxu0
        %v1194 = vadd.f32 0.0, %v1193
        %v1195 = vpop.f32.mrb[0].mxu0
        %v1196 = vadd.f32 0.0, %v1195
        %1197 = vmatprep.mubr.bf16.mxu0 0
        %1198 = vmatmul.mubr.bf16.gmra.mrb[0].mxu0 %v1102
        %v1199 = vpop.f32.mrb[0].mxu0
        %v1200 = vadd.f32 0.0, %v1199
        %v1201 = vpop.f32.mrb[0].mxu0
        %v1202 = vadd.f32 0.0, %v1201
        %v1203 = vpop.f32.mrb[0].mxu0
        %v1204 = vadd.f32 0.0, %v1203
        %v1205 = vpop.f32.mrb[0].mxu0
        %v1206 = vadd.f32 0.0, %v1205
        %1207 = vmatprep.mubr.bf16.mxu0 0
        %1208 = vmatmul.mubr.bf16.gmra.mrb[0].mxu0 %v1105
        %v1209 = vpop.f32.mrb[0].mxu0
        %v1210 = vadd.f32 0.0, %v1209
        %v1211 = vpop.f32.mrb[0].mxu0
        %v1212 = vadd.f32 0.0, %v1211
        %v1213 = vpop.f32.mrb[0].mxu0
        %v1214 = vadd.f32 0.0, %v1213
        %v1215 = vpop.f32.mrb[0].mxu0
        %v1216 = vadd.f32 0.0, %v1215
        %1217 = vmatprep.mubr.bf16.mxu0 0
        %1218 = vmatmul.mubr.bf16.gmra.mrb[0].mxu0 %v1108
        %v1219 = vpop.f32.mrb[0].mxu0
        %v1220 = vadd.f32 0.0, %v1219
        %v1221 = vpop.f32.mrb[0].mxu0
        %v1222 = vadd.f32 0.0, %v1221
        %v1223 = vpop.f32.mrb[0].mxu0
        %v1224 = vadd.f32 0.0, %v1223
        %v1225 = vpop.f32.mrb[0].mxu0
        %v1226 = vadd.f32 0.0, %v1225
        %1227 = vmatprep.mubr.bf16.mxu0 0
        %1228 = vmatmul.mubr.bf16.gmra.mrb[0].mxu0 %v1111
        %v1229 = vpop.f32.mrb[0].mxu0
        %v1230 = vadd.f32 0.0, %v1229
        %v1231 = vpop.f32.mrb[0].mxu0
        %v1232 = vadd.f32 0.0, %v1231
        %v1233 = vpop.f32.mrb[0].mxu0
        %v1234 = vadd.f32 0.0, %v1233
        %v1235 = vpop.f32.mrb[0].mxu0
        %v1236 = vadd.f32 0.0, %v1235
        %1237 = vmatprep.mubr.bf16.mxu0 0
        %1238 = vmatmul.mubr.bf16.gmra.mrb[0].mxu0 %v1114
        %v1239 = vpop.f32.mrb[0].mxu0
        %v1240 = vadd.f32 0.0, %v1239
        %v1241 = vpop.f32.mrb[0].mxu0
        %v1242 = vadd.f32 0.0, %v1241
        %v1243 = vpop.f32.mrb[0].mxu0
        %v1244 = vadd.f32 0.0, %v1243
        %v1245 = vpop.f32.mrb[0].mxu0
        %v1246 = vadd.f32 0.0, %v1245
        %1247 = vmatprep.mubr.bf16.mxu0 0
        %1248 = vmatmul.mubr.bf16.gmra.mrb[0].mxu0 %v1117
        %v1249 = vpop.f32.mrb[0].mxu0
        %v1250 = vadd.f32 0.0, %v1249
        %v1251 = vpop.f32.mrb[0].mxu0
        %v1252 = vadd.f32 0.0, %v1251
        %v1253 = vpop.f32.mrb[0].mxu0
        %v1254 = vadd.f32 0.0, %v1253
        %v1255 = vpop.f32.mrb[0].mxu0
        %v1256 = vadd.f32 0.0, %v1255
        %1257 = vmatprep.mubr.bf16.mxu0 0
        %1258 = vmatmul.mubr.bf16.gmra.mrb[0].mxu0 %v1120
        %v1259 = vpop.f32.mrb[0].mxu0
        %v1260 = vadd.f32 0.0, %v1259
        %v1261 = vpop.f32.mrb[0].mxu0
        %v1262 = vadd.f32 0.0, %v1261
        %v1263 = vpop.f32.mrb[0].mxu0
        %v1264 = vadd.f32 0.0, %v1263
        %v1265 = vpop.f32.mrb[0].mxu0
        %v1266 = vadd.f32 0.0, %v1265
        %1267 = vmatprep.mubr.bf16.mxu0 0
        %1268 = vmatmul.mubr.bf16.gmra.mrb[0].mxu0 %v1123
        %v1269 = vpop.f32.mrb[0].mxu0
        %v1270 = vadd.f32 0.0, %v1269
        %v1271 = vpop.f32.mrb[0].mxu0
        %v1272 = vadd.f32 0.0, %v1271
        %v1273 = vpop.f32.mrb[0].mxu0
        %v1274 = vadd.f32 0.0, %v1273
        %v1275 = vpop.f32.mrb[0].mxu0
        %v1276 = vadd.f32 0.0, %v1275
        %1277 = vdwg.mxu0
        %1278 = vmatprep.subr.bf16.mxu0 %v649
        %1279 = vmatpush1.bf16.msra.mxu0 %v648
        %1280 = vmatprep.subr.bf16.mxu0 %v653
        %1281 = vmatpush1.bf16.msra.mxu0 %v652
        %1282 = vmatprep.subr.bf16.mxu0 %v657
        %1283 = vmatpush1.bf16.msra.mxu0 %v656
        %1284 = vmatprep.subr.bf16.mxu0 %v661
        %1285 = vmatpush1.bf16.msra.mxu0 %v660
        %1286 = vmatprep.subr.bf16.mxu0 %v665
        %1287 = vmatpush1.bf16.msra.mxu0 %v664
        %1288 = vmatprep.subr.bf16.mxu0 0
        %1289 = vmatpush1.bf16.msra.mxu0 0
        %1290 = vmatprep.subr.bf16.mxu0 0
        %1291 = vmatpush1.bf16.msra.mxu0 0
        %1292 = vmatprep.subr.bf16.mxu0 0
        %1293 = vmatpush1.bf16.msra.mxu0 0
        %1294 = vmatprep.subr.bf16.mxu0 0
        %1295 = vmatpush1.bf16.msra.mxu0 0
        %1296 = vmatprep.subr.bf16.mxu0 0
        %1297 = vmatpush1.bf16.msra.mxu0 0
        %1298 = vmatprep.subr.bf16.mxu0 0
        %1299 = vmatpush1.bf16.msra.mxu0 0
        %1300 = vmatprep.subr.bf16.mxu0 0
        %1301 = vmatpush1.bf16.msra.mxu0 0
        %1302 = vmatprep.subr.bf16.mxu0 0
        %1303 = vmatpush1.bf16.msra.mxu0 0
        %1304 = vmatprep.subr.bf16.mxu0 0
        %1305 = vmatpush1.bf16.msra.mxu0 0
        %1306 = vmatprep.subr.bf16.mxu0 0
        %1307 = vmatpush1.bf16.msra.mxu0 0
        %1308 = vmatprep.subr.bf16.mxu0 0
        %1309 = vmatpush1.bf16.msra.mxu0 0
        %1310 = vmatprep.mubr.bf16.mxu0 0
        %1311 = vmatmul.mubr.bf16.gmra.mrb[0].mxu0 %v1090
        %v1312 = vpop.f32.mrb[0].mxu0
        %v1313 = vadd.f32 0.0, %v1312
        %v1314 = vpop.f32.mrb[0].mxu0
        %v1315 = vadd.f32 0.0, %v1314
        %v1316 = vpop.f32.mrb[0].mxu0
        %v1317 = vadd.f32 0.0, %v1316
        %v1318 = vpop.f32.mrb[0].mxu0
        %v1319 = vadd.f32 0.0, %v1318
        %1320 = vmatprep.mubr.bf16.mxu0 0
        %1321 = vmatmul.mubr.bf16.gmra.mrb[0].mxu0 %v1093
        %v1322 = vpop.f32.mrb[0].mxu0
        %v1323 = vadd.f32 0.0, %v1322
        %v1324 = vpop.f32.mrb[0].mxu0
        %v1325 = vadd.f32 0.0, %v1324
        %v1326 = vpop.f32.mrb[0].mxu0
        %v1327 = vadd.f32 0.0, %v1326
        %v1328 = vpop.f32.mrb[0].mxu0
        %v1329 = vadd.f32 0.0, %v1328
        %1330 = vmatprep.mubr.bf16.mxu0 0
        %1331 = vmatmul.mubr.bf16.gmra.mrb[0].mxu0 %v1096
        %v1332 = vpop.f32.mrb[0].mxu0
        %v1333 = vadd.f32 0.0, %v1332
        %v1334 = vpop.f32.mrb[0].mxu0
        %v1335 = vadd.f32 0.0, %v1334
        %v1336 = vpop.f32.mrb[0].mxu0
        %v1337 = vadd.f32 0.0, %v1336
        %v1338 = vpop.f32.mrb[0].mxu0
        %v1339 = vadd.f32 0.0, %v1338
        %1340 = vmatprep.mubr.bf16.mxu0 0
        %1341 = vmatmul.mubr.bf16.gmra.mrb[0].mxu0 %v1099
        %v1342 = vpop.f32.mrb[0].mxu0
        %v1343 = vadd.f32 0.0, %v1342
        %v1344 = vpop.f32.mrb[0].mxu0
        %v1345 = vadd.f32 0.0, %v1344
        %v1346 = vpop.f32.mrb[0].mxu0
        %v1347 = vadd.f32 0.0, %v1346
        %v1348 = vpop.f32.mrb[0].mxu0
        %v1349 = vadd.f32 0.0, %v1348
        %1350 = vmatprep.mubr.bf16.mxu0 0
        %1351 = vmatmul.mubr.bf16.gmra.mrb[0].mxu0 %v1102
        %v1352 = vpop.f32.mrb[0].mxu0
        %v1353 = vadd.f32 0.0, %v1352
        %v1354 = vpop.f32.mrb[0].mxu0
        %v1355 = vadd.f32 0.0, %v1354
        %v1356 = vpop.f32.mrb[0].mxu0
        %v1357 = vadd.f32 0.0, %v1356
        %v1358 = vpop.f32.mrb[0].mxu0
        %v1359 = vadd.f32 0.0, %v1358
        %1360 = vmatprep.mubr.bf16.mxu0 0
        %1361 = vmatmul.mubr.bf16.gmra.mrb[0].mxu0 %v1105
        %v1362 = vpop.f32.mrb[0].mxu0
        %v1363 = vadd.f32 0.0, %v1362
        %v1364 = vpop.f32.mrb[0].mxu0
        %v1365 = vadd.f32 0.0, %v1364
        %v1366 = vpop.f32.mrb[0].mxu0
        %v1367 = vadd.f32 0.0, %v1366
        %v1368 = vpop.f32.mrb[0].mxu0
        %v1369 = vadd.f32 0.0, %v1368
        %1370 = vmatprep.mubr.bf16.mxu0 0
        %1371 = vmatmul.mubr.bf16.gmra.mrb[0].mxu0 %v1108
        %v1372 = vpop.f32.mrb[0].mxu0
        %v1373 = vadd.f32 0.0, %v1372
        %v1374 = vpop.f32.mrb[0].mxu0
        %v1375 = vadd.f32 0.0, %v1374
        %v1376 = vpop.f32.mrb[0].mxu0
        %v1377 = vadd.f32 0.0, %v1376
        %v1378 = vpop.f32.mrb[0].mxu0
        %v1379 = vadd.f32 0.0, %v1378
        %1380 = vmatprep.mubr.bf16.mxu0 0
        %1381 = vmatmul.mubr.bf16.gmra.mrb[0].mxu0 %v1111
        %v1382 = vpop.f32.mrb[0].mxu0
        %v1383 = vadd.f32 0.0, %v1382
        %v1384 = vpop.f32.mrb[0].mxu0
        %v1385 = vadd.f32 0.0, %v1384
        %v1386 = vpop.f32.mrb[0].mxu0
        %v1387 = vadd.f32 0.0, %v1386
        %v1388 = vpop.f32.mrb[0].mxu0
        %v1389 = vadd.f32 0.0, %v1388
        %1390 = vmatprep.mubr.bf16.mxu0 0
        %1391 = vmatmul.mubr.bf16.gmra.mrb[0].mxu0 %v1114
        %v1392 = vpop.f32.mrb[0].mxu0
        %v1393 = vadd.f32 0.0, %v1392
        %v1394 = vpop.f32.mrb[0].mxu0
        %v1395 = vadd.f32 0.0, %v1394
        %v1396 = vpop.f32.mrb[0].mxu0
        %v1397 = vadd.f32 0.0, %v1396
        %v1398 = vpop.f32.mrb[0].mxu0
        %v1399 = vadd.f32 0.0, %v1398
        %1400 = vmatprep.mubr.bf16.mxu0 0
        %1401 = vmatmul.mubr.bf16.gmra.mrb[0].mxu0 %v1117
        %v1402 = vpop.f32.mrb[0].mxu0
        %v1403 = vadd.f32 0.0, %v1402
        %v1404 = vpop.f32.mrb[0].mxu0
        %v1405 = vadd.f32 0.0, %v1404
        %v1406 = vpop.f32.mrb[0].mxu0
        %v1407 = vadd.f32 0.0, %v1406
        %v1408 = vpop.f32.mrb[0].mxu0
        %v1409 = vadd.f32 0.0, %v1408
        %1410 = vmatprep.mubr.bf16.mxu0 0
        %1411 = vmatmul.mubr.bf16.gmra.mrb[0].mxu0 %v1120
        %v1412 = vpop.f32.mrb[0].mxu0
        %v1413 = vadd.f32 0.0, %v1412
        %v1414 = vpop.f32.mrb[0].mxu0
        %v1415 = vadd.f32 0.0, %v1414
        %v1416 = vpop.f32.mrb[0].mxu0
        %v1417 = vadd.f32 0.0, %v1416
        %v1418 = vpop.f32.mrb[0].mxu0
        %v1419 = vadd.f32 0.0, %v1418
        %1420 = vmatprep.mubr.bf16.mxu0 0
        %1421 = vmatmul.mubr.bf16.gmra.mrb[0].mxu0 %v1123
        %v1422 = vpop.f32.mrb[0].mxu0
        %v1423 = vadd.f32 0.0, %v1422
        %v1424 = vpop.f32.mrb[0].mxu0
        %v1425 = vadd.f32 0.0, %v1424
        %v1426 = vpop.f32.mrb[0].mxu0
        %v1427 = vadd.f32 0.0, %v1426
        %v1428 = vpop.f32.mrb[0].mxu0
        %v1429 = vadd.f32 0.0, %v1428
        %1430 = vdwg.mxu0
        %v1431 = vmax.f32 %v758, %v1160
        %v1432 = vmax.f32 %v760, %v1162
        %v1433 = vmax.f32 %v911, %v1313
        %v1434 = vmax.f32 %v913, %v1315
        %v1435 = vmax.f32 %v762, %v1164
        %v1436 = vmax.f32 %v764, %v1166
        %v1437 = vmax.f32 %v915, %v1317
        %v1438 = vmax.f32 %v917, %v1319
        %v1439 = vmax.f32 %v768, %v1170
        %v1440 = vmax.f32 %v770, %v1172
        %v1441 = vmax.f32 %v921, %v1323
        %v1442 = vmax.f32 %v923, %v1325
        %v1443 = vmax.f32 %v772, %v1174
        %v1444 = vmax.f32 %v774, %v1176
        %v1445 = vmax.f32 %v925, %v1327
        %v1446 = vmax.f32 %v927, %v1329
        %v1447 = vmax.f32 %v778, %v1180
        %v1448 = vmax.f32 %v780, %v1182
        %v1449 = vmax.f32 %v931, %v1333
        %v1450 = vmax.f32 %v933, %v1335
        %v1451 = vmax.f32 %v782, %v1184
        %v1452 = vmax.f32 %v784, %v1186
        %v1453 = vmax.f32 %v935, %v1337
        %v1454 = vmax.f32 %v937, %v1339
        %v1455 = vmax.f32 %v788, %v1190
        %v1456 = vmax.f32 %v790, %v1192
        %v1457 = vmax.f32 %v941, %v1343
        %v1458 = vmax.f32 %v943, %v1345
        %v1459 = vmax.f32 %v792, %v1194
        %v1460 = vmax.f32 %v794, %v1196
        %v1461 = vmax.f32 %v945, %v1347
        %v1462 = vmax.f32 %v947, %v1349
        %v1463 = vmax.f32 %v798, %v1200
        %v1464 = vmax.f32 %v800, %v1202
        %v1465 = vmax.f32 %v951, %v1353
        %v1466 = vmax.f32 %v953, %v1355
        %v1467 = vmax.f32 %v802, %v1204
        %v1468 = vmax.f32 %v804, %v1206
        %v1469 = vmax.f32 %v955, %v1357
        %v1470 = vmax.f32 %v957, %v1359
        %v1471 = vmax.f32 %v808, %v1210
        %v1472 = vmax.f32 %v810, %v1212
        %v1473 = vmax.f32 %v961, %v1363
        %v1474 = vmax.f32 %v963, %v1365
        %v1475 = vmax.f32 %v812, %v1214
        %v1476 = vmax.f32 %v814, %v1216
        %v1477 = vmax.f32 %v965, %v1367
        %v1478 = vmax.f32 %v967, %v1369
        %v1479 = vmax.f32 %v818, %v1220
        %v1480 = vmax.f32 %v820, %v1222
        %v1481 = vmax.f32 %v971, %v1373
        %v1482 = vmax.f32 %v973, %v1375
        %v1483 = vmax.f32 %v822, %v1224
        %v1484 = vmax.f32 %v824, %v1226
        %v1485 = vmax.f32 %v975, %v1377
        %v1486 = vmax.f32 %v977, %v1379
        %v1487 = vmax.f32 %v828, %v1230
        %v1488 = vmax.f32 %v830, %v1232
        %v1489 = vmax.f32 %v981, %v1383
        %v1490 = vmax.f32 %v983, %v1385
        %v1491 = vmax.f32 %v832, %v1234
        %v1492 = vmax.f32 %v834, %v1236
        %v1493 = vmax.f32 %v985, %v1387
        %v1494 = vmax.f32 %v987, %v1389
        %v1495 = vmax.f32 %v838, %v1240
        %v1496 = vmax.f32 %v840, %v1242
        %v1497 = vmax.f32 %v991, %v1393
        %v1498 = vmax.f32 %v993, %v1395
        %v1499 = vmax.f32 %v842, %v1244
        %v1500 = vmax.f32 %v844, %v1246
        %v1501 = vmax.f32 %v995, %v1397
        %v1502 = vmax.f32 %v997, %v1399
        %v1503 = vmax.f32 %v848, %v1250
        %v1504 = vmax.f32 %v850, %v1252
        %v1505 = vmax.f32 %v1001, %v1403
        %v1506 = vmax.f32 %v1003, %v1405
        %v1507 = vmax.f32 %v852, %v1254
        %v1508 = vmax.f32 %v854, %v1256
        %v1509 = vmax.f32 %v1005, %v1407
        %v1510 = vmax.f32 %v1007, %v1409
        %v1511 = vmax.f32 %v858, %v1260
        %v1512 = vmax.f32 %v860, %v1262
        %v1513 = vmax.f32 %v1011, %v1413
        %v1514 = vmax.f32 %v1013, %v1415
        %v1515 = vmax.f32 %v862, %v1264
        %v1516 = vmax.f32 %v864, %v1266
        %v1517 = vmax.f32 %v1015, %v1417
        %v1518 = vmax.f32 %v1017, %v1419
        %v1519 = vmax.f32 %v868, %v1270
        %v1520 = vmax.f32 %v870, %v1272
        %v1521 = vmax.f32 %v1021, %v1423
        %v1522 = vmax.f32 %v1023, %v1425
        %v1523 = vmax.f32 %v872, %v1274
        %v1524 = vmax.f32 %v874, %v1276
        %v1525 = vmax.f32 %v1025, %v1427
        %v1526 = vmax.f32 %v1027, %v1429
        %v1527 = vld [vmem:[%s1 + $0x30] sm:$0xff]
        %v1528 = vld [vmem:[%s1 + $0x38] sm:$0xff]
        %v1529 = vld [vmem:[%s1 + $0x90] sm:$0xff]
        %v1530 = vld [vmem:[%s1 + $0x98] sm:$0xff]
        %v1531 = vld [vmem:[%s1 + $0xf0] sm:$0xff]
        %v1532 = vld [vmem:[%s1 + $0xf8] sm:$0xff]
        %v1533 = vld [vmem:[%s1 + $0x150] sm:$0xff]
        %v1534 = vld [vmem:[%s1 + $0x158] sm:$0xff]
        %v1535 = vld [vmem:[%s1 + $0x1b0] sm:$0xff]
        %v1536 = vld [vmem:[%s1 + $0x1b8] sm:$0xff]
        %v1537 = vld [vmem:[%s1 + $0x210] sm:$0xff]
        %v1538 = vld [vmem:[%s1 + $0x218] sm:$0xff]
        %v1539 = vld [vmem:[%s1 + $0x270] sm:$0xff]
        %v1540 = vld [vmem:[%s1 + $0x278] sm:$0xff]
        %v1541 = vld [vmem:[%s1 + $0x2d0] sm:$0xff]
        %v1542 = vld [vmem:[%s1 + $0x2d8] sm:$0xff]
        %v1543 = vld [vmem:[%s1 + $0x330] sm:$0xff]
        %v1544 = vld [vmem:[%s1 + $0x338] sm:$0xff]
        %v1545 = vld [vmem:[%s1 + $0x390] sm:$0xff]
        %v1546 = vld [vmem:[%s1 + $0x398] sm:$0xff]
        %v1567 = vunpack.c.l.b16 %v1527
        %v1568 = vunpack.c.h.b16 %v1527
        %v1569 = vunpack.c.l.b16 %v1528
        %v1570 = vunpack.c.h.b16 %v1528
        %v1571 = vunpack.c.l.b16 %v1529
        %v1572 = vunpack.c.h.b16 %v1529
        %v1573 = vunpack.c.l.b16 %v1530
        %v1574 = vunpack.c.h.b16 %v1530
        %v1575 = vunpack.c.l.b16 %v1531
        %v1576 = vunpack.c.h.b16 %v1531
        %v1577 = vunpack.c.l.b16 %v1532
        %v1578 = vunpack.c.h.b16 %v1532
        %v1579 = vunpack.c.l.b16 %v1533
        %v1580 = vunpack.c.h.b16 %v1533
        %v1581 = vunpack.c.l.b16 %v1534
        %v1582 = vunpack.c.h.b16 %v1534
        %v1583 = vunpack.c.l.b16 %v1535
        %v1584 = vunpack.c.h.b16 %v1535
        %v1585 = vunpack.c.l.b16 %v1536
        %v1586 = vunpack.c.h.b16 %v1536
        %v1587 = vunpack.c.l.b16 %v1537
        %v1588 = vunpack.c.h.b16 %v1537
        %v1589 = vunpack.c.l.b16 %v1538
        %v1590 = vunpack.c.h.b16 %v1538
        %v1591 = vunpack.c.l.b16 %v1539
        %v1592 = vunpack.c.h.b16 %v1539
        %v1593 = vunpack.c.l.b16 %v1540
        %v1594 = vunpack.c.h.b16 %v1540
        %v1595 = vunpack.c.l.b16 %v1541
        %v1596 = vunpack.c.h.b16 %v1541
        %v1597 = vunpack.c.l.b16 %v1542
        %v1598 = vunpack.c.h.b16 %v1542
        %v1599 = vunpack.c.l.b16 %v1543
        %v1600 = vunpack.c.h.b16 %v1543
        %v1601 = vunpack.c.l.b16 %v1544
        %v1602 = vunpack.c.h.b16 %v1544
        %v1603 = vunpack.c.l.b16 %v1545
        %v1604 = vunpack.c.h.b16 %v1545
        %v1605 = vunpack.c.l.b16 %v1546
        %v1606 = vunpack.c.h.b16 %v1546
        %v1607 = vpack.c.b16 %v1571, %v1567
        %v1608 = vpack.c.b16 %v1572, %v1568
        %v1609 = vpack.c.b16 %v1573, %v1569
        %v1610 = vpack.c.b16 %v1574, %v1570
        %v1611 = vpack.c.b16 %v1579, %v1575
        %v1612 = vpack.c.b16 %v1580, %v1576
        %v1613 = vpack.c.b16 %v1581, %v1577
        %v1614 = vpack.c.b16 %v1582, %v1578
        %v1615 = vpack.c.b16 %v1587, %v1583
        %v1616 = vpack.c.b16 %v1588, %v1584
        %v1617 = vpack.c.b16 %v1589, %v1585
        %v1618 = vpack.c.b16 %v1590, %v1586
        %v1619 = vpack.c.b16 %v1595, %v1591
        %v1620 = vpack.c.b16 %v1596, %v1592
        %v1621 = vpack.c.b16 %v1597, %v1593
        %v1622 = vpack.c.b16 %v1598, %v1594
        %v1623 = vpack.c.b16 %v1603, %v1599
        %v1624 = vpack.c.b16 %v1604, %v1600
        %v1625 = vpack.c.b16 %v1605, %v1601
        %v1626 = vpack.c.b16 %v1606, %v1602
        %1647 = vmatprep.subr.bf16.mxu0 %v1608
        %1648 = vmatpush1.bf16.msra.mxu0 %v1607
        %1649 = vmatprep.subr.bf16.mxu0 %v1612
        %1650 = vmatpush1.bf16.msra.mxu0 %v1611
        %1651 = vmatprep.subr.bf16.mxu0 %v1616
        %1652 = vmatpush1.bf16.msra.mxu0 %v1615
        %1653 = vmatprep.subr.bf16.mxu0 %v1620
        %1654 = vmatpush1.bf16.msra.mxu0 %v1619
        %1655 = vmatprep.subr.bf16.mxu0 %v1624
        %1656 = vmatpush1.bf16.msra.mxu0 %v1623
        %1657 = vmatprep.subr.bf16.mxu0 0
        %1658 = vmatpush1.bf16.msra.mxu0 0
        %1659 = vmatprep.subr.bf16.mxu0 0
        %1660 = vmatpush1.bf16.msra.mxu0 0
        %1661 = vmatprep.subr.bf16.mxu0 0
        %1662 = vmatpush1.bf16.msra.mxu0 0
        %1663 = vmatprep.subr.bf16.mxu0 0
        %1664 = vmatpush1.bf16.msra.mxu0 0
        %1665 = vmatprep.subr.bf16.mxu0 0
        %1666 = vmatpush1.bf16.msra.mxu0 0
        %1667 = vmatprep.subr.bf16.mxu0 0
        %1668 = vmatpush1.bf16.msra.mxu0 0
        %1669 = vmatprep.subr.bf16.mxu0 0
        %1670 = vmatpush1.bf16.msra.mxu0 0
        %1671 = vmatprep.subr.bf16.mxu0 0
        %1672 = vmatpush1.bf16.msra.mxu0 0
        %1673 = vmatprep.subr.bf16.mxu0 0
        %1674 = vmatpush1.bf16.msra.mxu0 0
        %1675 = vmatprep.subr.bf16.mxu0 0
        %1676 = vmatpush1.bf16.msra.mxu0 0
        %1677 = vmatprep.subr.bf16.mxu0 0
        %1678 = vmatpush1.bf16.msra.mxu0 0
        %1679 = vmatprep.mubr.bf16.mxu0 0
        %1680 = vmatmul.mubr.bf16.gmra.mrb[0].mxu0 %v688
        %v1681 = vpop.f32.mrb[0].mxu0
        %v1682 = vadd.f32 0.0, %v1681
        %v1683 = vpop.f32.mrb[0].mxu0
        %v1684 = vadd.f32 0.0, %v1683
        %v1685 = vpop.f32.mrb[0].mxu0
        %v1686 = vadd.f32 0.0, %v1685
        %v1687 = vpop.f32.mrb[0].mxu0
        %v1688 = vadd.f32 0.0, %v1687
        %1689 = vmatprep.mubr.bf16.mxu0 0
        %1690 = vmatmul.mubr.bf16.gmra.mrb[0].mxu0 %v691
        %v1691 = vpop.f32.mrb[0].mxu0
        %v1692 = vadd.f32 0.0, %v1691
        %v1693 = vpop.f32.mrb[0].mxu0
        %v1694 = vadd.f32 0.0, %v1693
        %v1695 = vpop.f32.mrb[0].mxu0
        %v1696 = vadd.f32 0.0, %v1695
        %v1697 = vpop.f32.mrb[0].mxu0
        %v1698 = vadd.f32 0.0, %v1697
        %1699 = vmatprep.mubr.bf16.mxu0 0
        %1700 = vmatmul.mubr.bf16.gmra.mrb[0].mxu0 %v694
        %v1701 = vpop.f32.mrb[0].mxu0
        %v1702 = vadd.f32 0.0, %v1701
        %v1703 = vpop.f32.mrb[0].mxu0
        %v1704 = vadd.f32 0.0, %v1703
        %v1705 = vpop.f32.mrb[0].mxu0
        %v1706 = vadd.f32 0.0, %v1705
        %v1707 = vpop.f32.mrb[0].mxu0
        %v1708 = vadd.f32 0.0, %v1707
        %1709 = vmatprep.mubr.bf16.mxu0 0
        %1710 = vmatmul.mubr.bf16.gmra.mrb[0].mxu0 %v697
        %v1711 = vpop.f32.mrb[0].mxu0
        %v1712 = vadd.f32 0.0, %v1711
        %v1713 = vpop.f32.mrb[0].mxu0
        %v1714 = vadd.f32 0.0, %v1713
        %v1715 = vpop.f32.mrb[0].mxu0
        %v1716 = vadd.f32 0.0, %v1715
        %v1717 = vpop.f32.mrb[0].mxu0
        %v1718 = vadd.f32 0.0, %v1717
        %1719 = vmatprep.mubr.bf16.mxu0 0
        %1720 = vmatmul.mubr.bf16.gmra.mrb[0].mxu0 %v700
        %v1721 = vpop.f32.mrb[0].mxu0
        %v1722 = vadd.f32 0.0, %v1721
        %v1723 = vpop.f32.mrb[0].mxu0
        %v1724 = vadd.f32 0.0, %v1723
        %v1725 = vpop.f32.mrb[0].mxu0
        %v1726 = vadd.f32 0.0, %v1725
        %v1727 = vpop.f32.mrb[0].mxu0
        %v1728 = vadd.f32 0.0, %v1727
        %1729 = vmatprep.mubr.bf16.mxu0 0
        %1730 = vmatmul.mubr.bf16.gmra.mrb[0].mxu0 %v703
        %v1731 = vpop.f32.mrb[0].mxu0
        %v1732 = vadd.f32 0.0, %v1731
        %v1733 = vpop.f32.mrb[0].mxu0
        %v1734 = vadd.f32 0.0, %v1733
        %v1735 = vpop.f32.mrb[0].mxu0
        %v1736 = vadd.f32 0.0, %v1735
        %v1737 = vpop.f32.mrb[0].mxu0
        %v1738 = vadd.f32 0.0, %v1737
        %1739 = vmatprep.mubr.bf16.mxu0 0
        %1740 = vmatmul.mubr.bf16.gmra.mrb[0].mxu0 %v706
        %v1741 = vpop.f32.mrb[0].mxu0
        %v1742 = vadd.f32 0.0, %v1741
        %v1743 = vpop.f32.mrb[0].mxu0
        %v1744 = vadd.f32 0.0, %v1743
        %v1745 = vpop.f32.mrb[0].mxu0
        %v1746 = vadd.f32 0.0, %v1745
        %v1747 = vpop.f32.mrb[0].mxu0
        %v1748 = vadd.f32 0.0, %v1747
        %1749 = vmatprep.mubr.bf16.mxu0 0
        %1750 = vmatmul.mubr.bf16.gmra.mrb[0].mxu0 %v709
        %v1751 = vpop.f32.mrb[0].mxu0
        %v1752 = vadd.f32 0.0, %v1751
        %v1753 = vpop.f32.mrb[0].mxu0
        %v1754 = vadd.f32 0.0, %v1753
        %v1755 = vpop.f32.mrb[0].mxu0
        %v1756 = vadd.f32 0.0, %v1755
        %v1757 = vpop.f32.mrb[0].mxu0
        %v1758 = vadd.f32 0.0, %v1757
        %1759 = vmatprep.mubr.bf16.mxu0 0
        %1760 = vmatmul.mubr.bf16.gmra.mrb[0].mxu0 %v712
        %v1761 = vpop.f32.mrb[0].mxu0
        %v1762 = vadd.f32 0.0, %v1761
        %v1763 = vpop.f32.mrb[0].mxu0
        %v1764 = vadd.f32 0.0, %v1763
        %v1765 = vpop.f32.mrb[0].mxu0
        %v1766 = vadd.f32 0.0, %v1765
        %v1767 = vpop.f32.mrb[0].mxu0
        %v1768 = vadd.f32 0.0, %v1767
        %1769 = vmatprep.mubr.bf16.mxu0 0
        %1770 = vmatmul.mubr.bf16.gmra.mrb[0].mxu0 %v715
        %v1771 = vpop.f32.mrb[0].mxu0
        %v1772 = vadd.f32 0.0, %v1771
        %v1773 = vpop.f32.mrb[0].mxu0
        %v1774 = vadd.f32 0.0, %v1773
        %v1775 = vpop.f32.mrb[0].mxu0
        %v1776 = vadd.f32 0.0, %v1775
        %v1777 = vpop.f32.mrb[0].mxu0
        %v1778 = vadd.f32 0.0, %v1777
        %1779 = vmatprep.mubr.bf16.mxu0 0
        %1780 = vmatmul.mubr.bf16.gmra.mrb[0].mxu0 %v718
        %v1781 = vpop.f32.mrb[0].mxu0
        %v1782 = vadd.f32 0.0, %v1781
        %v1783 = vpop.f32.mrb[0].mxu0
        %v1784 = vadd.f32 0.0, %v1783
        %v1785 = vpop.f32.mrb[0].mxu0
        %v1786 = vadd.f32 0.0, %v1785
        %v1787 = vpop.f32.mrb[0].mxu0
        %v1788 = vadd.f32 0.0, %v1787
        %1789 = vmatprep.mubr.bf16.mxu0 0
        %1790 = vmatmul.mubr.bf16.gmra.mrb[0].mxu0 %v721
        %v1791 = vpop.f32.mrb[0].mxu0
        %v1792 = vadd.f32 0.0, %v1791
        %v1793 = vpop.f32.mrb[0].mxu0
        %v1794 = vadd.f32 0.0, %v1793
        %v1795 = vpop.f32.mrb[0].mxu0
        %v1796 = vadd.f32 0.0, %v1795
        %v1797 = vpop.f32.mrb[0].mxu0
        %v1798 = vadd.f32 0.0, %v1797
        %1799 = vdwg.mxu0
        %1800 = vmatprep.subr.bf16.mxu0 %v1610
        %1801 = vmatpush1.bf16.msra.mxu0 %v1609
        %1802 = vmatprep.subr.bf16.mxu0 %v1614
        %1803 = vmatpush1.bf16.msra.mxu0 %v1613
        %1804 = vmatprep.subr.bf16.mxu0 %v1618
        %1805 = vmatpush1.bf16.msra.mxu0 %v1617
        %1806 = vmatprep.subr.bf16.mxu0 %v1622
        %1807 = vmatpush1.bf16.msra.mxu0 %v1621
        %1808 = vmatprep.subr.bf16.mxu0 %v1626
        %1809 = vmatpush1.bf16.msra.mxu0 %v1625
        %1810 = vmatprep.subr.bf16.mxu0 0
        %1811 = vmatpush1.bf16.msra.mxu0 0
        %1812 = vmatprep.subr.bf16.mxu0 0
        %1813 = vmatpush1.bf16.msra.mxu0 0
        %1814 = vmatprep.subr.bf16.mxu0 0
        %1815 = vmatpush1.bf16.msra.mxu0 0
        %1816 = vmatprep.subr.bf16.mxu0 0
        %1817 = vmatpush1.bf16.msra.mxu0 0
        %1818 = vmatprep.subr.bf16.mxu0 0
        %1819 = vmatpush1.bf16.msra.mxu0 0
        %1820 = vmatprep.subr.bf16.mxu0 0
        %1821 = vmatpush1.bf16.msra.mxu0 0
        %1822 = vmatprep.subr.bf16.mxu0 0
        %1823 = vmatpush1.bf16.msra.mxu0 0
        %1824 = vmatprep.subr.bf16.mxu0 0
        %1825 = vmatpush1.bf16.msra.mxu0 0
        %1826 = vmatprep.subr.bf16.mxu0 0
        %1827 = vmatpush1.bf16.msra.mxu0 0
        %1828 = vmatprep.subr.bf16.mxu0 0
        %1829 = vmatpush1.bf16.msra.mxu0 0
        %1830 = vmatprep.subr.bf16.mxu0 0
        %1831 = vmatpush1.bf16.msra.mxu0 0
        %1832 = vmatprep.mubr.bf16.mxu0 0
        %1833 = vmatmul.mubr.bf16.gmra.mrb[0].mxu0 %v688
        %v1834 = vpop.f32.mrb[0].mxu0
        %v1835 = vadd.f32 0.0, %v1834
        %v1836 = vpop.f32.mrb[0].mxu0
        %v1837 = vadd.f32 0.0, %v1836
        %v1838 = vpop.f32.mrb[0].mxu0
        %v1839 = vadd.f32 0.0, %v1838
        %v1840 = vpop.f32.mrb[0].mxu0
        %v1841 = vadd.f32 0.0, %v1840
        %1842 = vmatprep.mubr.bf16.mxu0 0
        %1843 = vmatmul.mubr.bf16.gmra.mrb[0].mxu0 %v691
        %v1844 = vpop.f32.mrb[0].mxu0
        %v1845 = vadd.f32 0.0, %v1844
        %v1846 = vpop.f32.mrb[0].mxu0
        %v1847 = vadd.f32 0.0, %v1846
        %v1848 = vpop.f32.mrb[0].mxu0
        %v1849 = vadd.f32 0.0, %v1848
        %v1850 = vpop.f32.mrb[0].mxu0
        %v1851 = vadd.f32 0.0, %v1850
        %1852 = vmatprep.mubr.bf16.mxu0 0
        %1853 = vmatmul.mubr.bf16.gmra.mrb[0].mxu0 %v694
        %v1854 = vpop.f32.mrb[0].mxu0
        %v1855 = vadd.f32 0.0, %v1854
        %v1856 = vpop.f32.mrb[0].mxu0
        %v1857 = vadd.f32 0.0, %v1856
        %v1858 = vpop.f32.mrb[0].mxu0
        %v1859 = vadd.f32 0.0, %v1858
        %v1860 = vpop.f32.mrb[0].mxu0
        %v1861 = vadd.f32 0.0, %v1860
        %1862 = vmatprep.mubr.bf16.mxu0 0
        %1863 = vmatmul.mubr.bf16.gmra.mrb[0].mxu0 %v697
        %v1864 = vpop.f32.mrb[0].mxu0
        %v1865 = vadd.f32 0.0, %v1864
        %v1866 = vpop.f32.mrb[0].mxu0
        %v1867 = vadd.f32 0.0, %v1866
        %v1868 = vpop.f32.mrb[0].mxu0
        %v1869 = vadd.f32 0.0, %v1868
        %v1870 = vpop.f32.mrb[0].mxu0
        %v1871 = vadd.f32 0.0, %v1870
        %1872 = vmatprep.mubr.bf16.mxu0 0
        %1873 = vmatmul.mubr.bf16.gmra.mrb[0].mxu0 %v700
        %v1874 = vpop.f32.mrb[0].mxu0
        %v1875 = vadd.f32 0.0, %v1874
        %v1876 = vpop.f32.mrb[0].mxu0
        %v1877 = vadd.f32 0.0, %v1876
        %v1878 = vpop.f32.mrb[0].mxu0
        %v1879 = vadd.f32 0.0, %v1878
        %v1880 = vpop.f32.mrb[0].mxu0
        %v1881 = vadd.f32 0.0, %v1880
        %1882 = vmatprep.mubr.bf16.mxu0 0
        %1883 = vmatmul.mubr.bf16.gmra.mrb[0].mxu0 %v703
        %v1884 = vpop.f32.mrb[0].mxu0
        %v1885 = vadd.f32 0.0, %v1884
        %v1886 = vpop.f32.mrb[0].mxu0
        %v1887 = vadd.f32 0.0, %v1886
        %v1888 = vpop.f32.mrb[0].mxu0
        %v1889 = vadd.f32 0.0, %v1888
        %v1890 = vpop.f32.mrb[0].mxu0
        %v1891 = vadd.f32 0.0, %v1890
        %1892 = vmatprep.mubr.bf16.mxu0 0
        %1893 = vmatmul.mubr.bf16.gmra.mrb[0].mxu0 %v706
        %v1894 = vpop.f32.mrb[0].mxu0
        %v1895 = vadd.f32 0.0, %v1894
        %v1896 = vpop.f32.mrb[0].mxu0
        %v1897 = vadd.f32 0.0, %v1896
        %v1898 = vpop.f32.mrb[0].mxu0
        %v1899 = vadd.f32 0.0, %v1898
        %v1900 = vpop.f32.mrb[0].mxu0
        %v1901 = vadd.f32 0.0, %v1900
        %1902 = vmatprep.mubr.bf16.mxu0 0
        %1903 = vmatmul.mubr.bf16.gmra.mrb[0].mxu0 %v709
        %v1904 = vpop.f32.mrb[0].mxu0
        %v1905 = vadd.f32 0.0, %v1904
        %v1906 = vpop.f32.mrb[0].mxu0
        %v1907 = vadd.f32 0.0, %v1906
        %v1908 = vpop.f32.mrb[0].mxu0
        %v1909 = vadd.f32 0.0, %v1908
        %v1910 = vpop.f32.mrb[0].mxu0
        %v1911 = vadd.f32 0.0, %v1910
        %1912 = vmatprep.mubr.bf16.mxu0 0
        %1913 = vmatmul.mubr.bf16.gmra.mrb[0].mxu0 %v712
        %v1914 = vpop.f32.mrb[0].mxu0
        %v1915 = vadd.f32 0.0, %v1914
        %v1916 = vpop.f32.mrb[0].mxu0
        %v1917 = vadd.f32 0.0, %v1916
        %v1918 = vpop.f32.mrb[0].mxu0
        %v1919 = vadd.f32 0.0, %v1918
        %v1920 = vpop.f32.mrb[0].mxu0
        %v1921 = vadd.f32 0.0, %v1920
        %1922 = vmatprep.mubr.bf16.mxu0 0
        %1923 = vmatmul.mubr.bf16.gmra.mrb[0].mxu0 %v715
        %v1924 = vpop.f32.mrb[0].mxu0
        %v1925 = vadd.f32 0.0, %v1924
        %v1926 = vpop.f32.mrb[0].mxu0
        %v1927 = vadd.f32 0.0, %v1926
        %v1928 = vpop.f32.mrb[0].mxu0
        %v1929 = vadd.f32 0.0, %v1928
        %v1930 = vpop.f32.mrb[0].mxu0
        %v1931 = vadd.f32 0.0, %v1930
        %1932 = vmatprep.mubr.bf16.mxu0 0
        %1933 = vmatmul.mubr.bf16.gmra.mrb[0].mxu0 %v718
        %v1934 = vpop.f32.mrb[0].mxu0
        %v1935 = vadd.f32 0.0, %v1934
        %v1936 = vpop.f32.mrb[0].mxu0
        %v1937 = vadd.f32 0.0, %v1936
        %v1938 = vpop.f32.mrb[0].mxu0
        %v1939 = vadd.f32 0.0, %v1938
        %v1940 = vpop.f32.mrb[0].mxu0
        %v1941 = vadd.f32 0.0, %v1940
        %1942 = vmatprep.mubr.bf16.mxu0 0
        %1943 = vmatmul.mubr.bf16.gmra.mrb[0].mxu0 %v721
        %v1944 = vpop.f32.mrb[0].mxu0
        %v1945 = vadd.f32 0.0, %v1944
        %v1946 = vpop.f32.mrb[0].mxu0
        %v1947 = vadd.f32 0.0, %v1946
        %v1948 = vpop.f32.mrb[0].mxu0
        %v1949 = vadd.f32 0.0, %v1948
        %v1950 = vpop.f32.mrb[0].mxu0
        %v1951 = vadd.f32 0.0, %v1950
        %1952 = vdwg.mxu0
        %v1953 = vmax.f32 %v1431, %v1682
        %v1954 = vmax.f32 %v1432, %v1684
        %v1955 = vmax.f32 %v1433, %v1835
        %v1956 = vmax.f32 %v1434, %v1837
        %v1957 = vmax.f32 %v1435, %v1686
        %v1958 = vmax.f32 %v1436, %v1688
        %v1959 = vmax.f32 %v1437, %v1839
        %v1960 = vmax.f32 %v1438, %v1841
        %v1961 = vmax.f32 %v1439, %v1692
        %v1962 = vmax.f32 %v1440, %v1694
        %v1963 = vmax.f32 %v1441, %v1845
        %v1964 = vmax.f32 %v1442, %v1847
        %v1965 = vmax.f32 %v1443, %v1696
        %v1966 = vmax.f32 %v1444, %v1698
        %v1967 = vmax.f32 %v1445, %v1849
        %v1968 = vmax.f32 %v1446, %v1851
        %v1969 = vmax.f32 %v1447, %v1702
        %v1970 = vmax.f32 %v1448, %v1704
        %v1971 = vmax.f32 %v1449, %v1855
        %v1972 = vmax.f32 %v1450, %v1857
        %v1973 = vmax.f32 %v1451, %v1706
        %v1974 = vmax.f32 %v1452, %v1708
        %v1975 = vmax.f32 %v1453, %v1859
        %v1976 = vmax.f32 %v1454, %v1861
        %v1977 = vmax.f32 %v1455, %v1712
        %v1978 = vmax.f32 %v1456, %v1714
        %v1979 = vmax.f32 %v1457, %v1865
        %v1980 = vmax.f32 %v1458, %v1867
        %v1981 = vmax.f32 %v1459, %v1716
        %v1982 = vmax.f32 %v1460, %v1718
        %v1983 = vmax.f32 %v1461, %v1869
        %v1984 = vmax.f32 %v1462, %v1871
        %v1985 = vmax.f32 %v1463, %v1722
        %v1986 = vmax.f32 %v1464, %v1724
        %v1987 = vmax.f32 %v1465, %v1875
        %v1988 = vmax.f32 %v1466, %v1877
        %v1989 = vmax.f32 %v1467, %v1726
        %v1990 = vmax.f32 %v1468, %v1728
        %v1991 = vmax.f32 %v1469, %v1879
        %v1992 = vmax.f32 %v1470, %v1881
        %v1993 = vmax.f32 %v1471, %v1732
        %v1994 = vmax.f32 %v1472, %v1734
        %v1995 = vmax.f32 %v1473, %v1885
        %v1996 = vmax.f32 %v1474, %v1887
        %v1997 = vmax.f32 %v1475, %v1736
        %v1998 = vmax.f32 %v1476, %v1738
        %v1999 = vmax.f32 %v1477, %v1889
        %v2000 = vmax.f32 %v1478, %v1891
        %v2001 = vmax.f32 %v1479, %v1742
        %v2002 = vmax.f32 %v1480, %v1744
        %v2003 = vmax.f32 %v1481, %v1895
        %v2004 = vmax.f32 %v1482, %v1897
        %v2005 = vmax.f32 %v1483, %v1746
        %v2006 = vmax.f32 %v1484, %v1748
        %v2007 = vmax.f32 %v1485, %v1899
        %v2008 = vmax.f32 %v1486, %v1901
        %v2009 = vmax.f32 %v1487, %v1752
        %v2010 = vmax.f32 %v1488, %v1754
        %v2011 = vmax.f32 %v1489, %v1905
        %v2012 = vmax.f32 %v1490, %v1907
        %v2013 = vmax.f32 %v1491, %v1756
        %v2014 = vmax.f32 %v1492, %v1758
        %v2015 = vmax.f32 %v1493, %v1909
        %v2016 = vmax.f32 %v1494, %v1911
        %v2017 = vmax.f32 %v1495, %v1762
        %v2018 = vmax.f32 %v1496, %v1764
        %v2019 = vmax.f32 %v1497, %v1915
        %v2020 = vmax.f32 %v1498, %v1917
        %v2021 = vmax.f32 %v1499, %v1766
        %v2022 = vmax.f32 %v1500, %v1768
        %v2023 = vmax.f32 %v1501, %v1919
        %v2024 = vmax.f32 %v1502, %v1921
        %v2025 = vmax.f32 %v1503, %v1772
        %v2026 = vmax.f32 %v1504, %v1774
        %v2027 = vmax.f32 %v1505, %v1925
        %v2028 = vmax.f32 %v1506, %v1927
        %v2029 = vmax.f32 %v1507, %v1776
        %v2030 = vmax.f32 %v1508, %v1778
        %v2031 = vmax.f32 %v1509, %v1929
        %v2032 = vmax.f32 %v1510, %v1931
        %v2033 = vmax.f32 %v1511, %v1782
        %v2034 = vmax.f32 %v1512, %v1784
        %v2035 = vmax.f32 %v1513, %v1935
        %v2036 = vmax.f32 %v1514, %v1937
        %v2037 = vmax.f32 %v1515, %v1786
        %v2038 = vmax.f32 %v1516, %v1788
        %v2039 = vmax.f32 %v1517, %v1939
        %v2040 = vmax.f32 %v1518, %v1941
        %v2041 = vmax.f32 %v1519, %v1792
        %v2042 = vmax.f32 %v1520, %v1794
        %v2043 = vmax.f32 %v1521, %v1945
        %v2044 = vmax.f32 %v1522, %v1947
        %v2045 = vmax.f32 %v1523, %v1796
        %v2046 = vmax.f32 %v1524, %v1798
        %v2047 = vmax.f32 %v1525, %v1949
        %v2048 = vmax.f32 %v1526, %v1951
        %2049 = vmatprep.subr.bf16.mxu0 %v1608
        %2050 = vmatpush1.bf16.msra.mxu0 %v1607
        %2051 = vmatprep.subr.bf16.mxu0 %v1612
        %2052 = vmatpush1.bf16.msra.mxu0 %v1611
        %2053 = vmatprep.subr.bf16.mxu0 %v1616
        %2054 = vmatpush1.bf16.msra.mxu0 %v1615
        %2055 = vmatprep.subr.bf16.mxu0 %v1620
        %2056 = vmatpush1.bf16.msra.mxu0 %v1619
        %2057 = vmatprep.subr.bf16.mxu0 %v1624
        %2058 = vmatpush1.bf16.msra.mxu0 %v1623
        %2059 = vmatprep.subr.bf16.mxu0 0
        %2060 = vmatpush1.bf16.msra.mxu0 0
        %2061 = vmatprep.subr.bf16.mxu0 0
        %2062 = vmatpush1.bf16.msra.mxu0 0
        %2063 = vmatprep.subr.bf16.mxu0 0
        %2064 = vmatpush1.bf16.msra.mxu0 0
        %2065 = vmatprep.subr.bf16.mxu0 0
        %2066 = vmatpush1.bf16.msra.mxu0 0
        %2067 = vmatprep.subr.bf16.mxu0 0
        %2068 = vmatpush1.bf16.msra.mxu0 0
        %2069 = vmatprep.subr.bf16.mxu0 0
        %2070 = vmatpush1.bf16.msra.mxu0 0
        %2071 = vmatprep.subr.bf16.mxu0 0
        %2072 = vmatpush1.bf16.msra.mxu0 0
        %2073 = vmatprep.subr.bf16.mxu0 0
        %2074 = vmatpush1.bf16.msra.mxu0 0
        %2075 = vmatprep.subr.bf16.mxu0 0
        %2076 = vmatpush1.bf16.msra.mxu0 0
        %2077 = vmatprep.subr.bf16.mxu0 0
        %2078 = vmatpush1.bf16.msra.mxu0 0
        %2079 = vmatprep.subr.bf16.mxu0 0
        %2080 = vmatpush1.bf16.msra.mxu0 0
        %2081 = vmatprep.mubr.bf16.mxu0 0
        %2082 = vmatmul.mubr.bf16.gmra.mrb[0].mxu0 %v1090
        %v2083 = vpop.f32.mrb[0].mxu0
        %v2084 = vadd.f32 0.0, %v2083
        %v2085 = vpop.f32.mrb[0].mxu0
        %v2086 = vadd.f32 0.0, %v2085
        %v2087 = vpop.f32.mrb[0].mxu0
        %v2088 = vadd.f32 0.0, %v2087
        %v2089 = vpop.f32.mrb[0].mxu0
        %v2090 = vadd.f32 0.0, %v2089
        %2091 = vmatprep.mubr.bf16.mxu0 0
        %2092 = vmatmul.mubr.bf16.gmra.mrb[0].mxu0 %v1093
        %v2093 = vpop.f32.mrb[0].mxu0
        %v2094 = vadd.f32 0.0, %v2093
        %v2095 = vpop.f32.mrb[0].mxu0
        %v2096 = vadd.f32 0.0, %v2095
        %v2097 = vpop.f32.mrb[0].mxu0
        %v2098 = vadd.f32 0.0, %v2097
        %v2099 = vpop.f32.mrb[0].mxu0
        %v2100 = vadd.f32 0.0, %v2099
        %2101 = vmatprep.mubr.bf16.mxu0 0
        %2102 = vmatmul.mubr.bf16.gmra.mrb[0].mxu0 %v1096
        %v2103 = vpop.f32.mrb[0].mxu0
        %v2104 = vadd.f32 0.0, %v2103
        %v2105 = vpop.f32.mrb[0].mxu0
        %v2106 = vadd.f32 0.0, %v2105
        %v2107 = vpop.f32.mrb[0].mxu0
        %v2108 = vadd.f32 0.0, %v2107
        %v2109 = vpop.f32.mrb[0].mxu0
        %v2110 = vadd.f32 0.0, %v2109
        %2111 = vmatprep.mubr.bf16.mxu0 0
        %2112 = vmatmul.mubr.bf16.gmra.mrb[0].mxu0 %v1099
        %v2113 = vpop.f32.mrb[0].mxu0
        %v2114 = vadd.f32 0.0, %v2113
        %v2115 = vpop.f32.mrb[0].mxu0
        %v2116 = vadd.f32 0.0, %v2115
        %v2117 = vpop.f32.mrb[0].mxu0
        %v2118 = vadd.f32 0.0, %v2117
        %v2119 = vpop.f32.mrb[0].mxu0
        %v2120 = vadd.f32 0.0, %v2119
        %2121 = vmatprep.mubr.bf16.mxu0 0
        %2122 = vmatmul.mubr.bf16.gmra.mrb[0].mxu0 %v1102
        %v2123 = vpop.f32.mrb[0].mxu0
        %v2124 = vadd.f32 0.0, %v2123
        %v2125 = vpop.f32.mrb[0].mxu0
        %v2126 = vadd.f32 0.0, %v2125
        %v2127 = vpop.f32.mrb[0].mxu0
        %v2128 = vadd.f32 0.0, %v2127
        %v2129 = vpop.f32.mrb[0].mxu0
        %v2130 = vadd.f32 0.0, %v2129
        %2131 = vmatprep.mubr.bf16.mxu0 0
        %2132 = vmatmul.mubr.bf16.gmra.mrb[0].mxu0 %v1105
        %v2133 = vpop.f32.mrb[0].mxu0
        %v2134 = vadd.f32 0.0, %v2133
        %v2135 = vpop.f32.mrb[0].mxu0
        %v2136 = vadd.f32 0.0, %v2135
        %v2137 = vpop.f32.mrb[0].mxu0
        %v2138 = vadd.f32 0.0, %v2137
        %v2139 = vpop.f32.mrb[0].mxu0
        %v2140 = vadd.f32 0.0, %v2139
        %2141 = vmatprep.mubr.bf16.mxu0 0
        %2142 = vmatmul.mubr.bf16.gmra.mrb[0].mxu0 %v1108
        %v2143 = vpop.f32.mrb[0].mxu0
        %v2144 = vadd.f32 0.0, %v2143
        %v2145 = vpop.f32.mrb[0].mxu0
        %v2146 = vadd.f32 0.0, %v2145
        %v2147 = vpop.f32.mrb[0].mxu0
        %v2148 = vadd.f32 0.0, %v2147
        %v2149 = vpop.f32.mrb[0].mxu0
        %v2150 = vadd.f32 0.0, %v2149
        %2151 = vmatprep.mubr.bf16.mxu0 0
        %2152 = vmatmul.mubr.bf16.gmra.mrb[0].mxu0 %v1111
        %v2153 = vpop.f32.mrb[0].mxu0
        %v2154 = vadd.f32 0.0, %v2153
        %v2155 = vpop.f32.mrb[0].mxu0
        %v2156 = vadd.f32 0.0, %v2155
        %v2157 = vpop.f32.mrb[0].mxu0
        %v2158 = vadd.f32 0.0, %v2157
        %v2159 = vpop.f32.mrb[0].mxu0
        %v2160 = vadd.f32 0.0, %v2159
        %2161 = vmatprep.mubr.bf16.mxu0 0
        %2162 = vmatmul.mubr.bf16.gmra.mrb[0].mxu0 %v1114
        %v2163 = vpop.f32.mrb[0].mxu0
        %v2164 = vadd.f32 0.0, %v2163
        %v2165 = vpop.f32.mrb[0].mxu0
        %v2166 = vadd.f32 0.0, %v2165
        %v2167 = vpop.f32.mrb[0].mxu0
        %v2168 = vadd.f32 0.0, %v2167
        %v2169 = vpop.f32.mrb[0].mxu0
        %v2170 = vadd.f32 0.0, %v2169
        %2171 = vmatprep.mubr.bf16.mxu0 0
        %2172 = vmatmul.mubr.bf16.gmra.mrb[0].mxu0 %v1117
        %v2173 = vpop.f32.mrb[0].mxu0
        %v2174 = vadd.f32 0.0, %v2173
        %v2175 = vpop.f32.mrb[0].mxu0
        %v2176 = vadd.f32 0.0, %v2175
        %v2177 = vpop.f32.mrb[0].mxu0
        %v2178 = vadd.f32 0.0, %v2177
        %v2179 = vpop.f32.mrb[0].mxu0
        %v2180 = vadd.f32 0.0, %v2179
        %2181 = vmatprep.mubr.bf16.mxu0 0
        %2182 = vmatmul.mubr.bf16.gmra.mrb[0].mxu0 %v1120
        %v2183 = vpop.f32.mrb[0].mxu0
        %v2184 = vadd.f32 0.0, %v2183
        %v2185 = vpop.f32.mrb[0].mxu0
        %v2186 = vadd.f32 0.0, %v2185
        %v2187 = vpop.f32.mrb[0].mxu0
        %v2188 = vadd.f32 0.0, %v2187
        %v2189 = vpop.f32.mrb[0].mxu0
        %v2190 = vadd.f32 0.0, %v2189
        %2191 = vmatprep.mubr.bf16.mxu0 0
        %2192 = vmatmul.mubr.bf16.gmra.mrb[0].mxu0 %v1123
        %v2193 = vpop.f32.mrb[0].mxu0
        %v2194 = vadd.f32 0.0, %v2193
        %v2195 = vpop.f32.mrb[0].mxu0
        %v2196 = vadd.f32 0.0, %v2195
        %v2197 = vpop.f32.mrb[0].mxu0
        %v2198 = vadd.f32 0.0, %v2197
        %v2199 = vpop.f32.mrb[0].mxu0
        %v2200 = vadd.f32 0.0, %v2199
        %2201 = vdwg.mxu0
        %2202 = vmatprep.subr.bf16.mxu0 %v1610
        %2203 = vmatpush1.bf16.msra.mxu0 %v1609
        %2204 = vmatprep.subr.bf16.mxu0 %v1614
        %2205 = vmatpush1.bf16.msra.mxu0 %v1613
        %2206 = vmatprep.subr.bf16.mxu0 %v1618
        %2207 = vmatpush1.bf16.msra.mxu0 %v1617
        %2208 = vmatprep.subr.bf16.mxu0 %v1622
        %2209 = vmatpush1.bf16.msra.mxu0 %v1621
        %2210 = vmatprep.subr.bf16.mxu0 %v1626
        %2211 = vmatpush1.bf16.msra.mxu0 %v1625
        %2212 = vmatprep.subr.bf16.mxu0 0
        %2213 = vmatpush1.bf16.msra.mxu0 0
        %2214 = vmatprep.subr.bf16.mxu0 0
        %2215 = vmatpush1.bf16.msra.mxu0 0
        %2216 = vmatprep.subr.bf16.mxu0 0
        %2217 = vmatpush1.bf16.msra.mxu0 0
        %2218 = vmatprep.subr.bf16.mxu0 0
        %2219 = vmatpush1.bf16.msra.mxu0 0
        %2220 = vmatprep.subr.bf16.mxu0 0
        %2221 = vmatpush1.bf16.msra.mxu0 0
        %2222 = vmatprep.subr.bf16.mxu0 0
        %2223 = vmatpush1.bf16.msra.mxu0 0
        %2224 = vmatprep.subr.bf16.mxu0 0
        %2225 = vmatpush1.bf16.msra.mxu0 0
        %2226 = vmatprep.subr.bf16.mxu0 0
        %2227 = vmatpush1.bf16.msra.mxu0 0
        %2228 = vmatprep.subr.bf16.mxu0 0
        %2229 = vmatpush1.bf16.msra.mxu0 0
        %2230 = vmatprep.subr.bf16.mxu0 0
        %2231 = vmatpush1.bf16.msra.mxu0 0
        %2232 = vmatprep.subr.bf16.mxu0 0
        %2233 = vmatpush1.bf16.msra.mxu0 0
        %2234 = vmatprep.mubr.bf16.mxu0 0
        %2235 = vmatmul.mubr.bf16.gmra.mrb[0].mxu0 %v1090
        %v2236 = vpop.f32.mrb[0].mxu0
        %v2237 = vadd.f32 0.0, %v2236
        %v2238 = vpop.f32.mrb[0].mxu0
        %v2239 = vadd.f32 0.0, %v2238
        %v2240 = vpop.f32.mrb[0].mxu0
        %v2241 = vadd.f32 0.0, %v2240
        %v2242 = vpop.f32.mrb[0].mxu0
        %v2243 = vadd.f32 0.0, %v2242
        %2244 = vmatprep.mubr.bf16.mxu0 0
        %2245 = vmatmul.mubr.bf16.gmra.mrb[0].mxu0 %v1093
        %v2246 = vpop.f32.mrb[0].mxu0
        %v2247 = vadd.f32 0.0, %v2246
        %v2248 = vpop.f32.mrb[0].mxu0
        %v2249 = vadd.f32 0.0, %v2248
        %v2250 = vpop.f32.mrb[0].mxu0
        %v2251 = vadd.f32 0.0, %v2250
        %v2252 = vpop.f32.mrb[0].mxu0
        %v2253 = vadd.f32 0.0, %v2252
        %2254 = vmatprep.mubr.bf16.mxu0 0
        %2255 = vmatmul.mubr.bf16.gmra.mrb[0].mxu0 %v1096
        %v2256 = vpop.f32.mrb[0].mxu0
        %v2257 = vadd.f32 0.0, %v2256
        %v2258 = vpop.f32.mrb[0].mxu0
        %v2259 = vadd.f32 0.0, %v2258
        %v2260 = vpop.f32.mrb[0].mxu0
        %v2261 = vadd.f32 0.0, %v2260
        %v2262 = vpop.f32.mrb[0].mxu0
        %v2263 = vadd.f32 0.0, %v2262
        %2264 = vmatprep.mubr.bf16.mxu0 0
        %2265 = vmatmul.mubr.bf16.gmra.mrb[0].mxu0 %v1099
        %v2266 = vpop.f32.mrb[0].mxu0
        %v2267 = vadd.f32 0.0, %v2266
        %v2268 = vpop.f32.mrb[0].mxu0
        %v2269 = vadd.f32 0.0, %v2268
        %v2270 = vpop.f32.mrb[0].mxu0
        %v2271 = vadd.f32 0.0, %v2270
        %v2272 = vpop.f32.mrb[0].mxu0
        %v2273 = vadd.f32 0.0, %v2272
        %2274 = vmatprep.mubr.bf16.mxu0 0
        %2275 = vmatmul.mubr.bf16.gmra.mrb[0].mxu0 %v1102
        %v2276 = vpop.f32.mrb[0].mxu0
        %v2277 = vadd.f32 0.0, %v2276
        %v2278 = vpop.f32.mrb[0].mxu0
        %v2279 = vadd.f32 0.0, %v2278
        %v2280 = vpop.f32.mrb[0].mxu0
        %v2281 = vadd.f32 0.0, %v2280
        %v2282 = vpop.f32.mrb[0].mxu0
        %v2283 = vadd.f32 0.0, %v2282
        %2284 = vmatprep.mubr.bf16.mxu0 0
        %2285 = vmatmul.mubr.bf16.gmra.mrb[0].mxu0 %v1105
        %v2286 = vpop.f32.mrb[0].mxu0
        %v2287 = vadd.f32 0.0, %v2286
        %v2288 = vpop.f32.mrb[0].mxu0
        %v2289 = vadd.f32 0.0, %v2288
        %v2290 = vpop.f32.mrb[0].mxu0
        %v2291 = vadd.f32 0.0, %v2290
        %v2292 = vpop.f32.mrb[0].mxu0
        %v2293 = vadd.f32 0.0, %v2292
        %2294 = vmatprep.mubr.bf16.mxu0 0
        %2295 = vmatmul.mubr.bf16.gmra.mrb[0].mxu0 %v1108
        %v2296 = vpop.f32.mrb[0].mxu0
        %v2297 = vadd.f32 0.0, %v2296
        %v2298 = vpop.f32.mrb[0].mxu0
        %v2299 = vadd.f32 0.0, %v2298
        %v2300 = vpop.f32.mrb[0].mxu0
        %v2301 = vadd.f32 0.0, %v2300
        %v2302 = vpop.f32.mrb[0].mxu0
        %v2303 = vadd.f32 0.0, %v2302
        %2304 = vmatprep.mubr.bf16.mxu0 0
        %2305 = vmatmul.mubr.bf16.gmra.mrb[0].mxu0 %v1111
        %v2306 = vpop.f32.mrb[0].mxu0
        %v2307 = vadd.f32 0.0, %v2306
        %v2308 = vpop.f32.mrb[0].mxu0
        %v2309 = vadd.f32 0.0, %v2308
        %v2310 = vpop.f32.mrb[0].mxu0
        %v2311 = vadd.f32 0.0, %v2310
        %v2312 = vpop.f32.mrb[0].mxu0
        %v2313 = vadd.f32 0.0, %v2312
        %2314 = vmatprep.mubr.bf16.mxu0 0
        %2315 = vmatmul.mubr.bf16.gmra.mrb[0].mxu0 %v1114
        %v2316 = vpop.f32.mrb[0].mxu0
        %v2317 = vadd.f32 0.0, %v2316
        %v2318 = vpop.f32.mrb[0].mxu0
        %v2319 = vadd.f32 0.0, %v2318
        %v2320 = vpop.f32.mrb[0].mxu0
        %v2321 = vadd.f32 0.0, %v2320
        %v2322 = vpop.f32.mrb[0].mxu0
        %v2323 = vadd.f32 0.0, %v2322
        %2324 = vmatprep.mubr.bf16.mxu0 0
        %2325 = vmatmul.mubr.bf16.gmra.mrb[0].mxu0 %v1117
        %v2326 = vpop.f32.mrb[0].mxu0
        %v2327 = vadd.f32 0.0, %v2326
        %v2328 = vpop.f32.mrb[0].mxu0
        %v2329 = vadd.f32 0.0, %v2328
        %v2330 = vpop.f32.mrb[0].mxu0
        %v2331 = vadd.f32 0.0, %v2330
        %v2332 = vpop.f32.mrb[0].mxu0
        %v2333 = vadd.f32 0.0, %v2332
        %2334 = vmatprep.mubr.bf16.mxu0 0
        %2335 = vmatmul.mubr.bf16.gmra.mrb[0].mxu0 %v1120
        %v2336 = vpop.f32.mrb[0].mxu0
        %v2337 = vadd.f32 0.0, %v2336
        %v2338 = vpop.f32.mrb[0].mxu0
        %v2339 = vadd.f32 0.0, %v2338
        %v2340 = vpop.f32.mrb[0].mxu0
        %v2341 = vadd.f32 0.0, %v2340
        %v2342 = vpop.f32.mrb[0].mxu0
        %v2343 = vadd.f32 0.0, %v2342
        %2344 = vmatprep.mubr.bf16.mxu0 0
        %2345 = vmatmul.mubr.bf16.gmra.mrb[0].mxu0 %v1123
        %v2346 = vpop.f32.mrb[0].mxu0
        %v2347 = vadd.f32 0.0, %v2346
        %v2348 = vpop.f32.mrb[0].mxu0
        %v2349 = vadd.f32 0.0, %v2348
        %v2350 = vpop.f32.mrb[0].mxu0
        %v2351 = vadd.f32 0.0, %v2350
        %v2352 = vpop.f32.mrb[0].mxu0
        %v2353 = vadd.f32 0.0, %v2352
        %2354 = vdwg.mxu0
        %v2355 = vmax.f32 %v1953, %v2084
        %v2356 = vmax.f32 %v1954, %v2086
        %v2357 = vmax.f32 %v1955, %v2237
        %v2358 = vmax.f32 %v1956, %v2239
        %v2359 = vmax.f32 %v1957, %v2088
        %v2360 = vmax.f32 %v1958, %v2090
        %v2361 = vmax.f32 %v1959, %v2241
        %v2362 = vmax.f32 %v1960, %v2243
        %v2363 = vmax.f32 %v1961, %v2094
        %v2364 = vmax.f32 %v1962, %v2096
        %v2365 = vmax.f32 %v1963, %v2247
        %v2366 = vmax.f32 %v1964, %v2249
        %v2367 = vmax.f32 %v1965, %v2098
        %v2368 = vmax.f32 %v1966, %v2100
        %v2369 = vmax.f32 %v1967, %v2251
        %v2370 = vmax.f32 %v1968, %v2253
        %v2371 = vmax.f32 %v1969, %v2104
        %v2372 = vmax.f32 %v1970, %v2106
        %v2373 = vmax.f32 %v1971, %v2257
        %v2374 = vmax.f32 %v1972, %v2259
        %v2375 = vmax.f32 %v1973, %v2108
        %v2376 = vmax.f32 %v1974, %v2110
        %v2377 = vmax.f32 %v1975, %v2261
        %v2378 = vmax.f32 %v1976, %v2263
        %v2379 = vmax.f32 %v1977, %v2114
        %v2380 = vmax.f32 %v1978, %v2116
        %v2381 = vmax.f32 %v1979, %v2267
        %v2382 = vmax.f32 %v1980, %v2269
        %v2383 = vmax.f32 %v1981, %v2118
        %v2384 = vmax.f32 %v1982, %v2120
        %v2385 = vmax.f32 %v1983, %v2271
        %v2386 = vmax.f32 %v1984, %v2273
        %v2387 = vmax.f32 %v1985, %v2124
        %v2388 = vmax.f32 %v1986, %v2126
        %v2389 = vmax.f32 %v1987, %v2277
        %v2390 = vmax.f32 %v1988, %v2279
        %v2391 = vmax.f32 %v1989, %v2128
        %v2392 = vmax.f32 %v1990, %v2130
        %v2393 = vmax.f32 %v1991, %v2281
        %v2394 = vmax.f32 %v1992, %v2283
        %v2395 = vmax.f32 %v1993, %v2134
        %v2396 = vmax.f32 %v1994, %v2136
        %v2397 = vmax.f32 %v1995, %v2287
        %v2398 = vmax.f32 %v1996, %v2289
        %v2399 = vmax.f32 %v1997, %v2138
        %v2400 = vmax.f32 %v1998, %v2140
        %v2401 = vmax.f32 %v1999, %v2291
        %v2402 = vmax.f32 %v2000, %v2293
        %v2403 = vmax.f32 %v2001, %v2144
        %v2404 = vmax.f32 %v2002, %v2146
        %v2405 = vmax.f32 %v2003, %v2297
        %v2406 = vmax.f32 %v2004, %v2299
        %v2407 = vmax.f32 %v2005, %v2148
        %v2408 = vmax.f32 %v2006, %v2150
        %v2409 = vmax.f32 %v2007, %v2301
        %v2410 = vmax.f32 %v2008, %v2303
        %v2411 = vmax.f32 %v2009, %v2154
        %v2412 = vmax.f32 %v2010, %v2156
        %v2413 = vmax.f32 %v2011, %v2307
        %v2414 = vmax.f32 %v2012, %v2309
        %v2415 = vmax.f32 %v2013, %v2158
        %v2416 = vmax.f32 %v2014, %v2160
        %v2417 = vmax.f32 %v2015, %v2311
        %v2418 = vmax.f32 %v2016, %v2313
        %v2419 = vmax.f32 %v2017, %v2164
        %v2420 = vmax.f32 %v2018, %v2166
        %v2421 = vmax.f32 %v2019, %v2317
        %v2422 = vmax.f32 %v2020, %v2319
        %v2423 = vmax.f32 %v2021, %v2168
        %v2424 = vmax.f32 %v2022, %v2170
        %v2425 = vmax.f32 %v2023, %v2321
        %v2426 = vmax.f32 %v2024, %v2323
        %v2427 = vmax.f32 %v2025, %v2174
        %v2428 = vmax.f32 %v2026, %v2176
        %v2429 = vmax.f32 %v2027, %v2327
        %v2430 = vmax.f32 %v2028, %v2329
        %v2431 = vmax.f32 %v2029, %v2178
        %v2432 = vmax.f32 %v2030, %v2180
        %v2433 = vmax.f32 %v2031, %v2331
        %v2434 = vmax.f32 %v2032, %v2333
        %v2435 = vmax.f32 %v2033, %v2184
        %v2436 = vmax.f32 %v2034, %v2186
        %v2437 = vmax.f32 %v2035, %v2337
        %v2438 = vmax.f32 %v2036, %v2339
        %v2439 = vmax.f32 %v2037, %v2188
        %v2440 = vmax.f32 %v2038, %v2190
        %v2441 = vmax.f32 %v2039, %v2341
        %v2442 = vmax.f32 %v2040, %v2343
        %v2443 = vmax.f32 %v2041, %v2194
        %v2444 = vmax.f32 %v2042, %v2196
        %v2445 = vmax.f32 %v2043, %v2347
        %v2446 = vmax.f32 %v2044, %v2349
        %v2447 = vmax.f32 %v2045, %v2198
        %v2448 = vmax.f32 %v2046, %v2200
        %v2449 = vmax.f32 %v2047, %v2351
        %v2450 = vmax.f32 %v2048, %v2353
        %v2451 = vld [vmem:[%s2] sm:$0xf]
        %v2453 = vlaneseq
        %v2454 = vshrl.u32 %v2453, 7
        %v2455 = vsub.s32 0, %v2454
        %v2456 = vrot.slane %v2451, %v2455
        %v2457 = vlaneseq
        %v2458 = vshrl.u32 %v2457, 7
        %v2459 = vsub.s32 1, %v2458
        %v2460 = vrot.slane %v2451, %v2459
        %v2461 = vlaneseq
        %v2462 = vshrl.u32 %v2461, 7
        %v2463 = vsub.s32 2, %v2462
        %v2464 = vrot.slane %v2451, %v2463
        %v2465 = vlaneseq
        %v2466 = vshrl.u32 %v2465, 7
        %v2467 = vsub.s32 3, %v2466
        %v2468 = vrot.slane %v2451, %v2467
        %v2473 = vadd.f32 %v2355, %v2456
        %v2474 = vadd.f32 %v2356, %v2460
        %v2475 = vadd.f32 %v2357, %v2464
        %v2476 = vadd.f32 %v2358, %v2468
        %v2477 = vadd.f32 %v2359, %v2456
        %v2478 = vadd.f32 %v2360, %v2460
        %v2479 = vadd.f32 %v2361, %v2464
        %v2480 = vadd.f32 %v2362, %v2468
        %v2481 = vadd.f32 %v2363, %v2456
        %v2482 = vadd.f32 %v2364, %v2460
        %v2483 = vadd.f32 %v2365, %v2464
        %v2484 = vadd.f32 %v2366, %v2468
        %v2485 = vadd.f32 %v2367, %v2456
        %v2486 = vadd.f32 %v2368, %v2460
        %v2487 = vadd.f32 %v2369, %v2464
        %v2488 = vadd.f32 %v2370, %v2468
        %v2489 = vadd.f32 %v2371, %v2456
        %v2490 = vadd.f32 %v2372, %v2460
        %v2491 = vadd.f32 %v2373, %v2464
        %v2492 = vadd.f32 %v2374, %v2468
        %v2493 = vadd.f32 %v2375, %v2456
        %v2494 = vadd.f32 %v2376, %v2460
        %v2495 = vadd.f32 %v2377, %v2464
        %v2496 = vadd.f32 %v2378, %v2468
        %v2497 = vadd.f32 %v2379, %v2456
        %v2498 = vadd.f32 %v2380, %v2460
        %v2499 = vadd.f32 %v2381, %v2464
        %v2500 = vadd.f32 %v2382, %v2468
        %v2501 = vadd.f32 %v2383, %v2456
        %v2502 = vadd.f32 %v2384, %v2460
        %v2503 = vadd.f32 %v2385, %v2464
        %v2504 = vadd.f32 %v2386, %v2468
        %v2505 = vadd.f32 %v2387, %v2456
        %v2506 = vadd.f32 %v2388, %v2460
        %v2507 = vadd.f32 %v2389, %v2464
        %v2508 = vadd.f32 %v2390, %v2468
        %v2509 = vadd.f32 %v2391, %v2456
        %v2510 = vadd.f32 %v2392, %v2460
        %v2511 = vadd.f32 %v2393, %v2464
        %v2512 = vadd.f32 %v2394, %v2468
        %v2513 = vadd.f32 %v2395, %v2456
        %v2514 = vadd.f32 %v2396, %v2460
        %v2515 = vadd.f32 %v2397, %v2464
        %v2516 = vadd.f32 %v2398, %v2468
        %v2517 = vadd.f32 %v2399, %v2456
        %v2518 = vadd.f32 %v2400, %v2460
        %v2519 = vadd.f32 %v2401, %v2464
        %v2520 = vadd.f32 %v2402, %v2468
        %v2521 = vadd.f32 %v2403, %v2456
        %v2522 = vadd.f32 %v2404, %v2460
        %v2523 = vadd.f32 %v2405, %v2464
        %v2524 = vadd.f32 %v2406, %v2468
        %v2525 = vadd.f32 %v2407, %v2456
        %v2526 = vadd.f32 %v2408, %v2460
        %v2527 = vadd.f32 %v2409, %v2464
        %v2528 = vadd.f32 %v2410, %v2468
        %v2529 = vadd.f32 %v2411, %v2456
        %v2530 = vadd.f32 %v2412, %v2460
        %v2531 = vadd.f32 %v2413, %v2464
        %v2532 = vadd.f32 %v2414, %v2468
        %v2533 = vadd.f32 %v2415, %v2456
        %v2534 = vadd.f32 %v2416, %v2460
        %v2535 = vadd.f32 %v2417, %v2464
        %v2536 = vadd.f32 %v2418, %v2468
        %v2537 = vadd.f32 %v2419, %v2456
        %v2538 = vadd.f32 %v2420, %v2460
        %v2539 = vadd.f32 %v2421, %v2464
        %v2540 = vadd.f32 %v2422, %v2468
        %v2541 = vadd.f32 %v2423, %v2456
        %v2542 = vadd.f32 %v2424, %v2460
        %v2543 = vadd.f32 %v2425, %v2464
        %v2544 = vadd.f32 %v2426, %v2468
        %v2545 = vadd.f32 %v2427, %v2456
        %v2546 = vadd.f32 %v2428, %v2460
        %v2547 = vadd.f32 %v2429, %v2464
        %v2548 = vadd.f32 %v2430, %v2468
        %v2549 = vadd.f32 %v2431, %v2456
        %v2550 = vadd.f32 %v2432, %v2460
        %v2551 = vadd.f32 %v2433, %v2464
        %v2552 = vadd.f32 %v2434, %v2468
        %v2553 = vadd.f32 %v2435, %v2456
        %v2554 = vadd.f32 %v2436, %v2460
        %v2555 = vadd.f32 %v2437, %v2464
        %v2556 = vadd.f32 %v2438, %v2468
        %v2557 = vadd.f32 %v2439, %v2456
        %v2558 = vadd.f32 %v2440, %v2460
        %v2559 = vadd.f32 %v2441, %v2464
        %v2560 = vadd.f32 %v2442, %v2468
        %v2561 = vadd.f32 %v2443, %v2456
        %v2562 = vadd.f32 %v2444, %v2460
        %v2563 = vadd.f32 %v2445, %v2464
        %v2564 = vadd.f32 %v2446, %v2468
        %v2565 = vadd.f32 %v2447, %v2456
        %v2566 = vadd.f32 %v2448, %v2460
        %v2567 = vadd.f32 %v2449, %v2464
        %v2568 = vadd.f32 %v2450, %v2468
        %v2569 = vmax.f32 %v2473, 0.0
        %v2570 = vmax.f32 %v2474, 0.0
        %v2571 = vmax.f32 %v2475, 0.0
        %v2572 = vmax.f32 %v2476, 0.0
        %v2573 = vmax.f32 %v2477, 0.0
        %v2574 = vmax.f32 %v2478, 0.0
        %v2575 = vmax.f32 %v2479, 0.0
        %v2576 = vmax.f32 %v2480, 0.0
        %v2577 = vmax.f32 %v2481, 0.0
        %v2578 = vmax.f32 %v2482, 0.0
        %v2579 = vmax.f32 %v2483, 0.0
        %v2580 = vmax.f32 %v2484, 0.0
        %v2581 = vmax.f32 %v2485, 0.0
        %v2582 = vmax.f32 %v2486, 0.0
        %v2583 = vmax.f32 %v2487, 0.0
        %v2584 = vmax.f32 %v2488, 0.0
        %v2585 = vmax.f32 %v2489, 0.0
        %v2586 = vmax.f32 %v2490, 0.0
        %v2587 = vmax.f32 %v2491, 0.0
        %v2588 = vmax.f32 %v2492, 0.0
        %v2589 = vmax.f32 %v2493, 0.0
        %v2590 = vmax.f32 %v2494, 0.0
        %v2591 = vmax.f32 %v2495, 0.0
        %v2592 = vmax.f32 %v2496, 0.0
        %v2593 = vmax.f32 %v2497, 0.0
        %v2594 = vmax.f32 %v2498, 0.0
        %v2595 = vmax.f32 %v2499, 0.0
        %v2596 = vmax.f32 %v2500, 0.0
        %v2597 = vmax.f32 %v2501, 0.0
        %v2598 = vmax.f32 %v2502, 0.0
        %v2599 = vmax.f32 %v2503, 0.0
        %v2600 = vmax.f32 %v2504, 0.0
        %v2601 = vmax.f32 %v2505, 0.0
        %v2602 = vmax.f32 %v2506, 0.0
        %v2603 = vmax.f32 %v2507, 0.0
        %v2604 = vmax.f32 %v2508, 0.0
        %v2605 = vmax.f32 %v2509, 0.0
        %v2606 = vmax.f32 %v2510, 0.0
        %v2607 = vmax.f32 %v2511, 0.0
        %v2608 = vmax.f32 %v2512, 0.0
        %v2609 = vmax.f32 %v2513, 0.0
        %v2610 = vmax.f32 %v2514, 0.0
        %v2611 = vmax.f32 %v2515, 0.0
        %v2612 = vmax.f32 %v2516, 0.0
        %v2613 = vmax.f32 %v2517, 0.0
        %v2614 = vmax.f32 %v2518, 0.0
        %v2615 = vmax.f32 %v2519, 0.0
        %v2616 = vmax.f32 %v2520, 0.0
        %v2617 = vmax.f32 %v2521, 0.0
        %v2618 = vmax.f32 %v2522, 0.0
        %v2619 = vmax.f32 %v2523, 0.0
        %v2620 = vmax.f32 %v2524, 0.0
        %v2621 = vmax.f32 %v2525, 0.0
        %v2622 = vmax.f32 %v2526, 0.0
        %v2623 = vmax.f32 %v2527, 0.0
        %v2624 = vmax.f32 %v2528, 0.0
        %v2625 = vmax.f32 %v2529, 0.0
        %v2626 = vmax.f32 %v2530, 0.0
        %v2627 = vmax.f32 %v2531, 0.0
        %v2628 = vmax.f32 %v2532, 0.0
        %v2629 = vmax.f32 %v2533, 0.0
        %v2630 = vmax.f32 %v2534, 0.0
        %v2631 = vmax.f32 %v2535, 0.0
        %v2632 = vmax.f32 %v2536, 0.0
        %v2633 = vmax.f32 %v2537, 0.0
        %v2634 = vmax.f32 %v2538, 0.0
        %v2635 = vmax.f32 %v2539, 0.0
        %v2636 = vmax.f32 %v2540, 0.0
        %v2637 = vmax.f32 %v2541, 0.0
        %v2638 = vmax.f32 %v2542, 0.0
        %v2639 = vmax.f32 %v2543, 0.0
        %v2640 = vmax.f32 %v2544, 0.0
        %v2641 = vmax.f32 %v2545, 0.0
        %v2642 = vmax.f32 %v2546, 0.0
        %v2643 = vmax.f32 %v2547, 0.0
        %v2644 = vmax.f32 %v2548, 0.0
        %v2645 = vmax.f32 %v2549, 0.0
        %v2646 = vmax.f32 %v2550, 0.0
        %v2647 = vmax.f32 %v2551, 0.0
        %v2648 = vmax.f32 %v2552, 0.0
        %v2649 = vmax.f32 %v2553, 0.0
        %v2650 = vmax.f32 %v2554, 0.0
        %v2651 = vmax.f32 %v2555, 0.0
        %v2652 = vmax.f32 %v2556, 0.0
        %v2653 = vmax.f32 %v2557, 0.0
        %v2654 = vmax.f32 %v2558, 0.0
        %v2655 = vmax.f32 %v2559, 0.0
        %v2656 = vmax.f32 %v2560, 0.0
        %v2657 = vmax.f32 %v2561, 0.0
        %v2658 = vmax.f32 %v2562, 0.0
        %v2659 = vmax.f32 %v2563, 0.0
        %v2660 = vmax.f32 %v2564, 0.0
        %v2661 = vmax.f32 %v2565, 0.0
        %v2662 = vmax.f32 %v2566, 0.0
        %v2663 = vmax.f32 %v2567, 0.0
        %v2664 = vmax.f32 %v2568, 0.0
        %v2665 = vpack.c.bf16 %v2573, %v2569
        %v2666 = vpack.c.bf16 %v2574, %v2570
        %v2667 = vpack.c.bf16 %v2575, %v2571
        %v2668 = vpack.c.bf16 %v2576, %v2572
        %v2669 = vpack.c.bf16 %v2581, %v2577
        %v2670 = vpack.c.bf16 %v2582, %v2578
        %v2671 = vpack.c.bf16 %v2583, %v2579
        %v2672 = vpack.c.bf16 %v2584, %v2580
        %v2673 = vpack.c.bf16 %v2589, %v2585
        %v2674 = vpack.c.bf16 %v2590, %v2586
        %v2675 = vpack.c.bf16 %v2591, %v2587
        %v2676 = vpack.c.bf16 %v2592, %v2588
        %v2677 = vpack.c.bf16 %v2597, %v2593
        %v2678 = vpack.c.bf16 %v2598, %v2594
        %v2679 = vpack.c.bf16 %v2599, %v2595
        %v2680 = vpack.c.bf16 %v2600, %v2596
        %v2681 = vpack.c.bf16 %v2605, %v2601
        %v2682 = vpack.c.bf16 %v2606, %v2602
        %v2683 = vpack.c.bf16 %v2607, %v2603
        %v2684 = vpack.c.bf16 %v2608, %v2604
        %v2685 = vpack.c.bf16 %v2613, %v2609
        %v2686 = vpack.c.bf16 %v2614, %v2610
        %v2687 = vpack.c.bf16 %v2615, %v2611
        %v2688 = vpack.c.bf16 %v2616, %v2612
        %v2689 = vpack.c.bf16 %v2621, %v2617
        %v2690 = vpack.c.bf16 %v2622, %v2618
        %v2691 = vpack.c.bf16 %v2623, %v2619
        %v2692 = vpack.c.bf16 %v2624, %v2620
        %v2693 = vpack.c.bf16 %v2629, %v2625
        %v2694 = vpack.c.bf16 %v2630, %v2626
        %v2695 = vpack.c.bf16 %v2631, %v2627
        %v2696 = vpack.c.bf16 %v2632, %v2628
        %v2697 = vpack.c.bf16 %v2637, %v2633
        %v2698 = vpack.c.bf16 %v2638, %v2634
        %v2699 = vpack.c.bf16 %v2639, %v2635
        %v2700 = vpack.c.bf16 %v2640, %v2636
        %v2701 = vpack.c.bf16 %v2645, %v2641
        %v2702 = vpack.c.bf16 %v2646, %v2642
        %v2703 = vpack.c.bf16 %v2647, %v2643
        %v2704 = vpack.c.bf16 %v2648, %v2644
        %v2705 = vpack.c.bf16 %v2653, %v2649
        %v2706 = vpack.c.bf16 %v2654, %v2650
        %v2707 = vpack.c.bf16 %v2655, %v2651
        %v2708 = vpack.c.bf16 %v2656, %v2652
        %v2709 = vpack.c.bf16 %v2661, %v2657
        %v2710 = vpack.c.bf16 %v2662, %v2658
        %v2711 = vpack.c.bf16 %v2663, %v2659
        %v2712 = vpack.c.bf16 %v2664, %v2660
        %2713 = vst [vmem:[#allocation2] sm:$0xff] %v2665
        %2714 = vst [vmem:[#allocation2 + $0x8] sm:$0xff] %v2666
        %2715 = vst [vmem:[#allocation2 + $0x10] sm:$0xff] %v2667
        %2716 = vst [vmem:[#allocation2 + $0x18] sm:$0xff] %v2668
        %2717 = vst [vmem:[#allocation2 + $0x60] sm:$0xff] %v2669
        %2718 = vst [vmem:[#allocation2 + $0x68] sm:$0xff] %v2670
        %2719 = vst [vmem:[#allocation2 + $0x70] sm:$0xff] %v2671
        %2720 = vst [vmem:[#allocation2 + $0x78] sm:$0xff] %v2672
        %2721 = vst [vmem:[#allocation2 + $0xc0] sm:$0xff] %v2673
        %2722 = vst [vmem:[#allocation2 + $0xc8] sm:$0xff] %v2674
        %2723 = vst [vmem:[#allocation2 + $0xd0] sm:$0xff] %v2675
        %2724 = vst [vmem:[#allocation2 + $0xd8] sm:$0xff] %v2676
        %2725 = vst [vmem:[#allocation2 + $0x120] sm:$0xff] %v2677
        %2726 = vst [vmem:[#allocation2 + $0x128] sm:$0xff] %v2678
        %2727 = vst [vmem:[#allocation2 + $0x130] sm:$0xff] %v2679
        %2728 = vst [vmem:[#allocation2 + $0x138] sm:$0xff] %v2680
        %2729 = vst [vmem:[#allocation2 + $0x180] sm:$0xff] %v2681
        %2730 = vst [vmem:[#allocation2 + $0x188] sm:$0xff] %v2682
        %2731 = vst [vmem:[#allocation2 + $0x190] sm:$0xff] %v2683
        %2732 = vst [vmem:[#allocation2 + $0x198] sm:$0xff] %v2684
        %2733 = vst [vmem:[#allocation2 + $0x1e0] sm:$0xff] %v2685
        %2734 = vst [vmem:[#allocation2 + $0x1e8] sm:$0xff] %v2686
        %2735 = vst [vmem:[#allocation2 + $0x1f0] sm:$0xff] %v2687
        %2736 = vst [vmem:[#allocation2 + $0x1f8] sm:$0xff] %v2688
        %2737 = vst [vmem:[#allocation2 + $0x240] sm:$0xff] %v2689
        %2738 = vst [vmem:[#allocation2 + $0x248] sm:$0xff] %v2690
        %2739 = vst [vmem:[#allocation2 + $0x250] sm:$0xff] %v2691
        %2740 = vst [vmem:[#allocation2 + $0x258] sm:$0xff] %v2692
        %2741 = vst [vmem:[#allocation2 + $0x2a0] sm:$0xff] %v2693
        %2742 = vst [vmem:[#allocation2 + $0x2a8] sm:$0xff] %v2694
        %2743 = vst [vmem:[#allocation2 + $0x2b0] sm:$0xff] %v2695
        %2744 = vst [vmem:[#allocation2 + $0x2b8] sm:$0xff] %v2696
        %2745 = vst [vmem:[#allocation2 + $0x300] sm:$0xff] %v2697
        %2746 = vst [vmem:[#allocation2 + $0x308] sm:$0xff] %v2698
        %2747 = vst [vmem:[#allocation2 + $0x310] sm:$0xff] %v2699
        %2748 = vst [vmem:[#allocation2 + $0x318] sm:$0xff] %v2700
        %2749 = vst [vmem:[#allocation2 + $0x360] sm:$0xff] %v2701
        %2750 = vst [vmem:[#allocation2 + $0x368] sm:$0xff] %v2702
        %2751 = vst [vmem:[#allocation2 + $0x370] sm:$0xff] %v2703
        %2752 = vst [vmem:[#allocation2 + $0x378] sm:$0xff] %v2704
        %2753 = vst [vmem:[#allocation2 + $0x3c0] sm:$0xff] %v2705
        %2754 = vst [vmem:[#allocation2 + $0x3c8] sm:$0xff] %v2706
        %2755 = vst [vmem:[#allocation2 + $0x3d0] sm:$0xff] %v2707
        %2756 = vst [vmem:[#allocation2 + $0x3d8] sm:$0xff] %v2708
        %2757 = vst [vmem:[#allocation2 + $0x420] sm:$0xff] %v2709
        %2758 = vst [vmem:[#allocation2 + $0x428] sm:$0xff] %v2710
        %2759 = vst [vmem:[#allocation2 + $0x430] sm:$0xff] %v2711
        %2760 = vst [vmem:[#allocation2 + $0x438] sm:$0xff] %v2712
        %v2761 = vld [vmem:[%s1 + $0x10] sm:$0xff]
        %v2762 = vld [vmem:[%s1 + $0x18] sm:$0xff]
        %v2763 = vld [vmem:[%s1 + $0x70] sm:$0xff]
        %v2764 = vld [vmem:[%s1 + $0x78] sm:$0xff]
        %v2765 = vld [vmem:[%s1 + $0xd0] sm:$0xff]
        %v2766 = vld [vmem:[%s1 + $0xd8] sm:$0xff]
        %v2767 = vld [vmem:[%s1 + $0x130] sm:$0xff]
        %v2768 = vld [vmem:[%s1 + $0x138] sm:$0xff]
        %v2769 = vld [vmem:[%s1 + $0x190] sm:$0xff]
        %v2770 = vld [vmem:[%s1 + $0x198] sm:$0xff]
        %v2771 = vld [vmem:[%s1 + $0x1f0] sm:$0xff]
        %v2772 = vld [vmem:[%s1 + $0x1f8] sm:$0xff]
        %v2773 = vld [vmem:[%s1 + $0x250] sm:$0xff]
        %v2774 = vld [vmem:[%s1 + $0x258] sm:$0xff]
        %v2775 = vld [vmem:[%s1 + $0x2b0] sm:$0xff]
        %v2776 = vld [vmem:[%s1 + $0x2b8] sm:$0xff]
        %v2777 = vld [vmem:[%s1 + $0x310] sm:$0xff]
        %v2778 = vld [vmem:[%s1 + $0x318] sm:$0xff]
        %v2779 = vld [vmem:[%s1 + $0x370] sm:$0xff]
        %v2780 = vld [vmem:[%s1 + $0x378] sm:$0xff]
        %v2801 = vunpack.c.l.b16 %v2761
        %v2802 = vunpack.c.h.b16 %v2761
        %v2803 = vunpack.c.l.b16 %v2762
        %v2804 = vunpack.c.h.b16 %v2762
        %v2805 = vunpack.c.l.b16 %v2763
        %v2806 = vunpack.c.h.b16 %v2763
        %v2807 = vunpack.c.l.b16 %v2764
        %v2808 = vunpack.c.h.b16 %v2764
        %v2809 = vunpack.c.l.b16 %v2765
        %v2810 = vunpack.c.h.b16 %v2765
        %v2811 = vunpack.c.l.b16 %v2766
        %v2812 = vunpack.c.h.b16 %v2766
        %v2813 = vunpack.c.l.b16 %v2767
        %v2814 = vunpack.c.h.b16 %v2767
        %v2815 = vunpack.c.l.b16 %v2768
        %v2816 = vunpack.c.h.b16 %v2768
        %v2817 = vunpack.c.l.b16 %v2769
        %v2818 = vunpack.c.h.b16 %v2769
        %v2819 = vunpack.c.l.b16 %v2770
        %v2820 = vunpack.c.h.b16 %v2770
        %v2821 = vunpack.c.l.b16 %v2771
        %v2822 = vunpack.c.h.b16 %v2771
        %v2823 = vunpack.c.l.b16 %v2772
        %v2824 = vunpack.c.h.b16 %v2772
        %v2825 = vunpack.c.l.b16 %v2773
        %v2826 = vunpack.c.h.b16 %v2773
        %v2827 = vunpack.c.l.b16 %v2774
        %v2828 = vunpack.c.h.b16 %v2774
        %v2829 = vunpack.c.l.b16 %v2775
        %v2830 = vunpack.c.h.b16 %v2775
        %v2831 = vunpack.c.l.b16 %v2776
        %v2832 = vunpack.c.h.b16 %v2776
        %v2833 = vunpack.c.l.b16 %v2777
        %v2834 = vunpack.c.h.b16 %v2777
        %v2835 = vunpack.c.l.b16 %v2778
        %v2836 = vunpack.c.h.b16 %v2778
        %v2837 = vunpack.c.l.b16 %v2779
        %v2838 = vunpack.c.h.b16 %v2779
        %v2839 = vunpack.c.l.b16 %v2780
        %v2840 = vunpack.c.h.b16 %v2780
        %v2841 = vpack.c.b16 %v2805, %v2801
        %v2842 = vpack.c.b16 %v2806, %v2802
        %v2843 = vpack.c.b16 %v2807, %v2803
        %v2844 = vpack.c.b16 %v2808, %v2804
        %v2845 = vpack.c.b16 %v2813, %v2809
        %v2846 = vpack.c.b16 %v2814, %v2810
        %v2847 = vpack.c.b16 %v2815, %v2811
        %v2848 = vpack.c.b16 %v2816, %v2812
        %v2849 = vpack.c.b16 %v2821, %v2817
        %v2850 = vpack.c.b16 %v2822, %v2818
        %v2851 = vpack.c.b16 %v2823, %v2819
        %v2852 = vpack.c.b16 %v2824, %v2820
        %v2853 = vpack.c.b16 %v2829, %v2825
        %v2854 = vpack.c.b16 %v2830, %v2826
        %v2855 = vpack.c.b16 %v2831, %v2827
        %v2856 = vpack.c.b16 %v2832, %v2828
        %v2857 = vpack.c.b16 %v2837, %v2833
        %v2858 = vpack.c.b16 %v2838, %v2834
        %v2859 = vpack.c.b16 %v2839, %v2835
        %v2860 = vpack.c.b16 %v2840, %v2836
        %2881 = vmatprep.subr.bf16.mxu0 %v2842
        %2882 = vmatpush1.bf16.msra.mxu0 %v2841
        %2883 = vmatprep.subr.bf16.mxu0 %v2846
        %2884 = vmatpush1.bf16.msra.mxu0 %v2845
        %2885 = vmatprep.subr.bf16.mxu0 %v2850
        %2886 = vmatpush1.bf16.msra.mxu0 %v2849
        %2887 = vmatprep.subr.bf16.mxu0 %v2854
        %2888 = vmatpush1.bf16.msra.mxu0 %v2853
        %2889 = vmatprep.subr.bf16.mxu0 %v2858
        %2890 = vmatpush1.bf16.msra.mxu0 %v2857
        %2891 = vmatprep.subr.bf16.mxu0 0
        %2892 = vmatpush1.bf16.msra.mxu0 0
        %2893 = vmatprep.subr.bf16.mxu0 0
        %2894 = vmatpush1.bf16.msra.mxu0 0
        %2895 = vmatprep.subr.bf16.mxu0 0
        %2896 = vmatpush1.bf16.msra.mxu0 0
        %2897 = vmatprep.subr.bf16.mxu0 0
        %2898 = vmatpush1.bf16.msra.mxu0 0
        %2899 = vmatprep.subr.bf16.mxu0 0
        %2900 = vmatpush1.bf16.msra.mxu0 0
        %2901 = vmatprep.subr.bf16.mxu0 0
        %2902 = vmatpush1.bf16.msra.mxu0 0
        %2903 = vmatprep.subr.bf16.mxu0 0
        %2904 = vmatpush1.bf16.msra.mxu0 0
        %2905 = vmatprep.subr.bf16.mxu0 0
        %2906 = vmatpush1.bf16.msra.mxu0 0
        %2907 = vmatprep.subr.bf16.mxu0 0
        %2908 = vmatpush1.bf16.msra.mxu0 0
        %2909 = vmatprep.subr.bf16.mxu0 0
        %2910 = vmatpush1.bf16.msra.mxu0 0
        %2911 = vmatprep.subr.bf16.mxu0 0
        %2912 = vmatpush1.bf16.msra.mxu0 0
        %2913 = vmatprep.mubr.bf16.mxu0 0
        %2914 = vmatmul.mubr.bf16.gmra.mrb[0].mxu0 %v688
        %v2915 = vpop.f32.mrb[0].mxu0
        %v2916 = vadd.f32 0.0, %v2915
        %v2917 = vpop.f32.mrb[0].mxu0
        %v2918 = vadd.f32 0.0, %v2917
        %v2919 = vpop.f32.mrb[0].mxu0
        %v2920 = vadd.f32 0.0, %v2919
        %v2921 = vpop.f32.mrb[0].mxu0
        %v2922 = vadd.f32 0.0, %v2921
        %2923 = vmatprep.mubr.bf16.mxu0 0
        %2924 = vmatmul.mubr.bf16.gmra.mrb[0].mxu0 %v691
        %v2925 = vpop.f32.mrb[0].mxu0
        %v2926 = vadd.f32 0.0, %v2925
        %v2927 = vpop.f32.mrb[0].mxu0
        %v2928 = vadd.f32 0.0, %v2927
        %v2929 = vpop.f32.mrb[0].mxu0
        %v2930 = vadd.f32 0.0, %v2929
        %v2931 = vpop.f32.mrb[0].mxu0
        %v2932 = vadd.f32 0.0, %v2931
        %2933 = vmatprep.mubr.bf16.mxu0 0
        %2934 = vmatmul.mubr.bf16.gmra.mrb[0].mxu0 %v694
        %v2935 = vpop.f32.mrb[0].mxu0
        %v2936 = vadd.f32 0.0, %v2935
        %v2937 = vpop.f32.mrb[0].mxu0
        %v2938 = vadd.f32 0.0, %v2937
        %v2939 = vpop.f32.mrb[0].mxu0
        %v2940 = vadd.f32 0.0, %v2939
        %v2941 = vpop.f32.mrb[0].mxu0
        %v2942 = vadd.f32 0.0, %v2941
        %2943 = vmatprep.mubr.bf16.mxu0 0
        %2944 = vmatmul.mubr.bf16.gmra.mrb[0].mxu0 %v697
        %v2945 = vpop.f32.mrb[0].mxu0
        %v2946 = vadd.f32 0.0, %v2945
        %v2947 = vpop.f32.mrb[0].mxu0
        %v2948 = vadd.f32 0.0, %v2947
        %v2949 = vpop.f32.mrb[0].mxu0
        %v2950 = vadd.f32 0.0, %v2949
        %v2951 = vpop.f32.mrb[0].mxu0
        %v2952 = vadd.f32 0.0, %v2951
        %2953 = vmatprep.mubr.bf16.mxu0 0
        %2954 = vmatmul.mubr.bf16.gmra.mrb[0].mxu0 %v700
        %v2955 = vpop.f32.mrb[0].mxu0
        %v2956 = vadd.f32 0.0, %v2955
        %v2957 = vpop.f32.mrb[0].mxu0
        %v2958 = vadd.f32 0.0, %v2957
        %v2959 = vpop.f32.mrb[0].mxu0
        %v2960 = vadd.f32 0.0, %v2959
        %v2961 = vpop.f32.mrb[0].mxu0
        %v2962 = vadd.f32 0.0, %v2961
        %2963 = vmatprep.mubr.bf16.mxu0 0
        %2964 = vmatmul.mubr.bf16.gmra.mrb[0].mxu0 %v703
        %v2965 = vpop.f32.mrb[0].mxu0
        %v2966 = vadd.f32 0.0, %v2965
        %v2967 = vpop.f32.mrb[0].mxu0
        %v2968 = vadd.f32 0.0, %v2967
        %v2969 = vpop.f32.mrb[0].mxu0
        %v2970 = vadd.f32 0.0, %v2969
        %v2971 = vpop.f32.mrb[0].mxu0
        %v2972 = vadd.f32 0.0, %v2971
        %2973 = vmatprep.mubr.bf16.mxu0 0
        %2974 = vmatmul.mubr.bf16.gmra.mrb[0].mxu0 %v706
        %v2975 = vpop.f32.mrb[0].mxu0
        %v2976 = vadd.f32 0.0, %v2975
        %v2977 = vpop.f32.mrb[0].mxu0
        %v2978 = vadd.f32 0.0, %v2977
        %v2979 = vpop.f32.mrb[0].mxu0
        %v2980 = vadd.f32 0.0, %v2979
        %v2981 = vpop.f32.mrb[0].mxu0
        %v2982 = vadd.f32 0.0, %v2981
        %2983 = vmatprep.mubr.bf16.mxu0 0
        %2984 = vmatmul.mubr.bf16.gmra.mrb[0].mxu0 %v709
        %v2985 = vpop.f32.mrb[0].mxu0
        %v2986 = vadd.f32 0.0, %v2985
        %v2987 = vpop.f32.mrb[0].mxu0
        %v2988 = vadd.f32 0.0, %v2987
        %v2989 = vpop.f32.mrb[0].mxu0
        %v2990 = vadd.f32 0.0, %v2989
        %v2991 = vpop.f32.mrb[0].mxu0
        %v2992 = vadd.f32 0.0, %v2991
        %2993 = vmatprep.mubr.bf16.mxu0 0
        %2994 = vmatmul.mubr.bf16.gmra.mrb[0].mxu0 %v712
        %v2995 = vpop.f32.mrb[0].mxu0
        %v2996 = vadd.f32 0.0, %v2995
        %v2997 = vpop.f32.mrb[0].mxu0
        %v2998 = vadd.f32 0.0, %v2997
        %v2999 = vpop.f32.mrb[0].mxu0
        %v3000 = vadd.f32 0.0, %v2999
        %v3001 = vpop.f32.mrb[0].mxu0
        %v3002 = vadd.f32 0.0, %v3001
        %3003 = vmatprep.mubr.bf16.mxu0 0
        %3004 = vmatmul.mubr.bf16.gmra.mrb[0].mxu0 %v715
        %v3005 = vpop.f32.mrb[0].mxu0
        %v3006 = vadd.f32 0.0, %v3005
        %v3007 = vpop.f32.mrb[0].mxu0
        %v3008 = vadd.f32 0.0, %v3007
        %v3009 = vpop.f32.mrb[0].mxu0
        %v3010 = vadd.f32 0.0, %v3009
        %v3011 = vpop.f32.mrb[0].mxu0
        %v3012 = vadd.f32 0.0, %v3011
        %3013 = vmatprep.mubr.bf16.mxu0 0
        %3014 = vmatmul.mubr.bf16.gmra.mrb[0].mxu0 %v718
        %v3015 = vpop.f32.mrb[0].mxu0
        %v3016 = vadd.f32 0.0, %v3015
        %v3017 = vpop.f32.mrb[0].mxu0
        %v3018 = vadd.f32 0.0, %v3017
        %v3019 = vpop.f32.mrb[0].mxu0
        %v3020 = vadd.f32 0.0, %v3019
        %v3021 = vpop.f32.mrb[0].mxu0
        %v3022 = vadd.f32 0.0, %v3021
        %3023 = vmatprep.mubr.bf16.mxu0 0
        %3024 = vmatmul.mubr.bf16.gmra.mrb[0].mxu0 %v721
        %v3025 = vpop.f32.mrb[0].mxu0
        %v3026 = vadd.f32 0.0, %v3025
        %v3027 = vpop.f32.mrb[0].mxu0
        %v3028 = vadd.f32 0.0, %v3027
        %v3029 = vpop.f32.mrb[0].mxu0
        %v3030 = vadd.f32 0.0, %v3029
        %v3031 = vpop.f32.mrb[0].mxu0
        %v3032 = vadd.f32 0.0, %v3031
        %3033 = vdwg.mxu0
        %3034 = vmatprep.subr.bf16.mxu0 %v2844
        %3035 = vmatpush1.bf16.msra.mxu0 %v2843
        %3036 = vmatprep.subr.bf16.mxu0 %v2848
        %3037 = vmatpush1.bf16.msra.mxu0 %v2847
        %3038 = vmatprep.subr.bf16.mxu0 %v2852
        %3039 = vmatpush1.bf16.msra.mxu0 %v2851
        %3040 = vmatprep.subr.bf16.mxu0 %v2856
        %3041 = vmatpush1.bf16.msra.mxu0 %v2855
        %3042 = vmatprep.subr.bf16.mxu0 %v2860
        %3043 = vmatpush1.bf16.msra.mxu0 %v2859
        %3044 = vmatprep.subr.bf16.mxu0 0
        %3045 = vmatpush1.bf16.msra.mxu0 0
        %3046 = vmatprep.subr.bf16.mxu0 0
        %3047 = vmatpush1.bf16.msra.mxu0 0
        %3048 = vmatprep.subr.bf16.mxu0 0
        %3049 = vmatpush1.bf16.msra.mxu0 0
        %3050 = vmatprep.subr.bf16.mxu0 0
        %3051 = vmatpush1.bf16.msra.mxu0 0
        %3052 = vmatprep.subr.bf16.mxu0 0
        %3053 = vmatpush1.bf16.msra.mxu0 0
        %3054 = vmatprep.subr.bf16.mxu0 0
        %3055 = vmatpush1.bf16.msra.mxu0 0
        %3056 = vmatprep.subr.bf16.mxu0 0
        %3057 = vmatpush1.bf16.msra.mxu0 0
        %3058 = vmatprep.subr.bf16.mxu0 0
        %3059 = vmatpush1.bf16.msra.mxu0 0
        %3060 = vmatprep.subr.bf16.mxu0 0
        %3061 = vmatpush1.bf16.msra.mxu0 0
        %3062 = vmatprep.subr.bf16.mxu0 0
        %3063 = vmatpush1.bf16.msra.mxu0 0
        %3064 = vmatprep.subr.bf16.mxu0 0
        %3065 = vmatpush1.bf16.msra.mxu0 0
        %3066 = vmatprep.mubr.bf16.mxu0 0
        %3067 = vmatmul.mubr.bf16.gmra.mrb[0].mxu0 %v688
        %v3068 = vpop.f32.mrb[0].mxu0
        %v3069 = vadd.f32 0.0, %v3068
        %v3070 = vpop.f32.mrb[0].mxu0
        %v3071 = vadd.f32 0.0, %v3070
        %v3072 = vpop.f32.mrb[0].mxu0
        %v3073 = vadd.f32 0.0, %v3072
        %v3074 = vpop.f32.mrb[0].mxu0
        %v3075 = vadd.f32 0.0, %v3074
        %3076 = vmatprep.mubr.bf16.mxu0 0
        %3077 = vmatmul.mubr.bf16.gmra.mrb[0].mxu0 %v691
        %v3078 = vpop.f32.mrb[0].mxu0
        %v3079 = vadd.f32 0.0, %v3078
        %v3080 = vpop.f32.mrb[0].mxu0
        %v3081 = vadd.f32 0.0, %v3080
        %v3082 = vpop.f32.mrb[0].mxu0
        %v3083 = vadd.f32 0.0, %v3082
        %v3084 = vpop.f32.mrb[0].mxu0
        %v3085 = vadd.f32 0.0, %v3084
        %3086 = vmatprep.mubr.bf16.mxu0 0
        %3087 = vmatmul.mubr.bf16.gmra.mrb[0].mxu0 %v694
        %v3088 = vpop.f32.mrb[0].mxu0
        %v3089 = vadd.f32 0.0, %v3088
        %v3090 = vpop.f32.mrb[0].mxu0
        %v3091 = vadd.f32 0.0, %v3090
        %v3092 = vpop.f32.mrb[0].mxu0
        %v3093 = vadd.f32 0.0, %v3092
        %v3094 = vpop.f32.mrb[0].mxu0
        %v3095 = vadd.f32 0.0, %v3094
        %3096 = vmatprep.mubr.bf16.mxu0 0
        %3097 = vmatmul.mubr.bf16.gmra.mrb[0].mxu0 %v697
        %v3098 = vpop.f32.mrb[0].mxu0
        %v3099 = vadd.f32 0.0, %v3098
        %v3100 = vpop.f32.mrb[0].mxu0
        %v3101 = vadd.f32 0.0, %v3100
        %v3102 = vpop.f32.mrb[0].mxu0
        %v3103 = vadd.f32 0.0, %v3102
        %v3104 = vpop.f32.mrb[0].mxu0
        %v3105 = vadd.f32 0.0, %v3104
        %3106 = vmatprep.mubr.bf16.mxu0 0
        %3107 = vmatmul.mubr.bf16.gmra.mrb[0].mxu0 %v700
        %v3108 = vpop.f32.mrb[0].mxu0
        %v3109 = vadd.f32 0.0, %v3108
        %v3110 = vpop.f32.mrb[0].mxu0
        %v3111 = vadd.f32 0.0, %v3110
        %v3112 = vpop.f32.mrb[0].mxu0
        %v3113 = vadd.f32 0.0, %v3112
        %v3114 = vpop.f32.mrb[0].mxu0
        %v3115 = vadd.f32 0.0, %v3114
        %3116 = vmatprep.mubr.bf16.mxu0 0
        %3117 = vmatmul.mubr.bf16.gmra.mrb[0].mxu0 %v703
        %v3118 = vpop.f32.mrb[0].mxu0
        %v3119 = vadd.f32 0.0, %v3118
        %v3120 = vpop.f32.mrb[0].mxu0
        %v3121 = vadd.f32 0.0, %v3120
        %v3122 = vpop.f32.mrb[0].mxu0
        %v3123 = vadd.f32 0.0, %v3122
        %v3124 = vpop.f32.mrb[0].mxu0
        %v3125 = vadd.f32 0.0, %v3124
        %3126 = vmatprep.mubr.bf16.mxu0 0
        %3127 = vmatmul.mubr.bf16.gmra.mrb[0].mxu0 %v706
        %v3128 = vpop.f32.mrb[0].mxu0
        %v3129 = vadd.f32 0.0, %v3128
        %v3130 = vpop.f32.mrb[0].mxu0
        %v3131 = vadd.f32 0.0, %v3130
        %v3132 = vpop.f32.mrb[0].mxu0
        %v3133 = vadd.f32 0.0, %v3132
        %v3134 = vpop.f32.mrb[0].mxu0
        %v3135 = vadd.f32 0.0, %v3134
        %3136 = vmatprep.mubr.bf16.mxu0 0
        %3137 = vmatmul.mubr.bf16.gmra.mrb[0].mxu0 %v709
        %v3138 = vpop.f32.mrb[0].mxu0
        %v3139 = vadd.f32 0.0, %v3138
        %v3140 = vpop.f32.mrb[0].mxu0
        %v3141 = vadd.f32 0.0, %v3140
        %v3142 = vpop.f32.mrb[0].mxu0
        %v3143 = vadd.f32 0.0, %v3142
        %v3144 = vpop.f32.mrb[0].mxu0
        %v3145 = vadd.f32 0.0, %v3144
        %3146 = vmatprep.mubr.bf16.mxu0 0
        %3147 = vmatmul.mubr.bf16.gmra.mrb[0].mxu0 %v712
        %v3148 = vpop.f32.mrb[0].mxu0
        %v3149 = vadd.f32 0.0, %v3148
        %v3150 = vpop.f32.mrb[0].mxu0
        %v3151 = vadd.f32 0.0, %v3150
        %v3152 = vpop.f32.mrb[0].mxu0
        %v3153 = vadd.f32 0.0, %v3152
        %v3154 = vpop.f32.mrb[0].mxu0
        %v3155 = vadd.f32 0.0, %v3154
        %3156 = vmatprep.mubr.bf16.mxu0 0
        %3157 = vmatmul.mubr.bf16.gmra.mrb[0].mxu0 %v715
        %v3158 = vpop.f32.mrb[0].mxu0
        %v3159 = vadd.f32 0.0, %v3158
        %v3160 = vpop.f32.mrb[0].mxu0
        %v3161 = vadd.f32 0.0, %v3160
        %v3162 = vpop.f32.mrb[0].mxu0
        %v3163 = vadd.f32 0.0, %v3162
        %v3164 = vpop.f32.mrb[0].mxu0
        %v3165 = vadd.f32 0.0, %v3164
        %3166 = vmatprep.mubr.bf16.mxu0 0
        %3167 = vmatmul.mubr.bf16.gmra.mrb[0].mxu0 %v718
        %v3168 = vpop.f32.mrb[0].mxu0
        %v3169 = vadd.f32 0.0, %v3168
        %v3170 = vpop.f32.mrb[0].mxu0
        %v3171 = vadd.f32 0.0, %v3170
        %v3172 = vpop.f32.mrb[0].mxu0
        %v3173 = vadd.f32 0.0, %v3172
        %v3174 = vpop.f32.mrb[0].mxu0
        %v3175 = vadd.f32 0.0, %v3174
        %3176 = vmatprep.mubr.bf16.mxu0 0
        %3177 = vmatmul.mubr.bf16.gmra.mrb[0].mxu0 %v721
        %v3178 = vpop.f32.mrb[0].mxu0
        %v3179 = vadd.f32 0.0, %v3178
        %v3180 = vpop.f32.mrb[0].mxu0
        %v3181 = vadd.f32 0.0, %v3180
        %v3182 = vpop.f32.mrb[0].mxu0
        %v3183 = vadd.f32 0.0, %v3182
        %v3184 = vpop.f32.mrb[0].mxu0
        %v3185 = vadd.f32 0.0, %v3184
        %3186 = vdwg.mxu0
        %3187 = vmatprep.subr.bf16.mxu0 %v2842
        %3188 = vmatpush1.bf16.msra.mxu0 %v2841
        %3189 = vmatprep.subr.bf16.mxu0 %v2846
        %3190 = vmatpush1.bf16.msra.mxu0 %v2845
        %3191 = vmatprep.subr.bf16.mxu0 %v2850
        %3192 = vmatpush1.bf16.msra.mxu0 %v2849
        %3193 = vmatprep.subr.bf16.mxu0 %v2854
        %3194 = vmatpush1.bf16.msra.mxu0 %v2853
        %3195 = vmatprep.subr.bf16.mxu0 %v2858
        %3196 = vmatpush1.bf16.msra.mxu0 %v2857
        %3197 = vmatprep.subr.bf16.mxu0 0
        %3198 = vmatpush1.bf16.msra.mxu0 0
        %3199 = vmatprep.subr.bf16.mxu0 0
        %3200 = vmatpush1.bf16.msra.mxu0 0
        %3201 = vmatprep.subr.bf16.mxu0 0
        %3202 = vmatpush1.bf16.msra.mxu0 0
        %3203 = vmatprep.subr.bf16.mxu0 0
        %3204 = vmatpush1.bf16.msra.mxu0 0
        %3205 = vmatprep.subr.bf16.mxu0 0
        %3206 = vmatpush1.bf16.msra.mxu0 0
        %3207 = vmatprep.subr.bf16.mxu0 0
        %3208 = vmatpush1.bf16.msra.mxu0 0
        %3209 = vmatprep.subr.bf16.mxu0 0
        %3210 = vmatpush1.bf16.msra.mxu0 0
        %3211 = vmatprep.subr.bf16.mxu0 0
        %3212 = vmatpush1.bf16.msra.mxu0 0
        %3213 = vmatprep.subr.bf16.mxu0 0
        %3214 = vmatpush1.bf16.msra.mxu0 0
        %3215 = vmatprep.subr.bf16.mxu0 0
        %3216 = vmatpush1.bf16.msra.mxu0 0
        %3217 = vmatprep.subr.bf16.mxu0 0
        %3218 = vmatpush1.bf16.msra.mxu0 0
        %3219 = vmatprep.mubr.bf16.mxu0 0
        %3220 = vmatmul.mubr.bf16.gmra.mrb[0].mxu0 %v1090
        %v3221 = vpop.f32.mrb[0].mxu0
        %v3222 = vadd.f32 0.0, %v3221
        %v3223 = vpop.f32.mrb[0].mxu0
        %v3224 = vadd.f32 0.0, %v3223
        %v3225 = vpop.f32.mrb[0].mxu0
        %v3226 = vadd.f32 0.0, %v3225
        %v3227 = vpop.f32.mrb[0].mxu0
        %v3228 = vadd.f32 0.0, %v3227
        %3229 = vmatprep.mubr.bf16.mxu0 0
        %3230 = vmatmul.mubr.bf16.gmra.mrb[0].mxu0 %v1093
        %v3231 = vpop.f32.mrb[0].mxu0
        %v3232 = vadd.f32 0.0, %v3231
        %v3233 = vpop.f32.mrb[0].mxu0
        %v3234 = vadd.f32 0.0, %v3233
        %v3235 = vpop.f32.mrb[0].mxu0
        %v3236 = vadd.f32 0.0, %v3235
        %v3237 = vpop.f32.mrb[0].mxu0
        %v3238 = vadd.f32 0.0, %v3237
        %3239 = vmatprep.mubr.bf16.mxu0 0
        %3240 = vmatmul.mubr.bf16.gmra.mrb[0].mxu0 %v1096
        %v3241 = vpop.f32.mrb[0].mxu0
        %v3242 = vadd.f32 0.0, %v3241
        %v3243 = vpop.f32.mrb[0].mxu0
        %v3244 = vadd.f32 0.0, %v3243
        %v3245 = vpop.f32.mrb[0].mxu0
        %v3246 = vadd.f32 0.0, %v3245
        %v3247 = vpop.f32.mrb[0].mxu0
        %v3248 = vadd.f32 0.0, %v3247
        %3249 = vmatprep.mubr.bf16.mxu0 0
        %3250 = vmatmul.mubr.bf16.gmra.mrb[0].mxu0 %v1099
        %v3251 = vpop.f32.mrb[0].mxu0
        %v3252 = vadd.f32 0.0, %v3251
        %v3253 = vpop.f32.mrb[0].mxu0
        %v3254 = vadd.f32 0.0, %v3253
        %v3255 = vpop.f32.mrb[0].mxu0
        %v3256 = vadd.f32 0.0, %v3255
        %v3257 = vpop.f32.mrb[0].mxu0
        %v3258 = vadd.f32 0.0, %v3257
        %3259 = vmatprep.mubr.bf16.mxu0 0
        %3260 = vmatmul.mubr.bf16.gmra.mrb[0].mxu0 %v1102
        %v3261 = vpop.f32.mrb[0].mxu0
        %v3262 = vadd.f32 0.0, %v3261
        %v3263 = vpop.f32.mrb[0].mxu0
        %v3264 = vadd.f32 0.0, %v3263
        %v3265 = vpop.f32.mrb[0].mxu0
        %v3266 = vadd.f32 0.0, %v3265
        %v3267 = vpop.f32.mrb[0].mxu0
        %v3268 = vadd.f32 0.0, %v3267
        %3269 = vmatprep.mubr.bf16.mxu0 0
        %3270 = vmatmul.mubr.bf16.gmra.mrb[0].mxu0 %v1105
        %v3271 = vpop.f32.mrb[0].mxu0
        %v3272 = vadd.f32 0.0, %v3271
        %v3273 = vpop.f32.mrb[0].mxu0
        %v3274 = vadd.f32 0.0, %v3273
        %v3275 = vpop.f32.mrb[0].mxu0
        %v3276 = vadd.f32 0.0, %v3275
        %v3277 = vpop.f32.mrb[0].mxu0
        %v3278 = vadd.f32 0.0, %v3277
        %3279 = vmatprep.mubr.bf16.mxu0 0
        %3280 = vmatmul.mubr.bf16.gmra.mrb[0].mxu0 %v1108
        %v3281 = vpop.f32.mrb[0].mxu0
        %v3282 = vadd.f32 0.0, %v3281
        %v3283 = vpop.f32.mrb[0].mxu0
        %v3284 = vadd.f32 0.0, %v3283
        %v3285 = vpop.f32.mrb[0].mxu0
        %v3286 = vadd.f32 0.0, %v3285
        %v3287 = vpop.f32.mrb[0].mxu0
        %v3288 = vadd.f32 0.0, %v3287
        %3289 = vmatprep.mubr.bf16.mxu0 0
        %3290 = vmatmul.mubr.bf16.gmra.mrb[0].mxu0 %v1111
        %v3291 = vpop.f32.mrb[0].mxu0
        %v3292 = vadd.f32 0.0, %v3291
        %v3293 = vpop.f32.mrb[0].mxu0
        %v3294 = vadd.f32 0.0, %v3293
        %v3295 = vpop.f32.mrb[0].mxu0
        %v3296 = vadd.f32 0.0, %v3295
        %v3297 = vpop.f32.mrb[0].mxu0
        %v3298 = vadd.f32 0.0, %v3297
        %3299 = vmatprep.mubr.bf16.mxu0 0
        %3300 = vmatmul.mubr.bf16.gmra.mrb[0].mxu0 %v1114
        %v3301 = vpop.f32.mrb[0].mxu0
        %v3302 = vadd.f32 0.0, %v3301
        %v3303 = vpop.f32.mrb[0].mxu0
        %v3304 = vadd.f32 0.0, %v3303
        %v3305 = vpop.f32.mrb[0].mxu0
        %v3306 = vadd.f32 0.0, %v3305
        %v3307 = vpop.f32.mrb[0].mxu0
        %v3308 = vadd.f32 0.0, %v3307
        %3309 = vmatprep.mubr.bf16.mxu0 0
        %3310 = vmatmul.mubr.bf16.gmra.mrb[0].mxu0 %v1117
        %v3311 = vpop.f32.mrb[0].mxu0
        %v3312 = vadd.f32 0.0, %v3311
        %v3313 = vpop.f32.mrb[0].mxu0
        %v3314 = vadd.f32 0.0, %v3313
        %v3315 = vpop.f32.mrb[0].mxu0
        %v3316 = vadd.f32 0.0, %v3315
        %v3317 = vpop.f32.mrb[0].mxu0
        %v3318 = vadd.f32 0.0, %v3317
        %3319 = vmatprep.mubr.bf16.mxu0 0
        %3320 = vmatmul.mubr.bf16.gmra.mrb[0].mxu0 %v1120
        %v3321 = vpop.f32.mrb[0].mxu0
        %v3322 = vadd.f32 0.0, %v3321
        %v3323 = vpop.f32.mrb[0].mxu0
        %v3324 = vadd.f32 0.0, %v3323
        %v3325 = vpop.f32.mrb[0].mxu0
        %v3326 = vadd.f32 0.0, %v3325
        %v3327 = vpop.f32.mrb[0].mxu0
        %v3328 = vadd.f32 0.0, %v3327
        %3329 = vmatprep.mubr.bf16.mxu0 0
        %3330 = vmatmul.mubr.bf16.gmra.mrb[0].mxu0 %v1123
        %v3331 = vpop.f32.mrb[0].mxu0
        %v3332 = vadd.f32 0.0, %v3331
        %v3333 = vpop.f32.mrb[0].mxu0
        %v3334 = vadd.f32 0.0, %v3333
        %v3335 = vpop.f32.mrb[0].mxu0
        %v3336 = vadd.f32 0.0, %v3335
        %v3337 = vpop.f32.mrb[0].mxu0
        %v3338 = vadd.f32 0.0, %v3337
        %3339 = vdwg.mxu0
        %3340 = vmatprep.subr.bf16.mxu0 %v2844
        %3341 = vmatpush1.bf16.msra.mxu0 %v2843
        %3342 = vmatprep.subr.bf16.mxu0 %v2848
        %3343 = vmatpush1.bf16.msra.mxu0 %v2847
        %3344 = vmatprep.subr.bf16.mxu0 %v2852
        %3345 = vmatpush1.bf16.msra.mxu0 %v2851
        %3346 = vmatprep.subr.bf16.mxu0 %v2856
        %3347 = vmatpush1.bf16.msra.mxu0 %v2855
        %3348 = vmatprep.subr.bf16.mxu0 %v2860
        %3349 = vmatpush1.bf16.msra.mxu0 %v2859
        %3350 = vmatprep.subr.bf16.mxu0 0
        %3351 = vmatpush1.bf16.msra.mxu0 0
        %3352 = vmatprep.subr.bf16.mxu0 0
        %3353 = vmatpush1.bf16.msra.mxu0 0
        %3354 = vmatprep.subr.bf16.mxu0 0
        %3355 = vmatpush1.bf16.msra.mxu0 0
        %3356 = vmatprep.subr.bf16.mxu0 0
        %3357 = vmatpush1.bf16.msra.mxu0 0
        %3358 = vmatprep.subr.bf16.mxu0 0
        %3359 = vmatpush1.bf16.msra.mxu0 0
        %3360 = vmatprep.subr.bf16.mxu0 0
        %3361 = vmatpush1.bf16.msra.mxu0 0
        %3362 = vmatprep.subr.bf16.mxu0 0
        %3363 = vmatpush1.bf16.msra.mxu0 0
        %3364 = vmatprep.subr.bf16.mxu0 0
        %3365 = vmatpush1.bf16.msra.mxu0 0
        %3366 = vmatprep.subr.bf16.mxu0 0
        %3367 = vmatpush1.bf16.msra.mxu0 0
        %3368 = vmatprep.subr.bf16.mxu0 0
        %3369 = vmatpush1.bf16.msra.mxu0 0
        %3370 = vmatprep.subr.bf16.mxu0 0
        %3371 = vmatpush1.bf16.msra.mxu0 0
        %3372 = vmatprep.mubr.bf16.mxu0 0
        %3373 = vmatmul.mubr.bf16.gmra.mrb[0].mxu0 %v1090
        %v3374 = vpop.f32.mrb[0].mxu0
        %v3375 = vadd.f32 0.0, %v3374
        %v3376 = vpop.f32.mrb[0].mxu0
        %v3377 = vadd.f32 0.0, %v3376
        %v3378 = vpop.f32.mrb[0].mxu0
        %v3379 = vadd.f32 0.0, %v3378
        %v3380 = vpop.f32.mrb[0].mxu0
        %v3381 = vadd.f32 0.0, %v3380
        %3382 = vmatprep.mubr.bf16.mxu0 0
        %3383 = vmatmul.mubr.bf16.gmra.mrb[0].mxu0 %v1093
        %v3384 = vpop.f32.mrb[0].mxu0
        %v3385 = vadd.f32 0.0, %v3384
        %v3386 = vpop.f32.mrb[0].mxu0
        %v3387 = vadd.f32 0.0, %v3386
        %v3388 = vpop.f32.mrb[0].mxu0
        %v3389 = vadd.f32 0.0, %v3388
        %v3390 = vpop.f32.mrb[0].mxu0
        %v3391 = vadd.f32 0.0, %v3390
        %3392 = vmatprep.mubr.bf16.mxu0 0
        %3393 = vmatmul.mubr.bf16.gmra.mrb[0].mxu0 %v1096
        %v3394 = vpop.f32.mrb[0].mxu0
        %v3395 = vadd.f32 0.0, %v3394
        %v3396 = vpop.f32.mrb[0].mxu0
        %v3397 = vadd.f32 0.0, %v3396
        %v3398 = vpop.f32.mrb[0].mxu0
        %v3399 = vadd.f32 0.0, %v3398
        %v3400 = vpop.f32.mrb[0].mxu0
        %v3401 = vadd.f32 0.0, %v3400
        %3402 = vmatprep.mubr.bf16.mxu0 0
        %3403 = vmatmul.mubr.bf16.gmra.mrb[0].mxu0 %v1099
        %v3404 = vpop.f32.mrb[0].mxu0
        %v3405 = vadd.f32 0.0, %v3404
        %v3406 = vpop.f32.mrb[0].mxu0
        %v3407 = vadd.f32 0.0, %v3406
        %v3408 = vpop.f32.mrb[0].mxu0
        %v3409 = vadd.f32 0.0, %v3408
        %v3410 = vpop.f32.mrb[0].mxu0
        %v3411 = vadd.f32 0.0, %v3410
        %3412 = vmatprep.mubr.bf16.mxu0 0
        %3413 = vmatmul.mubr.bf16.gmra.mrb[0].mxu0 %v1102
        %v3414 = vpop.f32.mrb[0].mxu0
        %v3415 = vadd.f32 0.0, %v3414
        %v3416 = vpop.f32.mrb[0].mxu0
        %v3417 = vadd.f32 0.0, %v3416
        %v3418 = vpop.f32.mrb[0].mxu0
        %v3419 = vadd.f32 0.0, %v3418
        %v3420 = vpop.f32.mrb[0].mxu0
        %v3421 = vadd.f32 0.0, %v3420
        %3422 = vmatprep.mubr.bf16.mxu0 0
        %3423 = vmatmul.mubr.bf16.gmra.mrb[0].mxu0 %v1105
        %v3424 = vpop.f32.mrb[0].mxu0
        %v3425 = vadd.f32 0.0, %v3424
        %v3426 = vpop.f32.mrb[0].mxu0
        %v3427 = vadd.f32 0.0, %v3426
        %v3428 = vpop.f32.mrb[0].mxu0
        %v3429 = vadd.f32 0.0, %v3428
        %v3430 = vpop.f32.mrb[0].mxu0
        %v3431 = vadd.f32 0.0, %v3430
        %3432 = vmatprep.mubr.bf16.mxu0 0
        %3433 = vmatmul.mubr.bf16.gmra.mrb[0].mxu0 %v1108
        %v3434 = vpop.f32.mrb[0].mxu0
        %v3435 = vadd.f32 0.0, %v3434
        %v3436 = vpop.f32.mrb[0].mxu0
        %v3437 = vadd.f32 0.0, %v3436
        %v3438 = vpop.f32.mrb[0].mxu0
        %v3439 = vadd.f32 0.0, %v3438
        %v3440 = vpop.f32.mrb[0].mxu0
        %v3441 = vadd.f32 0.0, %v3440
        %3442 = vmatprep.mubr.bf16.mxu0 0
        %3443 = vmatmul.mubr.bf16.gmra.mrb[0].mxu0 %v1111
        %v3444 = vpop.f32.mrb[0].mxu0
        %v3445 = vadd.f32 0.0, %v3444
        %v3446 = vpop.f32.mrb[0].mxu0
        %v3447 = vadd.f32 0.0, %v3446
        %v3448 = vpop.f32.mrb[0].mxu0
        %v3449 = vadd.f32 0.0, %v3448
        %v3450 = vpop.f32.mrb[0].mxu0
        %v3451 = vadd.f32 0.0, %v3450
        %3452 = vmatprep.mubr.bf16.mxu0 0
        %3453 = vmatmul.mubr.bf16.gmra.mrb[0].mxu0 %v1114
        %v3454 = vpop.f32.mrb[0].mxu0
        %v3455 = vadd.f32 0.0, %v3454
        %v3456 = vpop.f32.mrb[0].mxu0
        %v3457 = vadd.f32 0.0, %v3456
        %v3458 = vpop.f32.mrb[0].mxu0
        %v3459 = vadd.f32 0.0, %v3458
        %v3460 = vpop.f32.mrb[0].mxu0
        %v3461 = vadd.f32 0.0, %v3460
        %3462 = vmatprep.mubr.bf16.mxu0 0
        %3463 = vmatmul.mubr.bf16.gmra.mrb[0].mxu0 %v1117
        %v3464 = vpop.f32.mrb[0].mxu0
        %v3465 = vadd.f32 0.0, %v3464
        %v3466 = vpop.f32.mrb[0].mxu0
        %v3467 = vadd.f32 0.0, %v3466
        %v3468 = vpop.f32.mrb[0].mxu0
        %v3469 = vadd.f32 0.0, %v3468
        %v3470 = vpop.f32.mrb[0].mxu0
        %v3471 = vadd.f32 0.0, %v3470
        %3472 = vmatprep.mubr.bf16.mxu0 0
        %3473 = vmatmul.mubr.bf16.gmra.mrb[0].mxu0 %v1120
        %v3474 = vpop.f32.mrb[0].mxu0
        %v3475 = vadd.f32 0.0, %v3474
        %v3476 = vpop.f32.mrb[0].mxu0
        %v3477 = vadd.f32 0.0, %v3476
        %v3478 = vpop.f32.mrb[0].mxu0
        %v3479 = vadd.f32 0.0, %v3478
        %v3480 = vpop.f32.mrb[0].mxu0
        %v3481 = vadd.f32 0.0, %v3480
        %3482 = vmatprep.mubr.bf16.mxu0 0
        %3483 = vmatmul.mubr.bf16.gmra.mrb[0].mxu0 %v1123
        %v3484 = vpop.f32.mrb[0].mxu0
        %v3485 = vadd.f32 0.0, %v3484
        %v3486 = vpop.f32.mrb[0].mxu0
        %v3487 = vadd.f32 0.0, %v3486
        %v3488 = vpop.f32.mrb[0].mxu0
        %v3489 = vadd.f32 0.0, %v3488
        %v3490 = vpop.f32.mrb[0].mxu0
        %v3491 = vadd.f32 0.0, %v3490
        %3492 = vdwg.mxu0
        %v3493 = vmax.f32 %v2916, %v3222
        %v3494 = vmax.f32 %v2918, %v3224
        %v3495 = vmax.f32 %v3069, %v3375
        %v3496 = vmax.f32 %v3071, %v3377
        %v3497 = vmax.f32 %v2920, %v3226
        %v3498 = vmax.f32 %v2922, %v3228
        %v3499 = vmax.f32 %v3073, %v3379
        %v3500 = vmax.f32 %v3075, %v3381
        %v3501 = vmax.f32 %v2926, %v3232
        %v3502 = vmax.f32 %v2928, %v3234
        %v3503 = vmax.f32 %v3079, %v3385
        %v3504 = vmax.f32 %v3081, %v3387
        %v3505 = vmax.f32 %v2930, %v3236
        %v3506 = vmax.f32 %v2932, %v3238
        %v3507 = vmax.f32 %v3083, %v3389
        %v3508 = vmax.f32 %v3085, %v3391
        %v3509 = vmax.f32 %v2936, %v3242
        %v3510 = vmax.f32 %v2938, %v3244
        %v3511 = vmax.f32 %v3089, %v3395
        %v3512 = vmax.f32 %v3091, %v3397
        %v3513 = vmax.f32 %v2940, %v3246
        %v3514 = vmax.f32 %v2942, %v3248
        %v3515 = vmax.f32 %v3093, %v3399
        %v3516 = vmax.f32 %v3095, %v3401
        %v3517 = vmax.f32 %v2946, %v3252
        %v3518 = vmax.f32 %v2948, %v3254
        %v3519 = vmax.f32 %v3099, %v3405
        %v3520 = vmax.f32 %v3101, %v3407
        %v3521 = vmax.f32 %v2950, %v3256
        %v3522 = vmax.f32 %v2952, %v3258
        %v3523 = vmax.f32 %v3103, %v3409
        %v3524 = vmax.f32 %v3105, %v3411
        %v3525 = vmax.f32 %v2956, %v3262
        %v3526 = vmax.f32 %v2958, %v3264
        %v3527 = vmax.f32 %v3109, %v3415
        %v3528 = vmax.f32 %v3111, %v3417
        %v3529 = vmax.f32 %v2960, %v3266
        %v3530 = vmax.f32 %v2962, %v3268
        %v3531 = vmax.f32 %v3113, %v3419
        %v3532 = vmax.f32 %v3115, %v3421
        %v3533 = vmax.f32 %v2966, %v3272
        %v3534 = vmax.f32 %v2968, %v3274
        %v3535 = vmax.f32 %v3119, %v3425
        %v3536 = vmax.f32 %v3121, %v3427
        %v3537 = vmax.f32 %v2970, %v3276
        %v3538 = vmax.f32 %v2972, %v3278
        %v3539 = vmax.f32 %v3123, %v3429
        %v3540 = vmax.f32 %v3125, %v3431
        %v3541 = vmax.f32 %v2976, %v3282
        %v3542 = vmax.f32 %v2978, %v3284
        %v3543 = vmax.f32 %v3129, %v3435
        %v3544 = vmax.f32 %v3131, %v3437
        %v3545 = vmax.f32 %v2980, %v3286
        %v3546 = vmax.f32 %v2982, %v3288
        %v3547 = vmax.f32 %v3133, %v3439
        %v3548 = vmax.f32 %v3135, %v3441
        %v3549 = vmax.f32 %v2986, %v3292
        %v3550 = vmax.f32 %v2988, %v3294
        %v3551 = vmax.f32 %v3139, %v3445
        %v3552 = vmax.f32 %v3141, %v3447
        %v3553 = vmax.f32 %v2990, %v3296
        %v3554 = vmax.f32 %v2992, %v3298
        %v3555 = vmax.f32 %v3143, %v3449
        %v3556 = vmax.f32 %v3145, %v3451
        %v3557 = vmax.f32 %v2996, %v3302
        %v3558 = vmax.f32 %v2998, %v3304
        %v3559 = vmax.f32 %v3149, %v3455
        %v3560 = vmax.f32 %v3151, %v3457
        %v3561 = vmax.f32 %v3000, %v3306
        %v3562 = vmax.f32 %v3002, %v3308
        %v3563 = vmax.f32 %v3153, %v3459
        %v3564 = vmax.f32 %v3155, %v3461
        %v3565 = vmax.f32 %v3006, %v3312
        %v3566 = vmax.f32 %v3008, %v3314
        %v3567 = vmax.f32 %v3159, %v3465
        %v3568 = vmax.f32 %v3161, %v3467
        %v3569 = vmax.f32 %v3010, %v3316
        %v3570 = vmax.f32 %v3012, %v3318
        %v3571 = vmax.f32 %v3163, %v3469
        %v3572 = vmax.f32 %v3165, %v3471
        %v3573 = vmax.f32 %v3016, %v3322
        %v3574 = vmax.f32 %v3018, %v3324
        %v3575 = vmax.f32 %v3169, %v3475
        %v3576 = vmax.f32 %v3171, %v3477
        %v3577 = vmax.f32 %v3020, %v3326
        %v3578 = vmax.f32 %v3022, %v3328
        %v3579 = vmax.f32 %v3173, %v3479
        %v3580 = vmax.f32 %v3175, %v3481
        %v3581 = vmax.f32 %v3026, %v3332
        %v3582 = vmax.f32 %v3028, %v3334
        %v3583 = vmax.f32 %v3179, %v3485
        %v3584 = vmax.f32 %v3181, %v3487
        %v3585 = vmax.f32 %v3030, %v3336
        %v3586 = vmax.f32 %v3032, %v3338
        %v3587 = vmax.f32 %v3183, %v3489
        %v3588 = vmax.f32 %v3185, %v3491
        %v3589 = vld [vmem:[%s1 + $0x40] sm:$0xff]
        %v3590 = vld [vmem:[%s1 + $0x48] sm:$0xff]
        %v3591 = vld [vmem:[%s1 + $0xa0] sm:$0xff]
        %v3592 = vld [vmem:[%s1 + $0xa8] sm:$0xff]
        %v3593 = vld [vmem:[%s1 + $0x100] sm:$0xff]
        %v3594 = vld [vmem:[%s1 + $0x108] sm:$0xff]
        %v3595 = vld [vmem:[%s1 + $0x160] sm:$0xff]
        %v3596 = vld [vmem:[%s1 + $0x168] sm:$0xff]
        %v3597 = vld [vmem:[%s1 + $0x1c0] sm:$0xff]
        %v3598 = vld [vmem:[%s1 + $0x1c8] sm:$0xff]
        %v3599 = vld [vmem:[%s1 + $0x220] sm:$0xff]
        %v3600 = vld [vmem:[%s1 + $0x228] sm:$0xff]
        %v3601 = vld [vmem:[%s1 + $0x280] sm:$0xff]
        %v3602 = vld [vmem:[%s1 + $0x288] sm:$0xff]
        %v3603 = vld [vmem:[%s1 + $0x2e0] sm:$0xff]
        %v3604 = vld [vmem:[%s1 + $0x2e8] sm:$0xff]
        %v3605 = vld [vmem:[%s1 + $0x340] sm:$0xff]
        %v3606 = vld [vmem:[%s1 + $0x348] sm:$0xff]
        %v3607 = vld [vmem:[%s1 + $0x3a0] sm:$0xff]
        %v3608 = vld [vmem:[%s1 + $0x3a8] sm:$0xff]
        %v3629 = vunpack.c.l.b16 %v3589
        %v3630 = vunpack.c.h.b16 %v3589
        %v3631 = vunpack.c.l.b16 %v3590
        %v3632 = vunpack.c.h.b16 %v3590
        %v3633 = vunpack.c.l.b16 %v3591
        %v3634 = vunpack.c.h.b16 %v3591
        %v3635 = vunpack.c.l.b16 %v3592
        %v3636 = vunpack.c.h.b16 %v3592
        %v3637 = vunpack.c.l.b16 %v3593
        %v3638 = vunpack.c.h.b16 %v3593
        %v3639 = vunpack.c.l.b16 %v3594
        %v3640 = vunpack.c.h.b16 %v3594
        %v3641 = vunpack.c.l.b16 %v3595
        %v3642 = vunpack.c.h.b16 %v3595
        %v3643 = vunpack.c.l.b16 %v3596
        %v3644 = vunpack.c.h.b16 %v3596
        %v3645 = vunpack.c.l.b16 %v3597
        %v3646 = vunpack.c.h.b16 %v3597
        %v3647 = vunpack.c.l.b16 %v3598
        %v3648 = vunpack.c.h.b16 %v3598
        %v3649 = vunpack.c.l.b16 %v3599
        %v3650 = vunpack.c.h.b16 %v3599
        %v3651 = vunpack.c.l.b16 %v3600
        %v3652 = vunpack.c.h.b16 %v3600
        %v3653 = vunpack.c.l.b16 %v3601
        %v3654 = vunpack.c.h.b16 %v3601
        %v3655 = vunpack.c.l.b16 %v3602
        %v3656 = vunpack.c.h.b16 %v3602
        %v3657 = vunpack.c.l.b16 %v3603
        %v3658 = vunpack.c.h.b16 %v3603
        %v3659 = vunpack.c.l.b16 %v3604
        %v3660 = vunpack.c.h.b16 %v3604
        %v3661 = vunpack.c.l.b16 %v3605
        %v3662 = vunpack.c.h.b16 %v3605
        %v3663 = vunpack.c.l.b16 %v3606
        %v3664 = vunpack.c.h.b16 %v3606
        %v3665 = vunpack.c.l.b16 %v3607
        %v3666 = vunpack.c.h.b16 %v3607
        %v3667 = vunpack.c.l.b16 %v3608
        %v3668 = vunpack.c.h.b16 %v3608
        %v3669 = vpack.c.b16 %v3633, %v3629
        %v3670 = vpack.c.b16 %v3634, %v3630
        %v3671 = vpack.c.b16 %v3635, %v3631
        %v3672 = vpack.c.b16 %v3636, %v3632
        %v3673 = vpack.c.b16 %v3641, %v3637
        %v3674 = vpack.c.b16 %v3642, %v3638
        %v3675 = vpack.c.b16 %v3643, %v3639
        %v3676 = vpack.c.b16 %v3644, %v3640
        %v3677 = vpack.c.b16 %v3649, %v3645
        %v3678 = vpack.c.b16 %v3650, %v3646
        %v3679 = vpack.c.b16 %v3651, %v3647
        %v3680 = vpack.c.b16 %v3652, %v3648
        %v3681 = vpack.c.b16 %v3657, %v3653
        %v3682 = vpack.c.b16 %v3658, %v3654
        %v3683 = vpack.c.b16 %v3659, %v3655
        %v3684 = vpack.c.b16 %v3660, %v3656
        %v3685 = vpack.c.b16 %v3665, %v3661
        %v3686 = vpack.c.b16 %v3666, %v3662
        %v3687 = vpack.c.b16 %v3667, %v3663
        %v3688 = vpack.c.b16 %v3668, %v3664
        %3709 = vmatprep.subr.bf16.mxu0 %v3670
        %3710 = vmatpush1.bf16.msra.mxu0 %v3669
        %3711 = vmatprep.subr.bf16.mxu0 %v3674
        %3712 = vmatpush1.bf16.msra.mxu0 %v3673
        %3713 = vmatprep.subr.bf16.mxu0 %v3678
        %3714 = vmatpush1.bf16.msra.mxu0 %v3677
        %3715 = vmatprep.subr.bf16.mxu0 %v3682
        %3716 = vmatpush1.bf16.msra.mxu0 %v3681
        %3717 = vmatprep.subr.bf16.mxu0 %v3686
        %3718 = vmatpush1.bf16.msra.mxu0 %v3685
        %3719 = vmatprep.subr.bf16.mxu0 0
        %3720 = vmatpush1.bf16.msra.mxu0 0
        %3721 = vmatprep.subr.bf16.mxu0 0
        %3722 = vmatpush1.bf16.msra.mxu0 0
        %3723 = vmatprep.subr.bf16.mxu0 0
        %3724 = vmatpush1.bf16.msra.mxu0 0
        %3725 = vmatprep.subr.bf16.mxu0 0
        %3726 = vmatpush1.bf16.msra.mxu0 0
        %3727 = vmatprep.subr.bf16.mxu0 0
        %3728 = vmatpush1.bf16.msra.mxu0 0
        %3729 = vmatprep.subr.bf16.mxu0 0
        %3730 = vmatpush1.bf16.msra.mxu0 0
        %3731 = vmatprep.subr.bf16.mxu0 0
        %3732 = vmatpush1.bf16.msra.mxu0 0
        %3733 = vmatprep.subr.bf16.mxu0 0
        %3734 = vmatpush1.bf16.msra.mxu0 0
        %3735 = vmatprep.subr.bf16.mxu0 0
        %3736 = vmatpush1.bf16.msra.mxu0 0
        %3737 = vmatprep.subr.bf16.mxu0 0
        %3738 = vmatpush1.bf16.msra.mxu0 0
        %3739 = vmatprep.subr.bf16.mxu0 0
        %3740 = vmatpush1.bf16.msra.mxu0 0
        %3741 = vmatprep.mubr.bf16.mxu0 0
        %3742 = vmatmul.mubr.bf16.gmra.mrb[0].mxu0 %v688
        %v3743 = vpop.f32.mrb[0].mxu0
        %v3744 = vadd.f32 0.0, %v3743
        %v3745 = vpop.f32.mrb[0].mxu0
        %v3746 = vadd.f32 0.0, %v3745
        %v3747 = vpop.f32.mrb[0].mxu0
        %v3748 = vadd.f32 0.0, %v3747
        %v3749 = vpop.f32.mrb[0].mxu0
        %v3750 = vadd.f32 0.0, %v3749
        %3751 = vmatprep.mubr.bf16.mxu0 0
        %3752 = vmatmul.mubr.bf16.gmra.mrb[0].mxu0 %v691
        %v3753 = vpop.f32.mrb[0].mxu0
        %v3754 = vadd.f32 0.0, %v3753
        %v3755 = vpop.f32.mrb[0].mxu0
        %v3756 = vadd.f32 0.0, %v3755
        %v3757 = vpop.f32.mrb[0].mxu0
        %v3758 = vadd.f32 0.0, %v3757
        %v3759 = vpop.f32.mrb[0].mxu0
        %v3760 = vadd.f32 0.0, %v3759
        %3761 = vmatprep.mubr.bf16.mxu0 0
        %3762 = vmatmul.mubr.bf16.gmra.mrb[0].mxu0 %v694
        %v3763 = vpop.f32.mrb[0].mxu0
        %v3764 = vadd.f32 0.0, %v3763
        %v3765 = vpop.f32.mrb[0].mxu0
        %v3766 = vadd.f32 0.0, %v3765
        %v3767 = vpop.f32.mrb[0].mxu0
        %v3768 = vadd.f32 0.0, %v3767
        %v3769 = vpop.f32.mrb[0].mxu0
        %v3770 = vadd.f32 0.0, %v3769
        %3771 = vmatprep.mubr.bf16.mxu0 0
        %3772 = vmatmul.mubr.bf16.gmra.mrb[0].mxu0 %v697
        %v3773 = vpop.f32.mrb[0].mxu0
        %v3774 = vadd.f32 0.0, %v3773
        %v3775 = vpop.f32.mrb[0].mxu0
        %v3776 = vadd.f32 0.0, %v3775
        %v3777 = vpop.f32.mrb[0].mxu0
        %v3778 = vadd.f32 0.0, %v3777
        %v3779 = vpop.f32.mrb[0].mxu0
        %v3780 = vadd.f32 0.0, %v3779
        %3781 = vmatprep.mubr.bf16.mxu0 0
        %3782 = vmatmul.mubr.bf16.gmra.mrb[0].mxu0 %v700
        %v3783 = vpop.f32.mrb[0].mxu0
        %v3784 = vadd.f32 0.0, %v3783
        %v3785 = vpop.f32.mrb[0].mxu0
        %v3786 = vadd.f32 0.0, %v3785
        %v3787 = vpop.f32.mrb[0].mxu0
        %v3788 = vadd.f32 0.0, %v3787
        %v3789 = vpop.f32.mrb[0].mxu0
        %v3790 = vadd.f32 0.0, %v3789
        %3791 = vmatprep.mubr.bf16.mxu0 0
        %3792 = vmatmul.mubr.bf16.gmra.mrb[0].mxu0 %v703
        %v3793 = vpop.f32.mrb[0].mxu0
        %v3794 = vadd.f32 0.0, %v3793
        %v3795 = vpop.f32.mrb[0].mxu0
        %v3796 = vadd.f32 0.0, %v3795
        %v3797 = vpop.f32.mrb[0].mxu0
        %v3798 = vadd.f32 0.0, %v3797
        %v3799 = vpop.f32.mrb[0].mxu0
        %v3800 = vadd.f32 0.0, %v3799
        %3801 = vmatprep.mubr.bf16.mxu0 0
        %3802 = vmatmul.mubr.bf16.gmra.mrb[0].mxu0 %v706
        %v3803 = vpop.f32.mrb[0].mxu0
        %v3804 = vadd.f32 0.0, %v3803
        %v3805 = vpop.f32.mrb[0].mxu0
        %v3806 = vadd.f32 0.0, %v3805
        %v3807 = vpop.f32.mrb[0].mxu0
        %v3808 = vadd.f32 0.0, %v3807
        %v3809 = vpop.f32.mrb[0].mxu0
        %v3810 = vadd.f32 0.0, %v3809
        %3811 = vmatprep.mubr.bf16.mxu0 0
        %3812 = vmatmul.mubr.bf16.gmra.mrb[0].mxu0 %v709
        %v3813 = vpop.f32.mrb[0].mxu0
        %v3814 = vadd.f32 0.0, %v3813
        %v3815 = vpop.f32.mrb[0].mxu0
        %v3816 = vadd.f32 0.0, %v3815
        %v3817 = vpop.f32.mrb[0].mxu0
        %v3818 = vadd.f32 0.0, %v3817
        %v3819 = vpop.f32.mrb[0].mxu0
        %v3820 = vadd.f32 0.0, %v3819
        %3821 = vmatprep.mubr.bf16.mxu0 0
        %3822 = vmatmul.mubr.bf16.gmra.mrb[0].mxu0 %v712
        %v3823 = vpop.f32.mrb[0].mxu0
        %v3824 = vadd.f32 0.0, %v3823
        %v3825 = vpop.f32.mrb[0].mxu0
        %v3826 = vadd.f32 0.0, %v3825
        %v3827 = vpop.f32.mrb[0].mxu0
        %v3828 = vadd.f32 0.0, %v3827
        %v3829 = vpop.f32.mrb[0].mxu0
        %v3830 = vadd.f32 0.0, %v3829
        %3831 = vmatprep.mubr.bf16.mxu0 0
        %3832 = vmatmul.mubr.bf16.gmra.mrb[0].mxu0 %v715
        %v3833 = vpop.f32.mrb[0].mxu0
        %v3834 = vadd.f32 0.0, %v3833
        %v3835 = vpop.f32.mrb[0].mxu0
        %v3836 = vadd.f32 0.0, %v3835
        %v3837 = vpop.f32.mrb[0].mxu0
        %v3838 = vadd.f32 0.0, %v3837
        %v3839 = vpop.f32.mrb[0].mxu0
        %v3840 = vadd.f32 0.0, %v3839
        %3841 = vmatprep.mubr.bf16.mxu0 0
        %3842 = vmatmul.mubr.bf16.gmra.mrb[0].mxu0 %v718
        %v3843 = vpop.f32.mrb[0].mxu0
        %v3844 = vadd.f32 0.0, %v3843
        %v3845 = vpop.f32.mrb[0].mxu0
        %v3846 = vadd.f32 0.0, %v3845
        %v3847 = vpop.f32.mrb[0].mxu0
        %v3848 = vadd.f32 0.0, %v3847
        %v3849 = vpop.f32.mrb[0].mxu0
        %v3850 = vadd.f32 0.0, %v3849
        %3851 = vmatprep.mubr.bf16.mxu0 0
        %3852 = vmatmul.mubr.bf16.gmra.mrb[0].mxu0 %v721
        %v3853 = vpop.f32.mrb[0].mxu0
        %v3854 = vadd.f32 0.0, %v3853
        %v3855 = vpop.f32.mrb[0].mxu0
        %v3856 = vadd.f32 0.0, %v3855
        %v3857 = vpop.f32.mrb[0].mxu0
        %v3858 = vadd.f32 0.0, %v3857
        %v3859 = vpop.f32.mrb[0].mxu0
        %v3860 = vadd.f32 0.0, %v3859
        %3861 = vdwg.mxu0
        %3862 = vmatprep.subr.bf16.mxu0 %v3672
        %3863 = vmatpush1.bf16.msra.mxu0 %v3671
        %3864 = vmatprep.subr.bf16.mxu0 %v3676
        %3865 = vmatpush1.bf16.msra.mxu0 %v3675
        %3866 = vmatprep.subr.bf16.mxu0 %v3680
        %3867 = vmatpush1.bf16.msra.mxu0 %v3679
        %3868 = vmatprep.subr.bf16.mxu0 %v3684
        %3869 = vmatpush1.bf16.msra.mxu0 %v3683
        %3870 = vmatprep.subr.bf16.mxu0 %v3688
        %3871 = vmatpush1.bf16.msra.mxu0 %v3687
        %3872 = vmatprep.subr.bf16.mxu0 0
        %3873 = vmatpush1.bf16.msra.mxu0 0
        %3874 = vmatprep.subr.bf16.mxu0 0
        %3875 = vmatpush1.bf16.msra.mxu0 0
        %3876 = vmatprep.subr.bf16.mxu0 0
        %3877 = vmatpush1.bf16.msra.mxu0 0
        %3878 = vmatprep.subr.bf16.mxu0 0
        %3879 = vmatpush1.bf16.msra.mxu0 0
        %3880 = vmatprep.subr.bf16.mxu0 0
        %3881 = vmatpush1.bf16.msra.mxu0 0
        %3882 = vmatprep.subr.bf16.mxu0 0
        %3883 = vmatpush1.bf16.msra.mxu0 0
        %3884 = vmatprep.subr.bf16.mxu0 0
        %3885 = vmatpush1.bf16.msra.mxu0 0
        %3886 = vmatprep.subr.bf16.mxu0 0
        %3887 = vmatpush1.bf16.msra.mxu0 0
        %3888 = vmatprep.subr.bf16.mxu0 0
        %3889 = vmatpush1.bf16.msra.mxu0 0
        %3890 = vmatprep.subr.bf16.mxu0 0
        %3891 = vmatpush1.bf16.msra.mxu0 0
        %3892 = vmatprep.subr.bf16.mxu0 0
        %3893 = vmatpush1.bf16.msra.mxu0 0
        %3894 = vmatprep.mubr.bf16.mxu0 0
        %3895 = vmatmul.mubr.bf16.gmra.mrb[0].mxu0 %v688
        %v3896 = vpop.f32.mrb[0].mxu0
        %v3897 = vadd.f32 0.0, %v3896
        %v3898 = vpop.f32.mrb[0].mxu0
        %v3899 = vadd.f32 0.0, %v3898
        %v3900 = vpop.f32.mrb[0].mxu0
        %v3901 = vadd.f32 0.0, %v3900
        %v3902 = vpop.f32.mrb[0].mxu0
        %v3903 = vadd.f32 0.0, %v3902
        %3904 = vmatprep.mubr.bf16.mxu0 0
        %3905 = vmatmul.mubr.bf16.gmra.mrb[0].mxu0 %v691
        %v3906 = vpop.f32.mrb[0].mxu0
        %v3907 = vadd.f32 0.0, %v3906
        %v3908 = vpop.f32.mrb[0].mxu0
        %v3909 = vadd.f32 0.0, %v3908
        %v3910 = vpop.f32.mrb[0].mxu0
        %v3911 = vadd.f32 0.0, %v3910
        %v3912 = vpop.f32.mrb[0].mxu0
        %v3913 = vadd.f32 0.0, %v3912
        %3914 = vmatprep.mubr.bf16.mxu0 0
        %3915 = vmatmul.mubr.bf16.gmra.mrb[0].mxu0 %v694
        %v3916 = vpop.f32.mrb[0].mxu0
        %v3917 = vadd.f32 0.0, %v3916
        %v3918 = vpop.f32.mrb[0].mxu0
        %v3919 = vadd.f32 0.0, %v3918
        %v3920 = vpop.f32.mrb[0].mxu0
        %v3921 = vadd.f32 0.0, %v3920
        %v3922 = vpop.f32.mrb[0].mxu0
        %v3923 = vadd.f32 0.0, %v3922
        %3924 = vmatprep.mubr.bf16.mxu0 0
        %3925 = vmatmul.mubr.bf16.gmra.mrb[0].mxu0 %v697
        %v3926 = vpop.f32.mrb[0].mxu0
        %v3927 = vadd.f32 0.0, %v3926
        %v3928 = vpop.f32.mrb[0].mxu0
        %v3929 = vadd.f32 0.0, %v3928
        %v3930 = vpop.f32.mrb[0].mxu0
        %v3931 = vadd.f32 0.0, %v3930
        %v3932 = vpop.f32.mrb[0].mxu0
        %v3933 = vadd.f32 0.0, %v3932
        %3934 = vmatprep.mubr.bf16.mxu0 0
        %3935 = vmatmul.mubr.bf16.gmra.mrb[0].mxu0 %v700
        %v3936 = vpop.f32.mrb[0].mxu0
        %v3937 = vadd.f32 0.0, %v3936
        %v3938 = vpop.f32.mrb[0].mxu0
        %v3939 = vadd.f32 0.0, %v3938
        %v3940 = vpop.f32.mrb[0].mxu0
        %v3941 = vadd.f32 0.0, %v3940
        %v3942 = vpop.f32.mrb[0].mxu0
        %v3943 = vadd.f32 0.0, %v3942
        %3944 = vmatprep.mubr.bf16.mxu0 0
        %3945 = vmatmul.mubr.bf16.gmra.mrb[0].mxu0 %v703
        %v3946 = vpop.f32.mrb[0].mxu0
        %v3947 = vadd.f32 0.0, %v3946
        %v3948 = vpop.f32.mrb[0].mxu0
        %v3949 = vadd.f32 0.0, %v3948
        %v3950 = vpop.f32.mrb[0].mxu0
        %v3951 = vadd.f32 0.0, %v3950
        %v3952 = vpop.f32.mrb[0].mxu0
        %v3953 = vadd.f32 0.0, %v3952
        %3954 = vmatprep.mubr.bf16.mxu0 0
        %3955 = vmatmul.mubr.bf16.gmra.mrb[0].mxu0 %v706
        %v3956 = vpop.f32.mrb[0].mxu0
        %v3957 = vadd.f32 0.0, %v3956
        %v3958 = vpop.f32.mrb[0].mxu0
        %v3959 = vadd.f32 0.0, %v3958
        %v3960 = vpop.f32.mrb[0].mxu0
        %v3961 = vadd.f32 0.0, %v3960
        %v3962 = vpop.f32.mrb[0].mxu0
        %v3963 = vadd.f32 0.0, %v3962
        %3964 = vmatprep.mubr.bf16.mxu0 0
        %3965 = vmatmul.mubr.bf16.gmra.mrb[0].mxu0 %v709
        %v3966 = vpop.f32.mrb[0].mxu0
        %v3967 = vadd.f32 0.0, %v3966
        %v3968 = vpop.f32.mrb[0].mxu0
        %v3969 = vadd.f32 0.0, %v3968
        %v3970 = vpop.f32.mrb[0].mxu0
        %v3971 = vadd.f32 0.0, %v3970
        %v3972 = vpop.f32.mrb[0].mxu0
        %v3973 = vadd.f32 0.0, %v3972
        %3974 = vmatprep.mubr.bf16.mxu0 0
        %3975 = vmatmul.mubr.bf16.gmra.mrb[0].mxu0 %v712
        %v3976 = vpop.f32.mrb[0].mxu0
        %v3977 = vadd.f32 0.0, %v3976
        %v3978 = vpop.f32.mrb[0].mxu0
        %v3979 = vadd.f32 0.0, %v3978
        %v3980 = vpop.f32.mrb[0].mxu0
        %v3981 = vadd.f32 0.0, %v3980
        %v3982 = vpop.f32.mrb[0].mxu0
        %v3983 = vadd.f32 0.0, %v3982
        %3984 = vmatprep.mubr.bf16.mxu0 0
        %3985 = vmatmul.mubr.bf16.gmra.mrb[0].mxu0 %v715
        %v3986 = vpop.f32.mrb[0].mxu0
        %v3987 = vadd.f32 0.0, %v3986
        %v3988 = vpop.f32.mrb[0].mxu0
        %v3989 = vadd.f32 0.0, %v3988
        %v3990 = vpop.f32.mrb[0].mxu0
        %v3991 = vadd.f32 0.0, %v3990
        %v3992 = vpop.f32.mrb[0].mxu0
        %v3993 = vadd.f32 0.0, %v3992
        %3994 = vmatprep.mubr.bf16.mxu0 0
        %3995 = vmatmul.mubr.bf16.gmra.mrb[0].mxu0 %v718
        %v3996 = vpop.f32.mrb[0].mxu0
        %v3997 = vadd.f32 0.0, %v3996
        %v3998 = vpop.f32.mrb[0].mxu0
        %v3999 = vadd.f32 0.0, %v3998
        %v4000 = vpop.f32.mrb[0].mxu0
        %v4001 = vadd.f32 0.0, %v4000
        %v4002 = vpop.f32.mrb[0].mxu0
        %v4003 = vadd.f32 0.0, %v4002
        %4004 = vmatprep.mubr.bf16.mxu0 0
        %4005 = vmatmul.mubr.bf16.gmra.mrb[0].mxu0 %v721
        %v4006 = vpop.f32.mrb[0].mxu0
        %v4007 = vadd.f32 0.0, %v4006
        %v4008 = vpop.f32.mrb[0].mxu0
        %v4009 = vadd.f32 0.0, %v4008
        %v4010 = vpop.f32.mrb[0].mxu0
        %v4011 = vadd.f32 0.0, %v4010
        %v4012 = vpop.f32.mrb[0].mxu0
        %v4013 = vadd.f32 0.0, %v4012
        %4014 = vdwg.mxu0
        %v4015 = vmax.f32 %v3493, %v3744
        %v4016 = vmax.f32 %v3494, %v3746
        %v4017 = vmax.f32 %v3495, %v3897
        %v4018 = vmax.f32 %v3496, %v3899
        %v4019 = vmax.f32 %v3497, %v3748
        %v4020 = vmax.f32 %v3498, %v3750
        %v4021 = vmax.f32 %v3499, %v3901
        %v4022 = vmax.f32 %v3500, %v3903
        %v4023 = vmax.f32 %v3501, %v3754
        %v4024 = vmax.f32 %v3502, %v3756
        %v4025 = vmax.f32 %v3503, %v3907
        %v4026 = vmax.f32 %v3504, %v3909
        %v4027 = vmax.f32 %v3505, %v3758
        %v4028 = vmax.f32 %v3506, %v3760
        %v4029 = vmax.f32 %v3507, %v3911
        %v4030 = vmax.f32 %v3508, %v3913
        %v4031 = vmax.f32 %v3509, %v3764
        %v4032 = vmax.f32 %v3510, %v3766
        %v4033 = vmax.f32 %v3511, %v3917
        %v4034 = vmax.f32 %v3512, %v3919
        %v4035 = vmax.f32 %v3513, %v3768
        %v4036 = vmax.f32 %v3514, %v3770
        %v4037 = vmax.f32 %v3515, %v3921
        %v4038 = vmax.f32 %v3516, %v3923
        %v4039 = vmax.f32 %v3517, %v3774
        %v4040 = vmax.f32 %v3518, %v3776
        %v4041 = vmax.f32 %v3519, %v3927
        %v4042 = vmax.f32 %v3520, %v3929
        %v4043 = vmax.f32 %v3521, %v3778
        %v4044 = vmax.f32 %v3522, %v3780
        %v4045 = vmax.f32 %v3523, %v3931
        %v4046 = vmax.f32 %v3524, %v3933
        %v4047 = vmax.f32 %v3525, %v3784
        %v4048 = vmax.f32 %v3526, %v3786
        %v4049 = vmax.f32 %v3527, %v3937
        %v4050 = vmax.f32 %v3528, %v3939
        %v4051 = vmax.f32 %v3529, %v3788
        %v4052 = vmax.f32 %v3530, %v3790
        %v4053 = vmax.f32 %v3531, %v3941
        %v4054 = vmax.f32 %v3532, %v3943
        %v4055 = vmax.f32 %v3533, %v3794
        %v4056 = vmax.f32 %v3534, %v3796
        %v4057 = vmax.f32 %v3535, %v3947
        %v4058 = vmax.f32 %v3536, %v3949
        %v4059 = vmax.f32 %v3537, %v3798
        %v4060 = vmax.f32 %v3538, %v3800
        %v4061 = vmax.f32 %v3539, %v3951
        %v4062 = vmax.f32 %v3540, %v3953
        %v4063 = vmax.f32 %v3541, %v3804
        %v4064 = vmax.f32 %v3542, %v3806
        %v4065 = vmax.f32 %v3543, %v3957
        %v4066 = vmax.f32 %v3544, %v3959
        %v4067 = vmax.f32 %v3545, %v3808
        %v4068 = vmax.f32 %v3546, %v3810
        %v4069 = vmax.f32 %v3547, %v3961
        %v4070 = vmax.f32 %v3548, %v3963
        %v4071 = vmax.f32 %v3549, %v3814
        %v4072 = vmax.f32 %v3550, %v3816
        %v4073 = vmax.f32 %v3551, %v3967
        %v4074 = vmax.f32 %v3552, %v3969
        %v4075 = vmax.f32 %v3553, %v3818
        %v4076 = vmax.f32 %v3554, %v3820
        %v4077 = vmax.f32 %v3555, %v3971
        %v4078 = vmax.f32 %v3556, %v3973
        %v4079 = vmax.f32 %v3557, %v3824
        %v4080 = vmax.f32 %v3558, %v3826
        %v4081 = vmax.f32 %v3559, %v3977
        %v4082 = vmax.f32 %v3560, %v3979
        %v4083 = vmax.f32 %v3561, %v3828
        %v4084 = vmax.f32 %v3562, %v3830
        %v4085 = vmax.f32 %v3563, %v3981
        %v4086 = vmax.f32 %v3564, %v3983
        %v4087 = vmax.f32 %v3565, %v3834
        %v4088 = vmax.f32 %v3566, %v3836
        %v4089 = vmax.f32 %v3567, %v3987
        %v4090 = vmax.f32 %v3568, %v3989
        %v4091 = vmax.f32 %v3569, %v3838
        %v4092 = vmax.f32 %v3570, %v3840
        %v4093 = vmax.f32 %v3571, %v3991
        %v4094 = vmax.f32 %v3572, %v3993
        %v4095 = vmax.f32 %v3573, %v3844
        %v4096 = vmax.f32 %v3574, %v3846
        %v4097 = vmax.f32 %v3575, %v3997
        %v4098 = vmax.f32 %v3576, %v3999
        %v4099 = vmax.f32 %v3577, %v3848
        %v4100 = vmax.f32 %v3578, %v3850
        %v4101 = vmax.f32 %v3579, %v4001
        %v4102 = vmax.f32 %v3580, %v4003
        %v4103 = vmax.f32 %v3581, %v3854
        %v4104 = vmax.f32 %v3582, %v3856
        %v4105 = vmax.f32 %v3583, %v4007
        %v4106 = vmax.f32 %v3584, %v4009
        %v4107 = vmax.f32 %v3585, %v3858
        %v4108 = vmax.f32 %v3586, %v3860
        %v4109 = vmax.f32 %v3587, %v4011
        %v4110 = vmax.f32 %v3588, %v4013
        %4111 = vmatprep.subr.bf16.mxu0 %v3670
        %4112 = vmatpush1.bf16.msra.mxu0 %v3669
        %4113 = vmatprep.subr.bf16.mxu0 %v3674
        %4114 = vmatpush1.bf16.msra.mxu0 %v3673
        %4115 = vmatprep.subr.bf16.mxu0 %v3678
        %4116 = vmatpush1.bf16.msra.mxu0 %v3677
        %4117 = vmatprep.subr.bf16.mxu0 %v3682
        %4118 = vmatpush1.bf16.msra.mxu0 %v3681
        %4119 = vmatprep.subr.bf16.mxu0 %v3686
        %4120 = vmatpush1.bf16.msra.mxu0 %v3685
        %4121 = vmatprep.subr.bf16.mxu0 0
        %4122 = vmatpush1.bf16.msra.mxu0 0
        %4123 = vmatprep.subr.bf16.mxu0 0
        %4124 = vmatpush1.bf16.msra.mxu0 0
        %4125 = vmatprep.subr.bf16.mxu0 0
        %4126 = vmatpush1.bf16.msra.mxu0 0
        %4127 = vmatprep.subr.bf16.mxu0 0
        %4128 = vmatpush1.bf16.msra.mxu0 0
        %4129 = vmatprep.subr.bf16.mxu0 0
        %4130 = vmatpush1.bf16.msra.mxu0 0
        %4131 = vmatprep.subr.bf16.mxu0 0
        %4132 = vmatpush1.bf16.msra.mxu0 0
        %4133 = vmatprep.subr.bf16.mxu0 0
        %4134 = vmatpush1.bf16.msra.mxu0 0
        %4135 = vmatprep.subr.bf16.mxu0 0
        %4136 = vmatpush1.bf16.msra.mxu0 0
        %4137 = vmatprep.subr.bf16.mxu0 0
        %4138 = vmatpush1.bf16.msra.mxu0 0
        %4139 = vmatprep.subr.bf16.mxu0 0
        %4140 = vmatpush1.bf16.msra.mxu0 0
        %4141 = vmatprep.subr.bf16.mxu0 0
        %4142 = vmatpush1.bf16.msra.mxu0 0
        %4143 = vmatprep.mubr.bf16.mxu0 0
        %4144 = vmatmul.mubr.bf16.gmra.mrb[0].mxu0 %v1090
        %v4145 = vpop.f32.mrb[0].mxu0
        %v4146 = vadd.f32 0.0, %v4145
        %v4147 = vpop.f32.mrb[0].mxu0
        %v4148 = vadd.f32 0.0, %v4147
        %v4149 = vpop.f32.mrb[0].mxu0
        %v4150 = vadd.f32 0.0, %v4149
        %v4151 = vpop.f32.mrb[0].mxu0
        %v4152 = vadd.f32 0.0, %v4151
        %4153 = vmatprep.mubr.bf16.mxu0 0
        %4154 = vmatmul.mubr.bf16.gmra.mrb[0].mxu0 %v1093
        %v4155 = vpop.f32.mrb[0].mxu0
        %v4156 = vadd.f32 0.0, %v4155
        %v4157 = vpop.f32.mrb[0].mxu0
        %v4158 = vadd.f32 0.0, %v4157
        %v4159 = vpop.f32.mrb[0].mxu0
        %v4160 = vadd.f32 0.0, %v4159
        %v4161 = vpop.f32.mrb[0].mxu0
        %v4162 = vadd.f32 0.0, %v4161
        %4163 = vmatprep.mubr.bf16.mxu0 0
        %4164 = vmatmul.mubr.bf16.gmra.mrb[0].mxu0 %v1096
        %v4165 = vpop.f32.mrb[0].mxu0
        %v4166 = vadd.f32 0.0, %v4165
        %v4167 = vpop.f32.mrb[0].mxu0
        %v4168 = vadd.f32 0.0, %v4167
        %v4169 = vpop.f32.mrb[0].mxu0
        %v4170 = vadd.f32 0.0, %v4169
        %v4171 = vpop.f32.mrb[0].mxu0
        %v4172 = vadd.f32 0.0, %v4171
        %4173 = vmatprep.mubr.bf16.mxu0 0
        %4174 = vmatmul.mubr.bf16.gmra.mrb[0].mxu0 %v1099
        %v4175 = vpop.f32.mrb[0].mxu0
        %v4176 = vadd.f32 0.0, %v4175
        %v4177 = vpop.f32.mrb[0].mxu0
        %v4178 = vadd.f32 0.0, %v4177
        %v4179 = vpop.f32.mrb[0].mxu0
        %v4180 = vadd.f32 0.0, %v4179
        %v4181 = vpop.f32.mrb[0].mxu0
        %v4182 = vadd.f32 0.0, %v4181
        %4183 = vmatprep.mubr.bf16.mxu0 0
        %4184 = vmatmul.mubr.bf16.gmra.mrb[0].mxu0 %v1102
        %v4185 = vpop.f32.mrb[0].mxu0
        %v4186 = vadd.f32 0.0, %v4185
        %v4187 = vpop.f32.mrb[0].mxu0
        %v4188 = vadd.f32 0.0, %v4187
        %v4189 = vpop.f32.mrb[0].mxu0
        %v4190 = vadd.f32 0.0, %v4189
        %v4191 = vpop.f32.mrb[0].mxu0
        %v4192 = vadd.f32 0.0, %v4191
        %4193 = vmatprep.mubr.bf16.mxu0 0
        %4194 = vmatmul.mubr.bf16.gmra.mrb[0].mxu0 %v1105
        %v4195 = vpop.f32.mrb[0].mxu0
        %v4196 = vadd.f32 0.0, %v4195
        %v4197 = vpop.f32.mrb[0].mxu0
        %v4198 = vadd.f32 0.0, %v4197
        %v4199 = vpop.f32.mrb[0].mxu0
        %v4200 = vadd.f32 0.0, %v4199
        %v4201 = vpop.f32.mrb[0].mxu0
        %v4202 = vadd.f32 0.0, %v4201
        %4203 = vmatprep.mubr.bf16.mxu0 0
        %4204 = vmatmul.mubr.bf16.gmra.mrb[0].mxu0 %v1108
        %v4205 = vpop.f32.mrb[0].mxu0
        %v4206 = vadd.f32 0.0, %v4205
        %v4207 = vpop.f32.mrb[0].mxu0
        %v4208 = vadd.f32 0.0, %v4207
        %v4209 = vpop.f32.mrb[0].mxu0
        %v4210 = vadd.f32 0.0, %v4209
        %v4211 = vpop.f32.mrb[0].mxu0
        %v4212 = vadd.f32 0.0, %v4211
        %4213 = vmatprep.mubr.bf16.mxu0 0
        %4214 = vmatmul.mubr.bf16.gmra.mrb[0].mxu0 %v1111
        %v4215 = vpop.f32.mrb[0].mxu0
        %v4216 = vadd.f32 0.0, %v4215
        %v4217 = vpop.f32.mrb[0].mxu0
        %v4218 = vadd.f32 0.0, %v4217
        %v4219 = vpop.f32.mrb[0].mxu0
        %v4220 = vadd.f32 0.0, %v4219
        %v4221 = vpop.f32.mrb[0].mxu0
        %v4222 = vadd.f32 0.0, %v4221
        %4223 = vmatprep.mubr.bf16.mxu0 0
        %4224 = vmatmul.mubr.bf16.gmra.mrb[0].mxu0 %v1114
        %v4225 = vpop.f32.mrb[0].mxu0
        %v4226 = vadd.f32 0.0, %v4225
        %v4227 = vpop.f32.mrb[0].mxu0
        %v4228 = vadd.f32 0.0, %v4227
        %v4229 = vpop.f32.mrb[0].mxu0
        %v4230 = vadd.f32 0.0, %v4229
        %v4231 = vpop.f32.mrb[0].mxu0
        %v4232 = vadd.f32 0.0, %v4231
        %4233 = vmatprep.mubr.bf16.mxu0 0
        %4234 = vmatmul.mubr.bf16.gmra.mrb[0].mxu0 %v1117
        %v4235 = vpop.f32.mrb[0].mxu0
        %v4236 = vadd.f32 0.0, %v4235
        %v4237 = vpop.f32.mrb[0].mxu0
        %v4238 = vadd.f32 0.0, %v4237
        %v4239 = vpop.f32.mrb[0].mxu0
        %v4240 = vadd.f32 0.0, %v4239
        %v4241 = vpop.f32.mrb[0].mxu0
        %v4242 = vadd.f32 0.0, %v4241
        %4243 = vmatprep.mubr.bf16.mxu0 0
        %4244 = vmatmul.mubr.bf16.gmra.mrb[0].mxu0 %v1120
        %v4245 = vpop.f32.mrb[0].mxu0
        %v4246 = vadd.f32 0.0, %v4245
        %v4247 = vpop.f32.mrb[0].mxu0
        %v4248 = vadd.f32 0.0, %v4247
        %v4249 = vpop.f32.mrb[0].mxu0
        %v4250 = vadd.f32 0.0, %v4249
        %v4251 = vpop.f32.mrb[0].mxu0
        %v4252 = vadd.f32 0.0, %v4251
        %4253 = vmatprep.mubr.bf16.mxu0 0
        %4254 = vmatmul.mubr.bf16.gmra.mrb[0].mxu0 %v1123
        %v4255 = vpop.f32.mrb[0].mxu0
        %v4256 = vadd.f32 0.0, %v4255
        %v4257 = vpop.f32.mrb[0].mxu0
        %v4258 = vadd.f32 0.0, %v4257
        %v4259 = vpop.f32.mrb[0].mxu0
        %v4260 = vadd.f32 0.0, %v4259
        %v4261 = vpop.f32.mrb[0].mxu0
        %v4262 = vadd.f32 0.0, %v4261
        %4263 = vdwg.mxu0
        %4264 = vmatprep.subr.bf16.mxu0 %v3672
        %4265 = vmatpush1.bf16.msra.mxu0 %v3671
        %4266 = vmatprep.subr.bf16.mxu0 %v3676
        %4267 = vmatpush1.bf16.msra.mxu0 %v3675
        %4268 = vmatprep.subr.bf16.mxu0 %v3680
        %4269 = vmatpush1.bf16.msra.mxu0 %v3679
        %4270 = vmatprep.subr.bf16.mxu0 %v3684
        %4271 = vmatpush1.bf16.msra.mxu0 %v3683
        %4272 = vmatprep.subr.bf16.mxu0 %v3688
        %4273 = vmatpush1.bf16.msra.mxu0 %v3687
        %4274 = vmatprep.subr.bf16.mxu0 0
        %4275 = vmatpush1.bf16.msra.mxu0 0
        %4276 = vmatprep.subr.bf16.mxu0 0
        %4277 = vmatpush1.bf16.msra.mxu0 0
        %4278 = vmatprep.subr.bf16.mxu0 0
        %4279 = vmatpush1.bf16.msra.mxu0 0
        %4280 = vmatprep.subr.bf16.mxu0 0
        %4281 = vmatpush1.bf16.msra.mxu0 0
        %4282 = vmatprep.subr.bf16.mxu0 0
        %4283 = vmatpush1.bf16.msra.mxu0 0
        %4284 = vmatprep.subr.bf16.mxu0 0
        %4285 = vmatpush1.bf16.msra.mxu0 0
        %4286 = vmatprep.subr.bf16.mxu0 0
        %4287 = vmatpush1.bf16.msra.mxu0 0
        %4288 = vmatprep.subr.bf16.mxu0 0
        %4289 = vmatpush1.bf16.msra.mxu0 0
        %4290 = vmatprep.subr.bf16.mxu0 0
        %4291 = vmatpush1.bf16.msra.mxu0 0
        %4292 = vmatprep.subr.bf16.mxu0 0
        %4293 = vmatpush1.bf16.msra.mxu0 0
        %4294 = vmatprep.subr.bf16.mxu0 0
        %4295 = vmatpush1.bf16.msra.mxu0 0
        %4296 = vmatprep.mubr.bf16.mxu0 0
        %4297 = vmatmul.mubr.bf16.gmra.mrb[0].mxu0 %v1090
        %v4298 = vpop.f32.mrb[0].mxu0
        %v4299 = vadd.f32 0.0, %v4298
        %v4300 = vpop.f32.mrb[0].mxu0
        %v4301 = vadd.f32 0.0, %v4300
        %v4302 = vpop.f32.mrb[0].mxu0
        %v4303 = vadd.f32 0.0, %v4302
        %v4304 = vpop.f32.mrb[0].mxu0
        %v4305 = vadd.f32 0.0, %v4304
        %4306 = vmatprep.mubr.bf16.mxu0 0
        %4307 = vmatmul.mubr.bf16.gmra.mrb[0].mxu0 %v1093
        %v4308 = vpop.f32.mrb[0].mxu0
        %v4309 = vadd.f32 0.0, %v4308
        %v4310 = vpop.f32.mrb[0].mxu0
        %v4311 = vadd.f32 0.0, %v4310
        %v4312 = vpop.f32.mrb[0].mxu0
        %v4313 = vadd.f32 0.0, %v4312
        %v4314 = vpop.f32.mrb[0].mxu0
        %v4315 = vadd.f32 0.0, %v4314
        %4316 = vmatprep.mubr.bf16.mxu0 0
        %4317 = vmatmul.mubr.bf16.gmra.mrb[0].mxu0 %v1096
        %v4318 = vpop.f32.mrb[0].mxu0
        %v4319 = vadd.f32 0.0, %v4318
        %v4320 = vpop.f32.mrb[0].mxu0
        %v4321 = vadd.f32 0.0, %v4320
        %v4322 = vpop.f32.mrb[0].mxu0
        %v4323 = vadd.f32 0.0, %v4322
        %v4324 = vpop.f32.mrb[0].mxu0
        %v4325 = vadd.f32 0.0, %v4324
        %4326 = vmatprep.mubr.bf16.mxu0 0
        %4327 = vmatmul.mubr.bf16.gmra.mrb[0].mxu0 %v1099
        %v4328 = vpop.f32.mrb[0].mxu0
        %v4329 = vadd.f32 0.0, %v4328
        %v4330 = vpop.f32.mrb[0].mxu0
        %v4331 = vadd.f32 0.0, %v4330
        %v4332 = vpop.f32.mrb[0].mxu0
        %v4333 = vadd.f32 0.0, %v4332
        %v4334 = vpop.f32.mrb[0].mxu0
        %v4335 = vadd.f32 0.0, %v4334
        %4336 = vmatprep.mubr.bf16.mxu0 0
        %4337 = vmatmul.mubr.bf16.gmra.mrb[0].mxu0 %v1102
        %v4338 = vpop.f32.mrb[0].mxu0
        %v4339 = vadd.f32 0.0, %v4338
        %v4340 = vpop.f32.mrb[0].mxu0
        %v4341 = vadd.f32 0.0, %v4340
        %v4342 = vpop.f32.mrb[0].mxu0
        %v4343 = vadd.f32 0.0, %v4342
        %v4344 = vpop.f32.mrb[0].mxu0
        %v4345 = vadd.f32 0.0, %v4344
        %4346 = vmatprep.mubr.bf16.mxu0 0
        %4347 = vmatmul.mubr.bf16.gmra.mrb[0].mxu0 %v1105
        %v4348 = vpop.f32.mrb[0].mxu0
        %v4349 = vadd.f32 0.0, %v4348
        %v4350 = vpop.f32.mrb[0].mxu0
        %v4351 = vadd.f32 0.0, %v4350
        %v4352 = vpop.f32.mrb[0].mxu0
        %v4353 = vadd.f32 0.0, %v4352
        %v4354 = vpop.f32.mrb[0].mxu0
        %v4355 = vadd.f32 0.0, %v4354
        %4356 = vmatprep.mubr.bf16.mxu0 0
        %4357 = vmatmul.mubr.bf16.gmra.mrb[0].mxu0 %v1108
        %v4358 = vpop.f32.mrb[0].mxu0
        %v4359 = vadd.f32 0.0, %v4358
        %v4360 = vpop.f32.mrb[0].mxu0
        %v4361 = vadd.f32 0.0, %v4360
        %v4362 = vpop.f32.mrb[0].mxu0
        %v4363 = vadd.f32 0.0, %v4362
        %v4364 = vpop.f32.mrb[0].mxu0
        %v4365 = vadd.f32 0.0, %v4364
        %4366 = vmatprep.mubr.bf16.mxu0 0
        %4367 = vmatmul.mubr.bf16.gmra.mrb[0].mxu0 %v1111
        %v4368 = vpop.f32.mrb[0].mxu0
        %v4369 = vadd.f32 0.0, %v4368
        %v4370 = vpop.f32.mrb[0].mxu0
        %v4371 = vadd.f32 0.0, %v4370
        %v4372 = vpop.f32.mrb[0].mxu0
        %v4373 = vadd.f32 0.0, %v4372
        %v4374 = vpop.f32.mrb[0].mxu0
        %v4375 = vadd.f32 0.0, %v4374
        %4376 = vmatprep.mubr.bf16.mxu0 0
        %4377 = vmatmul.mubr.bf16.gmra.mrb[0].mxu0 %v1114
        %v4378 = vpop.f32.mrb[0].mxu0
        %v4379 = vadd.f32 0.0, %v4378
        %v4380 = vpop.f32.mrb[0].mxu0
        %v4381 = vadd.f32 0.0, %v4380
        %v4382 = vpop.f32.mrb[0].mxu0
        %v4383 = vadd.f32 0.0, %v4382
        %v4384 = vpop.f32.mrb[0].mxu0
        %v4385 = vadd.f32 0.0, %v4384
        %4386 = vmatprep.mubr.bf16.mxu0 0
        %4387 = vmatmul.mubr.bf16.gmra.mrb[0].mxu0 %v1117
        %v4388 = vpop.f32.mrb[0].mxu0
        %v4389 = vadd.f32 0.0, %v4388
        %v4390 = vpop.f32.mrb[0].mxu0
        %v4391 = vadd.f32 0.0, %v4390
        %v4392 = vpop.f32.mrb[0].mxu0
        %v4393 = vadd.f32 0.0, %v4392
        %v4394 = vpop.f32.mrb[0].mxu0
        %v4395 = vadd.f32 0.0, %v4394
        %4396 = vmatprep.mubr.bf16.mxu0 0
        %4397 = vmatmul.mubr.bf16.gmra.mrb[0].mxu0 %v1120
        %v4398 = vpop.f32.mrb[0].mxu0
        %v4399 = vadd.f32 0.0, %v4398
        %v4400 = vpop.f32.mrb[0].mxu0
        %v4401 = vadd.f32 0.0, %v4400
        %v4402 = vpop.f32.mrb[0].mxu0
        %v4403 = vadd.f32 0.0, %v4402
        %v4404 = vpop.f32.mrb[0].mxu0
        %v4405 = vadd.f32 0.0, %v4404
        %4406 = vmatprep.mubr.bf16.mxu0 0
        %4407 = vmatmul.mubr.bf16.gmra.mrb[0].mxu0 %v1123
        %v4408 = vpop.f32.mrb[0].mxu0
        %v4409 = vadd.f32 0.0, %v4408
        %v4410 = vpop.f32.mrb[0].mxu0
        %v4411 = vadd.f32 0.0, %v4410
        %v4412 = vpop.f32.mrb[0].mxu0
        %v4413 = vadd.f32 0.0, %v4412
        %v4414 = vpop.f32.mrb[0].mxu0
        %v4415 = vadd.f32 0.0, %v4414
        %4416 = vdwg.mxu0
        %v4417 = vmax.f32 %v4015, %v4146
        %v4418 = vmax.f32 %v4016, %v4148
        %v4419 = vmax.f32 %v4017, %v4299
        %v4420 = vmax.f32 %v4018, %v4301
        %v4421 = vmax.f32 %v4019, %v4150
        %v4422 = vmax.f32 %v4020, %v4152
        %v4423 = vmax.f32 %v4021, %v4303
        %v4424 = vmax.f32 %v4022, %v4305
        %v4425 = vmax.f32 %v4023, %v4156
        %v4426 = vmax.f32 %v4024, %v4158
        %v4427 = vmax.f32 %v4025, %v4309
        %v4428 = vmax.f32 %v4026, %v4311
        %v4429 = vmax.f32 %v4027, %v4160
        %v4430 = vmax.f32 %v4028, %v4162
        %v4431 = vmax.f32 %v4029, %v4313
        %v4432 = vmax.f32 %v4030, %v4315
        %v4433 = vmax.f32 %v4031, %v4166
        %v4434 = vmax.f32 %v4032, %v4168
        %v4435 = vmax.f32 %v4033, %v4319
        %v4436 = vmax.f32 %v4034, %v4321
        %v4437 = vmax.f32 %v4035, %v4170
        %v4438 = vmax.f32 %v4036, %v4172
        %v4439 = vmax.f32 %v4037, %v4323
        %v4440 = vmax.f32 %v4038, %v4325
        %v4441 = vmax.f32 %v4039, %v4176
        %v4442 = vmax.f32 %v4040, %v4178
        %v4443 = vmax.f32 %v4041, %v4329
        %v4444 = vmax.f32 %v4042, %v4331
        %v4445 = vmax.f32 %v4043, %v4180
        %v4446 = vmax.f32 %v4044, %v4182
        %v4447 = vmax.f32 %v4045, %v4333
        %v4448 = vmax.f32 %v4046, %v4335
        %v4449 = vmax.f32 %v4047, %v4186
        %v4450 = vmax.f32 %v4048, %v4188
        %v4451 = vmax.f32 %v4049, %v4339
        %v4452 = vmax.f32 %v4050, %v4341
        %v4453 = vmax.f32 %v4051, %v4190
        %v4454 = vmax.f32 %v4052, %v4192
        %v4455 = vmax.f32 %v4053, %v4343
        %v4456 = vmax.f32 %v4054, %v4345
        %v4457 = vmax.f32 %v4055, %v4196
        %v4458 = vmax.f32 %v4056, %v4198
        %v4459 = vmax.f32 %v4057, %v4349
        %v4460 = vmax.f32 %v4058, %v4351
        %v4461 = vmax.f32 %v4059, %v4200
        %v4462 = vmax.f32 %v4060, %v4202
        %v4463 = vmax.f32 %v4061, %v4353
        %v4464 = vmax.f32 %v4062, %v4355
        %v4465 = vmax.f32 %v4063, %v4206
        %v4466 = vmax.f32 %v4064, %v4208
        %v4467 = vmax.f32 %v4065, %v4359
        %v4468 = vmax.f32 %v4066, %v4361
        %v4469 = vmax.f32 %v4067, %v4210
        %v4470 = vmax.f32 %v4068, %v4212
        %v4471 = vmax.f32 %v4069, %v4363
        %v4472 = vmax.f32 %v4070, %v4365
        %v4473 = vmax.f32 %v4071, %v4216
        %v4474 = vmax.f32 %v4072, %v4218
        %v4475 = vmax.f32 %v4073, %v4369
        %v4476 = vmax.f32 %v4074, %v4371
        %v4477 = vmax.f32 %v4075, %v4220
        %v4478 = vmax.f32 %v4076, %v4222
        %v4479 = vmax.f32 %v4077, %v4373
        %v4480 = vmax.f32 %v4078, %v4375
        %v4481 = vmax.f32 %v4079, %v4226
        %v4482 = vmax.f32 %v4080, %v4228
        %v4483 = vmax.f32 %v4081, %v4379
        %v4484 = vmax.f32 %v4082, %v4381
        %v4485 = vmax.f32 %v4083, %v4230
        %v4486 = vmax.f32 %v4084, %v4232
        %v4487 = vmax.f32 %v4085, %v4383
        %v4488 = vmax.f32 %v4086, %v4385
        %v4489 = vmax.f32 %v4087, %v4236
        %v4490 = vmax.f32 %v4088, %v4238
        %v4491 = vmax.f32 %v4089, %v4389
        %v4492 = vmax.f32 %v4090, %v4391
        %v4493 = vmax.f32 %v4091, %v4240
        %v4494 = vmax.f32 %v4092, %v4242
        %v4495 = vmax.f32 %v4093, %v4393
        %v4496 = vmax.f32 %v4094, %v4395
        %v4497 = vmax.f32 %v4095, %v4246
        %v4498 = vmax.f32 %v4096, %v4248
        %v4499 = vmax.f32 %v4097, %v4399
        %v4500 = vmax.f32 %v4098, %v4401
        %v4501 = vmax.f32 %v4099, %v4250
        %v4502 = vmax.f32 %v4100, %v4252
        %v4503 = vmax.f32 %v4101, %v4403
        %v4504 = vmax.f32 %v4102, %v4405
        %v4505 = vmax.f32 %v4103, %v4256
        %v4506 = vmax.f32 %v4104, %v4258
        %v4507 = vmax.f32 %v4105, %v4409
        %v4508 = vmax.f32 %v4106, %v4411
        %v4509 = vmax.f32 %v4107, %v4260
        %v4510 = vmax.f32 %v4108, %v4262
        %v4511 = vmax.f32 %v4109, %v4413
        %v4512 = vmax.f32 %v4110, %v4415
        %v4513 = vld [vmem:[%s2 + $0x4] sm:$0xf]
        %v4515 = vlaneseq
        %v4516 = vshrl.u32 %v4515, 7
        %v4517 = vsub.s32 0, %v4516
        %v4518 = vrot.slane %v4513, %v4517
        %v4519 = vlaneseq
        %v4520 = vshrl.u32 %v4519, 7
        %v4521 = vsub.s32 1, %v4520
        %v4522 = vrot.slane %v4513, %v4521
        %v4523 = vlaneseq
        %v4524 = vshrl.u32 %v4523, 7
        %v4525 = vsub.s32 2, %v4524
        %v4526 = vrot.slane %v4513, %v4525
        %v4527 = vlaneseq
        %v4528 = vshrl.u32 %v4527, 7
        %v4529 = vsub.s32 3, %v4528
        %v4530 = vrot.slane %v4513, %v4529
        %v4535 = vadd.f32 %v4417, %v4518
        %v4536 = vadd.f32 %v4418, %v4522
        %v4537 = vadd.f32 %v4419, %v4526
        %v4538 = vadd.f32 %v4420, %v4530
        %v4539 = vadd.f32 %v4421, %v4518
        %v4540 = vadd.f32 %v4422, %v4522
        %v4541 = vadd.f32 %v4423, %v4526
        %v4542 = vadd.f32 %v4424, %v4530
        %v4543 = vadd.f32 %v4425, %v4518
        %v4544 = vadd.f32 %v4426, %v4522
        %v4545 = vadd.f32 %v4427, %v4526
        %v4546 = vadd.f32 %v4428, %v4530
        %v4547 = vadd.f32 %v4429, %v4518
        %v4548 = vadd.f32 %v4430, %v4522
        %v4549 = vadd.f32 %v4431, %v4526
        %v4550 = vadd.f32 %v4432, %v4530
        %v4551 = vadd.f32 %v4433, %v4518
        %v4552 = vadd.f32 %v4434, %v4522
        %v4553 = vadd.f32 %v4435, %v4526
        %v4554 = vadd.f32 %v4436, %v4530
        %v4555 = vadd.f32 %v4437, %v4518
        %v4556 = vadd.f32 %v4438, %v4522
        %v4557 = vadd.f32 %v4439, %v4526
        %v4558 = vadd.f32 %v4440, %v4530
        %v4559 = vadd.f32 %v4441, %v4518
        %v4560 = vadd.f32 %v4442, %v4522
        %v4561 = vadd.f32 %v4443, %v4526
        %v4562 = vadd.f32 %v4444, %v4530
        %v4563 = vadd.f32 %v4445, %v4518
        %v4564 = vadd.f32 %v4446, %v4522
        %v4565 = vadd.f32 %v4447, %v4526
        %v4566 = vadd.f32 %v4448, %v4530
        %v4567 = vadd.f32 %v4449, %v4518
        %v4568 = vadd.f32 %v4450, %v4522
        %v4569 = vadd.f32 %v4451, %v4526
        %v4570 = vadd.f32 %v4452, %v4530
        %v4571 = vadd.f32 %v4453, %v4518
        %v4572 = vadd.f32 %v4454, %v4522
        %v4573 = vadd.f32 %v4455, %v4526
        %v4574 = vadd.f32 %v4456, %v4530
        %v4575 = vadd.f32 %v4457, %v4518
        %v4576 = vadd.f32 %v4458, %v4522
        %v4577 = vadd.f32 %v4459, %v4526
        %v4578 = vadd.f32 %v4460, %v4530
        %v4579 = vadd.f32 %v4461, %v4518
        %v4580 = vadd.f32 %v4462, %v4522
        %v4581 = vadd.f32 %v4463, %v4526
        %v4582 = vadd.f32 %v4464, %v4530
        %v4583 = vadd.f32 %v4465, %v4518
        %v4584 = vadd.f32 %v4466, %v4522
        %v4585 = vadd.f32 %v4467, %v4526
        %v4586 = vadd.f32 %v4468, %v4530
        %v4587 = vadd.f32 %v4469, %v4518
        %v4588 = vadd.f32 %v4470, %v4522
        %v4589 = vadd.f32 %v4471, %v4526
        %v4590 = vadd.f32 %v4472, %v4530
        %v4591 = vadd.f32 %v4473, %v4518
        %v4592 = vadd.f32 %v4474, %v4522
        %v4593 = vadd.f32 %v4475, %v4526
        %v4594 = vadd.f32 %v4476, %v4530
        %v4595 = vadd.f32 %v4477, %v4518
        %v4596 = vadd.f32 %v4478, %v4522
        %v4597 = vadd.f32 %v4479, %v4526
        %v4598 = vadd.f32 %v4480, %v4530
        %v4599 = vadd.f32 %v4481, %v4518
        %v4600 = vadd.f32 %v4482, %v4522
        %v4601 = vadd.f32 %v4483, %v4526
        %v4602 = vadd.f32 %v4484, %v4530
        %v4603 = vadd.f32 %v4485, %v4518
        %v4604 = vadd.f32 %v4486, %v4522
        %v4605 = vadd.f32 %v4487, %v4526
        %v4606 = vadd.f32 %v4488, %v4530
        %v4607 = vadd.f32 %v4489, %v4518
        %v4608 = vadd.f32 %v4490, %v4522
        %v4609 = vadd.f32 %v4491, %v4526
        %v4610 = vadd.f32 %v4492, %v4530
        %v4611 = vadd.f32 %v4493, %v4518
        %v4612 = vadd.f32 %v4494, %v4522
        %v4613 = vadd.f32 %v4495, %v4526
        %v4614 = vadd.f32 %v4496, %v4530
        %v4615 = vadd.f32 %v4497, %v4518
        %v4616 = vadd.f32 %v4498, %v4522
        %v4617 = vadd.f32 %v4499, %v4526
        %v4618 = vadd.f32 %v4500, %v4530
        %v4619 = vadd.f32 %v4501, %v4518
        %v4620 = vadd.f32 %v4502, %v4522
        %v4621 = vadd.f32 %v4503, %v4526
        %v4622 = vadd.f32 %v4504, %v4530
        %v4623 = vadd.f32 %v4505, %v4518
        %v4624 = vadd.f32 %v4506, %v4522
        %v4625 = vadd.f32 %v4507, %v4526
        %v4626 = vadd.f32 %v4508, %v4530
        %v4627 = vadd.f32 %v4509, %v4518
        %v4628 = vadd.f32 %v4510, %v4522
        %v4629 = vadd.f32 %v4511, %v4526
        %v4630 = vadd.f32 %v4512, %v4530
        %v4631 = vmax.f32 %v4535, 0.0
        %v4632 = vmax.f32 %v4536, 0.0
        %v4633 = vmax.f32 %v4537, 0.0
        %v4634 = vmax.f32 %v4538, 0.0
        %v4635 = vmax.f32 %v4539, 0.0
        %v4636 = vmax.f32 %v4540, 0.0
        %v4637 = vmax.f32 %v4541, 0.0
        %v4638 = vmax.f32 %v4542, 0.0
        %v4639 = vmax.f32 %v4543, 0.0
        %v4640 = vmax.f32 %v4544, 0.0
        %v4641 = vmax.f32 %v4545, 0.0
        %v4642 = vmax.f32 %v4546, 0.0
        %v4643 = vmax.f32 %v4547, 0.0
        %v4644 = vmax.f32 %v4548, 0.0
        %v4645 = vmax.f32 %v4549, 0.0
        %v4646 = vmax.f32 %v4550, 0.0
        %v4647 = vmax.f32 %v4551, 0.0
        %v4648 = vmax.f32 %v4552, 0.0
        %v4649 = vmax.f32 %v4553, 0.0
        %v4650 = vmax.f32 %v4554, 0.0
        %v4651 = vmax.f32 %v4555, 0.0
        %v4652 = vmax.f32 %v4556, 0.0
        %v4653 = vmax.f32 %v4557, 0.0
        %v4654 = vmax.f32 %v4558, 0.0
        %v4655 = vmax.f32 %v4559, 0.0
        %v4656 = vmax.f32 %v4560, 0.0
        %v4657 = vmax.f32 %v4561, 0.0
        %v4658 = vmax.f32 %v4562, 0.0
        %v4659 = vmax.f32 %v4563, 0.0
        %v4660 = vmax.f32 %v4564, 0.0
        %v4661 = vmax.f32 %v4565, 0.0
        %v4662 = vmax.f32 %v4566, 0.0
        %v4663 = vmax.f32 %v4567, 0.0
        %v4664 = vmax.f32 %v4568, 0.0
        %v4665 = vmax.f32 %v4569, 0.0
        %v4666 = vmax.f32 %v4570, 0.0
        %v4667 = vmax.f32 %v4571, 0.0
        %v4668 = vmax.f32 %v4572, 0.0
        %v4669 = vmax.f32 %v4573, 0.0
        %v4670 = vmax.f32 %v4574, 0.0
        %v4671 = vmax.f32 %v4575, 0.0
        %v4672 = vmax.f32 %v4576, 0.0
        %v4673 = vmax.f32 %v4577, 0.0
        %v4674 = vmax.f32 %v4578, 0.0
        %v4675 = vmax.f32 %v4579, 0.0
        %v4676 = vmax.f32 %v4580, 0.0
        %v4677 = vmax.f32 %v4581, 0.0
        %v4678 = vmax.f32 %v4582, 0.0
        %v4679 = vmax.f32 %v4583, 0.0
        %v4680 = vmax.f32 %v4584, 0.0
        %v4681 = vmax.f32 %v4585, 0.0
        %v4682 = vmax.f32 %v4586, 0.0
        %v4683 = vmax.f32 %v4587, 0.0
        %v4684 = vmax.f32 %v4588, 0.0
        %v4685 = vmax.f32 %v4589, 0.0
        %v4686 = vmax.f32 %v4590, 0.0
        %v4687 = vmax.f32 %v4591, 0.0
        %v4688 = vmax.f32 %v4592, 0.0
        %v4689 = vmax.f32 %v4593, 0.0
        %v4690 = vmax.f32 %v4594, 0.0
        %v4691 = vmax.f32 %v4595, 0.0
        %v4692 = vmax.f32 %v4596, 0.0
        %v4693 = vmax.f32 %v4597, 0.0
        %v4694 = vmax.f32 %v4598, 0.0
        %v4695 = vmax.f32 %v4599, 0.0
        %v4696 = vmax.f32 %v4600, 0.0
        %v4697 = vmax.f32 %v4601, 0.0
        %v4698 = vmax.f32 %v4602, 0.0
        %v4699 = vmax.f32 %v4603, 0.0
        %v4700 = vmax.f32 %v4604, 0.0
        %v4701 = vmax.f32 %v4605, 0.0
        %v4702 = vmax.f32 %v4606, 0.0
        %v4703 = vmax.f32 %v4607, 0.0
        %v4704 = vmax.f32 %v4608, 0.0
        %v4705 = vmax.f32 %v4609, 0.0
        %v4706 = vmax.f32 %v4610, 0.0
        %v4707 = vmax.f32 %v4611, 0.0
        %v4708 = vmax.f32 %v4612, 0.0
        %v4709 = vmax.f32 %v4613, 0.0
        %v4710 = vmax.f32 %v4614, 0.0
        %v4711 = vmax.f32 %v4615, 0.0
        %v4712 = vmax.f32 %v4616, 0.0
        %v4713 = vmax.f32 %v4617, 0.0
        %v4714 = vmax.f32 %v4618, 0.0
        %v4715 = vmax.f32 %v4619, 0.0
        %v4716 = vmax.f32 %v4620, 0.0
        %v4717 = vmax.f32 %v4621, 0.0
        %v4718 = vmax.f32 %v4622, 0.0
        %v4719 = vmax.f32 %v4623, 0.0
        %v4720 = vmax.f32 %v4624, 0.0
        %v4721 = vmax.f32 %v4625, 0.0
        %v4722 = vmax.f32 %v4626, 0.0
        %v4723 = vmax.f32 %v4627, 0.0
        %v4724 = vmax.f32 %v4628, 0.0
        %v4725 = vmax.f32 %v4629, 0.0
        %v4726 = vmax.f32 %v4630, 0.0
        %v4727 = vpack.c.bf16 %v4635, %v4631
        %v4728 = vpack.c.bf16 %v4636, %v4632
        %v4729 = vpack.c.bf16 %v4637, %v4633
        %v4730 = vpack.c.bf16 %v4638, %v4634
        %v4731 = vpack.c.bf16 %v4643, %v4639
        %v4732 = vpack.c.bf16 %v4644, %v4640
        %v4733 = vpack.c.bf16 %v4645, %v4641
        %v4734 = vpack.c.bf16 %v4646, %v4642
        %v4735 = vpack.c.bf16 %v4651, %v4647
        %v4736 = vpack.c.bf16 %v4652, %v4648
        %v4737 = vpack.c.bf16 %v4653, %v4649
        %v4738 = vpack.c.bf16 %v4654, %v4650
        %v4739 = vpack.c.bf16 %v4659, %v4655
        %v4740 = vpack.c.bf16 %v4660, %v4656
        %v4741 = vpack.c.bf16 %v4661, %v4657
        %v4742 = vpack.c.bf16 %v4662, %v4658
        %v4743 = vpack.c.bf16 %v4667, %v4663
        %v4744 = vpack.c.bf16 %v4668, %v4664
        %v4745 = vpack.c.bf16 %v4669, %v4665
        %v4746 = vpack.c.bf16 %v4670, %v4666
        %v4747 = vpack.c.bf16 %v4675, %v4671
        %v4748 = vpack.c.bf16 %v4676, %v4672
        %v4749 = vpack.c.bf16 %v4677, %v4673
        %v4750 = vpack.c.bf16 %v4678, %v4674
        %v4751 = vpack.c.bf16 %v4683, %v4679
        %v4752 = vpack.c.bf16 %v4684, %v4680
        %v4753 = vpack.c.bf16 %v4685, %v4681
        %v4754 = vpack.c.bf16 %v4686, %v4682
        %v4755 = vpack.c.bf16 %v4691, %v4687
        %v4756 = vpack.c.bf16 %v4692, %v4688
        %v4757 = vpack.c.bf16 %v4693, %v4689
        %v4758 = vpack.c.bf16 %v4694, %v4690
        %v4759 = vpack.c.bf16 %v4699, %v4695
        %v4760 = vpack.c.bf16 %v4700, %v4696
        %v4761 = vpack.c.bf16 %v4701, %v4697
        %v4762 = vpack.c.bf16 %v4702, %v4698
        %v4763 = vpack.c.bf16 %v4707, %v4703
        %v4764 = vpack.c.bf16 %v4708, %v4704
        %v4765 = vpack.c.bf16 %v4709, %v4705
        %v4766 = vpack.c.bf16 %v4710, %v4706
        %v4767 = vpack.c.bf16 %v4715, %v4711
        %v4768 = vpack.c.bf16 %v4716, %v4712
        %v4769 = vpack.c.bf16 %v4717, %v4713
        %v4770 = vpack.c.bf16 %v4718, %v4714
        %v4771 = vpack.c.bf16 %v4723, %v4719
        %v4772 = vpack.c.bf16 %v4724, %v4720
        %v4773 = vpack.c.bf16 %v4725, %v4721
        %v4774 = vpack.c.bf16 %v4726, %v4722
        %4775 = vst [vmem:[#allocation2 + $0x20] sm:$0xff] %v4727
        %4776 = vst [vmem:[#allocation2 + $0x28] sm:$0xff] %v4728
        %4777 = vst [vmem:[#allocation2 + $0x30] sm:$0xff] %v4729
        %4778 = vst [vmem:[#allocation2 + $0x38] sm:$0xff] %v4730
        %4779 = vst [vmem:[#allocation2 + $0x80] sm:$0xff] %v4731
        %4780 = vst [vmem:[#allocation2 + $0x88] sm:$0xff] %v4732
        %4781 = vst [vmem:[#allocation2 + $0x90] sm:$0xff] %v4733
        %4782 = vst [vmem:[#allocation2 + $0x98] sm:$0xff] %v4734
        %4783 = vst [vmem:[#allocation2 + $0xe0] sm:$0xff] %v4735
        %4784 = vst [vmem:[#allocation2 + $0xe8] sm:$0xff] %v4736
        %4785 = vst [vmem:[#allocation2 + $0xf0] sm:$0xff] %v4737
        %4786 = vst [vmem:[#allocation2 + $0xf8] sm:$0xff] %v4738
        %4787 = vst [vmem:[#allocation2 + $0x140] sm:$0xff] %v4739
        %4788 = vst [vmem:[#allocation2 + $0x148] sm:$0xff] %v4740
        %4789 = vst [vmem:[#allocation2 + $0x150] sm:$0xff] %v4741
        %4790 = vst [vmem:[#allocation2 + $0x158] sm:$0xff] %v4742
        %4791 = vst [vmem:[#allocation2 + $0x1a0] sm:$0xff] %v4743
        %4792 = vst [vmem:[#allocation2 + $0x1a8] sm:$0xff] %v4744
        %4793 = vst [vmem:[#allocation2 + $0x1b0] sm:$0xff] %v4745
        %4794 = vst [vmem:[#allocation2 + $0x1b8] sm:$0xff] %v4746
        %4795 = vst [vmem:[#allocation2 + $0x200] sm:$0xff] %v4747
        %4796 = vst [vmem:[#allocation2 + $0x208] sm:$0xff] %v4748
        %4797 = vst [vmem:[#allocation2 + $0x210] sm:$0xff] %v4749
        %4798 = vst [vmem:[#allocation2 + $0x218] sm:$0xff] %v4750
        %4799 = vst [vmem:[#allocation2 + $0x260] sm:$0xff] %v4751
        %4800 = vst [vmem:[#allocation2 + $0x268] sm:$0xff] %v4752
        %4801 = vst [vmem:[#allocation2 + $0x270] sm:$0xff] %v4753
        %4802 = vst [vmem:[#allocation2 + $0x278] sm:$0xff] %v4754
        %4803 = vst [vmem:[#allocation2 + $0x2c0] sm:$0xff] %v4755
        %4804 = vst [vmem:[#allocation2 + $0x2c8] sm:$0xff] %v4756
        %4805 = vst [vmem:[#allocation2 + $0x2d0] sm:$0xff] %v4757
        %4806 = vst [vmem:[#allocation2 + $0x2d8] sm:$0xff] %v4758
        %4807 = vst [vmem:[#allocation2 + $0x320] sm:$0xff] %v4759
        %4808 = vst [vmem:[#allocation2 + $0x328] sm:$0xff] %v4760
        %4809 = vst [vmem:[#allocation2 + $0x330] sm:$0xff] %v4761
        %4810 = vst [vmem:[#allocation2 + $0x338] sm:$0xff] %v4762
        %4811 = vst [vmem:[#allocation2 + $0x380] sm:$0xff] %v4763
        %4812 = vst [vmem:[#allocation2 + $0x388] sm:$0xff] %v4764
        %4813 = vst [vmem:[#allocation2 + $0x390] sm:$0xff] %v4765
        %4814 = vst [vmem:[#allocation2 + $0x398] sm:$0xff] %v4766
        %4815 = vst [vmem:[#allocation2 + $0x3e0] sm:$0xff] %v4767
        %4816 = vst [vmem:[#allocation2 + $0x3e8] sm:$0xff] %v4768
        %4817 = vst [vmem:[#allocation2 + $0x3f0] sm:$0xff] %v4769
        %4818 = vst [vmem:[#allocation2 + $0x3f8] sm:$0xff] %v4770
        %4819 = vst [vmem:[#allocation2 + $0x440] sm:$0xff] %v4771
        %4820 = vst [vmem:[#allocation2 + $0x448] sm:$0xff] %v4772
        %4821 = vst [vmem:[#allocation2 + $0x450] sm:$0xff] %v4773
        %4822 = vst [vmem:[#allocation2 + $0x458] sm:$0xff] %v4774
        %v4823 = vld [vmem:[%s1 + $0x20] sm:$0xff]
        %v4824 = vld [vmem:[%s1 + $0x28] sm:$0xff]
        %v4825 = vld [vmem:[%s1 + $0x80] sm:$0xff]
        %v4826 = vld [vmem:[%s1 + $0x88] sm:$0xff]
        %v4827 = vld [vmem:[%s1 + $0xe0] sm:$0xff]
        %v4828 = vld [vmem:[%s1 + $0xe8] sm:$0xff]
        %v4829 = vld [vmem:[%s1 + $0x140] sm:$0xff]
        %v4830 = vld [vmem:[%s1 + $0x148] sm:$0xff]
        %v4831 = vld [vmem:[%s1 + $0x1a0] sm:$0xff]
        %v4832 = vld [vmem:[%s1 + $0x1a8] sm:$0xff]
        %v4833 = vld [vmem:[%s1 + $0x200] sm:$0xff]
        %v4834 = vld [vmem:[%s1 + $0x208] sm:$0xff]
        %v4835 = vld [vmem:[%s1 + $0x260] sm:$0xff]
        %v4836 = vld [vmem:[%s1 + $0x268] sm:$0xff]
        %v4837 = vld [vmem:[%s1 + $0x2c0] sm:$0xff]
        %v4838 = vld [vmem:[%s1 + $0x2c8] sm:$0xff]
        %v4839 = vld [vmem:[%s1 + $0x320] sm:$0xff]
        %v4840 = vld [vmem:[%s1 + $0x328] sm:$0xff]
        %v4841 = vld [vmem:[%s1 + $0x380] sm:$0xff]
        %v4842 = vld [vmem:[%s1 + $0x388] sm:$0xff]
        %v4863 = vunpack.c.l.b16 %v4823
        %v4864 = vunpack.c.h.b16 %v4823
        %v4865 = vunpack.c.l.b16 %v4824
        %v4866 = vunpack.c.h.b16 %v4824
        %v4867 = vunpack.c.l.b16 %v4825
        %v4868 = vunpack.c.h.b16 %v4825
        %v4869 = vunpack.c.l.b16 %v4826
        %v4870 = vunpack.c.h.b16 %v4826
        %v4871 = vunpack.c.l.b16 %v4827
        %v4872 = vunpack.c.h.b16 %v4827
        %v4873 = vunpack.c.l.b16 %v4828
        %v4874 = vunpack.c.h.b16 %v4828
        %v4875 = vunpack.c.l.b16 %v4829
        %v4876 = vunpack.c.h.b16 %v4829
        %v4877 = vunpack.c.l.b16 %v4830
        %v4878 = vunpack.c.h.b16 %v4830
        %v4879 = vunpack.c.l.b16 %v4831
        %v4880 = vunpack.c.h.b16 %v4831
        %v4881 = vunpack.c.l.b16 %v4832
        %v4882 = vunpack.c.h.b16 %v4832
        %v4883 = vunpack.c.l.b16 %v4833
        %v4884 = vunpack.c.h.b16 %v4833
        %v4885 = vunpack.c.l.b16 %v4834
        %v4886 = vunpack.c.h.b16 %v4834
        %v4887 = vunpack.c.l.b16 %v4835
        %v4888 = vunpack.c.h.b16 %v4835
        %v4889 = vunpack.c.l.b16 %v4836
        %v4890 = vunpack.c.h.b16 %v4836
        %v4891 = vunpack.c.l.b16 %v4837
        %v4892 = vunpack.c.h.b16 %v4837
        %v4893 = vunpack.c.l.b16 %v4838
        %v4894 = vunpack.c.h.b16 %v4838
        %v4895 = vunpack.c.l.b16 %v4839
        %v4896 = vunpack.c.h.b16 %v4839
        %v4897 = vunpack.c.l.b16 %v4840
        %v4898 = vunpack.c.h.b16 %v4840
        %v4899 = vunpack.c.l.b16 %v4841
        %v4900 = vunpack.c.h.b16 %v4841
        %v4901 = vunpack.c.l.b16 %v4842
        %v4902 = vunpack.c.h.b16 %v4842
        %v4903 = vpack.c.b16 %v4867, %v4863
        %v4904 = vpack.c.b16 %v4868, %v4864
        %v4905 = vpack.c.b16 %v4869, %v4865
        %v4906 = vpack.c.b16 %v4870, %v4866
        %v4907 = vpack.c.b16 %v4875, %v4871
        %v4908 = vpack.c.b16 %v4876, %v4872
        %v4909 = vpack.c.b16 %v4877, %v4873
        %v4910 = vpack.c.b16 %v4878, %v4874
        %v4911 = vpack.c.b16 %v4883, %v4879
        %v4912 = vpack.c.b16 %v4884, %v4880
        %v4913 = vpack.c.b16 %v4885, %v4881
        %v4914 = vpack.c.b16 %v4886, %v4882
        %v4915 = vpack.c.b16 %v4891, %v4887
        %v4916 = vpack.c.b16 %v4892, %v4888
        %v4917 = vpack.c.b16 %v4893, %v4889
        %v4918 = vpack.c.b16 %v4894, %v4890
        %v4919 = vpack.c.b16 %v4899, %v4895
        %v4920 = vpack.c.b16 %v4900, %v4896
        %v4921 = vpack.c.b16 %v4901, %v4897
        %v4922 = vpack.c.b16 %v4902, %v4898
        %4943 = vmatprep.subr.bf16.mxu0 %v4904
        %4944 = vmatpush1.bf16.msra.mxu0 %v4903
        %4945 = vmatprep.subr.bf16.mxu0 %v4908
        %4946 = vmatpush1.bf16.msra.mxu0 %v4907
        %4947 = vmatprep.subr.bf16.mxu0 %v4912
        %4948 = vmatpush1.bf16.msra.mxu0 %v4911
        %4949 = vmatprep.subr.bf16.mxu0 %v4916
        %4950 = vmatpush1.bf16.msra.mxu0 %v4915
        %4951 = vmatprep.subr.bf16.mxu0 %v4920
        %4952 = vmatpush1.bf16.msra.mxu0 %v4919
        %4953 = vmatprep.subr.bf16.mxu0 0
        %4954 = vmatpush1.bf16.msra.mxu0 0
        %4955 = vmatprep.subr.bf16.mxu0 0
        %4956 = vmatpush1.bf16.msra.mxu0 0
        %4957 = vmatprep.subr.bf16.mxu0 0
        %4958 = vmatpush1.bf16.msra.mxu0 0
        %4959 = vmatprep.subr.bf16.mxu0 0
        %4960 = vmatpush1.bf16.msra.mxu0 0
        %4961 = vmatprep.subr.bf16.mxu0 0
        %4962 = vmatpush1.bf16.msra.mxu0 0
        %4963 = vmatprep.subr.bf16.mxu0 0
        %4964 = vmatpush1.bf16.msra.mxu0 0
        %4965 = vmatprep.subr.bf16.mxu0 0
        %4966 = vmatpush1.bf16.msra.mxu0 0
        %4967 = vmatprep.subr.bf16.mxu0 0
        %4968 = vmatpush1.bf16.msra.mxu0 0
        %4969 = vmatprep.subr.bf16.mxu0 0
        %4970 = vmatpush1.bf16.msra.mxu0 0
        %4971 = vmatprep.subr.bf16.mxu0 0
        %4972 = vmatpush1.bf16.msra.mxu0 0
        %4973 = vmatprep.subr.bf16.mxu0 0
        %4974 = vmatpush1.bf16.msra.mxu0 0
        %4975 = vmatprep.mubr.bf16.mxu0 0
        %4976 = vmatmul.mubr.bf16.gmra.mrb[0].mxu0 %v688
        %v4977 = vpop.f32.mrb[0].mxu0
        %v4978 = vadd.f32 0.0, %v4977
        %v4979 = vpop.f32.mrb[0].mxu0
        %v4980 = vadd.f32 0.0, %v4979
        %v4981 = vpop.f32.mrb[0].mxu0
        %v4982 = vadd.f32 0.0, %v4981
        %v4983 = vpop.f32.mrb[0].mxu0
        %v4984 = vadd.f32 0.0, %v4983
        %4985 = vmatprep.mubr.bf16.mxu0 0
        %4986 = vmatmul.mubr.bf16.gmra.mrb[0].mxu0 %v691
        %v4987 = vpop.f32.mrb[0].mxu0
        %v4988 = vadd.f32 0.0, %v4987
        %v4989 = vpop.f32.mrb[0].mxu0
        %v4990 = vadd.f32 0.0, %v4989
        %v4991 = vpop.f32.mrb[0].mxu0
        %v4992 = vadd.f32 0.0, %v4991
        %v4993 = vpop.f32.mrb[0].mxu0
        %v4994 = vadd.f32 0.0, %v4993
        %4995 = vmatprep.mubr.bf16.mxu0 0
        %4996 = vmatmul.mubr.bf16.gmra.mrb[0].mxu0 %v694
        %v4997 = vpop.f32.mrb[0].mxu0
        %v4998 = vadd.f32 0.0, %v4997
        %v4999 = vpop.f32.mrb[0].mxu0
        %v5000 = vadd.f32 0.0, %v4999
        %v5001 = vpop.f32.mrb[0].mxu0
        %v5002 = vadd.f32 0.0, %v5001
        %v5003 = vpop.f32.mrb[0].mxu0
        %v5004 = vadd.f32 0.0, %v5003
        %5005 = vmatprep.mubr.bf16.mxu0 0
        %5006 = vmatmul.mubr.bf16.gmra.mrb[0].mxu0 %v697
        %v5007 = vpop.f32.mrb[0].mxu0
        %v5008 = vadd.f32 0.0, %v5007
        %v5009 = vpop.f32.mrb[0].mxu0
        %v5010 = vadd.f32 0.0, %v5009
        %v5011 = vpop.f32.mrb[0].mxu0
        %v5012 = vadd.f32 0.0, %v5011
        %v5013 = vpop.f32.mrb[0].mxu0
        %v5014 = vadd.f32 0.0, %v5013
        %5015 = vmatprep.mubr.bf16.mxu0 0
        %5016 = vmatmul.mubr.bf16.gmra.mrb[0].mxu0 %v700
        %v5017 = vpop.f32.mrb[0].mxu0
        %v5018 = vadd.f32 0.0, %v5017
        %v5019 = vpop.f32.mrb[0].mxu0
        %v5020 = vadd.f32 0.0, %v5019
        %v5021 = vpop.f32.mrb[0].mxu0
        %v5022 = vadd.f32 0.0, %v5021
        %v5023 = vpop.f32.mrb[0].mxu0
        %v5024 = vadd.f32 0.0, %v5023
        %5025 = vmatprep.mubr.bf16.mxu0 0
        %5026 = vmatmul.mubr.bf16.gmra.mrb[0].mxu0 %v703
        %v5027 = vpop.f32.mrb[0].mxu0
        %v5028 = vadd.f32 0.0, %v5027
        %v5029 = vpop.f32.mrb[0].mxu0
        %v5030 = vadd.f32 0.0, %v5029
        %v5031 = vpop.f32.mrb[0].mxu0
        %v5032 = vadd.f32 0.0, %v5031
        %v5033 = vpop.f32.mrb[0].mxu0
        %v5034 = vadd.f32 0.0, %v5033
        %5035 = vmatprep.mubr.bf16.mxu0 0
        %5036 = vmatmul.mubr.bf16.gmra.mrb[0].mxu0 %v706
        %v5037 = vpop.f32.mrb[0].mxu0
        %v5038 = vadd.f32 0.0, %v5037
        %v5039 = vpop.f32.mrb[0].mxu0
        %v5040 = vadd.f32 0.0, %v5039
        %v5041 = vpop.f32.mrb[0].mxu0
        %v5042 = vadd.f32 0.0, %v5041
        %v5043 = vpop.f32.mrb[0].mxu0
        %v5044 = vadd.f32 0.0, %v5043
        %5045 = vmatprep.mubr.bf16.mxu0 0
        %5046 = vmatmul.mubr.bf16.gmra.mrb[0].mxu0 %v709
        %v5047 = vpop.f32.mrb[0].mxu0
        %v5048 = vadd.f32 0.0, %v5047
        %v5049 = vpop.f32.mrb[0].mxu0
        %v5050 = vadd.f32 0.0, %v5049
        %v5051 = vpop.f32.mrb[0].mxu0
        %v5052 = vadd.f32 0.0, %v5051
        %v5053 = vpop.f32.mrb[0].mxu0
        %v5054 = vadd.f32 0.0, %v5053
        %5055 = vmatprep.mubr.bf16.mxu0 0
        %5056 = vmatmul.mubr.bf16.gmra.mrb[0].mxu0 %v712
        %v5057 = vpop.f32.mrb[0].mxu0
        %v5058 = vadd.f32 0.0, %v5057
        %v5059 = vpop.f32.mrb[0].mxu0
        %v5060 = vadd.f32 0.0, %v5059
        %v5061 = vpop.f32.mrb[0].mxu0
        %v5062 = vadd.f32 0.0, %v5061
        %v5063 = vpop.f32.mrb[0].mxu0
        %v5064 = vadd.f32 0.0, %v5063
        %5065 = vmatprep.mubr.bf16.mxu0 0
        %5066 = vmatmul.mubr.bf16.gmra.mrb[0].mxu0 %v715
        %v5067 = vpop.f32.mrb[0].mxu0
        %v5068 = vadd.f32 0.0, %v5067
        %v5069 = vpop.f32.mrb[0].mxu0
        %v5070 = vadd.f32 0.0, %v5069
        %v5071 = vpop.f32.mrb[0].mxu0
        %v5072 = vadd.f32 0.0, %v5071
        %v5073 = vpop.f32.mrb[0].mxu0
        %v5074 = vadd.f32 0.0, %v5073
        %5075 = vmatprep.mubr.bf16.mxu0 0
        %5076 = vmatmul.mubr.bf16.gmra.mrb[0].mxu0 %v718
        %v5077 = vpop.f32.mrb[0].mxu0
        %v5078 = vadd.f32 0.0, %v5077
        %v5079 = vpop.f32.mrb[0].mxu0
        %v5080 = vadd.f32 0.0, %v5079
        %v5081 = vpop.f32.mrb[0].mxu0
        %v5082 = vadd.f32 0.0, %v5081
        %v5083 = vpop.f32.mrb[0].mxu0
        %v5084 = vadd.f32 0.0, %v5083
        %5085 = vmatprep.mubr.bf16.mxu0 0
        %5086 = vmatmul.mubr.bf16.gmra.mrb[0].mxu0 %v721
        %v5087 = vpop.f32.mrb[0].mxu0
        %v5088 = vadd.f32 0.0, %v5087
        %v5089 = vpop.f32.mrb[0].mxu0
        %v5090 = vadd.f32 0.0, %v5089
        %v5091 = vpop.f32.mrb[0].mxu0
        %v5092 = vadd.f32 0.0, %v5091
        %v5093 = vpop.f32.mrb[0].mxu0
        %v5094 = vadd.f32 0.0, %v5093
        %5095 = vdwg.mxu0
        %5096 = vmatprep.subr.bf16.mxu0 %v4906
        %5097 = vmatpush1.bf16.msra.mxu0 %v4905
        %5098 = vmatprep.subr.bf16.mxu0 %v4910
        %5099 = vmatpush1.bf16.msra.mxu0 %v4909
        %5100 = vmatprep.subr.bf16.mxu0 %v4914
        %5101 = vmatpush1.bf16.msra.mxu0 %v4913
        %5102 = vmatprep.subr.bf16.mxu0 %v4918
        %5103 = vmatpush1.bf16.msra.mxu0 %v4917
        %5104 = vmatprep.subr.bf16.mxu0 %v4922
        %5105 = vmatpush1.bf16.msra.mxu0 %v4921
        %5106 = vmatprep.subr.bf16.mxu0 0
        %5107 = vmatpush1.bf16.msra.mxu0 0
        %5108 = vmatprep.subr.bf16.mxu0 0
        %5109 = vmatpush1.bf16.msra.mxu0 0
        %5110 = vmatprep.subr.bf16.mxu0 0
        %5111 = vmatpush1.bf16.msra.mxu0 0
        %5112 = vmatprep.subr.bf16.mxu0 0
        %5113 = vmatpush1.bf16.msra.mxu0 0
        %5114 = vmatprep.subr.bf16.mxu0 0
        %5115 = vmatpush1.bf16.msra.mxu0 0
        %5116 = vmatprep.subr.bf16.mxu0 0
        %5117 = vmatpush1.bf16.msra.mxu0 0
        %5118 = vmatprep.subr.bf16.mxu0 0
        %5119 = vmatpush1.bf16.msra.mxu0 0
        %5120 = vmatprep.subr.bf16.mxu0 0
        %5121 = vmatpush1.bf16.msra.mxu0 0
        %5122 = vmatprep.subr.bf16.mxu0 0
        %5123 = vmatpush1.bf16.msra.mxu0 0
        %5124 = vmatprep.subr.bf16.mxu0 0
        %5125 = vmatpush1.bf16.msra.mxu0 0
        %5126 = vmatprep.subr.bf16.mxu0 0
        %5127 = vmatpush1.bf16.msra.mxu0 0
        %5128 = vmatprep.mubr.bf16.mxu0 0
        %5129 = vmatmul.mubr.bf16.gmra.mrb[0].mxu0 %v688
        %v5130 = vpop.f32.mrb[0].mxu0
        %v5131 = vadd.f32 0.0, %v5130
        %v5132 = vpop.f32.mrb[0].mxu0
        %v5133 = vadd.f32 0.0, %v5132
        %v5134 = vpop.f32.mrb[0].mxu0
        %v5135 = vadd.f32 0.0, %v5134
        %v5136 = vpop.f32.mrb[0].mxu0
        %v5137 = vadd.f32 0.0, %v5136
        %5138 = vmatprep.mubr.bf16.mxu0 0
        %5139 = vmatmul.mubr.bf16.gmra.mrb[0].mxu0 %v691
        %v5140 = vpop.f32.mrb[0].mxu0
        %v5141 = vadd.f32 0.0, %v5140
        %v5142 = vpop.f32.mrb[0].mxu0
        %v5143 = vadd.f32 0.0, %v5142
        %v5144 = vpop.f32.mrb[0].mxu0
        %v5145 = vadd.f32 0.0, %v5144
        %v5146 = vpop.f32.mrb[0].mxu0
        %v5147 = vadd.f32 0.0, %v5146
        %5148 = vmatprep.mubr.bf16.mxu0 0
        %5149 = vmatmul.mubr.bf16.gmra.mrb[0].mxu0 %v694
        %v5150 = vpop.f32.mrb[0].mxu0
        %v5151 = vadd.f32 0.0, %v5150
        %v5152 = vpop.f32.mrb[0].mxu0
        %v5153 = vadd.f32 0.0, %v5152
        %v5154 = vpop.f32.mrb[0].mxu0
        %v5155 = vadd.f32 0.0, %v5154
        %v5156 = vpop.f32.mrb[0].mxu0
        %v5157 = vadd.f32 0.0, %v5156
        %5158 = vmatprep.mubr.bf16.mxu0 0
        %5159 = vmatmul.mubr.bf16.gmra.mrb[0].mxu0 %v697
        %v5160 = vpop.f32.mrb[0].mxu0
        %v5161 = vadd.f32 0.0, %v5160
        %v5162 = vpop.f32.mrb[0].mxu0
        %v5163 = vadd.f32 0.0, %v5162
        %v5164 = vpop.f32.mrb[0].mxu0
        %v5165 = vadd.f32 0.0, %v5164
        %v5166 = vpop.f32.mrb[0].mxu0
        %v5167 = vadd.f32 0.0, %v5166
        %5168 = vmatprep.mubr.bf16.mxu0 0
        %5169 = vmatmul.mubr.bf16.gmra.mrb[0].mxu0 %v700
        %v5170 = vpop.f32.mrb[0].mxu0
        %v5171 = vadd.f32 0.0, %v5170
        %v5172 = vpop.f32.mrb[0].mxu0
        %v5173 = vadd.f32 0.0, %v5172
        %v5174 = vpop.f32.mrb[0].mxu0
        %v5175 = vadd.f32 0.0, %v5174
        %v5176 = vpop.f32.mrb[0].mxu0
        %v5177 = vadd.f32 0.0, %v5176
        %5178 = vmatprep.mubr.bf16.mxu0 0
        %5179 = vmatmul.mubr.bf16.gmra.mrb[0].mxu0 %v703
        %v5180 = vpop.f32.mrb[0].mxu0
        %v5181 = vadd.f32 0.0, %v5180
        %v5182 = vpop.f32.mrb[0].mxu0
        %v5183 = vadd.f32 0.0, %v5182
        %v5184 = vpop.f32.mrb[0].mxu0
        %v5185 = vadd.f32 0.0, %v5184
        %v5186 = vpop.f32.mrb[0].mxu0
        %v5187 = vadd.f32 0.0, %v5186
        %5188 = vmatprep.mubr.bf16.mxu0 0
        %5189 = vmatmul.mubr.bf16.gmra.mrb[0].mxu0 %v706
        %v5190 = vpop.f32.mrb[0].mxu0
        %v5191 = vadd.f32 0.0, %v5190
        %v5192 = vpop.f32.mrb[0].mxu0
        %v5193 = vadd.f32 0.0, %v5192
        %v5194 = vpop.f32.mrb[0].mxu0
        %v5195 = vadd.f32 0.0, %v5194
        %v5196 = vpop.f32.mrb[0].mxu0
        %v5197 = vadd.f32 0.0, %v5196
        %5198 = vmatprep.mubr.bf16.mxu0 0
        %5199 = vmatmul.mubr.bf16.gmra.mrb[0].mxu0 %v709
        %v5200 = vpop.f32.mrb[0].mxu0
        %v5201 = vadd.f32 0.0, %v5200
        %v5202 = vpop.f32.mrb[0].mxu0
        %v5203 = vadd.f32 0.0, %v5202
        %v5204 = vpop.f32.mrb[0].mxu0
        %v5205 = vadd.f32 0.0, %v5204
        %v5206 = vpop.f32.mrb[0].mxu0
        %v5207 = vadd.f32 0.0, %v5206
        %5208 = vmatprep.mubr.bf16.mxu0 0
        %5209 = vmatmul.mubr.bf16.gmra.mrb[0].mxu0 %v712
        %v5210 = vpop.f32.mrb[0].mxu0
        %v5211 = vadd.f32 0.0, %v5210
        %v5212 = vpop.f32.mrb[0].mxu0
        %v5213 = vadd.f32 0.0, %v5212
        %v5214 = vpop.f32.mrb[0].mxu0
        %v5215 = vadd.f32 0.0, %v5214
        %v5216 = vpop.f32.mrb[0].mxu0
        %v5217 = vadd.f32 0.0, %v5216
        %5218 = vmatprep.mubr.bf16.mxu0 0
        %5219 = vmatmul.mubr.bf16.gmra.mrb[0].mxu0 %v715
        %v5220 = vpop.f32.mrb[0].mxu0
        %v5221 = vadd.f32 0.0, %v5220
        %v5222 = vpop.f32.mrb[0].mxu0
        %v5223 = vadd.f32 0.0, %v5222
        %v5224 = vpop.f32.mrb[0].mxu0
        %v5225 = vadd.f32 0.0, %v5224
        %v5226 = vpop.f32.mrb[0].mxu0
        %v5227 = vadd.f32 0.0, %v5226
        %5228 = vmatprep.mubr.bf16.mxu0 0
        %5229 = vmatmul.mubr.bf16.gmra.mrb[0].mxu0 %v718
        %v5230 = vpop.f32.mrb[0].mxu0
        %v5231 = vadd.f32 0.0, %v5230
        %v5232 = vpop.f32.mrb[0].mxu0
        %v5233 = vadd.f32 0.0, %v5232
        %v5234 = vpop.f32.mrb[0].mxu0
        %v5235 = vadd.f32 0.0, %v5234
        %v5236 = vpop.f32.mrb[0].mxu0
        %v5237 = vadd.f32 0.0, %v5236
        %5238 = vmatprep.mubr.bf16.mxu0 0
        %5239 = vmatmul.mubr.bf16.gmra.mrb[0].mxu0 %v721
        %v5240 = vpop.f32.mrb[0].mxu0
        %v5241 = vadd.f32 0.0, %v5240
        %v5242 = vpop.f32.mrb[0].mxu0
        %v5243 = vadd.f32 0.0, %v5242
        %v5244 = vpop.f32.mrb[0].mxu0
        %v5245 = vadd.f32 0.0, %v5244
        %v5246 = vpop.f32.mrb[0].mxu0
        %v5247 = vadd.f32 0.0, %v5246
        %5248 = vdwg.mxu0
        %5249 = vmatprep.subr.bf16.mxu0 %v4904
        %5250 = vmatpush1.bf16.msra.mxu0 %v4903
        %5251 = vmatprep.subr.bf16.mxu0 %v4908
        %5252 = vmatpush1.bf16.msra.mxu0 %v4907
        %5253 = vmatprep.subr.bf16.mxu0 %v4912
        %5254 = vmatpush1.bf16.msra.mxu0 %v4911
        %5255 = vmatprep.subr.bf16.mxu0 %v4916
        %5256 = vmatpush1.bf16.msra.mxu0 %v4915
        %5257 = vmatprep.subr.bf16.mxu0 %v4920
        %5258 = vmatpush1.bf16.msra.mxu0 %v4919
        %5259 = vmatprep.subr.bf16.mxu0 0
        %5260 = vmatpush1.bf16.msra.mxu0 0
        %5261 = vmatprep.subr.bf16.mxu0 0
        %5262 = vmatpush1.bf16.msra.mxu0 0
        %5263 = vmatprep.subr.bf16.mxu0 0
        %5264 = vmatpush1.bf16.msra.mxu0 0
        %5265 = vmatprep.subr.bf16.mxu0 0
        %5266 = vmatpush1.bf16.msra.mxu0 0
        %5267 = vmatprep.subr.bf16.mxu0 0
        %5268 = vmatpush1.bf16.msra.mxu0 0
        %5269 = vmatprep.subr.bf16.mxu0 0
        %5270 = vmatpush1.bf16.msra.mxu0 0
        %5271 = vmatprep.subr.bf16.mxu0 0
        %5272 = vmatpush1.bf16.msra.mxu0 0
        %5273 = vmatprep.subr.bf16.mxu0 0
        %5274 = vmatpush1.bf16.msra.mxu0 0
        %5275 = vmatprep.subr.bf16.mxu0 0
        %5276 = vmatpush1.bf16.msra.mxu0 0
        %5277 = vmatprep.subr.bf16.mxu0 0
        %5278 = vmatpush1.bf16.msra.mxu0 0
        %5279 = vmatprep.subr.bf16.mxu0 0
        %5280 = vmatpush1.bf16.msra.mxu0 0
        %5281 = vmatprep.mubr.bf16.mxu0 0
        %5282 = vmatmul.mubr.bf16.gmra.mrb[0].mxu0 %v1090
        %v5283 = vpop.f32.mrb[0].mxu0
        %v5284 = vadd.f32 0.0, %v5283
        %v5285 = vpop.f32.mrb[0].mxu0
        %v5286 = vadd.f32 0.0, %v5285
        %v5287 = vpop.f32.mrb[0].mxu0
        %v5288 = vadd.f32 0.0, %v5287
        %v5289 = vpop.f32.mrb[0].mxu0
        %v5290 = vadd.f32 0.0, %v5289
        %5291 = vmatprep.mubr.bf16.mxu0 0
        %5292 = vmatmul.mubr.bf16.gmra.mrb[0].mxu0 %v1093
        %v5293 = vpop.f32.mrb[0].mxu0
        %v5294 = vadd.f32 0.0, %v5293
        %v5295 = vpop.f32.mrb[0].mxu0
        %v5296 = vadd.f32 0.0, %v5295
        %v5297 = vpop.f32.mrb[0].mxu0
        %v5298 = vadd.f32 0.0, %v5297
        %v5299 = vpop.f32.mrb[0].mxu0
        %v5300 = vadd.f32 0.0, %v5299
        %5301 = vmatprep.mubr.bf16.mxu0 0
        %5302 = vmatmul.mubr.bf16.gmra.mrb[0].mxu0 %v1096
        %v5303 = vpop.f32.mrb[0].mxu0
        %v5304 = vadd.f32 0.0, %v5303
        %v5305 = vpop.f32.mrb[0].mxu0
        %v5306 = vadd.f32 0.0, %v5305
        %v5307 = vpop.f32.mrb[0].mxu0
        %v5308 = vadd.f32 0.0, %v5307
        %v5309 = vpop.f32.mrb[0].mxu0
        %v5310 = vadd.f32 0.0, %v5309
        %5311 = vmatprep.mubr.bf16.mxu0 0
        %5312 = vmatmul.mubr.bf16.gmra.mrb[0].mxu0 %v1099
        %v5313 = vpop.f32.mrb[0].mxu0
        %v5314 = vadd.f32 0.0, %v5313
        %v5315 = vpop.f32.mrb[0].mxu0
        %v5316 = vadd.f32 0.0, %v5315
        %v5317 = vpop.f32.mrb[0].mxu0
        %v5318 = vadd.f32 0.0, %v5317
        %v5319 = vpop.f32.mrb[0].mxu0
        %v5320 = vadd.f32 0.0, %v5319
        %5321 = vmatprep.mubr.bf16.mxu0 0
        %5322 = vmatmul.mubr.bf16.gmra.mrb[0].mxu0 %v1102
        %v5323 = vpop.f32.mrb[0].mxu0
        %v5324 = vadd.f32 0.0, %v5323
        %v5325 = vpop.f32.mrb[0].mxu0
        %v5326 = vadd.f32 0.0, %v5325
        %v5327 = vpop.f32.mrb[0].mxu0
        %v5328 = vadd.f32 0.0, %v5327
        %v5329 = vpop.f32.mrb[0].mxu0
        %v5330 = vadd.f32 0.0, %v5329
        %5331 = vmatprep.mubr.bf16.mxu0 0
        %5332 = vmatmul.mubr.bf16.gmra.mrb[0].mxu0 %v1105
        %v5333 = vpop.f32.mrb[0].mxu0
        %v5334 = vadd.f32 0.0, %v5333
        %v5335 = vpop.f32.mrb[0].mxu0
        %v5336 = vadd.f32 0.0, %v5335
        %v5337 = vpop.f32.mrb[0].mxu0
        %v5338 = vadd.f32 0.0, %v5337
        %v5339 = vpop.f32.mrb[0].mxu0
        %v5340 = vadd.f32 0.0, %v5339
        %5341 = vmatprep.mubr.bf16.mxu0 0
        %5342 = vmatmul.mubr.bf16.gmra.mrb[0].mxu0 %v1108
        %v5343 = vpop.f32.mrb[0].mxu0
        %v5344 = vadd.f32 0.0, %v5343
        %v5345 = vpop.f32.mrb[0].mxu0
        %v5346 = vadd.f32 0.0, %v5345
        %v5347 = vpop.f32.mrb[0].mxu0
        %v5348 = vadd.f32 0.0, %v5347
        %v5349 = vpop.f32.mrb[0].mxu0
        %v5350 = vadd.f32 0.0, %v5349
        %5351 = vmatprep.mubr.bf16.mxu0 0
        %5352 = vmatmul.mubr.bf16.gmra.mrb[0].mxu0 %v1111
        %v5353 = vpop.f32.mrb[0].mxu0
        %v5354 = vadd.f32 0.0, %v5353
        %v5355 = vpop.f32.mrb[0].mxu0
        %v5356 = vadd.f32 0.0, %v5355
        %v5357 = vpop.f32.mrb[0].mxu0
        %v5358 = vadd.f32 0.0, %v5357
        %v5359 = vpop.f32.mrb[0].mxu0
        %v5360 = vadd.f32 0.0, %v5359
        %5361 = vmatprep.mubr.bf16.mxu0 0
        %5362 = vmatmul.mubr.bf16.gmra.mrb[0].mxu0 %v1114
        %v5363 = vpop.f32.mrb[0].mxu0
        %v5364 = vadd.f32 0.0, %v5363
        %v5365 = vpop.f32.mrb[0].mxu0
        %v5366 = vadd.f32 0.0, %v5365
        %v5367 = vpop.f32.mrb[0].mxu0
        %v5368 = vadd.f32 0.0, %v5367
        %v5369 = vpop.f32.mrb[0].mxu0
        %v5370 = vadd.f32 0.0, %v5369
        %5371 = vmatprep.mubr.bf16.mxu0 0
        %5372 = vmatmul.mubr.bf16.gmra.mrb[0].mxu0 %v1117
        %v5373 = vpop.f32.mrb[0].mxu0
        %v5374 = vadd.f32 0.0, %v5373
        %v5375 = vpop.f32.mrb[0].mxu0
        %v5376 = vadd.f32 0.0, %v5375
        %v5377 = vpop.f32.mrb[0].mxu0
        %v5378 = vadd.f32 0.0, %v5377
        %v5379 = vpop.f32.mrb[0].mxu0
        %v5380 = vadd.f32 0.0, %v5379
        %5381 = vmatprep.mubr.bf16.mxu0 0
        %5382 = vmatmul.mubr.bf16.gmra.mrb[0].mxu0 %v1120
        %v5383 = vpop.f32.mrb[0].mxu0
        %v5384 = vadd.f32 0.0, %v5383
        %v5385 = vpop.f32.mrb[0].mxu0
        %v5386 = vadd.f32 0.0, %v5385
        %v5387 = vpop.f32.mrb[0].mxu0
        %v5388 = vadd.f32 0.0, %v5387
        %v5389 = vpop.f32.mrb[0].mxu0
        %v5390 = vadd.f32 0.0, %v5389
        %5391 = vmatprep.mubr.bf16.mxu0 0
        %5392 = vmatmul.mubr.bf16.gmra.mrb[0].mxu0 %v1123
        %v5393 = vpop.f32.mrb[0].mxu0
        %v5394 = vadd.f32 0.0, %v5393
        %v5395 = vpop.f32.mrb[0].mxu0
        %v5396 = vadd.f32 0.0, %v5395
        %v5397 = vpop.f32.mrb[0].mxu0
        %v5398 = vadd.f32 0.0, %v5397
        %v5399 = vpop.f32.mrb[0].mxu0
        %v5400 = vadd.f32 0.0, %v5399
        %5401 = vdwg.mxu0
        %5402 = vmatprep.subr.bf16.mxu0 %v4906
        %5403 = vmatpush1.bf16.msra.mxu0 %v4905
        %5404 = vmatprep.subr.bf16.mxu0 %v4910
        %5405 = vmatpush1.bf16.msra.mxu0 %v4909
        %5406 = vmatprep.subr.bf16.mxu0 %v4914
        %5407 = vmatpush1.bf16.msra.mxu0 %v4913
        %5408 = vmatprep.subr.bf16.mxu0 %v4918
        %5409 = vmatpush1.bf16.msra.mxu0 %v4917
        %5410 = vmatprep.subr.bf16.mxu0 %v4922
        %5411 = vmatpush1.bf16.msra.mxu0 %v4921
        %5412 = vmatprep.subr.bf16.mxu0 0
        %5413 = vmatpush1.bf16.msra.mxu0 0
        %5414 = vmatprep.subr.bf16.mxu0 0
        %5415 = vmatpush1.bf16.msra.mxu0 0
        %5416 = vmatprep.subr.bf16.mxu0 0
        %5417 = vmatpush1.bf16.msra.mxu0 0
        %5418 = vmatprep.subr.bf16.mxu0 0
        %5419 = vmatpush1.bf16.msra.mxu0 0
        %5420 = vmatprep.subr.bf16.mxu0 0
        %5421 = vmatpush1.bf16.msra.mxu0 0
        %5422 = vmatprep.subr.bf16.mxu0 0
        %5423 = vmatpush1.bf16.msra.mxu0 0
        %5424 = vmatprep.subr.bf16.mxu0 0
        %5425 = vmatpush1.bf16.msra.mxu0 0
        %5426 = vmatprep.subr.bf16.mxu0 0
        %5427 = vmatpush1.bf16.msra.mxu0 0
        %5428 = vmatprep.subr.bf16.mxu0 0
        %5429 = vmatpush1.bf16.msra.mxu0 0
        %5430 = vmatprep.subr.bf16.mxu0 0
        %5431 = vmatpush1.bf16.msra.mxu0 0
        %5432 = vmatprep.subr.bf16.mxu0 0
        %5433 = vmatpush1.bf16.msra.mxu0 0
        %5434 = vmatprep.mubr.bf16.mxu0 0
        %5435 = vmatmul.mubr.bf16.gmra.mrb[0].mxu0 %v1090
        %v5436 = vpop.f32.mrb[0].mxu0
        %v5437 = vadd.f32 0.0, %v5436
        %v5438 = vpop.f32.mrb[0].mxu0
        %v5439 = vadd.f32 0.0, %v5438
        %v5440 = vpop.f32.mrb[0].mxu0
        %v5441 = vadd.f32 0.0, %v5440
        %v5442 = vpop.f32.mrb[0].mxu0
        %v5443 = vadd.f32 0.0, %v5442
        %5444 = vmatprep.mubr.bf16.mxu0 0
        %5445 = vmatmul.mubr.bf16.gmra.mrb[0].mxu0 %v1093
        %v5446 = vpop.f32.mrb[0].mxu0
        %v5447 = vadd.f32 0.0, %v5446
        %v5448 = vpop.f32.mrb[0].mxu0
        %v5449 = vadd.f32 0.0, %v5448
        %v5450 = vpop.f32.mrb[0].mxu0
        %v5451 = vadd.f32 0.0, %v5450
        %v5452 = vpop.f32.mrb[0].mxu0
        %v5453 = vadd.f32 0.0, %v5452
        %5454 = vmatprep.mubr.bf16.mxu0 0
        %5455 = vmatmul.mubr.bf16.gmra.mrb[0].mxu0 %v1096
        %v5456 = vpop.f32.mrb[0].mxu0
        %v5457 = vadd.f32 0.0, %v5456
        %v5458 = vpop.f32.mrb[0].mxu0
        %v5459 = vadd.f32 0.0, %v5458
        %v5460 = vpop.f32.mrb[0].mxu0
        %v5461 = vadd.f32 0.0, %v5460
        %v5462 = vpop.f32.mrb[0].mxu0
        %v5463 = vadd.f32 0.0, %v5462
        %5464 = vmatprep.mubr.bf16.mxu0 0
        %5465 = vmatmul.mubr.bf16.gmra.mrb[0].mxu0 %v1099
        %v5466 = vpop.f32.mrb[0].mxu0
        %v5467 = vadd.f32 0.0, %v5466
        %v5468 = vpop.f32.mrb[0].mxu0
        %v5469 = vadd.f32 0.0, %v5468
        %v5470 = vpop.f32.mrb[0].mxu0
        %v5471 = vadd.f32 0.0, %v5470
        %v5472 = vpop.f32.mrb[0].mxu0
        %v5473 = vadd.f32 0.0, %v5472
        %5474 = vmatprep.mubr.bf16.mxu0 0
        %5475 = vmatmul.mubr.bf16.gmra.mrb[0].mxu0 %v1102
        %v5476 = vpop.f32.mrb[0].mxu0
        %v5477 = vadd.f32 0.0, %v5476
        %v5478 = vpop.f32.mrb[0].mxu0
        %v5479 = vadd.f32 0.0, %v5478
        %v5480 = vpop.f32.mrb[0].mxu0
        %v5481 = vadd.f32 0.0, %v5480
        %v5482 = vpop.f32.mrb[0].mxu0
        %v5483 = vadd.f32 0.0, %v5482
        %5484 = vmatprep.mubr.bf16.mxu0 0
        %5485 = vmatmul.mubr.bf16.gmra.mrb[0].mxu0 %v1105
        %v5486 = vpop.f32.mrb[0].mxu0
        %v5487 = vadd.f32 0.0, %v5486
        %v5488 = vpop.f32.mrb[0].mxu0
        %v5489 = vadd.f32 0.0, %v5488
        %v5490 = vpop.f32.mrb[0].mxu0
        %v5491 = vadd.f32 0.0, %v5490
        %v5492 = vpop.f32.mrb[0].mxu0
        %v5493 = vadd.f32 0.0, %v5492
        %5494 = vmatprep.mubr.bf16.mxu0 0
        %5495 = vmatmul.mubr.bf16.gmra.mrb[0].mxu0 %v1108
        %v5496 = vpop.f32.mrb[0].mxu0
        %v5497 = vadd.f32 0.0, %v5496
        %v5498 = vpop.f32.mrb[0].mxu0
        %v5499 = vadd.f32 0.0, %v5498
        %v5500 = vpop.f32.mrb[0].mxu0
        %v5501 = vadd.f32 0.0, %v5500
        %v5502 = vpop.f32.mrb[0].mxu0
        %v5503 = vadd.f32 0.0, %v5502
        %5504 = vmatprep.mubr.bf16.mxu0 0
        %5505 = vmatmul.mubr.bf16.gmra.mrb[0].mxu0 %v1111
        %v5506 = vpop.f32.mrb[0].mxu0
        %v5507 = vadd.f32 0.0, %v5506
        %v5508 = vpop.f32.mrb[0].mxu0
        %v5509 = vadd.f32 0.0, %v5508
        %v5510 = vpop.f32.mrb[0].mxu0
        %v5511 = vadd.f32 0.0, %v5510
        %v5512 = vpop.f32.mrb[0].mxu0
        %v5513 = vadd.f32 0.0, %v5512
        %5514 = vmatprep.mubr.bf16.mxu0 0
        %5515 = vmatmul.mubr.bf16.gmra.mrb[0].mxu0 %v1114
        %v5516 = vpop.f32.mrb[0].mxu0
        %v5517 = vadd.f32 0.0, %v5516
        %v5518 = vpop.f32.mrb[0].mxu0
        %v5519 = vadd.f32 0.0, %v5518
        %v5520 = vpop.f32.mrb[0].mxu0
        %v5521 = vadd.f32 0.0, %v5520
        %v5522 = vpop.f32.mrb[0].mxu0
        %v5523 = vadd.f32 0.0, %v5522
        %5524 = vmatprep.mubr.bf16.mxu0 0
        %5525 = vmatmul.mubr.bf16.gmra.mrb[0].mxu0 %v1117
        %v5526 = vpop.f32.mrb[0].mxu0
        %v5527 = vadd.f32 0.0, %v5526
        %v5528 = vpop.f32.mrb[0].mxu0
        %v5529 = vadd.f32 0.0, %v5528
        %v5530 = vpop.f32.mrb[0].mxu0
        %v5531 = vadd.f32 0.0, %v5530
        %v5532 = vpop.f32.mrb[0].mxu0
        %v5533 = vadd.f32 0.0, %v5532
        %5534 = vmatprep.mubr.bf16.mxu0 0
        %5535 = vmatmul.mubr.bf16.gmra.mrb[0].mxu0 %v1120
        %v5536 = vpop.f32.mrb[0].mxu0
        %v5537 = vadd.f32 0.0, %v5536
        %v5538 = vpop.f32.mrb[0].mxu0
        %v5539 = vadd.f32 0.0, %v5538
        %v5540 = vpop.f32.mrb[0].mxu0
        %v5541 = vadd.f32 0.0, %v5540
        %v5542 = vpop.f32.mrb[0].mxu0
        %v5543 = vadd.f32 0.0, %v5542
        %5544 = vmatprep.mubr.bf16.mxu0 0
        %5545 = vmatmul.mubr.bf16.gmra.mrb[0].mxu0 %v1123
        %v5546 = vpop.f32.mrb[0].mxu0
        %v5547 = vadd.f32 0.0, %v5546
        %v5548 = vpop.f32.mrb[0].mxu0
        %v5549 = vadd.f32 0.0, %v5548
        %v5550 = vpop.f32.mrb[0].mxu0
        %v5551 = vadd.f32 0.0, %v5550
        %v5552 = vpop.f32.mrb[0].mxu0
        %v5553 = vadd.f32 0.0, %v5552
        %5554 = vdwg.mxu0
        %v5555 = vmax.f32 %v4978, %v5284
        %v5556 = vmax.f32 %v4980, %v5286
        %v5557 = vmax.f32 %v5131, %v5437
        %v5558 = vmax.f32 %v5133, %v5439
        %v5559 = vmax.f32 %v4982, %v5288
        %v5560 = vmax.f32 %v4984, %v5290
        %v5561 = vmax.f32 %v5135, %v5441
        %v5562 = vmax.f32 %v5137, %v5443
        %v5563 = vmax.f32 %v4988, %v5294
        %v5564 = vmax.f32 %v4990, %v5296
        %v5565 = vmax.f32 %v5141, %v5447
        %v5566 = vmax.f32 %v5143, %v5449
        %v5567 = vmax.f32 %v4992, %v5298
        %v5568 = vmax.f32 %v4994, %v5300
        %v5569 = vmax.f32 %v5145, %v5451
        %v5570 = vmax.f32 %v5147, %v5453
        %v5571 = vmax.f32 %v4998, %v5304
        %v5572 = vmax.f32 %v5000, %v5306
        %v5573 = vmax.f32 %v5151, %v5457
        %v5574 = vmax.f32 %v5153, %v5459
        %v5575 = vmax.f32 %v5002, %v5308
        %v5576 = vmax.f32 %v5004, %v5310
        %v5577 = vmax.f32 %v5155, %v5461
        %v5578 = vmax.f32 %v5157, %v5463
        %v5579 = vmax.f32 %v5008, %v5314
        %v5580 = vmax.f32 %v5010, %v5316
        %v5581 = vmax.f32 %v5161, %v5467
        %v5582 = vmax.f32 %v5163, %v5469
        %v5583 = vmax.f32 %v5012, %v5318
        %v5584 = vmax.f32 %v5014, %v5320
        %v5585 = vmax.f32 %v5165, %v5471
        %v5586 = vmax.f32 %v5167, %v5473
        %v5587 = vmax.f32 %v5018, %v5324
        %v5588 = vmax.f32 %v5020, %v5326
        %v5589 = vmax.f32 %v5171, %v5477
        %v5590 = vmax.f32 %v5173, %v5479
        %v5591 = vmax.f32 %v5022, %v5328
        %v5592 = vmax.f32 %v5024, %v5330
        %v5593 = vmax.f32 %v5175, %v5481
        %v5594 = vmax.f32 %v5177, %v5483
        %v5595 = vmax.f32 %v5028, %v5334
        %v5596 = vmax.f32 %v5030, %v5336
        %v5597 = vmax.f32 %v5181, %v5487
        %v5598 = vmax.f32 %v5183, %v5489
        %v5599 = vmax.f32 %v5032, %v5338
        %v5600 = vmax.f32 %v5034, %v5340
        %v5601 = vmax.f32 %v5185, %v5491
        %v5602 = vmax.f32 %v5187, %v5493
        %v5603 = vmax.f32 %v5038, %v5344
        %v5604 = vmax.f32 %v5040, %v5346
        %v5605 = vmax.f32 %v5191, %v5497
        %v5606 = vmax.f32 %v5193, %v5499
        %v5607 = vmax.f32 %v5042, %v5348
        %v5608 = vmax.f32 %v5044, %v5350
        %v5609 = vmax.f32 %v5195, %v5501
        %v5610 = vmax.f32 %v5197, %v5503
        %v5611 = vmax.f32 %v5048, %v5354
        %v5612 = vmax.f32 %v5050, %v5356
        %v5613 = vmax.f32 %v5201, %v5507
        %v5614 = vmax.f32 %v5203, %v5509
        %v5615 = vmax.f32 %v5052, %v5358
        %v5616 = vmax.f32 %v5054, %v5360
        %v5617 = vmax.f32 %v5205, %v5511
        %v5618 = vmax.f32 %v5207, %v5513
        %v5619 = vmax.f32 %v5058, %v5364
        %v5620 = vmax.f32 %v5060, %v5366
        %v5621 = vmax.f32 %v5211, %v5517
        %v5622 = vmax.f32 %v5213, %v5519
        %v5623 = vmax.f32 %v5062, %v5368
        %v5624 = vmax.f32 %v5064, %v5370
        %v5625 = vmax.f32 %v5215, %v5521
        %v5626 = vmax.f32 %v5217, %v5523
        %v5627 = vmax.f32 %v5068, %v5374
        %v5628 = vmax.f32 %v5070, %v5376
        %v5629 = vmax.f32 %v5221, %v5527
        %v5630 = vmax.f32 %v5223, %v5529
        %v5631 = vmax.f32 %v5072, %v5378
        %v5632 = vmax.f32 %v5074, %v5380
        %v5633 = vmax.f32 %v5225, %v5531
        %v5634 = vmax.f32 %v5227, %v5533
        %v5635 = vmax.f32 %v5078, %v5384
        %v5636 = vmax.f32 %v5080, %v5386
        %v5637 = vmax.f32 %v5231, %v5537
        %v5638 = vmax.f32 %v5233, %v5539
        %v5639 = vmax.f32 %v5082, %v5388
        %v5640 = vmax.f32 %v5084, %v5390
        %v5641 = vmax.f32 %v5235, %v5541
        %v5642 = vmax.f32 %v5237, %v5543
        %v5643 = vmax.f32 %v5088, %v5394
        %v5644 = vmax.f32 %v5090, %v5396
        %v5645 = vmax.f32 %v5241, %v5547
        %v5646 = vmax.f32 %v5243, %v5549
        %v5647 = vmax.f32 %v5092, %v5398
        %v5648 = vmax.f32 %v5094, %v5400
        %v5649 = vmax.f32 %v5245, %v5551
        %v5650 = vmax.f32 %v5247, %v5553
        %v5651 = vld [vmem:[%s1 + $0x50] sm:$0xff]
        %v5652 = vld [vmem:[%s1 + $0x58] sm:$0xff]
        %v5653 = vld [vmem:[%s1 + $0xb0] sm:$0xff]
        %v5654 = vld [vmem:[%s1 + $0xb8] sm:$0xff]
        %v5655 = vld [vmem:[%s1 + $0x110] sm:$0xff]
        %v5656 = vld [vmem:[%s1 + $0x118] sm:$0xff]
        %v5657 = vld [vmem:[%s1 + $0x170] sm:$0xff]
        %v5658 = vld [vmem:[%s1 + $0x178] sm:$0xff]
        %v5659 = vld [vmem:[%s1 + $0x1d0] sm:$0xff]
        %v5660 = vld [vmem:[%s1 + $0x1d8] sm:$0xff]
        %v5661 = vld [vmem:[%s1 + $0x230] sm:$0xff]
        %v5662 = vld [vmem:[%s1 + $0x238] sm:$0xff]
        %v5663 = vld [vmem:[%s1 + $0x290] sm:$0xff]
        %v5664 = vld [vmem:[%s1 + $0x298] sm:$0xff]
        %v5665 = vld [vmem:[%s1 + $0x2f0] sm:$0xff]
        %v5666 = vld [vmem:[%s1 + $0x2f8] sm:$0xff]
        %v5667 = vld [vmem:[%s1 + $0x350] sm:$0xff]
        %v5668 = vld [vmem:[%s1 + $0x358] sm:$0xff]
        %v5669 = vld [vmem:[%s1 + $0x3b0] sm:$0xff]
        %v5670 = vld [vmem:[%s1 + $0x3b8] sm:$0xff]
        %v5691 = vunpack.c.l.b16 %v5651
        %v5692 = vunpack.c.h.b16 %v5651
        %v5693 = vunpack.c.l.b16 %v5652
        %v5694 = vunpack.c.h.b16 %v5652
        %v5695 = vunpack.c.l.b16 %v5653
        %v5696 = vunpack.c.h.b16 %v5653
        %v5697 = vunpack.c.l.b16 %v5654
        %v5698 = vunpack.c.h.b16 %v5654
        %v5699 = vunpack.c.l.b16 %v5655
        %v5700 = vunpack.c.h.b16 %v5655
        %v5701 = vunpack.c.l.b16 %v5656
        %v5702 = vunpack.c.h.b16 %v5656
        %v5703 = vunpack.c.l.b16 %v5657
        %v5704 = vunpack.c.h.b16 %v5657
        %v5705 = vunpack.c.l.b16 %v5658
        %v5706 = vunpack.c.h.b16 %v5658
        %v5707 = vunpack.c.l.b16 %v5659
        %v5708 = vunpack.c.h.b16 %v5659
        %v5709 = vunpack.c.l.b16 %v5660
        %v5710 = vunpack.c.h.b16 %v5660
        %v5711 = vunpack.c.l.b16 %v5661
        %v5712 = vunpack.c.h.b16 %v5661
        %v5713 = vunpack.c.l.b16 %v5662
        %v5714 = vunpack.c.h.b16 %v5662
        %v5715 = vunpack.c.l.b16 %v5663
        %v5716 = vunpack.c.h.b16 %v5663
        %v5717 = vunpack.c.l.b16 %v5664
        %v5718 = vunpack.c.h.b16 %v5664
        %v5719 = vunpack.c.l.b16 %v5665
        %v5720 = vunpack.c.h.b16 %v5665
        %v5721 = vunpack.c.l.b16 %v5666
        %v5722 = vunpack.c.h.b16 %v5666
        %v5723 = vunpack.c.l.b16 %v5667
        %v5724 = vunpack.c.h.b16 %v5667
        %v5725 = vunpack.c.l.b16 %v5668
        %v5726 = vunpack.c.h.b16 %v5668
        %v5727 = vunpack.c.l.b16 %v5669
        %v5728 = vunpack.c.h.b16 %v5669
        %v5729 = vunpack.c.l.b16 %v5670
        %v5730 = vunpack.c.h.b16 %v5670
        %v5731 = vpack.c.b16 %v5695, %v5691
        %v5732 = vpack.c.b16 %v5696, %v5692
        %v5733 = vpack.c.b16 %v5697, %v5693
        %v5734 = vpack.c.b16 %v5698, %v5694
        %v5735 = vpack.c.b16 %v5703, %v5699
        %v5736 = vpack.c.b16 %v5704, %v5700
        %v5737 = vpack.c.b16 %v5705, %v5701
        %v5738 = vpack.c.b16 %v5706, %v5702
        %v5739 = vpack.c.b16 %v5711, %v5707
        %v5740 = vpack.c.b16 %v5712, %v5708
        %v5741 = vpack.c.b16 %v5713, %v5709
        %v5742 = vpack.c.b16 %v5714, %v5710
        %v5743 = vpack.c.b16 %v5719, %v5715
        %v5744 = vpack.c.b16 %v5720, %v5716
        %v5745 = vpack.c.b16 %v5721, %v5717
        %v5746 = vpack.c.b16 %v5722, %v5718
        %v5747 = vpack.c.b16 %v5727, %v5723
        %v5748 = vpack.c.b16 %v5728, %v5724
        %v5749 = vpack.c.b16 %v5729, %v5725
        %v5750 = vpack.c.b16 %v5730, %v5726
        %5771 = vmatprep.subr.bf16.mxu0 %v5732
        %5772 = vmatpush1.bf16.msra.mxu0 %v5731
        %5773 = vmatprep.subr.bf16.mxu0 %v5736
        %5774 = vmatpush1.bf16.msra.mxu0 %v5735
        %5775 = vmatprep.subr.bf16.mxu0 %v5740
        %5776 = vmatpush1.bf16.msra.mxu0 %v5739
        %5777 = vmatprep.subr.bf16.mxu0 %v5744
        %5778 = vmatpush1.bf16.msra.mxu0 %v5743
        %5779 = vmatprep.subr.bf16.mxu0 %v5748
        %5780 = vmatpush1.bf16.msra.mxu0 %v5747
        %5781 = vmatprep.subr.bf16.mxu0 0
        %5782 = vmatpush1.bf16.msra.mxu0 0
        %5783 = vmatprep.subr.bf16.mxu0 0
        %5784 = vmatpush1.bf16.msra.mxu0 0
        %5785 = vmatprep.subr.bf16.mxu0 0
        %5786 = vmatpush1.bf16.msra.mxu0 0
        %5787 = vmatprep.subr.bf16.mxu0 0
        %5788 = vmatpush1.bf16.msra.mxu0 0
        %5789 = vmatprep.subr.bf16.mxu0 0
        %5790 = vmatpush1.bf16.msra.mxu0 0
        %5791 = vmatprep.subr.bf16.mxu0 0
        %5792 = vmatpush1.bf16.msra.mxu0 0
        %5793 = vmatprep.subr.bf16.mxu0 0
        %5794 = vmatpush1.bf16.msra.mxu0 0
        %5795 = vmatprep.subr.bf16.mxu0 0
        %5796 = vmatpush1.bf16.msra.mxu0 0
        %5797 = vmatprep.subr.bf16.mxu0 0
        %5798 = vmatpush1.bf16.msra.mxu0 0
        %5799 = vmatprep.subr.bf16.mxu0 0
        %5800 = vmatpush1.bf16.msra.mxu0 0
        %5801 = vmatprep.subr.bf16.mxu0 0
        %5802 = vmatpush1.bf16.msra.mxu0 0
        %5803 = vmatprep.mubr.bf16.mxu0 0
        %5804 = vmatmul.mubr.bf16.gmra.mrb[0].mxu0 %v688
        %v5805 = vpop.f32.mrb[0].mxu0
        %v5806 = vadd.f32 0.0, %v5805
        %v5807 = vpop.f32.mrb[0].mxu0
        %v5808 = vadd.f32 0.0, %v5807
        %v5809 = vpop.f32.mrb[0].mxu0
        %v5810 = vadd.f32 0.0, %v5809
        %v5811 = vpop.f32.mrb[0].mxu0
        %v5812 = vadd.f32 0.0, %v5811
        %5813 = vmatprep.mubr.bf16.mxu0 0
        %5814 = vmatmul.mubr.bf16.gmra.mrb[0].mxu0 %v691
        %v5815 = vpop.f32.mrb[0].mxu0
        %v5816 = vadd.f32 0.0, %v5815
        %v5817 = vpop.f32.mrb[0].mxu0
        %v5818 = vadd.f32 0.0, %v5817
        %v5819 = vpop.f32.mrb[0].mxu0
        %v5820 = vadd.f32 0.0, %v5819
        %v5821 = vpop.f32.mrb[0].mxu0
        %v5822 = vadd.f32 0.0, %v5821
        %5823 = vmatprep.mubr.bf16.mxu0 0
        %5824 = vmatmul.mubr.bf16.gmra.mrb[0].mxu0 %v694
        %v5825 = vpop.f32.mrb[0].mxu0
        %v5826 = vadd.f32 0.0, %v5825
        %v5827 = vpop.f32.mrb[0].mxu0
        %v5828 = vadd.f32 0.0, %v5827
        %v5829 = vpop.f32.mrb[0].mxu0
        %v5830 = vadd.f32 0.0, %v5829
        %v5831 = vpop.f32.mrb[0].mxu0
        %v5832 = vadd.f32 0.0, %v5831
        %5833 = vmatprep.mubr.bf16.mxu0 0
        %5834 = vmatmul.mubr.bf16.gmra.mrb[0].mxu0 %v697
        %v5835 = vpop.f32.mrb[0].mxu0
        %v5836 = vadd.f32 0.0, %v5835
        %v5837 = vpop.f32.mrb[0].mxu0
        %v5838 = vadd.f32 0.0, %v5837
        %v5839 = vpop.f32.mrb[0].mxu0
        %v5840 = vadd.f32 0.0, %v5839
        %v5841 = vpop.f32.mrb[0].mxu0
        %v5842 = vadd.f32 0.0, %v5841
        %5843 = vmatprep.mubr.bf16.mxu0 0
        %5844 = vmatmul.mubr.bf16.gmra.mrb[0].mxu0 %v700
        %v5845 = vpop.f32.mrb[0].mxu0
        %v5846 = vadd.f32 0.0, %v5845
        %v5847 = vpop.f32.mrb[0].mxu0
        %v5848 = vadd.f32 0.0, %v5847
        %v5849 = vpop.f32.mrb[0].mxu0
        %v5850 = vadd.f32 0.0, %v5849
        %v5851 = vpop.f32.mrb[0].mxu0
        %v5852 = vadd.f32 0.0, %v5851
        %5853 = vmatprep.mubr.bf16.mxu0 0
        %5854 = vmatmul.mubr.bf16.gmra.mrb[0].mxu0 %v703
        %v5855 = vpop.f32.mrb[0].mxu0
        %v5856 = vadd.f32 0.0, %v5855
        %v5857 = vpop.f32.mrb[0].mxu0
        %v5858 = vadd.f32 0.0, %v5857
        %v5859 = vpop.f32.mrb[0].mxu0
        %v5860 = vadd.f32 0.0, %v5859
        %v5861 = vpop.f32.mrb[0].mxu0
        %v5862 = vadd.f32 0.0, %v5861
        %5863 = vmatprep.mubr.bf16.mxu0 0
        %5864 = vmatmul.mubr.bf16.gmra.mrb[0].mxu0 %v706
        %v5865 = vpop.f32.mrb[0].mxu0
        %v5866 = vadd.f32 0.0, %v5865
        %v5867 = vpop.f32.mrb[0].mxu0
        %v5868 = vadd.f32 0.0, %v5867
        %v5869 = vpop.f32.mrb[0].mxu0
        %v5870 = vadd.f32 0.0, %v5869
        %v5871 = vpop.f32.mrb[0].mxu0
        %v5872 = vadd.f32 0.0, %v5871
        %5873 = vmatprep.mubr.bf16.mxu0 0
        %5874 = vmatmul.mubr.bf16.gmra.mrb[0].mxu0 %v709
        %v5875 = vpop.f32.mrb[0].mxu0
        %v5876 = vadd.f32 0.0, %v5875
        %v5877 = vpop.f32.mrb[0].mxu0
        %v5878 = vadd.f32 0.0, %v5877
        %v5879 = vpop.f32.mrb[0].mxu0
        %v5880 = vadd.f32 0.0, %v5879
        %v5881 = vpop.f32.mrb[0].mxu0
        %v5882 = vadd.f32 0.0, %v5881
        %5883 = vmatprep.mubr.bf16.mxu0 0
        %5884 = vmatmul.mubr.bf16.gmra.mrb[0].mxu0 %v712
        %v5885 = vpop.f32.mrb[0].mxu0
        %v5886 = vadd.f32 0.0, %v5885
        %v5887 = vpop.f32.mrb[0].mxu0
        %v5888 = vadd.f32 0.0, %v5887
        %v5889 = vpop.f32.mrb[0].mxu0
        %v5890 = vadd.f32 0.0, %v5889
        %v5891 = vpop.f32.mrb[0].mxu0
        %v5892 = vadd.f32 0.0, %v5891
        %5893 = vmatprep.mubr.bf16.mxu0 0
        %5894 = vmatmul.mubr.bf16.gmra.mrb[0].mxu0 %v715
        %v5895 = vpop.f32.mrb[0].mxu0
        %v5896 = vadd.f32 0.0, %v5895
        %v5897 = vpop.f32.mrb[0].mxu0
        %v5898 = vadd.f32 0.0, %v5897
        %v5899 = vpop.f32.mrb[0].mxu0
        %v5900 = vadd.f32 0.0, %v5899
        %v5901 = vpop.f32.mrb[0].mxu0
        %v5902 = vadd.f32 0.0, %v5901
        %5903 = vmatprep.mubr.bf16.mxu0 0
        %5904 = vmatmul.mubr.bf16.gmra.mrb[0].mxu0 %v718
        %v5905 = vpop.f32.mrb[0].mxu0
        %v5906 = vadd.f32 0.0, %v5905
        %v5907 = vpop.f32.mrb[0].mxu0
        %v5908 = vadd.f32 0.0, %v5907
        %v5909 = vpop.f32.mrb[0].mxu0
        %v5910 = vadd.f32 0.0, %v5909
        %v5911 = vpop.f32.mrb[0].mxu0
        %v5912 = vadd.f32 0.0, %v5911
        %5913 = vmatprep.mubr.bf16.mxu0 0
        %5914 = vmatmul.mubr.bf16.gmra.mrb[0].mxu0 %v721
        %v5915 = vpop.f32.mrb[0].mxu0
        %v5916 = vadd.f32 0.0, %v5915
        %v5917 = vpop.f32.mrb[0].mxu0
        %v5918 = vadd.f32 0.0, %v5917
        %v5919 = vpop.f32.mrb[0].mxu0
        %v5920 = vadd.f32 0.0, %v5919
        %v5921 = vpop.f32.mrb[0].mxu0
        %v5922 = vadd.f32 0.0, %v5921
        %5923 = vdwg.mxu0
        %5924 = vmatprep.subr.bf16.mxu0 %v5734
        %5925 = vmatpush1.bf16.msra.mxu0 %v5733
        %5926 = vmatprep.subr.bf16.mxu0 %v5738
        %5927 = vmatpush1.bf16.msra.mxu0 %v5737
        %5928 = vmatprep.subr.bf16.mxu0 %v5742
        %5929 = vmatpush1.bf16.msra.mxu0 %v5741
        %5930 = vmatprep.subr.bf16.mxu0 %v5746
        %5931 = vmatpush1.bf16.msra.mxu0 %v5745
        %5932 = vmatprep.subr.bf16.mxu0 %v5750
        %5933 = vmatpush1.bf16.msra.mxu0 %v5749
        %5934 = vmatprep.subr.bf16.mxu0 0
        %5935 = vmatpush1.bf16.msra.mxu0 0
        %5936 = vmatprep.subr.bf16.mxu0 0
        %5937 = vmatpush1.bf16.msra.mxu0 0
        %5938 = vmatprep.subr.bf16.mxu0 0
        %5939 = vmatpush1.bf16.msra.mxu0 0
        %5940 = vmatprep.subr.bf16.mxu0 0
        %5941 = vmatpush1.bf16.msra.mxu0 0
        %5942 = vmatprep.subr.bf16.mxu0 0
        %5943 = vmatpush1.bf16.msra.mxu0 0
        %5944 = vmatprep.subr.bf16.mxu0 0
        %5945 = vmatpush1.bf16.msra.mxu0 0
        %5946 = vmatprep.subr.bf16.mxu0 0
        %5947 = vmatpush1.bf16.msra.mxu0 0
        %5948 = vmatprep.subr.bf16.mxu0 0
        %5949 = vmatpush1.bf16.msra.mxu0 0
        %5950 = vmatprep.subr.bf16.mxu0 0
        %5951 = vmatpush1.bf16.msra.mxu0 0
        %5952 = vmatprep.subr.bf16.mxu0 0
        %5953 = vmatpush1.bf16.msra.mxu0 0
        %5954 = vmatprep.subr.bf16.mxu0 0
        %5955 = vmatpush1.bf16.msra.mxu0 0
        %5956 = vmatprep.mubr.bf16.mxu0 0
        %5957 = vmatmul.mubr.bf16.gmra.mrb[0].mxu0 %v688
        %v5958 = vpop.f32.mrb[0].mxu0
        %v5959 = vadd.f32 0.0, %v5958
        %v5960 = vpop.f32.mrb[0].mxu0
        %v5961 = vadd.f32 0.0, %v5960
        %v5962 = vpop.f32.mrb[0].mxu0
        %v5963 = vadd.f32 0.0, %v5962
        %v5964 = vpop.f32.mrb[0].mxu0
        %v5965 = vadd.f32 0.0, %v5964
        %5966 = vmatprep.mubr.bf16.mxu0 0
        %5967 = vmatmul.mubr.bf16.gmra.mrb[0].mxu0 %v691
        %v5968 = vpop.f32.mrb[0].mxu0
        %v5969 = vadd.f32 0.0, %v5968
        %v5970 = vpop.f32.mrb[0].mxu0
        %v5971 = vadd.f32 0.0, %v5970
        %v5972 = vpop.f32.mrb[0].mxu0
        %v5973 = vadd.f32 0.0, %v5972
        %v5974 = vpop.f32.mrb[0].mxu0
        %v5975 = vadd.f32 0.0, %v5974
        %5976 = vmatprep.mubr.bf16.mxu0 0
        %5977 = vmatmul.mubr.bf16.gmra.mrb[0].mxu0 %v694
        %v5978 = vpop.f32.mrb[0].mxu0
        %v5979 = vadd.f32 0.0, %v5978
        %v5980 = vpop.f32.mrb[0].mxu0
        %v5981 = vadd.f32 0.0, %v5980
        %v5982 = vpop.f32.mrb[0].mxu0
        %v5983 = vadd.f32 0.0, %v5982
        %v5984 = vpop.f32.mrb[0].mxu0
        %v5985 = vadd.f32 0.0, %v5984
        %5986 = vmatprep.mubr.bf16.mxu0 0
        %5987 = vmatmul.mubr.bf16.gmra.mrb[0].mxu0 %v697
        %v5988 = vpop.f32.mrb[0].mxu0
        %v5989 = vadd.f32 0.0, %v5988
        %v5990 = vpop.f32.mrb[0].mxu0
        %v5991 = vadd.f32 0.0, %v5990
        %v5992 = vpop.f32.mrb[0].mxu0
        %v5993 = vadd.f32 0.0, %v5992
        %v5994 = vpop.f32.mrb[0].mxu0
        %v5995 = vadd.f32 0.0, %v5994
        %5996 = vmatprep.mubr.bf16.mxu0 0
        %5997 = vmatmul.mubr.bf16.gmra.mrb[0].mxu0 %v700
        %v5998 = vpop.f32.mrb[0].mxu0
        %v5999 = vadd.f32 0.0, %v5998
        %v6000 = vpop.f32.mrb[0].mxu0
        %v6001 = vadd.f32 0.0, %v6000
        %v6002 = vpop.f32.mrb[0].mxu0
        %v6003 = vadd.f32 0.0, %v6002
        %v6004 = vpop.f32.mrb[0].mxu0
        %v6005 = vadd.f32 0.0, %v6004
        %6006 = vmatprep.mubr.bf16.mxu0 0
        %6007 = vmatmul.mubr.bf16.gmra.mrb[0].mxu0 %v703
        %v6008 = vpop.f32.mrb[0].mxu0
        %v6009 = vadd.f32 0.0, %v6008
        %v6010 = vpop.f32.mrb[0].mxu0
        %v6011 = vadd.f32 0.0, %v6010
        %v6012 = vpop.f32.mrb[0].mxu0
        %v6013 = vadd.f32 0.0, %v6012
        %v6014 = vpop.f32.mrb[0].mxu0
        %v6015 = vadd.f32 0.0, %v6014
        %6016 = vmatprep.mubr.bf16.mxu0 0
        %6017 = vmatmul.mubr.bf16.gmra.mrb[0].mxu0 %v706
        %v6018 = vpop.f32.mrb[0].mxu0
        %v6019 = vadd.f32 0.0, %v6018
        %v6020 = vpop.f32.mrb[0].mxu0
        %v6021 = vadd.f32 0.0, %v6020
        %v6022 = vpop.f32.mrb[0].mxu0
        %v6023 = vadd.f32 0.0, %v6022
        %v6024 = vpop.f32.mrb[0].mxu0
        %v6025 = vadd.f32 0.0, %v6024
        %6026 = vmatprep.mubr.bf16.mxu0 0
        %6027 = vmatmul.mubr.bf16.gmra.mrb[0].mxu0 %v709
        %v6028 = vpop.f32.mrb[0].mxu0
        %v6029 = vadd.f32 0.0, %v6028
        %v6030 = vpop.f32.mrb[0].mxu0
        %v6031 = vadd.f32 0.0, %v6030
        %v6032 = vpop.f32.mrb[0].mxu0
        %v6033 = vadd.f32 0.0, %v6032
        %v6034 = vpop.f32.mrb[0].mxu0
        %v6035 = vadd.f32 0.0, %v6034
        %6036 = vmatprep.mubr.bf16.mxu0 0
        %6037 = vmatmul.mubr.bf16.gmra.mrb[0].mxu0 %v712
        %v6038 = vpop.f32.mrb[0].mxu0
        %v6039 = vadd.f32 0.0, %v6038
        %v6040 = vpop.f32.mrb[0].mxu0
        %v6041 = vadd.f32 0.0, %v6040
        %v6042 = vpop.f32.mrb[0].mxu0
        %v6043 = vadd.f32 0.0, %v6042
        %v6044 = vpop.f32.mrb[0].mxu0
        %v6045 = vadd.f32 0.0, %v6044
        %6046 = vmatprep.mubr.bf16.mxu0 0
        %6047 = vmatmul.mubr.bf16.gmra.mrb[0].mxu0 %v715
        %v6048 = vpop.f32.mrb[0].mxu0
        %v6049 = vadd.f32 0.0, %v6048
        %v6050 = vpop.f32.mrb[0].mxu0
        %v6051 = vadd.f32 0.0, %v6050
        %v6052 = vpop.f32.mrb[0].mxu0
        %v6053 = vadd.f32 0.0, %v6052
        %v6054 = vpop.f32.mrb[0].mxu0
        %v6055 = vadd.f32 0.0, %v6054
        %6056 = vmatprep.mubr.bf16.mxu0 0
        %6057 = vmatmul.mubr.bf16.gmra.mrb[0].mxu0 %v718
        %v6058 = vpop.f32.mrb[0].mxu0
        %v6059 = vadd.f32 0.0, %v6058
        %v6060 = vpop.f32.mrb[0].mxu0
        %v6061 = vadd.f32 0.0, %v6060
        %v6062 = vpop.f32.mrb[0].mxu0
        %v6063 = vadd.f32 0.0, %v6062
        %v6064 = vpop.f32.mrb[0].mxu0
        %v6065 = vadd.f32 0.0, %v6064
        %6066 = vmatprep.mubr.bf16.mxu0 0
        %6067 = vmatmul.mubr.bf16.gmra.mrb[0].mxu0 %v721
        %v6068 = vpop.f32.mrb[0].mxu0
        %v6069 = vadd.f32 0.0, %v6068
        %v6070 = vpop.f32.mrb[0].mxu0
        %v6071 = vadd.f32 0.0, %v6070
        %v6072 = vpop.f32.mrb[0].mxu0
        %v6073 = vadd.f32 0.0, %v6072
        %v6074 = vpop.f32.mrb[0].mxu0
        %v6075 = vadd.f32 0.0, %v6074
        %6076 = vdwg.mxu0
        %v6077 = vmax.f32 %v5555, %v5806
        %v6078 = vmax.f32 %v5556, %v5808
        %v6079 = vmax.f32 %v5557, %v5959
        %v6080 = vmax.f32 %v5558, %v5961
        %v6081 = vmax.f32 %v5559, %v5810
        %v6082 = vmax.f32 %v5560, %v5812
        %v6083 = vmax.f32 %v5561, %v5963
        %v6084 = vmax.f32 %v5562, %v5965
        %v6085 = vmax.f32 %v5563, %v5816
        %v6086 = vmax.f32 %v5564, %v5818
        %v6087 = vmax.f32 %v5565, %v5969
        %v6088 = vmax.f32 %v5566, %v5971
        %v6089 = vmax.f32 %v5567, %v5820
        %v6090 = vmax.f32 %v5568, %v5822
        %v6091 = vmax.f32 %v5569, %v5973
        %v6092 = vmax.f32 %v5570, %v5975
        %v6093 = vmax.f32 %v5571, %v5826
        %v6094 = vmax.f32 %v5572, %v5828
        %v6095 = vmax.f32 %v5573, %v5979
        %v6096 = vmax.f32 %v5574, %v5981
        %v6097 = vmax.f32 %v5575, %v5830
        %v6098 = vmax.f32 %v5576, %v5832
        %v6099 = vmax.f32 %v5577, %v5983
        %v6100 = vmax.f32 %v5578, %v5985
        %v6101 = vmax.f32 %v5579, %v5836
        %v6102 = vmax.f32 %v5580, %v5838
        %v6103 = vmax.f32 %v5581, %v5989
        %v6104 = vmax.f32 %v5582, %v5991
        %v6105 = vmax.f32 %v5583, %v5840
        %v6106 = vmax.f32 %v5584, %v5842
        %v6107 = vmax.f32 %v5585, %v5993
        %v6108 = vmax.f32 %v5586, %v5995
        %v6109 = vmax.f32 %v5587, %v5846
        %v6110 = vmax.f32 %v5588, %v5848
        %v6111 = vmax.f32 %v5589, %v5999
        %v6112 = vmax.f32 %v5590, %v6001
        %v6113 = vmax.f32 %v5591, %v5850
        %v6114 = vmax.f32 %v5592, %v5852
        %v6115 = vmax.f32 %v5593, %v6003
        %v6116 = vmax.f32 %v5594, %v6005
        %v6117 = vmax.f32 %v5595, %v5856
        %v6118 = vmax.f32 %v5596, %v5858
        %v6119 = vmax.f32 %v5597, %v6009
        %v6120 = vmax.f32 %v5598, %v6011
        %v6121 = vmax.f32 %v5599, %v5860
        %v6122 = vmax.f32 %v5600, %v5862
        %v6123 = vmax.f32 %v5601, %v6013
        %v6124 = vmax.f32 %v5602, %v6015
        %v6125 = vmax.f32 %v5603, %v5866
        %v6126 = vmax.f32 %v5604, %v5868
        %v6127 = vmax.f32 %v5605, %v6019
        %v6128 = vmax.f32 %v5606, %v6021
        %v6129 = vmax.f32 %v5607, %v5870
        %v6130 = vmax.f32 %v5608, %v5872
        %v6131 = vmax.f32 %v5609, %v6023
        %v6132 = vmax.f32 %v5610, %v6025
        %v6133 = vmax.f32 %v5611, %v5876
        %v6134 = vmax.f32 %v5612, %v5878
        %v6135 = vmax.f32 %v5613, %v6029
        %v6136 = vmax.f32 %v5614, %v6031
        %v6137 = vmax.f32 %v5615, %v5880
        %v6138 = vmax.f32 %v5616, %v5882
        %v6139 = vmax.f32 %v5617, %v6033
        %v6140 = vmax.f32 %v5618, %v6035
        %v6141 = vmax.f32 %v5619, %v5886
        %v6142 = vmax.f32 %v5620, %v5888
        %v6143 = vmax.f32 %v5621, %v6039
        %v6144 = vmax.f32 %v5622, %v6041
        %v6145 = vmax.f32 %v5623, %v5890
        %v6146 = vmax.f32 %v5624, %v5892
        %v6147 = vmax.f32 %v5625, %v6043
        %v6148 = vmax.f32 %v5626, %v6045
        %v6149 = vmax.f32 %v5627, %v5896
        %v6150 = vmax.f32 %v5628, %v5898
        %v6151 = vmax.f32 %v5629, %v6049
        %v6152 = vmax.f32 %v5630, %v6051
        %v6153 = vmax.f32 %v5631, %v5900
        %v6154 = vmax.f32 %v5632, %v5902
        %v6155 = vmax.f32 %v5633, %v6053
        %v6156 = vmax.f32 %v5634, %v6055
        %v6157 = vmax.f32 %v5635, %v5906
        %v6158 = vmax.f32 %v5636, %v5908
        %v6159 = vmax.f32 %v5637, %v6059
        %v6160 = vmax.f32 %v5638, %v6061
        %v6161 = vmax.f32 %v5639, %v5910
        %v6162 = vmax.f32 %v5640, %v5912
        %v6163 = vmax.f32 %v5641, %v6063
        %v6164 = vmax.f32 %v5642, %v6065
        %v6165 = vmax.f32 %v5643, %v5916
        %v6166 = vmax.f32 %v5644, %v5918
        %v6167 = vmax.f32 %v5645, %v6069
        %v6168 = vmax.f32 %v5646, %v6071
        %v6169 = vmax.f32 %v5647, %v5920
        %v6170 = vmax.f32 %v5648, %v5922
        %v6171 = vmax.f32 %v5649, %v6073
        %v6172 = vmax.f32 %v5650, %v6075
        %6173 = vmatprep.subr.bf16.mxu0 %v5732
        %6174 = vmatpush1.bf16.msra.mxu0 %v5731
        %6175 = vmatprep.subr.bf16.mxu0 %v5736
        %6176 = vmatpush1.bf16.msra.mxu0 %v5735
        %6177 = vmatprep.subr.bf16.mxu0 %v5740
        %6178 = vmatpush1.bf16.msra.mxu0 %v5739
        %6179 = vmatprep.subr.bf16.mxu0 %v5744
        %6180 = vmatpush1.bf16.msra.mxu0 %v5743
        %6181 = vmatprep.subr.bf16.mxu0 %v5748
        %6182 = vmatpush1.bf16.msra.mxu0 %v5747
        %6183 = vmatprep.subr.bf16.mxu0 0
        %6184 = vmatpush1.bf16.msra.mxu0 0
        %6185 = vmatprep.subr.bf16.mxu0 0
        %6186 = vmatpush1.bf16.msra.mxu0 0
        %6187 = vmatprep.subr.bf16.mxu0 0
        %6188 = vmatpush1.bf16.msra.mxu0 0
        %6189 = vmatprep.subr.bf16.mxu0 0
        %6190 = vmatpush1.bf16.msra.mxu0 0
        %6191 = vmatprep.subr.bf16.mxu0 0
        %6192 = vmatpush1.bf16.msra.mxu0 0
        %6193 = vmatprep.subr.bf16.mxu0 0
        %6194 = vmatpush1.bf16.msra.mxu0 0
        %6195 = vmatprep.subr.bf16.mxu0 0
        %6196 = vmatpush1.bf16.msra.mxu0 0
        %6197 = vmatprep.subr.bf16.mxu0 0
        %6198 = vmatpush1.bf16.msra.mxu0 0
        %6199 = vmatprep.subr.bf16.mxu0 0
        %6200 = vmatpush1.bf16.msra.mxu0 0
        %6201 = vmatprep.subr.bf16.mxu0 0
        %6202 = vmatpush1.bf16.msra.mxu0 0
        %6203 = vmatprep.subr.bf16.mxu0 0
        %6204 = vmatpush1.bf16.msra.mxu0 0
        %6205 = vmatprep.mubr.bf16.mxu0 0
        %6206 = vmatmul.mubr.bf16.gmra.mrb[0].mxu0 %v1090
        %v6207 = vpop.f32.mrb[0].mxu0
        %v6208 = vadd.f32 0.0, %v6207
        %v6209 = vpop.f32.mrb[0].mxu0
        %v6210 = vadd.f32 0.0, %v6209
        %v6211 = vpop.f32.mrb[0].mxu0
        %v6212 = vadd.f32 0.0, %v6211
        %v6213 = vpop.f32.mrb[0].mxu0
        %v6214 = vadd.f32 0.0, %v6213
        %6215 = vmatprep.mubr.bf16.mxu0 0
        %6216 = vmatmul.mubr.bf16.gmra.mrb[0].mxu0 %v1093
        %v6217 = vpop.f32.mrb[0].mxu0
        %v6218 = vadd.f32 0.0, %v6217
        %v6219 = vpop.f32.mrb[0].mxu0
        %v6220 = vadd.f32 0.0, %v6219
        %v6221 = vpop.f32.mrb[0].mxu0
        %v6222 = vadd.f32 0.0, %v6221
        %v6223 = vpop.f32.mrb[0].mxu0
        %v6224 = vadd.f32 0.0, %v6223
        %6225 = vmatprep.mubr.bf16.mxu0 0
        %6226 = vmatmul.mubr.bf16.gmra.mrb[0].mxu0 %v1096
        %v6227 = vpop.f32.mrb[0].mxu0
        %v6228 = vadd.f32 0.0, %v6227
        %v6229 = vpop.f32.mrb[0].mxu0
        %v6230 = vadd.f32 0.0, %v6229
        %v6231 = vpop.f32.mrb[0].mxu0
        %v6232 = vadd.f32 0.0, %v6231
        %v6233 = vpop.f32.mrb[0].mxu0
        %v6234 = vadd.f32 0.0, %v6233
        %6235 = vmatprep.mubr.bf16.mxu0 0
        %6236 = vmatmul.mubr.bf16.gmra.mrb[0].mxu0 %v1099
        %v6237 = vpop.f32.mrb[0].mxu0
        %v6238 = vadd.f32 0.0, %v6237
        %v6239 = vpop.f32.mrb[0].mxu0
        %v6240 = vadd.f32 0.0, %v6239
        %v6241 = vpop.f32.mrb[0].mxu0
        %v6242 = vadd.f32 0.0, %v6241
        %v6243 = vpop.f32.mrb[0].mxu0
        %v6244 = vadd.f32 0.0, %v6243
        %6245 = vmatprep.mubr.bf16.mxu0 0
        %6246 = vmatmul.mubr.bf16.gmra.mrb[0].mxu0 %v1102
        %v6247 = vpop.f32.mrb[0].mxu0
        %v6248 = vadd.f32 0.0, %v6247
        %v6249 = vpop.f32.mrb[0].mxu0
        %v6250 = vadd.f32 0.0, %v6249
        %v6251 = vpop.f32.mrb[0].mxu0
        %v6252 = vadd.f32 0.0, %v6251
        %v6253 = vpop.f32.mrb[0].mxu0
        %v6254 = vadd.f32 0.0, %v6253
        %6255 = vmatprep.mubr.bf16.mxu0 0
        %6256 = vmatmul.mubr.bf16.gmra.mrb[0].mxu0 %v1105
        %v6257 = vpop.f32.mrb[0].mxu0
        %v6258 = vadd.f32 0.0, %v6257
        %v6259 = vpop.f32.mrb[0].mxu0
        %v6260 = vadd.f32 0.0, %v6259
        %v6261 = vpop.f32.mrb[0].mxu0
        %v6262 = vadd.f32 0.0, %v6261
        %v6263 = vpop.f32.mrb[0].mxu0
        %v6264 = vadd.f32 0.0, %v6263
        %6265 = vmatprep.mubr.bf16.mxu0 0
        %6266 = vmatmul.mubr.bf16.gmra.mrb[0].mxu0 %v1108
        %v6267 = vpop.f32.mrb[0].mxu0
        %v6268 = vadd.f32 0.0, %v6267
        %v6269 = vpop.f32.mrb[0].mxu0
        %v6270 = vadd.f32 0.0, %v6269
        %v6271 = vpop.f32.mrb[0].mxu0
        %v6272 = vadd.f32 0.0, %v6271
        %v6273 = vpop.f32.mrb[0].mxu0
        %v6274 = vadd.f32 0.0, %v6273
        %6275 = vmatprep.mubr.bf16.mxu0 0
        %6276 = vmatmul.mubr.bf16.gmra.mrb[0].mxu0 %v1111
        %v6277 = vpop.f32.mrb[0].mxu0
        %v6278 = vadd.f32 0.0, %v6277
        %v6279 = vpop.f32.mrb[0].mxu0
        %v6280 = vadd.f32 0.0, %v6279
        %v6281 = vpop.f32.mrb[0].mxu0
        %v6282 = vadd.f32 0.0, %v6281
        %v6283 = vpop.f32.mrb[0].mxu0
        %v6284 = vadd.f32 0.0, %v6283
        %6285 = vmatprep.mubr.bf16.mxu0 0
        %6286 = vmatmul.mubr.bf16.gmra.mrb[0].mxu0 %v1114
        %v6287 = vpop.f32.mrb[0].mxu0
        %v6288 = vadd.f32 0.0, %v6287
        %v6289 = vpop.f32.mrb[0].mxu0
        %v6290 = vadd.f32 0.0, %v6289
        %v6291 = vpop.f32.mrb[0].mxu0
        %v6292 = vadd.f32 0.0, %v6291
        %v6293 = vpop.f32.mrb[0].mxu0
        %v6294 = vadd.f32 0.0, %v6293
        %6295 = vmatprep.mubr.bf16.mxu0 0
        %6296 = vmatmul.mubr.bf16.gmra.mrb[0].mxu0 %v1117
        %v6297 = vpop.f32.mrb[0].mxu0
        %v6298 = vadd.f32 0.0, %v6297
        %v6299 = vpop.f32.mrb[0].mxu0
        %v6300 = vadd.f32 0.0, %v6299
        %v6301 = vpop.f32.mrb[0].mxu0
        %v6302 = vadd.f32 0.0, %v6301
        %v6303 = vpop.f32.mrb[0].mxu0
        %v6304 = vadd.f32 0.0, %v6303
        %6305 = vmatprep.mubr.bf16.mxu0 0
        %6306 = vmatmul.mubr.bf16.gmra.mrb[0].mxu0 %v1120
        %v6307 = vpop.f32.mrb[0].mxu0
        %v6308 = vadd.f32 0.0, %v6307
        %v6309 = vpop.f32.mrb[0].mxu0
        %v6310 = vadd.f32 0.0, %v6309
        %v6311 = vpop.f32.mrb[0].mxu0
        %v6312 = vadd.f32 0.0, %v6311
        %v6313 = vpop.f32.mrb[0].mxu0
        %v6314 = vadd.f32 0.0, %v6313
        %6315 = vmatprep.mubr.bf16.mxu0 0
        %6316 = vmatmul.mubr.bf16.gmra.mrb[0].mxu0 %v1123
        %v6317 = vpop.f32.mrb[0].mxu0
        %v6318 = vadd.f32 0.0, %v6317
        %v6319 = vpop.f32.mrb[0].mxu0
        %v6320 = vadd.f32 0.0, %v6319
        %v6321 = vpop.f32.mrb[0].mxu0
        %v6322 = vadd.f32 0.0, %v6321
        %v6323 = vpop.f32.mrb[0].mxu0
        %v6324 = vadd.f32 0.0, %v6323
        %6325 = vdwg.mxu0
        %6326 = vmatprep.subr.bf16.mxu0 %v5734
        %6327 = vmatpush1.bf16.msra.mxu0 %v5733
        %6328 = vmatprep.subr.bf16.mxu0 %v5738
        %6329 = vmatpush1.bf16.msra.mxu0 %v5737
        %6330 = vmatprep.subr.bf16.mxu0 %v5742
        %6331 = vmatpush1.bf16.msra.mxu0 %v5741
        %6332 = vmatprep.subr.bf16.mxu0 %v5746
        %6333 = vmatpush1.bf16.msra.mxu0 %v5745
        %6334 = vmatprep.subr.bf16.mxu0 %v5750
        %6335 = vmatpush1.bf16.msra.mxu0 %v5749
        %6336 = vmatprep.subr.bf16.mxu0 0
        %6337 = vmatpush1.bf16.msra.mxu0 0
        %6338 = vmatprep.subr.bf16.mxu0 0
        %6339 = vmatpush1.bf16.msra.mxu0 0
        %6340 = vmatprep.subr.bf16.mxu0 0
        %6341 = vmatpush1.bf16.msra.mxu0 0
        %6342 = vmatprep.subr.bf16.mxu0 0
        %6343 = vmatpush1.bf16.msra.mxu0 0
        %6344 = vmatprep.subr.bf16.mxu0 0
        %6345 = vmatpush1.bf16.msra.mxu0 0
        %6346 = vmatprep.subr.bf16.mxu0 0
        %6347 = vmatpush1.bf16.msra.mxu0 0
        %6348 = vmatprep.subr.bf16.mxu0 0
        %6349 = vmatpush1.bf16.msra.mxu0 0
        %6350 = vmatprep.subr.bf16.mxu0 0
        %6351 = vmatpush1.bf16.msra.mxu0 0
        %6352 = vmatprep.subr.bf16.mxu0 0
        %6353 = vmatpush1.bf16.msra.mxu0 0
        %6354 = vmatprep.subr.bf16.mxu0 0
        %6355 = vmatpush1.bf16.msra.mxu0 0
        %6356 = vmatprep.subr.bf16.mxu0 0
        %6357 = vmatpush1.bf16.msra.mxu0 0
        %6358 = vmatprep.mubr.bf16.mxu0 0
        %6359 = vmatmul.mubr.bf16.gmra.mrb[0].mxu0 %v1090
        %v6360 = vpop.f32.mrb[0].mxu0
        %v6361 = vadd.f32 0.0, %v6360
        %v6362 = vpop.f32.mrb[0].mxu0
        %v6363 = vadd.f32 0.0, %v6362
        %v6364 = vpop.f32.mrb[0].mxu0
        %v6365 = vadd.f32 0.0, %v6364
        %v6366 = vpop.f32.mrb[0].mxu0
        %v6367 = vadd.f32 0.0, %v6366
        %6368 = vmatprep.mubr.bf16.mxu0 0
        %6369 = vmatmul.mubr.bf16.gmra.mrb[0].mxu0 %v1093
        %v6370 = vpop.f32.mrb[0].mxu0
        %v6371 = vadd.f32 0.0, %v6370
        %v6372 = vpop.f32.mrb[0].mxu0
        %v6373 = vadd.f32 0.0, %v6372
        %v6374 = vpop.f32.mrb[0].mxu0
        %v6375 = vadd.f32 0.0, %v6374
        %v6376 = vpop.f32.mrb[0].mxu0
        %v6377 = vadd.f32 0.0, %v6376
        %6378 = vmatprep.mubr.bf16.mxu0 0
        %6379 = vmatmul.mubr.bf16.gmra.mrb[0].mxu0 %v1096
        %v6380 = vpop.f32.mrb[0].mxu0
        %v6381 = vadd.f32 0.0, %v6380
        %v6382 = vpop.f32.mrb[0].mxu0
        %v6383 = vadd.f32 0.0, %v6382
        %v6384 = vpop.f32.mrb[0].mxu0
        %v6385 = vadd.f32 0.0, %v6384
        %v6386 = vpop.f32.mrb[0].mxu0
        %v6387 = vadd.f32 0.0, %v6386
        %6388 = vmatprep.mubr.bf16.mxu0 0
        %6389 = vmatmul.mubr.bf16.gmra.mrb[0].mxu0 %v1099
        %v6390 = vpop.f32.mrb[0].mxu0
        %v6391 = vadd.f32 0.0, %v6390
        %v6392 = vpop.f32.mrb[0].mxu0
        %v6393 = vadd.f32 0.0, %v6392
        %v6394 = vpop.f32.mrb[0].mxu0
        %v6395 = vadd.f32 0.0, %v6394
        %v6396 = vpop.f32.mrb[0].mxu0
        %v6397 = vadd.f32 0.0, %v6396
        %6398 = vmatprep.mubr.bf16.mxu0 0
        %6399 = vmatmul.mubr.bf16.gmra.mrb[0].mxu0 %v1102
        %v6400 = vpop.f32.mrb[0].mxu0
        %v6401 = vadd.f32 0.0, %v6400
        %v6402 = vpop.f32.mrb[0].mxu0
        %v6403 = vadd.f32 0.0, %v6402
        %v6404 = vpop.f32.mrb[0].mxu0
        %v6405 = vadd.f32 0.0, %v6404
        %v6406 = vpop.f32.mrb[0].mxu0
        %v6407 = vadd.f32 0.0, %v6406
        %6408 = vmatprep.mubr.bf16.mxu0 0
        %6409 = vmatmul.mubr.bf16.gmra.mrb[0].mxu0 %v1105
        %v6410 = vpop.f32.mrb[0].mxu0
        %v6411 = vadd.f32 0.0, %v6410
        %v6412 = vpop.f32.mrb[0].mxu0
        %v6413 = vadd.f32 0.0, %v6412
        %v6414 = vpop.f32.mrb[0].mxu0
        %v6415 = vadd.f32 0.0, %v6414
        %v6416 = vpop.f32.mrb[0].mxu0
        %v6417 = vadd.f32 0.0, %v6416
        %6418 = vmatprep.mubr.bf16.mxu0 0
        %6419 = vmatmul.mubr.bf16.gmra.mrb[0].mxu0 %v1108
        %v6420 = vpop.f32.mrb[0].mxu0
        %v6421 = vadd.f32 0.0, %v6420
        %v6422 = vpop.f32.mrb[0].mxu0
        %v6423 = vadd.f32 0.0, %v6422
        %v6424 = vpop.f32.mrb[0].mxu0
        %v6425 = vadd.f32 0.0, %v6424
        %v6426 = vpop.f32.mrb[0].mxu0
        %v6427 = vadd.f32 0.0, %v6426
        %6428 = vmatprep.mubr.bf16.mxu0 0
        %6429 = vmatmul.mubr.bf16.gmra.mrb[0].mxu0 %v1111
        %v6430 = vpop.f32.mrb[0].mxu0
        %v6431 = vadd.f32 0.0, %v6430
        %v6432 = vpop.f32.mrb[0].mxu0
        %v6433 = vadd.f32 0.0, %v6432
        %v6434 = vpop.f32.mrb[0].mxu0
        %v6435 = vadd.f32 0.0, %v6434
        %v6436 = vpop.f32.mrb[0].mxu0
        %v6437 = vadd.f32 0.0, %v6436
        %6438 = vmatprep.mubr.bf16.mxu0 0
        %6439 = vmatmul.mubr.bf16.gmra.mrb[0].mxu0 %v1114
        %v6440 = vpop.f32.mrb[0].mxu0
        %v6441 = vadd.f32 0.0, %v6440
        %v6442 = vpop.f32.mrb[0].mxu0
        %v6443 = vadd.f32 0.0, %v6442
        %v6444 = vpop.f32.mrb[0].mxu0
        %v6445 = vadd.f32 0.0, %v6444
        %v6446 = vpop.f32.mrb[0].mxu0
        %v6447 = vadd.f32 0.0, %v6446
        %6448 = vmatprep.mubr.bf16.mxu0 0
        %6449 = vmatmul.mubr.bf16.gmra.mrb[0].mxu0 %v1117
        %v6450 = vpop.f32.mrb[0].mxu0
        %v6451 = vadd.f32 0.0, %v6450
        %v6452 = vpop.f32.mrb[0].mxu0
        %v6453 = vadd.f32 0.0, %v6452
        %v6454 = vpop.f32.mrb[0].mxu0
        %v6455 = vadd.f32 0.0, %v6454
        %v6456 = vpop.f32.mrb[0].mxu0
        %v6457 = vadd.f32 0.0, %v6456
        %6458 = vmatprep.mubr.bf16.mxu0 0
        %6459 = vmatmul.mubr.bf16.gmra.mrb[0].mxu0 %v1120
        %v6460 = vpop.f32.mrb[0].mxu0
        %v6461 = vadd.f32 0.0, %v6460
        %v6462 = vpop.f32.mrb[0].mxu0
        %v6463 = vadd.f32 0.0, %v6462
        %v6464 = vpop.f32.mrb[0].mxu0
        %v6465 = vadd.f32 0.0, %v6464
        %v6466 = vpop.f32.mrb[0].mxu0
        %v6467 = vadd.f32 0.0, %v6466
        %6468 = vmatprep.mubr.bf16.mxu0 0
        %6469 = vmatmul.mubr.bf16.gmra.mrb[0].mxu0 %v1123
        %v6470 = vpop.f32.mrb[0].mxu0
        %v6471 = vadd.f32 0.0, %v6470
        %v6472 = vpop.f32.mrb[0].mxu0
        %v6473 = vadd.f32 0.0, %v6472
        %v6474 = vpop.f32.mrb[0].mxu0
        %v6475 = vadd.f32 0.0, %v6474
        %v6476 = vpop.f32.mrb[0].mxu0
        %v6477 = vadd.f32 0.0, %v6476
        %6478 = vdwg.mxu0
        %v6479 = vmax.f32 %v6077, %v6208
        %v6480 = vmax.f32 %v6078, %v6210
        %v6481 = vmax.f32 %v6079, %v6361
        %v6482 = vmax.f32 %v6080, %v6363
        %v6483 = vmax.f32 %v6081, %v6212
        %v6484 = vmax.f32 %v6082, %v6214
        %v6485 = vmax.f32 %v6083, %v6365
        %v6486 = vmax.f32 %v6084, %v6367
        %v6487 = vmax.f32 %v6085, %v6218
        %v6488 = vmax.f32 %v6086, %v6220
        %v6489 = vmax.f32 %v6087, %v6371
        %v6490 = vmax.f32 %v6088, %v6373
        %v6491 = vmax.f32 %v6089, %v6222
        %v6492 = vmax.f32 %v6090, %v6224
        %v6493 = vmax.f32 %v6091, %v6375
        %v6494 = vmax.f32 %v6092, %v6377
        %v6495 = vmax.f32 %v6093, %v6228
        %v6496 = vmax.f32 %v6094, %v6230
        %v6497 = vmax.f32 %v6095, %v6381
        %v6498 = vmax.f32 %v6096, %v6383
        %v6499 = vmax.f32 %v6097, %v6232
        %v6500 = vmax.f32 %v6098, %v6234
        %v6501 = vmax.f32 %v6099, %v6385
        %v6502 = vmax.f32 %v6100, %v6387
        %v6503 = vmax.f32 %v6101, %v6238
        %v6504 = vmax.f32 %v6102, %v6240
        %v6505 = vmax.f32 %v6103, %v6391
        %v6506 = vmax.f32 %v6104, %v6393
        %v6507 = vmax.f32 %v6105, %v6242
        %v6508 = vmax.f32 %v6106, %v6244
        %v6509 = vmax.f32 %v6107, %v6395
        %v6510 = vmax.f32 %v6108, %v6397
        %v6511 = vmax.f32 %v6109, %v6248
        %v6512 = vmax.f32 %v6110, %v6250
        %v6513 = vmax.f32 %v6111, %v6401
        %v6514 = vmax.f32 %v6112, %v6403
        %v6515 = vmax.f32 %v6113, %v6252
        %v6516 = vmax.f32 %v6114, %v6254
        %v6517 = vmax.f32 %v6115, %v6405
        %v6518 = vmax.f32 %v6116, %v6407
        %v6519 = vmax.f32 %v6117, %v6258
        %v6520 = vmax.f32 %v6118, %v6260
        %v6521 = vmax.f32 %v6119, %v6411
        %v6522 = vmax.f32 %v6120, %v6413
        %v6523 = vmax.f32 %v6121, %v6262
        %v6524 = vmax.f32 %v6122, %v6264
        %v6525 = vmax.f32 %v6123, %v6415
        %v6526 = vmax.f32 %v6124, %v6417
        %v6527 = vmax.f32 %v6125, %v6268
        %v6528 = vmax.f32 %v6126, %v6270
        %v6529 = vmax.f32 %v6127, %v6421
        %v6530 = vmax.f32 %v6128, %v6423
        %v6531 = vmax.f32 %v6129, %v6272
        %v6532 = vmax.f32 %v6130, %v6274
        %v6533 = vmax.f32 %v6131, %v6425
        %v6534 = vmax.f32 %v6132, %v6427
        %v6535 = vmax.f32 %v6133, %v6278
        %v6536 = vmax.f32 %v6134, %v6280
        %v6537 = vmax.f32 %v6135, %v6431
        %v6538 = vmax.f32 %v6136, %v6433
        %v6539 = vmax.f32 %v6137, %v6282
        %v6540 = vmax.f32 %v6138, %v6284
        %v6541 = vmax.f32 %v6139, %v6435
        %v6542 = vmax.f32 %v6140, %v6437
        %v6543 = vmax.f32 %v6141, %v6288
        %v6544 = vmax.f32 %v6142, %v6290
        %v6545 = vmax.f32 %v6143, %v6441
        %v6546 = vmax.f32 %v6144, %v6443
        %v6547 = vmax.f32 %v6145, %v6292
        %v6548 = vmax.f32 %v6146, %v6294
        %v6549 = vmax.f32 %v6147, %v6445
        %v6550 = vmax.f32 %v6148, %v6447
        %v6551 = vmax.f32 %v6149, %v6298
        %v6552 = vmax.f32 %v6150, %v6300
        %v6553 = vmax.f32 %v6151, %v6451
        %v6554 = vmax.f32 %v6152, %v6453
        %v6555 = vmax.f32 %v6153, %v6302
        %v6556 = vmax.f32 %v6154, %v6304
        %v6557 = vmax.f32 %v6155, %v6455
        %v6558 = vmax.f32 %v6156, %v6457
        %v6559 = vmax.f32 %v6157, %v6308
        %v6560 = vmax.f32 %v6158, %v6310
        %v6561 = vmax.f32 %v6159, %v6461
        %v6562 = vmax.f32 %v6160, %v6463
        %v6563 = vmax.f32 %v6161, %v6312
        %v6564 = vmax.f32 %v6162, %v6314
        %v6565 = vmax.f32 %v6163, %v6465
        %v6566 = vmax.f32 %v6164, %v6467
        %v6567 = vmax.f32 %v6165, %v6318
        %v6568 = vmax.f32 %v6166, %v6320
        %v6569 = vmax.f32 %v6167, %v6471
        %v6570 = vmax.f32 %v6168, %v6473
        %v6571 = vmax.f32 %v6169, %v6322
        %v6572 = vmax.f32 %v6170, %v6324
        %v6573 = vmax.f32 %v6171, %v6475
        %v6574 = vmax.f32 %v6172, %v6477
        %v6575 = vld [vmem:[%s2 + $0x8] sm:$0xf]
        %v6577 = vlaneseq
        %v6578 = vshrl.u32 %v6577, 7
        %v6579 = vsub.s32 0, %v6578
        %v6580 = vrot.slane %v6575, %v6579
        %v6581 = vlaneseq
        %v6582 = vshrl.u32 %v6581, 7
        %v6583 = vsub.s32 1, %v6582
        %v6584 = vrot.slane %v6575, %v6583
        %v6585 = vlaneseq
        %v6586 = vshrl.u32 %v6585, 7
        %v6587 = vsub.s32 2, %v6586
        %v6588 = vrot.slane %v6575, %v6587
        %v6589 = vlaneseq
        %v6590 = vshrl.u32 %v6589, 7
        %v6591 = vsub.s32 3, %v6590
        %v6592 = vrot.slane %v6575, %v6591
        %v6597 = vadd.f32 %v6479, %v6580
        %v6598 = vadd.f32 %v6480, %v6584
        %v6599 = vadd.f32 %v6481, %v6588
        %v6600 = vadd.f32 %v6482, %v6592
        %v6601 = vadd.f32 %v6483, %v6580
        %v6602 = vadd.f32 %v6484, %v6584
        %v6603 = vadd.f32 %v6485, %v6588
        %v6604 = vadd.f32 %v6486, %v6592
        %v6605 = vadd.f32 %v6487, %v6580
        %v6606 = vadd.f32 %v6488, %v6584
        %v6607 = vadd.f32 %v6489, %v6588
        %v6608 = vadd.f32 %v6490, %v6592
        %v6609 = vadd.f32 %v6491, %v6580
        %v6610 = vadd.f32 %v6492, %v6584
        %v6611 = vadd.f32 %v6493, %v6588
        %v6612 = vadd.f32 %v6494, %v6592
        %v6613 = vadd.f32 %v6495, %v6580
        %v6614 = vadd.f32 %v6496, %v6584
        %v6615 = vadd.f32 %v6497, %v6588
        %v6616 = vadd.f32 %v6498, %v6592
        %v6617 = vadd.f32 %v6499, %v6580
        %v6618 = vadd.f32 %v6500, %v6584
        %v6619 = vadd.f32 %v6501, %v6588
        %v6620 = vadd.f32 %v6502, %v6592
        %v6621 = vadd.f32 %v6503, %v6580
        %v6622 = vadd.f32 %v6504, %v6584
        %v6623 = vadd.f32 %v6505, %v6588
        %v6624 = vadd.f32 %v6506, %v6592
        %v6625 = vadd.f32 %v6507, %v6580
        %v6626 = vadd.f32 %v6508, %v6584
        %v6627 = vadd.f32 %v6509, %v6588
        %v6628 = vadd.f32 %v6510, %v6592
        %v6629 = vadd.f32 %v6511, %v6580
        %v6630 = vadd.f32 %v6512, %v6584
        %v6631 = vadd.f32 %v6513, %v6588
        %v6632 = vadd.f32 %v6514, %v6592
        %v6633 = vadd.f32 %v6515, %v6580
        %v6634 = vadd.f32 %v6516, %v6584
        %v6635 = vadd.f32 %v6517, %v6588
        %v6636 = vadd.f32 %v6518, %v6592
        %v6637 = vadd.f32 %v6519, %v6580
        %v6638 = vadd.f32 %v6520, %v6584
        %v6639 = vadd.f32 %v6521, %v6588
        %v6640 = vadd.f32 %v6522, %v6592
        %v6641 = vadd.f32 %v6523, %v6580
        %v6642 = vadd.f32 %v6524, %v6584
        %v6643 = vadd.f32 %v6525, %v6588
        %v6644 = vadd.f32 %v6526, %v6592
        %v6645 = vadd.f32 %v6527, %v6580
        %v6646 = vadd.f32 %v6528, %v6584
        %v6647 = vadd.f32 %v6529, %v6588
        %v6648 = vadd.f32 %v6530, %v6592
        %v6649 = vadd.f32 %v6531, %v6580
        %v6650 = vadd.f32 %v6532, %v6584
        %v6651 = vadd.f32 %v6533, %v6588
        %v6652 = vadd.f32 %v6534, %v6592
        %v6653 = vadd.f32 %v6535, %v6580
        %v6654 = vadd.f32 %v6536, %v6584
        %v6655 = vadd.f32 %v6537, %v6588
        %v6656 = vadd.f32 %v6538, %v6592
        %v6657 = vadd.f32 %v6539, %v6580
        %v6658 = vadd.f32 %v6540, %v6584
        %v6659 = vadd.f32 %v6541, %v6588
        %v6660 = vadd.f32 %v6542, %v6592
        %v6661 = vadd.f32 %v6543, %v6580
        %v6662 = vadd.f32 %v6544, %v6584
        %v6663 = vadd.f32 %v6545, %v6588
        %v6664 = vadd.f32 %v6546, %v6592
        %v6665 = vadd.f32 %v6547, %v6580
        %v6666 = vadd.f32 %v6548, %v6584
        %v6667 = vadd.f32 %v6549, %v6588
        %v6668 = vadd.f32 %v6550, %v6592
        %v6669 = vadd.f32 %v6551, %v6580
        %v6670 = vadd.f32 %v6552, %v6584
        %v6671 = vadd.f32 %v6553, %v6588
        %v6672 = vadd.f32 %v6554, %v6592
        %v6673 = vadd.f32 %v6555, %v6580
        %v6674 = vadd.f32 %v6556, %v6584
        %v6675 = vadd.f32 %v6557, %v6588
        %v6676 = vadd.f32 %v6558, %v6592
        %v6677 = vadd.f32 %v6559, %v6580
        %v6678 = vadd.f32 %v6560, %v6584
        %v6679 = vadd.f32 %v6561, %v6588
        %v6680 = vadd.f32 %v6562, %v6592
        %v6681 = vadd.f32 %v6563, %v6580
        %v6682 = vadd.f32 %v6564, %v6584
        %v6683 = vadd.f32 %v6565, %v6588
        %v6684 = vadd.f32 %v6566, %v6592
        %v6685 = vadd.f32 %v6567, %v6580
        %v6686 = vadd.f32 %v6568, %v6584
        %v6687 = vadd.f32 %v6569, %v6588
        %v6688 = vadd.f32 %v6570, %v6592
        %v6689 = vadd.f32 %v6571, %v6580
        %v6690 = vadd.f32 %v6572, %v6584
        %v6691 = vadd.f32 %v6573, %v6588
        %v6692 = vadd.f32 %v6574, %v6592
        %v6693 = vmax.f32 %v6597, 0.0
        %v6694 = vmax.f32 %v6598, 0.0
        %v6695 = vmax.f32 %v6599, 0.0
        %v6696 = vmax.f32 %v6600, 0.0
        %v6697 = vmax.f32 %v6601, 0.0
        %v6698 = vmax.f32 %v6602, 0.0
        %v6699 = vmax.f32 %v6603, 0.0
        %v6700 = vmax.f32 %v6604, 0.0
        %v6701 = vmax.f32 %v6605, 0.0
        %v6702 = vmax.f32 %v6606, 0.0
        %v6703 = vmax.f32 %v6607, 0.0
        %v6704 = vmax.f32 %v6608, 0.0
        %v6705 = vmax.f32 %v6609, 0.0
        %v6706 = vmax.f32 %v6610, 0.0
        %v6707 = vmax.f32 %v6611, 0.0
        %v6708 = vmax.f32 %v6612, 0.0
        %v6709 = vmax.f32 %v6613, 0.0
        %v6710 = vmax.f32 %v6614, 0.0
        %v6711 = vmax.f32 %v6615, 0.0
        %v6712 = vmax.f32 %v6616, 0.0
        %v6713 = vmax.f32 %v6617, 0.0
        %v6714 = vmax.f32 %v6618, 0.0
        %v6715 = vmax.f32 %v6619, 0.0
        %v6716 = vmax.f32 %v6620, 0.0
        %v6717 = vmax.f32 %v6621, 0.0
        %v6718 = vmax.f32 %v6622, 0.0
        %v6719 = vmax.f32 %v6623, 0.0
        %v6720 = vmax.f32 %v6624, 0.0
        %v6721 = vmax.f32 %v6625, 0.0
        %v6722 = vmax.f32 %v6626, 0.0
        %v6723 = vmax.f32 %v6627, 0.0
        %v6724 = vmax.f32 %v6628, 0.0
        %v6725 = vmax.f32 %v6629, 0.0
        %v6726 = vmax.f32 %v6630, 0.0
        %v6727 = vmax.f32 %v6631, 0.0
        %v6728 = vmax.f32 %v6632, 0.0
        %v6729 = vmax.f32 %v6633, 0.0
        %v6730 = vmax.f32 %v6634, 0.0
        %v6731 = vmax.f32 %v6635, 0.0
        %v6732 = vmax.f32 %v6636, 0.0
        %v6733 = vmax.f32 %v6637, 0.0
        %v6734 = vmax.f32 %v6638, 0.0
        %v6735 = vmax.f32 %v6639, 0.0
        %v6736 = vmax.f32 %v6640, 0.0
        %v6737 = vmax.f32 %v6641, 0.0
        %v6738 = vmax.f32 %v6642, 0.0
        %v6739 = vmax.f32 %v6643, 0.0
        %v6740 = vmax.f32 %v6644, 0.0
        %v6741 = vmax.f32 %v6645, 0.0
        %v6742 = vmax.f32 %v6646, 0.0
        %v6743 = vmax.f32 %v6647, 0.0
        %v6744 = vmax.f32 %v6648, 0.0
        %v6745 = vmax.f32 %v6649, 0.0
        %v6746 = vmax.f32 %v6650, 0.0
        %v6747 = vmax.f32 %v6651, 0.0
        %v6748 = vmax.f32 %v6652, 0.0
        %v6749 = vmax.f32 %v6653, 0.0
        %v6750 = vmax.f32 %v6654, 0.0
        %v6751 = vmax.f32 %v6655, 0.0
        %v6752 = vmax.f32 %v6656, 0.0
        %v6753 = vmax.f32 %v6657, 0.0
        %v6754 = vmax.f32 %v6658, 0.0
        %v6755 = vmax.f32 %v6659, 0.0
        %v6756 = vmax.f32 %v6660, 0.0
        %v6757 = vmax.f32 %v6661, 0.0
        %v6758 = vmax.f32 %v6662, 0.0
        %v6759 = vmax.f32 %v6663, 0.0
        %v6760 = vmax.f32 %v6664, 0.0
        %v6761 = vmax.f32 %v6665, 0.0
        %v6762 = vmax.f32 %v6666, 0.0
        %v6763 = vmax.f32 %v6667, 0.0
        %v6764 = vmax.f32 %v6668, 0.0
        %v6765 = vmax.f32 %v6669, 0.0
        %v6766 = vmax.f32 %v6670, 0.0
        %v6767 = vmax.f32 %v6671, 0.0
        %v6768 = vmax.f32 %v6672, 0.0
        %v6769 = vmax.f32 %v6673, 0.0
        %v6770 = vmax.f32 %v6674, 0.0
        %v6771 = vmax.f32 %v6675, 0.0
        %v6772 = vmax.f32 %v6676, 0.0
        %v6773 = vmax.f32 %v6677, 0.0
        %v6774 = vmax.f32 %v6678, 0.0
        %v6775 = vmax.f32 %v6679, 0.0
        %v6776 = vmax.f32 %v6680, 0.0
        %v6777 = vmax.f32 %v6681, 0.0
        %v6778 = vmax.f32 %v6682, 0.0
        %v6779 = vmax.f32 %v6683, 0.0
        %v6780 = vmax.f32 %v6684, 0.0
        %v6781 = vmax.f32 %v6685, 0.0
        %v6782 = vmax.f32 %v6686, 0.0
        %v6783 = vmax.f32 %v6687, 0.0
        %v6784 = vmax.f32 %v6688, 0.0
        %v6785 = vmax.f32 %v6689, 0.0
        %v6786 = vmax.f32 %v6690, 0.0
        %v6787 = vmax.f32 %v6691, 0.0
        %v6788 = vmax.f32 %v6692, 0.0
        %v6789 = vpack.c.bf16 %v6697, %v6693
        %v6790 = vpack.c.bf16 %v6698, %v6694
        %v6791 = vpack.c.bf16 %v6699, %v6695
        %v6792 = vpack.c.bf16 %v6700, %v6696
        %v6793 = vpack.c.bf16 %v6705, %v6701
        %v6794 = vpack.c.bf16 %v6706, %v6702
        %v6795 = vpack.c.bf16 %v6707, %v6703
        %v6796 = vpack.c.bf16 %v6708, %v6704
        %v6797 = vpack.c.bf16 %v6713, %v6709
        %v6798 = vpack.c.bf16 %v6714, %v6710
        %v6799 = vpack.c.bf16 %v6715, %v6711
        %v6800 = vpack.c.bf16 %v6716, %v6712
        %v6801 = vpack.c.bf16 %v6721, %v6717
        %v6802 = vpack.c.bf16 %v6722, %v6718
        %v6803 = vpack.c.bf16 %v6723, %v6719
        %v6804 = vpack.c.bf16 %v6724, %v6720
        %v6805 = vpack.c.bf16 %v6729, %v6725
        %v6806 = vpack.c.bf16 %v6730, %v6726
        %v6807 = vpack.c.bf16 %v6731, %v6727
        %v6808 = vpack.c.bf16 %v6732, %v6728
        %v6809 = vpack.c.bf16 %v6737, %v6733
        %v6810 = vpack.c.bf16 %v6738, %v6734
        %v6811 = vpack.c.bf16 %v6739, %v6735
        %v6812 = vpack.c.bf16 %v6740, %v6736
        %v6813 = vpack.c.bf16 %v6745, %v6741
        %v6814 = vpack.c.bf16 %v6746, %v6742
        %v6815 = vpack.c.bf16 %v6747, %v6743
        %v6816 = vpack.c.bf16 %v6748, %v6744
        %v6817 = vpack.c.bf16 %v6753, %v6749
        %v6818 = vpack.c.bf16 %v6754, %v6750
        %v6819 = vpack.c.bf16 %v6755, %v6751
        %v6820 = vpack.c.bf16 %v6756, %v6752
        %v6821 = vpack.c.bf16 %v6761, %v6757
        %v6822 = vpack.c.bf16 %v6762, %v6758
        %v6823 = vpack.c.bf16 %v6763, %v6759
        %v6824 = vpack.c.bf16 %v6764, %v6760
        %v6825 = vpack.c.bf16 %v6769, %v6765
        %v6826 = vpack.c.bf16 %v6770, %v6766
        %v6827 = vpack.c.bf16 %v6771, %v6767
        %v6828 = vpack.c.bf16 %v6772, %v6768
        %v6829 = vpack.c.bf16 %v6777, %v6773
        %v6830 = vpack.c.bf16 %v6778, %v6774
        %v6831 = vpack.c.bf16 %v6779, %v6775
        %v6832 = vpack.c.bf16 %v6780, %v6776
        %v6833 = vpack.c.bf16 %v6785, %v6781
        %v6834 = vpack.c.bf16 %v6786, %v6782
        %v6835 = vpack.c.bf16 %v6787, %v6783
        %v6836 = vpack.c.bf16 %v6788, %v6784
        %6837 = vst [vmem:[#allocation2 + $0x40] sm:$0xff] %v6789
        %6838 = vst [vmem:[#allocation2 + $0x48] sm:$0xff] %v6790
        %6839 = vst [vmem:[#allocation2 + $0x50] sm:$0xff] %v6791
        %6840 = vst [vmem:[#allocation2 + $0x58] sm:$0xff] %v6792
        %6841 = vst [vmem:[#allocation2 + $0xa0] sm:$0xff] %v6793
        %6842 = vst [vmem:[#allocation2 + $0xa8] sm:$0xff] %v6794
        %6843 = vst [vmem:[#allocation2 + $0xb0] sm:$0xff] %v6795
        %6844 = vst [vmem:[#allocation2 + $0xb8] sm:$0xff] %v6796
        %6845 = vst [vmem:[#allocation2 + $0x100] sm:$0xff] %v6797
        %6846 = vst [vmem:[#allocation2 + $0x108] sm:$0xff] %v6798
        %6847 = vst [vmem:[#allocation2 + $0x110] sm:$0xff] %v6799
        %6848 = vst [vmem:[#allocation2 + $0x118] sm:$0xff] %v6800
        %6849 = vst [vmem:[#allocation2 + $0x160] sm:$0xff] %v6801
        %6850 = vst [vmem:[#allocation2 + $0x168] sm:$0xff] %v6802
        %6851 = vst [vmem:[#allocation2 + $0x170] sm:$0xff] %v6803
        %6852 = vst [vmem:[#allocation2 + $0x178] sm:$0xff] %v6804
        %6853 = vst [vmem:[#allocation2 + $0x1c0] sm:$0xff] %v6805
        %6854 = vst [vmem:[#allocation2 + $0x1c8] sm:$0xff] %v6806
        %6855 = vst [vmem:[#allocation2 + $0x1d0] sm:$0xff] %v6807
        %6856 = vst [vmem:[#allocation2 + $0x1d8] sm:$0xff] %v6808
        %6857 = vst [vmem:[#allocation2 + $0x220] sm:$0xff] %v6809
        %6858 = vst [vmem:[#allocation2 + $0x228] sm:$0xff] %v6810
        %6859 = vst [vmem:[#allocation2 + $0x230] sm:$0xff] %v6811
        %6860 = vst [vmem:[#allocation2 + $0x238] sm:$0xff] %v6812
        %6861 = vst [vmem:[#allocation2 + $0x280] sm:$0xff] %v6813
        %6862 = vst [vmem:[#allocation2 + $0x288] sm:$0xff] %v6814
        %6863 = vst [vmem:[#allocation2 + $0x290] sm:$0xff] %v6815
        %6864 = vst [vmem:[#allocation2 + $0x298] sm:$0xff] %v6816
        %6865 = vst [vmem:[#allocation2 + $0x2e0] sm:$0xff] %v6817
        %6866 = vst [vmem:[#allocation2 + $0x2e8] sm:$0xff] %v6818
        %6867 = vst [vmem:[#allocation2 + $0x2f0] sm:$0xff] %v6819
        %6868 = vst [vmem:[#allocation2 + $0x2f8] sm:$0xff] %v6820
        %6869 = vst [vmem:[#allocation2 + $0x340] sm:$0xff] %v6821
        %6870 = vst [vmem:[#allocation2 + $0x348] sm:$0xff] %v6822
        %6871 = vst [vmem:[#allocation2 + $0x350] sm:$0xff] %v6823
        %6872 = vst [vmem:[#allocation2 + $0x358] sm:$0xff] %v6824
        %6873 = vst [vmem:[#allocation2 + $0x3a0] sm:$0xff] %v6825
        %6874 = vst [vmem:[#allocation2 + $0x3a8] sm:$0xff] %v6826
        %6875 = vst [vmem:[#allocation2 + $0x3b0] sm:$0xff] %v6827
        %6876 = vst [vmem:[#allocation2 + $0x3b8] sm:$0xff] %v6828
        %6877 = vst [vmem:[#allocation2 + $0x400] sm:$0xff] %v6829
        %6878 = vst [vmem:[#allocation2 + $0x408] sm:$0xff] %v6830
        %6879 = vst [vmem:[#allocation2 + $0x410] sm:$0xff] %v6831
        %6880 = vst [vmem:[#allocation2 + $0x418] sm:$0xff] %v6832
        %6881 = vst [vmem:[#allocation2 + $0x460] sm:$0xff] %v6833
        %6882 = vst [vmem:[#allocation2 + $0x468] sm:$0xff] %v6834
        %6883 = vst [vmem:[#allocation2 + $0x470] sm:$0xff] %v6835
        %6884 = vst [vmem:[#allocation2 + $0x478] sm:$0xff] %v6836
        %v6885 = vld [vmem:[#allocation2] sm:$0xff]
        %v6886 = vld [vmem:[#allocation2 + $0x8] sm:$0xff]
        %v6887 = vld [vmem:[#allocation2 + $0x10] sm:$0xff]
        %v6888 = vld [vmem:[#allocation2 + $0x18] sm:$0xff]
        %v6889 = vld [vmem:[#allocation2 + $0x20] sm:$0xff]
        %v6890 = vld [vmem:[#allocation2 + $0x28] sm:$0xff]
        %v6891 = vld [vmem:[#allocation2 + $0x30] sm:$0xff]
        %v6892 = vld [vmem:[#allocation2 + $0x38] sm:$0xff]
        %v6893 = vld [vmem:[#allocation2 + $0x40] sm:$0xff]
        %v6894 = vld [vmem:[#allocation2 + $0x48] sm:$0xff]
        %v6895 = vld [vmem:[#allocation2 + $0x50] sm:$0xff]
        %v6896 = vld [vmem:[#allocation2 + $0x58] sm:$0xff]
        %v6897 = vld [vmem:[#allocation2 + $0x60] sm:$0xff]
        %v6898 = vld [vmem:[#allocation2 + $0x68] sm:$0xff]
        %v6899 = vld [vmem:[#allocation2 + $0x70] sm:$0xff]
        %v6900 = vld [vmem:[#allocation2 + $0x78] sm:$0xff]
        %v6901 = vld [vmem:[#allocation2 + $0x80] sm:$0xff]
        %v6902 = vld [vmem:[#allocation2 + $0x88] sm:$0xff]
        %v6903 = vld [vmem:[#allocation2 + $0x90] sm:$0xff]
        %v6904 = vld [vmem:[#allocation2 + $0x98] sm:$0xff]
        %v6905 = vld [vmem:[#allocation2 + $0xa0] sm:$0xff]
        %v6906 = vld [vmem:[#allocation2 + $0xa8] sm:$0xff]
        %v6907 = vld [vmem:[#allocation2 + $0xb0] sm:$0xff]
        %v6908 = vld [vmem:[#allocation2 + $0xb8] sm:$0xff]
        %v6909 = vld [vmem:[#allocation2 + $0xc0] sm:$0xff]
        %v6910 = vld [vmem:[#allocation2 + $0xc8] sm:$0xff]
        %v6911 = vld [vmem:[#allocation2 + $0xd0] sm:$0xff]
        %v6912 = vld [vmem:[#allocation2 + $0xd8] sm:$0xff]
        %v6913 = vld [vmem:[#allocation2 + $0xe0] sm:$0xff]
        %v6914 = vld [vmem:[#allocation2 + $0xe8] sm:$0xff]
        %v6915 = vld [vmem:[#allocation2 + $0xf0] sm:$0xff]
        %v6916 = vld [vmem:[#allocation2 + $0xf8] sm:$0xff]
        %v6917 = vld [vmem:[#allocation2 + $0x100] sm:$0xff]
        %v6918 = vld [vmem:[#allocation2 + $0x108] sm:$0xff]
        %v6919 = vld [vmem:[#allocation2 + $0x110] sm:$0xff]
        %v6920 = vld [vmem:[#allocation2 + $0x118] sm:$0xff]
        %v6921 = vld [vmem:[#allocation2 + $0x120] sm:$0xff]
        %v6922 = vld [vmem:[#allocation2 + $0x128] sm:$0xff]
        %v6923 = vld [vmem:[#allocation2 + $0x130] sm:$0xff]
        %v6924 = vld [vmem:[#allocation2 + $0x138] sm:$0xff]
        %v6925 = vld [vmem:[#allocation2 + $0x140] sm:$0xff]
        %v6926 = vld [vmem:[#allocation2 + $0x148] sm:$0xff]
        %v6927 = vld [vmem:[#allocation2 + $0x150] sm:$0xff]
        %v6928 = vld [vmem:[#allocation2 + $0x158] sm:$0xff]
        %v6929 = vld [vmem:[#allocation2 + $0x160] sm:$0xff]
        %v6930 = vld [vmem:[#allocation2 + $0x168] sm:$0xff]
        %v6931 = vld [vmem:[#allocation2 + $0x170] sm:$0xff]
        %v6932 = vld [vmem:[#allocation2 + $0x178] sm:$0xff]
        %v6933 = vld [vmem:[#allocation2 + $0x180] sm:$0xff]
        %v6934 = vld [vmem:[#allocation2 + $0x188] sm:$0xff]
        %v6935 = vld [vmem:[#allocation2 + $0x190] sm:$0xff]
        %v6936 = vld [vmem:[#allocation2 + $0x198] sm:$0xff]
        %v6937 = vld [vmem:[#allocation2 + $0x1a0] sm:$0xff]
        %v6938 = vld [vmem:[#allocation2 + $0x1a8] sm:$0xff]
        %v6939 = vld [vmem:[#allocation2 + $0x1b0] sm:$0xff]
        %v6940 = vld [vmem:[#allocation2 + $0x1b8] sm:$0xff]
        %v6941 = vld [vmem:[#allocation2 + $0x1c0] sm:$0xff]
        %v6942 = vld [vmem:[#allocation2 + $0x1c8] sm:$0xff]
        %v6943 = vld [vmem:[#allocation2 + $0x1d0] sm:$0xff]
        %v6944 = vld [vmem:[#allocation2 + $0x1d8] sm:$0xff]
        %v6945 = vld [vmem:[#allocation2 + $0x1e0] sm:$0xff]
        %v6946 = vld [vmem:[#allocation2 + $0x1e8] sm:$0xff]
        %v6947 = vld [vmem:[#allocation2 + $0x1f0] sm:$0xff]
        %v6948 = vld [vmem:[#allocation2 + $0x1f8] sm:$0xff]
        %v6949 = vld [vmem:[#allocation2 + $0x200] sm:$0xff]
        %v6950 = vld [vmem:[#allocation2 + $0x208] sm:$0xff]
        %v6951 = vld [vmem:[#allocation2 + $0x210] sm:$0xff]
        %v6952 = vld [vmem:[#allocation2 + $0x218] sm:$0xff]
        %v6953 = vld [vmem:[#allocation2 + $0x220] sm:$0xff]
        %v6954 = vld [vmem:[#allocation2 + $0x228] sm:$0xff]
        %v6955 = vld [vmem:[#allocation2 + $0x230] sm:$0xff]
        %v6956 = vld [vmem:[#allocation2 + $0x238] sm:$0xff]
        %v6957 = vld [vmem:[#allocation2 + $0x240] sm:$0xff]
        %v6958 = vld [vmem:[#allocation2 + $0x248] sm:$0xff]
        %v6959 = vld [vmem:[#allocation2 + $0x250] sm:$0xff]
        %v6960 = vld [vmem:[#allocation2 + $0x258] sm:$0xff]
        %v6961 = vld [vmem:[#allocation2 + $0x260] sm:$0xff]
        %v6962 = vld [vmem:[#allocation2 + $0x268] sm:$0xff]
        %v6963 = vld [vmem:[#allocation2 + $0x270] sm:$0xff]
        %v6964 = vld [vmem:[#allocation2 + $0x278] sm:$0xff]
        %v6965 = vld [vmem:[#allocation2 + $0x280] sm:$0xff]
        %v6966 = vld [vmem:[#allocation2 + $0x288] sm:$0xff]
        %v6967 = vld [vmem:[#allocation2 + $0x290] sm:$0xff]
        %v6968 = vld [vmem:[#allocation2 + $0x298] sm:$0xff]
        %v6969 = vld [vmem:[#allocation2 + $0x2a0] sm:$0xff]
        %v6970 = vld [vmem:[#allocation2 + $0x2a8] sm:$0xff]
        %v6971 = vld [vmem:[#allocation2 + $0x2b0] sm:$0xff]
        %v6972 = vld [vmem:[#allocation2 + $0x2b8] sm:$0xff]
        %v6973 = vld [vmem:[#allocation2 + $0x2c0] sm:$0xff]
        %v6974 = vld [vmem:[#allocation2 + $0x2c8] sm:$0xff]
        %v6975 = vld [vmem:[#allocation2 + $0x2d0] sm:$0xff]
        %v6976 = vld [vmem:[#allocation2 + $0x2d8] sm:$0xff]
        %v6977 = vld [vmem:[#allocation2 + $0x2e0] sm:$0xff]
        %v6978 = vld [vmem:[#allocation2 + $0x2e8] sm:$0xff]
        %v6979 = vld [vmem:[#allocation2 + $0x2f0] sm:$0xff]
        %v6980 = vld [vmem:[#allocation2 + $0x2f8] sm:$0xff]
        %v6981 = vld [vmem:[%s3] sm:$0xf]
        %v6982 = vld [vmem:[%s3 + $0x4] sm:$0xf]
        %v6983 = vld [vmem:[%s3 + $0x8] sm:$0xf]
        %v6984 = vld [vmem:[%s3 + $0xc] sm:$0xf]
        %v6985 = vld [vmem:[%s3 + $0x10] sm:$0xf]
        %v6986 = vld [vmem:[%s3 + $0x14] sm:$0xf]
        %v6987 = vld [vmem:[%s3 + $0x18] sm:$0xf]
        %v6988 = vld [vmem:[%s3 + $0x1c] sm:$0xf]
        %v6989 = vld [vmem:[%s3 + $0x20] sm:$0xf]
        %v6990 = vld [vmem:[%s3 + $0x24] sm:$0xf]
        %v6991 = vld [vmem:[%s3 + $0x28] sm:$0xf]
        %v6992 = vld [vmem:[%s3 + $0x2c] sm:$0xf]
        %v6993 = vld [vmem:[%s3 + $0x30] sm:$0xf]
        %v6994 = vld [vmem:[%s3 + $0x34] sm:$0xf]
        %v6995 = vld [vmem:[%s3 + $0x38] sm:$0xf]
        %v6996 = vld [vmem:[%s3 + $0x3c] sm:$0xf]
        %v6997 = vld [vmem:[%s3 + $0x40] sm:$0xf]
        %v6998 = vld [vmem:[%s3 + $0x44] sm:$0xf]
        %v6999 = vld [vmem:[%s3 + $0x48] sm:$0xf]
        %v7000 = vld [vmem:[%s3 + $0x4c] sm:$0xf]
        %v7001 = vld [vmem:[%s3 + $0x50] sm:$0xf]
        %v7002 = vld [vmem:[%s3 + $0x54] sm:$0xf]
        %v7003 = vld [vmem:[%s3 + $0x58] sm:$0xf]
        %v7004 = vld [vmem:[%s3 + $0x5c] sm:$0xf]
        %v7005 = vld [vmem:[%s3 + $0x60] sm:$0xf]
        %v7006 = vld [vmem:[%s3 + $0x64] sm:$0xf]
        %v7007 = vld [vmem:[%s3 + $0x68] sm:$0xf]
        %v7008 = vld [vmem:[%s3 + $0x6c] sm:$0xf]
        %v7009 = vld [vmem:[%s3 + $0x70] sm:$0xf]
        %v7010 = vld [vmem:[%s3 + $0x74] sm:$0xf]
        %v7011 = vld [vmem:[%s3 + $0x78] sm:$0xf]
        %v7012 = vld [vmem:[%s3 + $0x7c] sm:$0xf]
        %v7013 = vld [vmem:[%s3 + $0x80] sm:$0xf]
        %v7014 = vld [vmem:[%s3 + $0x84] sm:$0xf]
        %v7015 = vld [vmem:[%s3 + $0x88] sm:$0xf]
        %v7016 = vld [vmem:[%s3 + $0x8c] sm:$0xf]
        %v7017 = vld [vmem:[%s3 + $0x90] sm:$0xf]
        %v7018 = vld [vmem:[%s3 + $0x94] sm:$0xf]
        %v7019 = vld [vmem:[%s3 + $0x98] sm:$0xf]
        %v7020 = vld [vmem:[%s3 + $0x9c] sm:$0xf]
        %v7021 = vld [vmem:[%s3 + $0xa0] sm:$0xf]
        %v7022 = vld [vmem:[%s3 + $0xa4] sm:$0xf]
        %v7023 = vld [vmem:[%s3 + $0xa8] sm:$0xf]
        %v7024 = vld [vmem:[%s3 + $0xac] sm:$0xf]
        %v7025 = vld [vmem:[%s3 + $0xb0] sm:$0xf]
        %v7026 = vld [vmem:[%s3 + $0xb4] sm:$0xf]
        %v7027 = vld [vmem:[%s3 + $0xb8] sm:$0xf]
        %v7028 = vld [vmem:[%s3 + $0xbc] sm:$0xf]
        %v7029 = vld [vmem:[%s3 + $0xc0] sm:$0xf]
        %v7030 = vld [vmem:[%s3 + $0xc4] sm:$0xf]
        %v7031 = vld [vmem:[%s3 + $0xc8] sm:$0xf]
        %v7032 = vld [vmem:[%s3 + $0xcc] sm:$0xf]
        %v7033 = vld [vmem:[%s3 + $0xd0] sm:$0xf]
        %v7034 = vld [vmem:[%s3 + $0xd4] sm:$0xf]
        %v7035 = vld [vmem:[%s3 + $0xd8] sm:$0xf]
        %v7036 = vld [vmem:[%s3 + $0xdc] sm:$0xf]
        %v7037 = vld [vmem:[%s3 + $0xe0] sm:$0xf]
        %v7038 = vld [vmem:[%s3 + $0xe4] sm:$0xf]
        %v7039 = vld [vmem:[%s3 + $0xe8] sm:$0xf]
        %v7040 = vld [vmem:[%s3 + $0xec] sm:$0xf]
        %v7041 = vld [vmem:[%s3 + $0xf0] sm:$0xf]
        %v7042 = vld [vmem:[%s3 + $0xf4] sm:$0xf]
        %v7043 = vld [vmem:[%s3 + $0xf8] sm:$0xf]
        %v7044 = vld [vmem:[%s3 + $0xfc] sm:$0xf]
        %v7045 = vld [vmem:[%s3 + $0x100] sm:$0xf]
        %v7046 = vld [vmem:[%s3 + $0x104] sm:$0xf]
        %v7047 = vld [vmem:[%s3 + $0x108] sm:$0xf]
        %v7048 = vld [vmem:[%s3 + $0x10c] sm:$0xf]
        %v7049 = vld [vmem:[%s3 + $0x110] sm:$0xf]
        %v7050 = vld [vmem:[%s3 + $0x114] sm:$0xf]
        %v7051 = vld [vmem:[%s3 + $0x118] sm:$0xf]
        %v7052 = vld [vmem:[%s3 + $0x11c] sm:$0xf]
        %v7053 = vld [vmem:[%s3 + $0x120] sm:$0xf]
        %v7054 = vld [vmem:[%s3 + $0x124] sm:$0xf]
        %v7055 = vld [vmem:[%s3 + $0x128] sm:$0xf]
        %v7056 = vld [vmem:[%s3 + $0x12c] sm:$0xf]
        %v7057 = vld [vmem:[%s3 + $0x130] sm:$0xf]
        %v7058 = vld [vmem:[%s3 + $0x134] sm:$0xf]
        %v7059 = vld [vmem:[%s3 + $0x138] sm:$0xf]
        %v7060 = vld [vmem:[%s3 + $0x13c] sm:$0xf]
        %v7061 = vld [vmem:[%s3 + $0x140] sm:$0xf]
        %v7062 = vld [vmem:[%s3 + $0x144] sm:$0xf]
        %v7063 = vld [vmem:[%s3 + $0x148] sm:$0xf]
        %v7064 = vld [vmem:[%s3 + $0x14c] sm:$0xf]
        %v7065 = vld [vmem:[%s3 + $0x150] sm:$0xf]
        %v7066 = vld [vmem:[%s3 + $0x154] sm:$0xf]
        %v7067 = vld [vmem:[%s3 + $0x158] sm:$0xf]
        %v7068 = vld [vmem:[%s3 + $0x15c] sm:$0xf]
        %v7069 = vld [vmem:[%s3 + $0x160] sm:$0xf]
        %v7070 = vld [vmem:[%s3 + $0x164] sm:$0xf]
        %v7071 = vld [vmem:[%s3 + $0x168] sm:$0xf]
        %v7072 = vld [vmem:[%s3 + $0x16c] sm:$0xf]
        %v7073 = vld [vmem:[%s3 + $0x170] sm:$0xf]
        %v7074 = vld [vmem:[%s3 + $0x174] sm:$0xf]
        %v7075 = vld [vmem:[%s3 + $0x178] sm:$0xf]
        %v7076 = vld [vmem:[%s3 + $0x17c] sm:$0xf]
        %v7077 = vld [vmem:[%s3 + $0x180] sm:$0xf]
        %v7078 = vld [vmem:[%s3 + $0x184] sm:$0xf]
        %v7079 = vld [vmem:[%s3 + $0x188] sm:$0xf]
        %v7080 = vld [vmem:[%s3 + $0x18c] sm:$0xf]
        %v7081 = vld [vmem:[%s3 + $0x190] sm:$0xf]
        %v7082 = vld [vmem:[%s3 + $0x194] sm:$0xf]
        %v7083 = vld [vmem:[%s3 + $0x198] sm:$0xf]
        %v7084 = vld [vmem:[%s3 + $0x19c] sm:$0xf]
        %v7085 = vld [vmem:[%s3 + $0x1a0] sm:$0xf]
        %v7086 = vld [vmem:[%s3 + $0x1a4] sm:$0xf]
        %v7087 = vld [vmem:[%s3 + $0x1a8] sm:$0xf]
        %v7088 = vld [vmem:[%s3 + $0x1ac] sm:$0xf]
        %v7089 = vld [vmem:[%s3 + $0x1b0] sm:$0xf]
        %v7090 = vld [vmem:[%s3 + $0x1b4] sm:$0xf]
        %v7091 = vld [vmem:[%s3 + $0x1b8] sm:$0xf]
        %v7092 = vld [vmem:[%s3 + $0x1bc] sm:$0xf]
        %v7093 = vld [vmem:[%s3 + $0x1c0] sm:$0xf]
        %v7094 = vld [vmem:[%s3 + $0x1c4] sm:$0xf]
        %v7095 = vld [vmem:[%s3 + $0x1c8] sm:$0xf]
        %v7096 = vld [vmem:[%s3 + $0x1cc] sm:$0xf]
        %v7097 = vld [vmem:[%s3 + $0x1d0] sm:$0xf]
        %v7098 = vld [vmem:[%s3 + $0x1d4] sm:$0xf]
        %v7099 = vld [vmem:[%s3 + $0x1d8] sm:$0xf]
        %v7100 = vld [vmem:[%s3 + $0x1dc] sm:$0xf]
        %v7101 = vld [vmem:[%s3 + $0x1e0] sm:$0xf]
        %v7102 = vld [vmem:[%s3 + $0x1e4] sm:$0xf]
        %v7103 = vld [vmem:[%s3 + $0x1e8] sm:$0xf]
        %v7104 = vld [vmem:[%s3 + $0x1ec] sm:$0xf]
        %v7105 = vld [vmem:[%s3 + $0x1f0] sm:$0xf]
        %v7106 = vld [vmem:[%s3 + $0x1f4] sm:$0xf]
        %v7107 = vld [vmem:[%s3 + $0x1f8] sm:$0xf]
        %v7108 = vld [vmem:[%s3 + $0x1fc] sm:$0xf]
        %v7109 = vld [vmem:[%s3 + $0x200] sm:$0xf]
        %v7110 = vld [vmem:[%s3 + $0x204] sm:$0xf]
        %v7111 = vld [vmem:[%s3 + $0x208] sm:$0xf]
        %v7112 = vld [vmem:[%s3 + $0x20c] sm:$0xf]
        %v7113 = vld [vmem:[%s3 + $0x210] sm:$0xf]
        %v7114 = vld [vmem:[%s3 + $0x214] sm:$0xf]
        %v7115 = vld [vmem:[%s3 + $0x218] sm:$0xf]
        %v7116 = vld [vmem:[%s3 + $0x21c] sm:$0xf]
        %v7117 = vld [vmem:[%s3 + $0x220] sm:$0xf]
        %v7118 = vld [vmem:[%s3 + $0x224] sm:$0xf]
        %v7119 = vld [vmem:[%s3 + $0x228] sm:$0xf]
        %v7120 = vld [vmem:[%s3 + $0x22c] sm:$0xf]
        %v7121 = vld [vmem:[%s3 + $0x230] sm:$0xf]
        %v7122 = vld [vmem:[%s3 + $0x234] sm:$0xf]
        %v7123 = vld [vmem:[%s3 + $0x238] sm:$0xf]
        %v7124 = vld [vmem:[%s3 + $0x23c] sm:$0xf]
        %v7125 = vld [vmem:[%s3 + $0x240] sm:$0xf]
        %v7126 = vld [vmem:[%s3 + $0x244] sm:$0xf]
        %v7127 = vld [vmem:[%s3 + $0x248] sm:$0xf]
        %v7128 = vld [vmem:[%s3 + $0x24c] sm:$0xf]
        %v7129 = vld [vmem:[%s3 + $0x250] sm:$0xf]
        %v7130 = vld [vmem:[%s3 + $0x254] sm:$0xf]
        %v7131 = vld [vmem:[%s3 + $0x258] sm:$0xf]
        %v7132 = vld [vmem:[%s3 + $0x25c] sm:$0xf]
        %v7133 = vld [vmem:[%s3 + $0x260] sm:$0xf]
        %v7134 = vld [vmem:[%s3 + $0x264] sm:$0xf]
        %v7135 = vld [vmem:[%s3 + $0x268] sm:$0xf]
        %v7136 = vld [vmem:[%s3 + $0x26c] sm:$0xf]
        %v7137 = vld [vmem:[%s3 + $0x270] sm:$0xf]
        %v7138 = vld [vmem:[%s3 + $0x274] sm:$0xf]
        %v7139 = vld [vmem:[%s3 + $0x278] sm:$0xf]
        %v7140 = vld [vmem:[%s3 + $0x27c] sm:$0xf]
        %v7141 = vld [vmem:[%s3 + $0x280] sm:$0xf]
        %v7142 = vld [vmem:[%s3 + $0x284] sm:$0xf]
        %v7143 = vld [vmem:[%s3 + $0x288] sm:$0xf]
        %v7144 = vld [vmem:[%s3 + $0x28c] sm:$0xf]
        %v7145 = vld [vmem:[%s3 + $0x290] sm:$0xf]
        %v7146 = vld [vmem:[%s3 + $0x294] sm:$0xf]
        %v7147 = vld [vmem:[%s3 + $0x298] sm:$0xf]
        %v7148 = vld [vmem:[%s3 + $0x29c] sm:$0xf]
        %v7149 = vld [vmem:[%s3 + $0x2a0] sm:$0xf]
        %v7150 = vld [vmem:[%s3 + $0x2a4] sm:$0xf]
        %v7151 = vld [vmem:[%s3 + $0x2a8] sm:$0xf]
        %v7152 = vld [vmem:[%s3 + $0x2ac] sm:$0xf]
        %v7153 = vld [vmem:[%s3 + $0x2b0] sm:$0xf]
        %v7154 = vld [vmem:[%s3 + $0x2b4] sm:$0xf]
        %v7155 = vld [vmem:[%s3 + $0x2b8] sm:$0xf]
        %v7156 = vld [vmem:[%s3 + $0x2bc] sm:$0xf]
        %v7157 = vld [vmem:[%s3 + $0x2c0] sm:$0xf]
        %v7158 = vld [vmem:[%s3 + $0x2c4] sm:$0xf]
        %v7159 = vld [vmem:[%s3 + $0x2c8] sm:$0xf]
        %v7160 = vld [vmem:[%s3 + $0x2cc] sm:$0xf]
        %v7161 = vld [vmem:[%s3 + $0x2d0] sm:$0xf]
        %v7162 = vld [vmem:[%s3 + $0x2d4] sm:$0xf]
        %v7163 = vld [vmem:[%s3 + $0x2d8] sm:$0xf]
        %v7164 = vld [vmem:[%s3 + $0x2dc] sm:$0xf]
        %v7165 = vld [vmem:[%s3 + $0x2e0] sm:$0xf]
        %v7166 = vld [vmem:[%s3 + $0x2e4] sm:$0xf]
        %v7167 = vld [vmem:[%s3 + $0x2e8] sm:$0xf]
        %v7168 = vld [vmem:[%s3 + $0x2ec] sm:$0xf]
        %v7169 = vld [vmem:[%s3 + $0x2f0] sm:$0xf]
        %v7170 = vld [vmem:[%s3 + $0x2f4] sm:$0xf]
        %v7171 = vld [vmem:[%s3 + $0x2f8] sm:$0xf]
        %v7172 = vld [vmem:[%s3 + $0x2fc] sm:$0xf]
        %v7173 = vld [vmem:[#allocation2 + $0x300] sm:$0xff]
        %v7174 = vld [vmem:[#allocation2 + $0x308] sm:$0xff]
        %v7175 = vld [vmem:[#allocation2 + $0x310] sm:$0xff]
        %v7176 = vld [vmem:[#allocation2 + $0x318] sm:$0xff]
        %v7177 = vld [vmem:[#allocation2 + $0x320] sm:$0xff]
        %v7178 = vld [vmem:[#allocation2 + $0x328] sm:$0xff]
        %v7179 = vld [vmem:[#allocation2 + $0x330] sm:$0xff]
        %v7180 = vld [vmem:[#allocation2 + $0x338] sm:$0xff]
        %v7181 = vld [vmem:[#allocation2 + $0x340] sm:$0xff]
        %v7182 = vld [vmem:[#allocation2 + $0x348] sm:$0xff]
        %v7183 = vld [vmem:[#allocation2 + $0x350] sm:$0xff]
        %v7184 = vld [vmem:[#allocation2 + $0x358] sm:$0xff]
        %v7185 = vld [vmem:[#allocation2 + $0x360] sm:$0xff]
        %v7186 = vld [vmem:[#allocation2 + $0x368] sm:$0xff]
        %v7187 = vld [vmem:[#allocation2 + $0x370] sm:$0xff]
        %v7188 = vld [vmem:[#allocation2 + $0x378] sm:$0xff]
        %v7189 = vld [vmem:[#allocation2 + $0x380] sm:$0xff]
        %v7190 = vld [vmem:[#allocation2 + $0x388] sm:$0xff]
        %v7191 = vld [vmem:[#allocation2 + $0x390] sm:$0xff]
        %v7192 = vld [vmem:[#allocation2 + $0x398] sm:$0xff]
        %v7193 = vld [vmem:[#allocation2 + $0x3a0] sm:$0xff]
        %v7194 = vld [vmem:[#allocation2 + $0x3a8] sm:$0xff]
        %v7195 = vld [vmem:[#allocation2 + $0x3b0] sm:$0xff]
        %v7196 = vld [vmem:[#allocation2 + $0x3b8] sm:$0xff]
        %s7197 = scalar_lea.vmem %s3, 768
        %v7198 = vld [vmem:[%s7197] sm:$0xf]
        %v7199 = vld [vmem:[%s7197 + $0x4] sm:$0xf]
        %v7200 = vld [vmem:[%s7197 + $0x8] sm:$0xf]
        %v7201 = vld [vmem:[%s7197 + $0xc] sm:$0xf]
        %v7202 = vld [vmem:[%s7197 + $0x10] sm:$0xf]
        %v7203 = vld [vmem:[%s7197 + $0x14] sm:$0xf]
        %v7204 = vld [vmem:[%s7197 + $0x18] sm:$0xf]
        %v7205 = vld [vmem:[%s7197 + $0x1c] sm:$0xf]
        %v7206 = vld [vmem:[%s7197 + $0x20] sm:$0xf]
        %v7207 = vld [vmem:[%s7197 + $0x24] sm:$0xf]
        %v7208 = vld [vmem:[%s7197 + $0x28] sm:$0xf]
        %v7209 = vld [vmem:[%s7197 + $0x2c] sm:$0xf]
        %v7210 = vld [vmem:[%s7197 + $0x30] sm:$0xf]
        %v7211 = vld [vmem:[%s7197 + $0x34] sm:$0xf]
        %v7212 = vld [vmem:[%s7197 + $0x38] sm:$0xf]
        %v7213 = vld [vmem:[%s7197 + $0x3c] sm:$0xf]
        %v7214 = vld [vmem:[%s7197 + $0x40] sm:$0xf]
        %v7215 = vld [vmem:[%s7197 + $0x44] sm:$0xf]
        %v7216 = vld [vmem:[%s7197 + $0x48] sm:$0xf]
        %v7217 = vld [vmem:[%s7197 + $0x4c] sm:$0xf]
        %v7218 = vld [vmem:[%s7197 + $0x50] sm:$0xf]
        %v7219 = vld [vmem:[%s7197 + $0x54] sm:$0xf]
        %v7220 = vld [vmem:[%s7197 + $0x58] sm:$0xf]
        %v7221 = vld [vmem:[%s7197 + $0x5c] sm:$0xf]
        %v7222 = vld [vmem:[%s7197 + $0x60] sm:$0xf]
        %v7223 = vld [vmem:[%s7197 + $0x64] sm:$0xf]
        %v7224 = vld [vmem:[%s7197 + $0x68] sm:$0xf]
        %v7225 = vld [vmem:[%s7197 + $0x6c] sm:$0xf]
        %v7226 = vld [vmem:[%s7197 + $0x70] sm:$0xf]
        %v7227 = vld [vmem:[%s7197 + $0x74] sm:$0xf]
        %v7228 = vld [vmem:[%s7197 + $0x78] sm:$0xf]
        %v7229 = vld [vmem:[%s7197 + $0x7c] sm:$0xf]
        %v7230 = vld [vmem:[%s7197 + $0x80] sm:$0xf]
        %v7231 = vld [vmem:[%s7197 + $0x84] sm:$0xf]
        %v7232 = vld [vmem:[%s7197 + $0x88] sm:$0xf]
        %v7233 = vld [vmem:[%s7197 + $0x8c] sm:$0xf]
        %v7234 = vld [vmem:[%s7197 + $0x90] sm:$0xf]
        %v7235 = vld [vmem:[%s7197 + $0x94] sm:$0xf]
        %v7236 = vld [vmem:[%s7197 + $0x98] sm:$0xf]
        %v7237 = vld [vmem:[%s7197 + $0x9c] sm:$0xf]
        %v7238 = vld [vmem:[%s7197 + $0xa0] sm:$0xf]
        %v7239 = vld [vmem:[%s7197 + $0xa4] sm:$0xf]
        %v7240 = vld [vmem:[%s7197 + $0xa8] sm:$0xf]
        %v7241 = vld [vmem:[%s7197 + $0xac] sm:$0xf]
        %v7242 = vld [vmem:[%s7197 + $0xb0] sm:$0xf]
        %v7243 = vld [vmem:[%s7197 + $0xb4] sm:$0xf]
        %v7244 = vld [vmem:[%s7197 + $0xb8] sm:$0xf]
        %v7245 = vld [vmem:[%s7197 + $0xbc] sm:$0xf]
        %v7246 = vld [vmem:[%s7197 + $0xc0] sm:$0xf]
        %v7247 = vld [vmem:[%s7197 + $0xc4] sm:$0xf]
        %v7248 = vld [vmem:[%s7197 + $0xc8] sm:$0xf]
        %v7249 = vld [vmem:[%s7197 + $0xcc] sm:$0xf]
        %v7250 = vld [vmem:[%s7197 + $0xd0] sm:$0xf]
        %v7251 = vld [vmem:[%s7197 + $0xd4] sm:$0xf]
        %v7252 = vld [vmem:[%s7197 + $0xd8] sm:$0xf]
        %v7253 = vld [vmem:[%s7197 + $0xdc] sm:$0xf]
        %v7254 = vld [vmem:[%s7197 + $0xe0] sm:$0xf]
        %v7255 = vld [vmem:[%s7197 + $0xe4] sm:$0xf]
        %v7256 = vld [vmem:[%s7197 + $0xe8] sm:$0xf]
        %v7257 = vld [vmem:[%s7197 + $0xec] sm:$0xf]
        %v7258 = vld [vmem:[%s7197 + $0xf0] sm:$0xf]
        %v7259 = vld [vmem:[%s7197 + $0xf4] sm:$0xf]
        %v7260 = vld [vmem:[%s7197 + $0xf8] sm:$0xf]
        %v7261 = vld [vmem:[%s7197 + $0xfc] sm:$0xf]
        %v7262 = vld [vmem:[%s7197 + $0x100] sm:$0xf]
        %v7263 = vld [vmem:[%s7197 + $0x104] sm:$0xf]
        %v7264 = vld [vmem:[%s7197 + $0x108] sm:$0xf]
        %v7265 = vld [vmem:[%s7197 + $0x10c] sm:$0xf]
        %v7266 = vld [vmem:[%s7197 + $0x110] sm:$0xf]
        %v7267 = vld [vmem:[%s7197 + $0x114] sm:$0xf]
        %v7268 = vld [vmem:[%s7197 + $0x118] sm:$0xf]
        %v7269 = vld [vmem:[%s7197 + $0x11c] sm:$0xf]
        %v7270 = vld [vmem:[%s7197 + $0x120] sm:$0xf]
        %v7271 = vld [vmem:[%s7197 + $0x124] sm:$0xf]
        %v7272 = vld [vmem:[%s7197 + $0x128] sm:$0xf]
        %v7273 = vld [vmem:[%s7197 + $0x12c] sm:$0xf]
        %v7274 = vld [vmem:[%s7197 + $0x130] sm:$0xf]
        %v7275 = vld [vmem:[%s7197 + $0x134] sm:$0xf]
        %v7276 = vld [vmem:[%s7197 + $0x138] sm:$0xf]
        %v7277 = vld [vmem:[%s7197 + $0x13c] sm:$0xf]
        %v7278 = vld [vmem:[%s7197 + $0x140] sm:$0xf]
        %v7279 = vld [vmem:[%s7197 + $0x144] sm:$0xf]
        %v7280 = vld [vmem:[%s7197 + $0x148] sm:$0xf]
        %v7281 = vld [vmem:[%s7197 + $0x14c] sm:$0xf]
        %v7282 = vld [vmem:[%s7197 + $0x150] sm:$0xf]
        %v7283 = vld [vmem:[%s7197 + $0x154] sm:$0xf]
        %v7284 = vld [vmem:[%s7197 + $0x158] sm:$0xf]
        %v7285 = vld [vmem:[%s7197 + $0x15c] sm:$0xf]
        %v7286 = vld [vmem:[%s7197 + $0x160] sm:$0xf]
        %v7287 = vld [vmem:[%s7197 + $0x164] sm:$0xf]
        %v7288 = vld [vmem:[%s7197 + $0x168] sm:$0xf]
        %v7289 = vld [vmem:[%s7197 + $0x16c] sm:$0xf]
        %v7290 = vld [vmem:[%s7197 + $0x170] sm:$0xf]
        %v7291 = vld [vmem:[%s7197 + $0x174] sm:$0xf]
        %v7292 = vld [vmem:[%s7197 + $0x178] sm:$0xf]
        %v7293 = vld [vmem:[%s7197 + $0x17c] sm:$0xf]
        %v7294 = vld [vmem:[%s7197 + $0x180] sm:$0xf]
        %v7295 = vld [vmem:[%s7197 + $0x184] sm:$0xf]
        %v7296 = vld [vmem:[%s7197 + $0x188] sm:$0xf]
        %v7297 = vld [vmem:[%s7197 + $0x18c] sm:$0xf]
        %v7298 = vld [vmem:[%s7197 + $0x190] sm:$0xf]
        %v7299 = vld [vmem:[%s7197 + $0x194] sm:$0xf]
        %v7300 = vld [vmem:[%s7197 + $0x198] sm:$0xf]
        %v7301 = vld [vmem:[%s7197 + $0x19c] sm:$0xf]
        %v7302 = vld [vmem:[%s7197 + $0x1a0] sm:$0xf]
        %v7303 = vld [vmem:[%s7197 + $0x1a4] sm:$0xf]
        %v7304 = vld [vmem:[%s7197 + $0x1a8] sm:$0xf]
        %v7305 = vld [vmem:[%s7197 + $0x1ac] sm:$0xf]
        %v7306 = vld [vmem:[%s7197 + $0x1b0] sm:$0xf]
        %v7307 = vld [vmem:[%s7197 + $0x1b4] sm:$0xf]
        %v7308 = vld [vmem:[%s7197 + $0x1b8] sm:$0xf]
        %v7309 = vld [vmem:[%s7197 + $0x1bc] sm:$0xf]
        %v7310 = vld [vmem:[%s7197 + $0x1c0] sm:$0xf]
        %v7311 = vld [vmem:[%s7197 + $0x1c4] sm:$0xf]
        %v7312 = vld [vmem:[%s7197 + $0x1c8] sm:$0xf]
        %v7313 = vld [vmem:[%s7197 + $0x1cc] sm:$0xf]
        %v7314 = vld [vmem:[%s7197 + $0x1d0] sm:$0xf]
        %v7315 = vld [vmem:[%s7197 + $0x1d4] sm:$0xf]
        %v7316 = vld [vmem:[%s7197 + $0x1d8] sm:$0xf]
        %v7317 = vld [vmem:[%s7197 + $0x1dc] sm:$0xf]
        %v7318 = vld [vmem:[%s7197 + $0x1e0] sm:$0xf]
        %v7319 = vld [vmem:[%s7197 + $0x1e4] sm:$0xf]
        %v7320 = vld [vmem:[%s7197 + $0x1e8] sm:$0xf]
        %v7321 = vld [vmem:[%s7197 + $0x1ec] sm:$0xf]
        %v7322 = vld [vmem:[%s7197 + $0x1f0] sm:$0xf]
        %v7323 = vld [vmem:[%s7197 + $0x1f4] sm:$0xf]
        %v7324 = vld [vmem:[%s7197 + $0x1f8] sm:$0xf]
        %v7325 = vld [vmem:[%s7197 + $0x1fc] sm:$0xf]
        %v7326 = vld [vmem:[%s7197 + $0x200] sm:$0xf]
        %v7327 = vld [vmem:[%s7197 + $0x204] sm:$0xf]
        %v7328 = vld [vmem:[%s7197 + $0x208] sm:$0xf]
        %v7329 = vld [vmem:[%s7197 + $0x20c] sm:$0xf]
        %v7330 = vld [vmem:[%s7197 + $0x210] sm:$0xf]
        %v7331 = vld [vmem:[%s7197 + $0x214] sm:$0xf]
        %v7332 = vld [vmem:[%s7197 + $0x218] sm:$0xf]
        %v7333 = vld [vmem:[%s7197 + $0x21c] sm:$0xf]
        %v7334 = vld [vmem:[%s7197 + $0x220] sm:$0xf]
        %v7335 = vld [vmem:[%s7197 + $0x224] sm:$0xf]
        %v7336 = vld [vmem:[%s7197 + $0x228] sm:$0xf]
        %v7337 = vld [vmem:[%s7197 + $0x22c] sm:$0xf]
        %v7338 = vld [vmem:[%s7197 + $0x230] sm:$0xf]
        %v7339 = vld [vmem:[%s7197 + $0x234] sm:$0xf]
        %v7340 = vld [vmem:[%s7197 + $0x238] sm:$0xf]
        %v7341 = vld [vmem:[%s7197 + $0x23c] sm:$0xf]
        %v7342 = vld [vmem:[%s7197 + $0x240] sm:$0xf]
        %v7343 = vld [vmem:[%s7197 + $0x244] sm:$0xf]
        %v7344 = vld [vmem:[%s7197 + $0x248] sm:$0xf]
        %v7345 = vld [vmem:[%s7197 + $0x24c] sm:$0xf]
        %v7346 = vld [vmem:[%s7197 + $0x250] sm:$0xf]
        %v7347 = vld [vmem:[%s7197 + $0x254] sm:$0xf]
        %v7348 = vld [vmem:[%s7197 + $0x258] sm:$0xf]
        %v7349 = vld [vmem:[%s7197 + $0x25c] sm:$0xf]
        %v7350 = vld [vmem:[%s7197 + $0x260] sm:$0xf]
        %v7351 = vld [vmem:[%s7197 + $0x264] sm:$0xf]
        %v7352 = vld [vmem:[%s7197 + $0x268] sm:$0xf]
        %v7353 = vld [vmem:[%s7197 + $0x26c] sm:$0xf]
        %v7354 = vld [vmem:[%s7197 + $0x270] sm:$0xf]
        %v7355 = vld [vmem:[%s7197 + $0x274] sm:$0xf]
        %v7356 = vld [vmem:[%s7197 + $0x278] sm:$0xf]
        %v7357 = vld [vmem:[%s7197 + $0x27c] sm:$0xf]
        %v7358 = vld [vmem:[%s7197 + $0x280] sm:$0xf]
        %v7359 = vld [vmem:[%s7197 + $0x284] sm:$0xf]
        %v7360 = vld [vmem:[%s7197 + $0x288] sm:$0xf]
        %v7361 = vld [vmem:[%s7197 + $0x28c] sm:$0xf]
        %v7362 = vld [vmem:[%s7197 + $0x290] sm:$0xf]
        %v7363 = vld [vmem:[%s7197 + $0x294] sm:$0xf]
        %v7364 = vld [vmem:[%s7197 + $0x298] sm:$0xf]
        %v7365 = vld [vmem:[%s7197 + $0x29c] sm:$0xf]
        %v7366 = vld [vmem:[%s7197 + $0x2a0] sm:$0xf]
        %v7367 = vld [vmem:[%s7197 + $0x2a4] sm:$0xf]
        %v7368 = vld [vmem:[%s7197 + $0x2a8] sm:$0xf]
        %v7369 = vld [vmem:[%s7197 + $0x2ac] sm:$0xf]
        %v7370 = vld [vmem:[%s7197 + $0x2b0] sm:$0xf]
        %v7371 = vld [vmem:[%s7197 + $0x2b4] sm:$0xf]
        %v7372 = vld [vmem:[%s7197 + $0x2b8] sm:$0xf]
        %v7373 = vld [vmem:[%s7197 + $0x2bc] sm:$0xf]
        %v7374 = vld [vmem:[%s7197 + $0x2c0] sm:$0xf]
        %v7375 = vld [vmem:[%s7197 + $0x2c4] sm:$0xf]
        %v7376 = vld [vmem:[%s7197 + $0x2c8] sm:$0xf]
        %v7377 = vld [vmem:[%s7197 + $0x2cc] sm:$0xf]
        %v7378 = vld [vmem:[%s7197 + $0x2d0] sm:$0xf]
        %v7379 = vld [vmem:[%s7197 + $0x2d4] sm:$0xf]
        %v7380 = vld [vmem:[%s7197 + $0x2d8] sm:$0xf]
        %v7381 = vld [vmem:[%s7197 + $0x2dc] sm:$0xf]
        %v7382 = vld [vmem:[%s7197 + $0x2e0] sm:$0xf]
        %v7383 = vld [vmem:[%s7197 + $0x2e4] sm:$0xf]
        %v7384 = vld [vmem:[%s7197 + $0x2e8] sm:$0xf]
        %v7385 = vld [vmem:[%s7197 + $0x2ec] sm:$0xf]
        %v7386 = vld [vmem:[%s7197 + $0x2f0] sm:$0xf]
        %v7387 = vld [vmem:[%s7197 + $0x2f4] sm:$0xf]
        %v7388 = vld [vmem:[%s7197 + $0x2f8] sm:$0xf]
        %v7389 = vld [vmem:[%s7197 + $0x2fc] sm:$0xf]
        %v7582 = vunpack.c.l.b16 %v7198
        %v7583 = vunpack.c.l.b16 %v7199
        %v7584 = vunpack.c.l.b16 %v7200
        %v7585 = vunpack.c.l.b16 %v7201
        %v7586 = vunpack.c.l.b16 %v7202
        %v7587 = vunpack.c.l.b16 %v7203
        %v7588 = vunpack.c.l.b16 %v7204
        %v7589 = vunpack.c.l.b16 %v7205
        %v7590 = vunpack.c.l.b16 %v7206
        %v7591 = vunpack.c.l.b16 %v7207
        %v7592 = vunpack.c.l.b16 %v7208
        %v7593 = vunpack.c.l.b16 %v7209
        %v7594 = vunpack.c.l.b16 %v7210
        %v7595 = vunpack.c.l.b16 %v7211
        %v7596 = vunpack.c.l.b16 %v7212
        %v7597 = vunpack.c.l.b16 %v7213
        %v7598 = vunpack.c.l.b16 %v7214
        %v7599 = vunpack.c.l.b16 %v7215
        %v7600 = vunpack.c.l.b16 %v7216
        %v7601 = vunpack.c.l.b16 %v7217
        %v7602 = vunpack.c.l.b16 %v7218
        %v7603 = vunpack.c.l.b16 %v7219
        %v7604 = vunpack.c.l.b16 %v7220
        %v7605 = vunpack.c.l.b16 %v7221
        %v7606 = vunpack.c.l.b16 %v7222
        %v7607 = vunpack.c.l.b16 %v7223
        %v7608 = vunpack.c.l.b16 %v7224
        %v7609 = vunpack.c.l.b16 %v7225
        %v7610 = vunpack.c.l.b16 %v7226
        %v7611 = vunpack.c.l.b16 %v7227
        %v7612 = vunpack.c.l.b16 %v7228
        %v7613 = vunpack.c.l.b16 %v7229
        %v7614 = vunpack.c.l.b16 %v7230
        %v7615 = vunpack.c.l.b16 %v7231
        %v7616 = vunpack.c.l.b16 %v7232
        %v7617 = vunpack.c.l.b16 %v7233
        %v7618 = vunpack.c.l.b16 %v7234
        %v7619 = vunpack.c.l.b16 %v7235
        %v7620 = vunpack.c.l.b16 %v7236
        %v7621 = vunpack.c.l.b16 %v7237
        %v7622 = vunpack.c.l.b16 %v7238
        %v7623 = vunpack.c.l.b16 %v7239
        %v7624 = vunpack.c.l.b16 %v7240
        %v7625 = vunpack.c.l.b16 %v7241
        %v7626 = vunpack.c.l.b16 %v7242
        %v7627 = vunpack.c.l.b16 %v7243
        %v7628 = vunpack.c.l.b16 %v7244
        %v7629 = vunpack.c.l.b16 %v7245
        %v7630 = vunpack.c.l.b16 %v7246
        %v7631 = vunpack.c.l.b16 %v7247
        %v7632 = vunpack.c.l.b16 %v7248
        %v7633 = vunpack.c.l.b16 %v7249
        %v7634 = vunpack.c.l.b16 %v7250
        %v7635 = vunpack.c.l.b16 %v7251
        %v7636 = vunpack.c.l.b16 %v7252
        %v7637 = vunpack.c.l.b16 %v7253
        %v7638 = vunpack.c.l.b16 %v7254
        %v7639 = vunpack.c.l.b16 %v7255
        %v7640 = vunpack.c.l.b16 %v7256
        %v7641 = vunpack.c.l.b16 %v7257
        %v7642 = vunpack.c.l.b16 %v7258
        %v7643 = vunpack.c.l.b16 %v7259
        %v7644 = vunpack.c.l.b16 %v7260
        %v7645 = vunpack.c.l.b16 %v7261
        %v7646 = vunpack.c.l.b16 %v7262
        %v7647 = vunpack.c.l.b16 %v7263
        %v7648 = vunpack.c.l.b16 %v7264
        %v7649 = vunpack.c.l.b16 %v7265
        %v7650 = vunpack.c.l.b16 %v7266
        %v7651 = vunpack.c.l.b16 %v7267
        %v7652 = vunpack.c.l.b16 %v7268
        %v7653 = vunpack.c.l.b16 %v7269
        %v7654 = vunpack.c.l.b16 %v7270
        %v7655 = vunpack.c.l.b16 %v7271
        %v7656 = vunpack.c.l.b16 %v7272
        %v7657 = vunpack.c.l.b16 %v7273
        %v7658 = vunpack.c.l.b16 %v7274
        %v7659 = vunpack.c.l.b16 %v7275
        %v7660 = vunpack.c.l.b16 %v7276
        %v7661 = vunpack.c.l.b16 %v7277
        %v7662 = vunpack.c.l.b16 %v7278
        %v7663 = vunpack.c.l.b16 %v7279
        %v7664 = vunpack.c.l.b16 %v7280
        %v7665 = vunpack.c.l.b16 %v7281
        %v7666 = vunpack.c.l.b16 %v7282
        %v7667 = vunpack.c.l.b16 %v7283
        %v7668 = vunpack.c.l.b16 %v7284
        %v7669 = vunpack.c.l.b16 %v7285
        %v7670 = vunpack.c.l.b16 %v7286
        %v7671 = vunpack.c.l.b16 %v7287
        %v7672 = vunpack.c.l.b16 %v7288
        %v7673 = vunpack.c.l.b16 %v7289
        %v7674 = vunpack.c.l.b16 %v7290
        %v7675 = vunpack.c.l.b16 %v7291
        %v7676 = vunpack.c.l.b16 %v7292
        %v7677 = vunpack.c.l.b16 %v7293
        %v7678 = vunpack.c.l.b16 %v7294
        %v7679 = vunpack.c.l.b16 %v7295
        %v7680 = vunpack.c.l.b16 %v7296
        %v7681 = vunpack.c.l.b16 %v7297
        %v7682 = vunpack.c.l.b16 %v7298
        %v7683 = vunpack.c.l.b16 %v7299
        %v7684 = vunpack.c.l.b16 %v7300
        %v7685 = vunpack.c.l.b16 %v7301
        %v7686 = vunpack.c.l.b16 %v7302
        %v7687 = vunpack.c.l.b16 %v7303
        %v7688 = vunpack.c.l.b16 %v7304
        %v7689 = vunpack.c.l.b16 %v7305
        %v7690 = vunpack.c.l.b16 %v7306
        %v7691 = vunpack.c.l.b16 %v7307
        %v7692 = vunpack.c.l.b16 %v7308
        %v7693 = vunpack.c.l.b16 %v7309
        %v7694 = vunpack.c.l.b16 %v7310
        %v7695 = vunpack.c.l.b16 %v7311
        %v7696 = vunpack.c.l.b16 %v7312
        %v7697 = vunpack.c.l.b16 %v7313
        %v7698 = vunpack.c.l.b16 %v7314
        %v7699 = vunpack.c.l.b16 %v7315
        %v7700 = vunpack.c.l.b16 %v7316
        %v7701 = vunpack.c.l.b16 %v7317
        %v7702 = vunpack.c.l.b16 %v7318
        %v7703 = vunpack.c.l.b16 %v7319
        %v7704 = vunpack.c.l.b16 %v7320
        %v7705 = vunpack.c.l.b16 %v7321
        %v7706 = vunpack.c.l.b16 %v7322
        %v7707 = vunpack.c.l.b16 %v7323
        %v7708 = vunpack.c.l.b16 %v7324
        %v7709 = vunpack.c.l.b16 %v7325
        %v7710 = vunpack.c.l.b16 %v7326
        %v7711 = vunpack.c.l.b16 %v7327
        %v7712 = vunpack.c.l.b16 %v7328
        %v7713 = vunpack.c.l.b16 %v7329
        %v7714 = vunpack.c.l.b16 %v7330
        %v7715 = vunpack.c.l.b16 %v7331
        %v7716 = vunpack.c.l.b16 %v7332
        %v7717 = vunpack.c.l.b16 %v7333
        %v7718 = vunpack.c.l.b16 %v7334
        %v7719 = vunpack.c.l.b16 %v7335
        %v7720 = vunpack.c.l.b16 %v7336
        %v7721 = vunpack.c.l.b16 %v7337
        %v7722 = vunpack.c.l.b16 %v7338
        %v7723 = vunpack.c.l.b16 %v7339
        %v7724 = vunpack.c.l.b16 %v7340
        %v7725 = vunpack.c.l.b16 %v7341
        %v7726 = vunpack.c.l.b16 %v7342
        %v7727 = vunpack.c.l.b16 %v7343
        %v7728 = vunpack.c.l.b16 %v7344
        %v7729 = vunpack.c.l.b16 %v7345
        %v7730 = vunpack.c.l.b16 %v7346
        %v7731 = vunpack.c.l.b16 %v7347
        %v7732 = vunpack.c.l.b16 %v7348
        %v7733 = vunpack.c.l.b16 %v7349
        %v7734 = vunpack.c.l.b16 %v7350
        %v7735 = vunpack.c.l.b16 %v7351
        %v7736 = vunpack.c.l.b16 %v7352
        %v7737 = vunpack.c.l.b16 %v7353
        %v7738 = vunpack.c.l.b16 %v7354
        %v7739 = vunpack.c.l.b16 %v7355
        %v7740 = vunpack.c.l.b16 %v7356
        %v7741 = vunpack.c.l.b16 %v7357
        %v7742 = vunpack.c.l.b16 %v7358
        %v7743 = vunpack.c.l.b16 %v7359
        %v7744 = vunpack.c.l.b16 %v7360
        %v7745 = vunpack.c.l.b16 %v7361
        %v7746 = vunpack.c.l.b16 %v7362
        %v7747 = vunpack.c.l.b16 %v7363
        %v7748 = vunpack.c.l.b16 %v7364
        %v7749 = vunpack.c.l.b16 %v7365
        %v7750 = vunpack.c.l.b16 %v7366
        %v7751 = vunpack.c.l.b16 %v7367
        %v7752 = vunpack.c.l.b16 %v7368
        %v7753 = vunpack.c.l.b16 %v7369
        %v7754 = vunpack.c.l.b16 %v7370
        %v7755 = vunpack.c.l.b16 %v7371
        %v7756 = vunpack.c.l.b16 %v7372
        %v7757 = vunpack.c.l.b16 %v7373
        %v7758 = vunpack.c.l.b16 %v7374
        %v7759 = vunpack.c.l.b16 %v7375
        %v7760 = vunpack.c.l.b16 %v7376
        %v7761 = vunpack.c.l.b16 %v7377
        %v7762 = vunpack.c.l.b16 %v7378
        %v7763 = vunpack.c.l.b16 %v7379
        %v7764 = vunpack.c.l.b16 %v7380
        %v7765 = vunpack.c.l.b16 %v7381
        %v7766 = vunpack.c.l.b16 %v7382
        %v7767 = vunpack.c.l.b16 %v7383
        %v7768 = vunpack.c.l.b16 %v7384
        %v7769 = vunpack.c.l.b16 %v7385
        %v7770 = vunpack.c.l.b16 %v7386
        %v7771 = vunpack.c.l.b16 %v7387
        %v7772 = vunpack.c.l.b16 %v7388
        %v7773 = vunpack.c.l.b16 %v7389
        %v7774 = vpack.c.b16 %v7583, %v7582
        %v7775 = vpack.c.b16 %v7585, %v7584
        %v7776 = vpack.c.b16 %v7587, %v7586
        %v7777 = vpack.c.b16 %v7589, %v7588
        %v7778 = vpack.c.b16 %v7591, %v7590
        %v7779 = vpack.c.b16 %v7593, %v7592
        %v7780 = vpack.c.b16 %v7595, %v7594
        %v7781 = vpack.c.b16 %v7597, %v7596
        %v7782 = vpack.c.b16 %v7599, %v7598
        %v7783 = vpack.c.b16 %v7601, %v7600
        %v7784 = vpack.c.b16 %v7603, %v7602
        %v7785 = vpack.c.b16 %v7605, %v7604
        %v7786 = vpack.c.b16 %v7607, %v7606
        %v7787 = vpack.c.b16 %v7609, %v7608
        %v7788 = vpack.c.b16 %v7611, %v7610
        %v7789 = vpack.c.b16 %v7613, %v7612
        %v7790 = vpack.c.b16 %v7615, %v7614
        %v7791 = vpack.c.b16 %v7617, %v7616
        %v7792 = vpack.c.b16 %v7619, %v7618
        %v7793 = vpack.c.b16 %v7621, %v7620
        %v7794 = vpack.c.b16 %v7623, %v7622
        %v7795 = vpack.c.b16 %v7625, %v7624
        %v7796 = vpack.c.b16 %v7627, %v7626
        %v7797 = vpack.c.b16 %v7629, %v7628
        %v7798 = vpack.c.b16 %v7631, %v7630
        %v7799 = vpack.c.b16 %v7633, %v7632
        %v7800 = vpack.c.b16 %v7635, %v7634
        %v7801 = vpack.c.b16 %v7637, %v7636
        %v7802 = vpack.c.b16 %v7639, %v7638
        %v7803 = vpack.c.b16 %v7641, %v7640
        %v7804 = vpack.c.b16 %v7643, %v7642
        %v7805 = vpack.c.b16 %v7645, %v7644
        %v7806 = vpack.c.b16 %v7647, %v7646
        %v7807 = vpack.c.b16 %v7649, %v7648
        %v7808 = vpack.c.b16 %v7651, %v7650
        %v7809 = vpack.c.b16 %v7653, %v7652
        %v7810 = vpack.c.b16 %v7655, %v7654
        %v7811 = vpack.c.b16 %v7657, %v7656
        %v7812 = vpack.c.b16 %v7659, %v7658
        %v7813 = vpack.c.b16 %v7661, %v7660
        %v7814 = vpack.c.b16 %v7663, %v7662
        %v7815 = vpack.c.b16 %v7665, %v7664
        %v7816 = vpack.c.b16 %v7667, %v7666
        %v7817 = vpack.c.b16 %v7669, %v7668
        %v7818 = vpack.c.b16 %v7671, %v7670
        %v7819 = vpack.c.b16 %v7673, %v7672
        %v7820 = vpack.c.b16 %v7675, %v7674
        %v7821 = vpack.c.b16 %v7677, %v7676
        %v7822 = vpack.c.b16 %v7679, %v7678
        %v7823 = vpack.c.b16 %v7681, %v7680
        %v7824 = vpack.c.b16 %v7683, %v7682
        %v7825 = vpack.c.b16 %v7685, %v7684
        %v7826 = vpack.c.b16 %v7687, %v7686
        %v7827 = vpack.c.b16 %v7689, %v7688
        %v7828 = vpack.c.b16 %v7691, %v7690
        %v7829 = vpack.c.b16 %v7693, %v7692
        %v7830 = vpack.c.b16 %v7695, %v7694
        %v7831 = vpack.c.b16 %v7697, %v7696
        %v7832 = vpack.c.b16 %v7699, %v7698
        %v7833 = vpack.c.b16 %v7701, %v7700
        %v7834 = vpack.c.b16 %v7703, %v7702
        %v7835 = vpack.c.b16 %v7705, %v7704
        %v7836 = vpack.c.b16 %v7707, %v7706
        %v7837 = vpack.c.b16 %v7709, %v7708
        %v7838 = vpack.c.b16 %v7711, %v7710
        %v7839 = vpack.c.b16 %v7713, %v7712
        %v7840 = vpack.c.b16 %v7715, %v7714
        %v7841 = vpack.c.b16 %v7717, %v7716
        %v7842 = vpack.c.b16 %v7719, %v7718
        %v7843 = vpack.c.b16 %v7721, %v7720
        %v7844 = vpack.c.b16 %v7723, %v7722
        %v7845 = vpack.c.b16 %v7725, %v7724
        %v7846 = vpack.c.b16 %v7727, %v7726
        %v7847 = vpack.c.b16 %v7729, %v7728
        %v7848 = vpack.c.b16 %v7731, %v7730
        %v7849 = vpack.c.b16 %v7733, %v7732
        %v7850 = vpack.c.b16 %v7735, %v7734
        %v7851 = vpack.c.b16 %v7737, %v7736
        %v7852 = vpack.c.b16 %v7739, %v7738
        %v7853 = vpack.c.b16 %v7741, %v7740
        %v7854 = vpack.c.b16 %v7743, %v7742
        %v7855 = vpack.c.b16 %v7745, %v7744
        %v7856 = vpack.c.b16 %v7747, %v7746
        %v7857 = vpack.c.b16 %v7749, %v7748
        %v7858 = vpack.c.b16 %v7751, %v7750
        %v7859 = vpack.c.b16 %v7753, %v7752
        %v7860 = vpack.c.b16 %v7755, %v7754
        %v7861 = vpack.c.b16 %v7757, %v7756
        %v7862 = vpack.c.b16 %v7759, %v7758
        %v7863 = vpack.c.b16 %v7761, %v7760
        %v7864 = vpack.c.b16 %v7763, %v7762
        %v7865 = vpack.c.b16 %v7765, %v7764
        %v7866 = vpack.c.b16 %v7767, %v7766
        %v7867 = vpack.c.b16 %v7769, %v7768
        %v7868 = vpack.c.b16 %v7771, %v7770
        %v7869 = vpack.c.b16 %v7773, %v7772
        %7966 = vmatprep.subr.bf16.mxu0 0
        %7967 = vmatpush1.bf16.msra.mxu0 %v7774
        %7968 = vmatprep.subr.bf16.mxu0 0
        %7969 = vmatpush1.bf16.msra.mxu0 %v7775
        %7970 = vmatprep.subr.bf16.mxu0 0
        %7971 = vmatpush1.bf16.msra.mxu0 %v7776
        %7972 = vmatprep.subr.bf16.mxu0 0
        %7973 = vmatpush1.bf16.msra.mxu0 %v7777
        %7974 = vmatprep.subr.bf16.mxu0 0
        %7975 = vmatpush1.bf16.msra.mxu0 %v7778
        %7976 = vmatprep.subr.bf16.mxu0 0
        %7977 = vmatpush1.bf16.msra.mxu0 %v7779
        %7978 = vmatprep.subr.bf16.mxu0 0
        %7979 = vmatpush1.bf16.msra.mxu0 %v7780
        %7980 = vmatprep.subr.bf16.mxu0 0
        %7981 = vmatpush1.bf16.msra.mxu0 %v7781
        %7982 = vmatprep.subr.bf16.mxu0 0
        %7983 = vmatpush1.bf16.msra.mxu0 %v7782
        %7984 = vmatprep.subr.bf16.mxu0 0
        %7985 = vmatpush1.bf16.msra.mxu0 %v7783
        %7986 = vmatprep.subr.bf16.mxu0 0
        %7987 = vmatpush1.bf16.msra.mxu0 %v7784
        %7988 = vmatprep.subr.bf16.mxu0 0
        %7989 = vmatpush1.bf16.msra.mxu0 %v7785
        %7990 = vmatprep.subr.bf16.mxu0 0
        %7991 = vmatpush1.bf16.msra.mxu0 %v7786
        %7992 = vmatprep.subr.bf16.mxu0 0
        %7993 = vmatpush1.bf16.msra.mxu0 %v7787
        %7994 = vmatprep.subr.bf16.mxu0 0
        %7995 = vmatpush1.bf16.msra.mxu0 %v7788
        %7996 = vmatprep.subr.bf16.mxu0 0
        %7997 = vmatpush1.bf16.msra.mxu0 %v7789
        %7998 = vmatprep.mubr.bf16.mxu0 %v6910
        %7999 = vmatmul.mubr.bf16.gmra.mrb[0].mxu0 %v6909
        %v8000 = vpop.f32.mrb[0].mxu0
        %v8001 = vadd.f32 0.0, %v8000
        %v8002 = vpop.f32.mrb[0].mxu0
        %v8003 = vpop.f32.mrb[0].mxu0
        %v8004 = vadd.f32 0.0, %v8003
        %v8005 = vpop.f32.mrb[0].mxu0
        %8006 = vmatprep.mubr.bf16.mxu0 %v6922
        %8007 = vmatmul.mubr.bf16.gmra.mrb[0].mxu0 %v6921
        %v8008 = vpop.f32.mrb[0].mxu0
        %v8009 = vadd.f32 0.0, %v8008
        %v8010 = vpop.f32.mrb[0].mxu0
        %v8011 = vpop.f32.mrb[0].mxu0
        %v8012 = vadd.f32 0.0, %v8011
        %v8013 = vpop.f32.mrb[0].mxu0
        %8014 = vmatprep.mubr.bf16.mxu0 %v6934
        %8015 = vmatmul.mubr.bf16.gmra.mrb[0].mxu0 %v6933
        %v8016 = vpop.f32.mrb[0].mxu0
        %v8017 = vadd.f32 0.0, %v8016
        %v8018 = vpop.f32.mrb[0].mxu0
        %v8019 = vpop.f32.mrb[0].mxu0
        %v8020 = vadd.f32 0.0, %v8019
        %v8021 = vpop.f32.mrb[0].mxu0
        %8022 = vmatprep.mubr.bf16.mxu0 %v6946
        %8023 = vmatmul.mubr.bf16.gmra.mrb[0].mxu0 %v6945
        %v8024 = vpop.f32.mrb[0].mxu0
        %v8025 = vadd.f32 0.0, %v8024
        %v8026 = vpop.f32.mrb[0].mxu0
        %v8027 = vpop.f32.mrb[0].mxu0
        %v8028 = vadd.f32 0.0, %v8027
        %v8029 = vpop.f32.mrb[0].mxu0
        %8030 = vmatprep.mubr.bf16.mxu0 %v6958
        %8031 = vmatmul.mubr.bf16.gmra.mrb[0].mxu0 %v6957
        %v8032 = vpop.f32.mrb[0].mxu0
        %v8033 = vadd.f32 0.0, %v8032
        %v8034 = vpop.f32.mrb[0].mxu0
        %v8035 = vpop.f32.mrb[0].mxu0
        %v8036 = vadd.f32 0.0, %v8035
        %v8037 = vpop.f32.mrb[0].mxu0
        %8038 = vmatprep.mubr.bf16.mxu0 %v6970
        %8039 = vmatmul.mubr.bf16.gmra.mrb[0].mxu0 %v6969
        %v8040 = vpop.f32.mrb[0].mxu0
        %v8041 = vadd.f32 0.0, %v8040
        %v8042 = vpop.f32.mrb[0].mxu0
        %v8043 = vpop.f32.mrb[0].mxu0
        %v8044 = vadd.f32 0.0, %v8043
        %v8045 = vpop.f32.mrb[0].mxu0
        %8046 = vmatprep.mubr.bf16.mxu0 %v7174
        %8047 = vmatmul.mubr.bf16.gmra.mrb[0].mxu0 %v7173
        %v8048 = vpop.f32.mrb[0].mxu0
        %v8049 = vadd.f32 0.0, %v8048
        %v8050 = vpop.f32.mrb[0].mxu0
        %v8051 = vpop.f32.mrb[0].mxu0
        %v8052 = vadd.f32 0.0, %v8051
        %v8053 = vpop.f32.mrb[0].mxu0
        %8054 = vmatprep.mubr.bf16.mxu0 %v7186
        %8055 = vmatmul.mubr.bf16.gmra.mrb[0].mxu0 %v7185
        %v8056 = vpop.f32.mrb[0].mxu0
        %v8057 = vadd.f32 0.0, %v8056
        %v8058 = vpop.f32.mrb[0].mxu0
        %v8059 = vpop.f32.mrb[0].mxu0
        %v8060 = vadd.f32 0.0, %v8059
        %v8061 = vpop.f32.mrb[0].mxu0
        %8062 = vdwg.mxu0
        %8063 = vmatprep.subr.bf16.mxu0 0
        %8064 = vmatpush1.bf16.msra.mxu0 %v7790
        %8065 = vmatprep.subr.bf16.mxu0 0
        %8066 = vmatpush1.bf16.msra.mxu0 %v7791
        %8067 = vmatprep.subr.bf16.mxu0 0
        %8068 = vmatpush1.bf16.msra.mxu0 %v7792
        %8069 = vmatprep.subr.bf16.mxu0 0
        %8070 = vmatpush1.bf16.msra.mxu0 %v7793
        %8071 = vmatprep.subr.bf16.mxu0 0
        %8072 = vmatpush1.bf16.msra.mxu0 %v7794
        %8073 = vmatprep.subr.bf16.mxu0 0
        %8074 = vmatpush1.bf16.msra.mxu0 %v7795
        %8075 = vmatprep.subr.bf16.mxu0 0
        %8076 = vmatpush1.bf16.msra.mxu0 %v7796
        %8077 = vmatprep.subr.bf16.mxu0 0
        %8078 = vmatpush1.bf16.msra.mxu0 %v7797
        %8079 = vmatprep.subr.bf16.mxu0 0
        %8080 = vmatpush1.bf16.msra.mxu0 %v7798
        %8081 = vmatprep.subr.bf16.mxu0 0
        %8082 = vmatpush1.bf16.msra.mxu0 %v7799
        %8083 = vmatprep.subr.bf16.mxu0 0
        %8084 = vmatpush1.bf16.msra.mxu0 %v7800
        %8085 = vmatprep.subr.bf16.mxu0 0
        %8086 = vmatpush1.bf16.msra.mxu0 %v7801
        %8087 = vmatprep.subr.bf16.mxu0 0
        %8088 = vmatpush1.bf16.msra.mxu0 %v7802
        %8089 = vmatprep.subr.bf16.mxu0 0
        %8090 = vmatpush1.bf16.msra.mxu0 %v7803
        %8091 = vmatprep.subr.bf16.mxu0 0
        %8092 = vmatpush1.bf16.msra.mxu0 %v7804
        %8093 = vmatprep.subr.bf16.mxu0 0
        %8094 = vmatpush1.bf16.msra.mxu0 %v7805
        %8095 = vmatprep.mubr.bf16.mxu0 %v6912
        %8096 = vmatmul.mubr.bf16.gmra.mrb[0].mxu0 %v6911
        %v8097 = vpop.f32.mrb[0].mxu0
        %v8098 = vadd.f32 %v8001, %v8097
        %v8099 = vpop.f32.mrb[0].mxu0
        %v8100 = vpop.f32.mrb[0].mxu0
        %v8101 = vadd.f32 %v8004, %v8100
        %v8102 = vpop.f32.mrb[0].mxu0
        %8103 = vmatprep.mubr.bf16.mxu0 %v6924
        %8104 = vmatmul.mubr.bf16.gmra.mrb[0].mxu0 %v6923
        %v8105 = vpop.f32.mrb[0].mxu0
        %v8106 = vadd.f32 %v8009, %v8105
        %v8107 = vpop.f32.mrb[0].mxu0
        %v8108 = vpop.f32.mrb[0].mxu0
        %v8109 = vadd.f32 %v8012, %v8108
        %v8110 = vpop.f32.mrb[0].mxu0
        %8111 = vmatprep.mubr.bf16.mxu0 %v6936
        %8112 = vmatmul.mubr.bf16.gmra.mrb[0].mxu0 %v6935
        %v8113 = vpop.f32.mrb[0].mxu0
        %v8114 = vadd.f32 %v8017, %v8113
        %v8115 = vpop.f32.mrb[0].mxu0
        %v8116 = vpop.f32.mrb[0].mxu0
        %v8117 = vadd.f32 %v8020, %v8116
        %v8118 = vpop.f32.mrb[0].mxu0
        %8119 = vmatprep.mubr.bf16.mxu0 %v6948
        %8120 = vmatmul.mubr.bf16.gmra.mrb[0].mxu0 %v6947
        %v8121 = vpop.f32.mrb[0].mxu0
        %v8122 = vadd.f32 %v8025, %v8121
        %v8123 = vpop.f32.mrb[0].mxu0
        %v8124 = vpop.f32.mrb[0].mxu0
        %v8125 = vadd.f32 %v8028, %v8124
        %v8126 = vpop.f32.mrb[0].mxu0
        %8127 = vmatprep.mubr.bf16.mxu0 %v6960
        %8128 = vmatmul.mubr.bf16.gmra.mrb[0].mxu0 %v6959
        %v8129 = vpop.f32.mrb[0].mxu0
        %v8130 = vadd.f32 %v8033, %v8129
        %v8131 = vpop.f32.mrb[0].mxu0
        %v8132 = vpop.f32.mrb[0].mxu0
        %v8133 = vadd.f32 %v8036, %v8132
        %v8134 = vpop.f32.mrb[0].mxu0
        %8135 = vmatprep.mubr.bf16.mxu0 %v6972
        %8136 = vmatmul.mubr.bf16.gmra.mrb[0].mxu0 %v6971
        %v8137 = vpop.f32.mrb[0].mxu0
        %v8138 = vadd.f32 %v8041, %v8137
        %v8139 = vpop.f32.mrb[0].mxu0
        %v8140 = vpop.f32.mrb[0].mxu0
        %v8141 = vadd.f32 %v8044, %v8140
        %v8142 = vpop.f32.mrb[0].mxu0
        %8143 = vmatprep.mubr.bf16.mxu0 %v7176
        %8144 = vmatmul.mubr.bf16.gmra.mrb[0].mxu0 %v7175
        %v8145 = vpop.f32.mrb[0].mxu0
        %v8146 = vadd.f32 %v8049, %v8145
        %v8147 = vpop.f32.mrb[0].mxu0
        %v8148 = vpop.f32.mrb[0].mxu0
        %v8149 = vadd.f32 %v8052, %v8148
        %v8150 = vpop.f32.mrb[0].mxu0
        %8151 = vmatprep.mubr.bf16.mxu0 %v7188
        %8152 = vmatmul.mubr.bf16.gmra.mrb[0].mxu0 %v7187
        %v8153 = vpop.f32.mrb[0].mxu0
        %v8154 = vadd.f32 %v8057, %v8153
        %v8155 = vpop.f32.mrb[0].mxu0
        %v8156 = vpop.f32.mrb[0].mxu0
        %v8157 = vadd.f32 %v8060, %v8156
        %v8158 = vpop.f32.mrb[0].mxu0
        %8159 = vdwg.mxu0
        %8160 = vmatprep.subr.bf16.mxu0 0
        %8161 = vmatpush1.bf16.msra.mxu0 %v7806
        %8162 = vmatprep.subr.bf16.mxu0 0
        %8163 = vmatpush1.bf16.msra.mxu0 %v7807
        %8164 = vmatprep.subr.bf16.mxu0 0
        %8165 = vmatpush1.bf16.msra.mxu0 %v7808
        %8166 = vmatprep.subr.bf16.mxu0 0
        %8167 = vmatpush1.bf16.msra.mxu0 %v7809
        %8168 = vmatprep.subr.bf16.mxu0 0
        %8169 = vmatpush1.bf16.msra.mxu0 %v7810
        %8170 = vmatprep.subr.bf16.mxu0 0
        %8171 = vmatpush1.bf16.msra.mxu0 %v7811
        %8172 = vmatprep.subr.bf16.mxu0 0
        %8173 = vmatpush1.bf16.msra.mxu0 %v7812
        %8174 = vmatprep.subr.bf16.mxu0 0
        %8175 = vmatpush1.bf16.msra.mxu0 %v7813
        %8176 = vmatprep.subr.bf16.mxu0 0
        %8177 = vmatpush1.bf16.msra.mxu0 %v7814
        %8178 = vmatprep.subr.bf16.mxu0 0
        %8179 = vmatpush1.bf16.msra.mxu0 %v7815
        %8180 = vmatprep.subr.bf16.mxu0 0
        %8181 = vmatpush1.bf16.msra.mxu0 %v7816
        %8182 = vmatprep.subr.bf16.mxu0 0
        %8183 = vmatpush1.bf16.msra.mxu0 %v7817
        %8184 = vmatprep.subr.bf16.mxu0 0
        %8185 = vmatpush1.bf16.msra.mxu0 %v7818
        %8186 = vmatprep.subr.bf16.mxu0 0
        %8187 = vmatpush1.bf16.msra.mxu0 %v7819
        %8188 = vmatprep.subr.bf16.mxu0 0
        %8189 = vmatpush1.bf16.msra.mxu0 %v7820
        %8190 = vmatprep.subr.bf16.mxu0 0
        %8191 = vmatpush1.bf16.msra.mxu0 %v7821
        %8192 = vmatprep.mubr.bf16.mxu0 %v6914
        %8193 = vmatmul.mubr.bf16.gmra.mrb[0].mxu0 %v6913
        %v8194 = vpop.f32.mrb[0].mxu0
        %v8195 = vadd.f32 %v8098, %v8194
        %v8196 = vpop.f32.mrb[0].mxu0
        %v8197 = vpop.f32.mrb[0].mxu0
        %v8198 = vadd.f32 %v8101, %v8197
        %v8199 = vpop.f32.mrb[0].mxu0
        %8200 = vmatprep.mubr.bf16.mxu0 %v6926
        %8201 = vmatmul.mubr.bf16.gmra.mrb[0].mxu0 %v6925
        %v8202 = vpop.f32.mrb[0].mxu0
        %v8203 = vadd.f32 %v8106, %v8202
        %v8204 = vpop.f32.mrb[0].mxu0
        %v8205 = vpop.f32.mrb[0].mxu0
        %v8206 = vadd.f32 %v8109, %v8205
        %v8207 = vpop.f32.mrb[0].mxu0
        %8208 = vmatprep.mubr.bf16.mxu0 %v6938
        %8209 = vmatmul.mubr.bf16.gmra.mrb[0].mxu0 %v6937
        %v8210 = vpop.f32.mrb[0].mxu0
        %v8211 = vadd.f32 %v8114, %v8210
        %v8212 = vpop.f32.mrb[0].mxu0
        %v8213 = vpop.f32.mrb[0].mxu0
        %v8214 = vadd.f32 %v8117, %v8213
        %v8215 = vpop.f32.mrb[0].mxu0
        %8216 = vmatprep.mubr.bf16.mxu0 %v6950
        %8217 = vmatmul.mubr.bf16.gmra.mrb[0].mxu0 %v6949
        %v8218 = vpop.f32.mrb[0].mxu0
        %v8219 = vadd.f32 %v8122, %v8218
        %v8220 = vpop.f32.mrb[0].mxu0
        %v8221 = vpop.f32.mrb[0].mxu0
        %v8222 = vadd.f32 %v8125, %v8221
        %v8223 = vpop.f32.mrb[0].mxu0
        %8224 = vmatprep.mubr.bf16.mxu0 %v6962
        %8225 = vmatmul.mubr.bf16.gmra.mrb[0].mxu0 %v6961
        %v8226 = vpop.f32.mrb[0].mxu0
        %v8227 = vadd.f32 %v8130, %v8226
        %v8228 = vpop.f32.mrb[0].mxu0
        %v8229 = vpop.f32.mrb[0].mxu0
        %v8230 = vadd.f32 %v8133, %v8229
        %v8231 = vpop.f32.mrb[0].mxu0
        %8232 = vmatprep.mubr.bf16.mxu0 %v6974
        %8233 = vmatmul.mubr.bf16.gmra.mrb[0].mxu0 %v6973
        %v8234 = vpop.f32.mrb[0].mxu0
        %v8235 = vadd.f32 %v8138, %v8234
        %v8236 = vpop.f32.mrb[0].mxu0
        %v8237 = vpop.f32.mrb[0].mxu0
        %v8238 = vadd.f32 %v8141, %v8237
        %v8239 = vpop.f32.mrb[0].mxu0
        %8240 = vmatprep.mubr.bf16.mxu0 %v7178
        %8241 = vmatmul.mubr.bf16.gmra.mrb[0].mxu0 %v7177
        %v8242 = vpop.f32.mrb[0].mxu0
        %v8243 = vadd.f32 %v8146, %v8242
        %v8244 = vpop.f32.mrb[0].mxu0
        %v8245 = vpop.f32.mrb[0].mxu0
        %v8246 = vadd.f32 %v8149, %v8245
        %v8247 = vpop.f32.mrb[0].mxu0
        %8248 = vmatprep.mubr.bf16.mxu0 %v7190
        %8249 = vmatmul.mubr.bf16.gmra.mrb[0].mxu0 %v7189
        %v8250 = vpop.f32.mrb[0].mxu0
        %v8251 = vadd.f32 %v8154, %v8250
        %v8252 = vpop.f32.mrb[0].mxu0
        %v8253 = vpop.f32.mrb[0].mxu0
        %v8254 = vadd.f32 %v8157, %v8253
        %v8255 = vpop.f32.mrb[0].mxu0
        %8256 = vdwg.mxu0
        %8257 = vmatprep.subr.bf16.mxu0 0
        %8258 = vmatpush1.bf16.msra.mxu0 %v7822
        %8259 = vmatprep.subr.bf16.mxu0 0
        %8260 = vmatpush1.bf16.msra.mxu0 %v7823
        %8261 = vmatprep.subr.bf16.mxu0 0
        %8262 = vmatpush1.bf16.msra.mxu0 %v7824
        %8263 = vmatprep.subr.bf16.mxu0 0
        %8264 = vmatpush1.bf16.msra.mxu0 %v7825
        %8265 = vmatprep.subr.bf16.mxu0 0
        %8266 = vmatpush1.bf16.msra.mxu0 %v7826
        %8267 = vmatprep.subr.bf16.mxu0 0
        %8268 = vmatpush1.bf16.msra.mxu0 %v7827
        %8269 = vmatprep.subr.bf16.mxu0 0
        %8270 = vmatpush1.bf16.msra.mxu0 %v7828
        %8271 = vmatprep.subr.bf16.mxu0 0
        %8272 = vmatpush1.bf16.msra.mxu0 %v7829
        %8273 = vmatprep.subr.bf16.mxu0 0
        %8274 = vmatpush1.bf16.msra.mxu0 %v7830
        %8275 = vmatprep.subr.bf16.mxu0 0
        %8276 = vmatpush1.bf16.msra.mxu0 %v7831
        %8277 = vmatprep.subr.bf16.mxu0 0
        %8278 = vmatpush1.bf16.msra.mxu0 %v7832
        %8279 = vmatprep.subr.bf16.mxu0 0
        %8280 = vmatpush1.bf16.msra.mxu0 %v7833
        %8281 = vmatprep.subr.bf16.mxu0 0
        %8282 = vmatpush1.bf16.msra.mxu0 %v7834
        %8283 = vmatprep.subr.bf16.mxu0 0
        %8284 = vmatpush1.bf16.msra.mxu0 %v7835
        %8285 = vmatprep.subr.bf16.mxu0 0
        %8286 = vmatpush1.bf16.msra.mxu0 %v7836
        %8287 = vmatprep.subr.bf16.mxu0 0
        %8288 = vmatpush1.bf16.msra.mxu0 %v7837
        %8289 = vmatprep.mubr.bf16.mxu0 %v6916
        %8290 = vmatmul.mubr.bf16.gmra.mrb[0].mxu0 %v6915
        %v8291 = vpop.f32.mrb[0].mxu0
        %v8292 = vadd.f32 %v8195, %v8291
        %v8293 = vpop.f32.mrb[0].mxu0
        %v8294 = vpop.f32.mrb[0].mxu0
        %v8295 = vadd.f32 %v8198, %v8294
        %v8296 = vpop.f32.mrb[0].mxu0
        %8297 = vmatprep.mubr.bf16.mxu0 %v6928
        %8298 = vmatmul.mubr.bf16.gmra.mrb[0].mxu0 %v6927
        %v8299 = vpop.f32.mrb[0].mxu0
        %v8300 = vadd.f32 %v8203, %v8299
        %v8301 = vpop.f32.mrb[0].mxu0
        %v8302 = vpop.f32.mrb[0].mxu0
        %v8303 = vadd.f32 %v8206, %v8302
        %v8304 = vpop.f32.mrb[0].mxu0
        %8305 = vmatprep.mubr.bf16.mxu0 %v6940
        %8306 = vmatmul.mubr.bf16.gmra.mrb[0].mxu0 %v6939
        %v8307 = vpop.f32.mrb[0].mxu0
        %v8308 = vadd.f32 %v8211, %v8307
        %v8309 = vpop.f32.mrb[0].mxu0
        %v8310 = vpop.f32.mrb[0].mxu0
        %v8311 = vadd.f32 %v8214, %v8310
        %v8312 = vpop.f32.mrb[0].mxu0
        %8313 = vmatprep.mubr.bf16.mxu0 %v6952
        %8314 = vmatmul.mubr.bf16.gmra.mrb[0].mxu0 %v6951
        %v8315 = vpop.f32.mrb[0].mxu0
        %v8316 = vadd.f32 %v8219, %v8315
        %v8317 = vpop.f32.mrb[0].mxu0
        %v8318 = vpop.f32.mrb[0].mxu0
        %v8319 = vadd.f32 %v8222, %v8318
        %v8320 = vpop.f32.mrb[0].mxu0
        %8321 = vmatprep.mubr.bf16.mxu0 %v6964
        %8322 = vmatmul.mubr.bf16.gmra.mrb[0].mxu0 %v6963
        %v8323 = vpop.f32.mrb[0].mxu0
        %v8324 = vadd.f32 %v8227, %v8323
        %v8325 = vpop.f32.mrb[0].mxu0
        %v8326 = vpop.f32.mrb[0].mxu0
        %v8327 = vadd.f32 %v8230, %v8326
        %v8328 = vpop.f32.mrb[0].mxu0
        %8329 = vmatprep.mubr.bf16.mxu0 %v6976
        %8330 = vmatmul.mubr.bf16.gmra.mrb[0].mxu0 %v6975
        %v8331 = vpop.f32.mrb[0].mxu0
        %v8332 = vadd.f32 %v8235, %v8331
        %v8333 = vpop.f32.mrb[0].mxu0
        %v8334 = vpop.f32.mrb[0].mxu0
        %v8335 = vadd.f32 %v8238, %v8334
        %v8336 = vpop.f32.mrb[0].mxu0
        %8337 = vmatprep.mubr.bf16.mxu0 %v7180
        %8338 = vmatmul.mubr.bf16.gmra.mrb[0].mxu0 %v7179
        %v8339 = vpop.f32.mrb[0].mxu0
        %v8340 = vadd.f32 %v8243, %v8339
        %v8341 = vpop.f32.mrb[0].mxu0
        %v8342 = vpop.f32.mrb[0].mxu0
        %v8343 = vadd.f32 %v8246, %v8342
        %v8344 = vpop.f32.mrb[0].mxu0
        %8345 = vmatprep.mubr.bf16.mxu0 %v7192
        %8346 = vmatmul.mubr.bf16.gmra.mrb[0].mxu0 %v7191
        %v8347 = vpop.f32.mrb[0].mxu0
        %v8348 = vadd.f32 %v8251, %v8347
        %v8349 = vpop.f32.mrb[0].mxu0
        %v8350 = vpop.f32.mrb[0].mxu0
        %v8351 = vadd.f32 %v8254, %v8350
        %v8352 = vpop.f32.mrb[0].mxu0
        %8353 = vdwg.mxu0
        %8354 = vmatprep.subr.bf16.mxu0 0
        %8355 = vmatpush1.bf16.msra.mxu0 %v7838
        %8356 = vmatprep.subr.bf16.mxu0 0
        %8357 = vmatpush1.bf16.msra.mxu0 %v7839
        %8358 = vmatprep.subr.bf16.mxu0 0
        %8359 = vmatpush1.bf16.msra.mxu0 %v7840
        %8360 = vmatprep.subr.bf16.mxu0 0
        %8361 = vmatpush1.bf16.msra.mxu0 %v7841
        %8362 = vmatprep.subr.bf16.mxu0 0
        %8363 = vmatpush1.bf16.msra.mxu0 %v7842
        %8364 = vmatprep.subr.bf16.mxu0 0
        %8365 = vmatpush1.bf16.msra.mxu0 %v7843
        %8366 = vmatprep.subr.bf16.mxu0 0
        %8367 = vmatpush1.bf16.msra.mxu0 %v7844
        %8368 = vmatprep.subr.bf16.mxu0 0
        %8369 = vmatpush1.bf16.msra.mxu0 %v7845
        %8370 = vmatprep.subr.bf16.mxu0 0
        %8371 = vmatpush1.bf16.msra.mxu0 %v7846
        %8372 = vmatprep.subr.bf16.mxu0 0
        %8373 = vmatpush1.bf16.msra.mxu0 %v7847
        %8374 = vmatprep.subr.bf16.mxu0 0
        %8375 = vmatpush1.bf16.msra.mxu0 %v7848
        %8376 = vmatprep.subr.bf16.mxu0 0
        %8377 = vmatpush1.bf16.msra.mxu0 %v7849
        %8378 = vmatprep.subr.bf16.mxu0 0
        %8379 = vmatpush1.bf16.msra.mxu0 %v7850
        %8380 = vmatprep.subr.bf16.mxu0 0
        %8381 = vmatpush1.bf16.msra.mxu0 %v7851
        %8382 = vmatprep.subr.bf16.mxu0 0
        %8383 = vmatpush1.bf16.msra.mxu0 %v7852
        %8384 = vmatprep.subr.bf16.mxu0 0
        %8385 = vmatpush1.bf16.msra.mxu0 %v7853
        %8386 = vmatprep.mubr.bf16.mxu0 %v6918
        %8387 = vmatmul.mubr.bf16.gmra.mrb[0].mxu0 %v6917
        %v8388 = vpop.f32.mrb[0].mxu0
        %v8389 = vadd.f32 %v8292, %v8388
        %v8390 = vpop.f32.mrb[0].mxu0
        %v8391 = vpop.f32.mrb[0].mxu0
        %v8392 = vadd.f32 %v8295, %v8391
        %v8393 = vpop.f32.mrb[0].mxu0
        %8394 = vmatprep.mubr.bf16.mxu0 %v6930
        %8395 = vmatmul.mubr.bf16.gmra.mrb[0].mxu0 %v6929
        %v8396 = vpop.f32.mrb[0].mxu0
        %v8397 = vadd.f32 %v8300, %v8396
        %v8398 = vpop.f32.mrb[0].mxu0
        %v8399 = vpop.f32.mrb[0].mxu0
        %v8400 = vadd.f32 %v8303, %v8399
        %v8401 = vpop.f32.mrb[0].mxu0
        %8402 = vmatprep.mubr.bf16.mxu0 %v6942
        %8403 = vmatmul.mubr.bf16.gmra.mrb[0].mxu0 %v6941
        %v8404 = vpop.f32.mrb[0].mxu0
        %v8405 = vadd.f32 %v8308, %v8404
        %v8406 = vpop.f32.mrb[0].mxu0
        %v8407 = vpop.f32.mrb[0].mxu0
        %v8408 = vadd.f32 %v8311, %v8407
        %v8409 = vpop.f32.mrb[0].mxu0
        %8410 = vmatprep.mubr.bf16.mxu0 %v6954
        %8411 = vmatmul.mubr.bf16.gmra.mrb[0].mxu0 %v6953
        %v8412 = vpop.f32.mrb[0].mxu0
        %v8413 = vadd.f32 %v8316, %v8412
        %v8414 = vpop.f32.mrb[0].mxu0
        %v8415 = vpop.f32.mrb[0].mxu0
        %v8416 = vadd.f32 %v8319, %v8415
        %v8417 = vpop.f32.mrb[0].mxu0
        %8418 = vmatprep.mubr.bf16.mxu0 %v6966
        %8419 = vmatmul.mubr.bf16.gmra.mrb[0].mxu0 %v6965
        %v8420 = vpop.f32.mrb[0].mxu0
        %v8421 = vadd.f32 %v8324, %v8420
        %v8422 = vpop.f32.mrb[0].mxu0
        %v8423 = vpop.f32.mrb[0].mxu0
        %v8424 = vadd.f32 %v8327, %v8423
        %v8425 = vpop.f32.mrb[0].mxu0
        %8426 = vmatprep.mubr.bf16.mxu0 %v6978
        %8427 = vmatmul.mubr.bf16.gmra.mrb[0].mxu0 %v6977
        %v8428 = vpop.f32.mrb[0].mxu0
        %v8429 = vadd.f32 %v8332, %v8428
        %v8430 = vpop.f32.mrb[0].mxu0
        %v8431 = vpop.f32.mrb[0].mxu0
        %v8432 = vadd.f32 %v8335, %v8431
        %v8433 = vpop.f32.mrb[0].mxu0
        %8434 = vmatprep.mubr.bf16.mxu0 %v7182
        %8435 = vmatmul.mubr.bf16.gmra.mrb[0].mxu0 %v7181
        %v8436 = vpop.f32.mrb[0].mxu0
        %v8437 = vadd.f32 %v8340, %v8436
        %v8438 = vpop.f32.mrb[0].mxu0
        %v8439 = vpop.f32.mrb[0].mxu0
        %v8440 = vadd.f32 %v8343, %v8439
        %v8441 = vpop.f32.mrb[0].mxu0
        %8442 = vmatprep.mubr.bf16.mxu0 %v7194
        %8443 = vmatmul.mubr.bf16.gmra.mrb[0].mxu0 %v7193
        %v8444 = vpop.f32.mrb[0].mxu0
        %v8445 = vadd.f32 %v8348, %v8444
        %v8446 = vpop.f32.mrb[0].mxu0
        %v8447 = vpop.f32.mrb[0].mxu0
        %v8448 = vadd.f32 %v8351, %v8447
        %v8449 = vpop.f32.mrb[0].mxu0
        %8450 = vdwg.mxu0
        %8451 = vmatprep.subr.bf16.mxu0 0
        %8452 = vmatpush1.bf16.msra.mxu0 %v7854
        %8453 = vmatprep.subr.bf16.mxu0 0
        %8454 = vmatpush1.bf16.msra.mxu0 %v7855
        %8455 = vmatprep.subr.bf16.mxu0 0
        %8456 = vmatpush1.bf16.msra.mxu0 %v7856
        %8457 = vmatprep.subr.bf16.mxu0 0
        %8458 = vmatpush1.bf16.msra.mxu0 %v7857
        %8459 = vmatprep.subr.bf16.mxu0 0
        %8460 = vmatpush1.bf16.msra.mxu0 %v7858
        %8461 = vmatprep.subr.bf16.mxu0 0
        %8462 = vmatpush1.bf16.msra.mxu0 %v7859
        %8463 = vmatprep.subr.bf16.mxu0 0
        %8464 = vmatpush1.bf16.msra.mxu0 %v7860
        %8465 = vmatprep.subr.bf16.mxu0 0
        %8466 = vmatpush1.bf16.msra.mxu0 %v7861
        %8467 = vmatprep.subr.bf16.mxu0 0
        %8468 = vmatpush1.bf16.msra.mxu0 %v7862
        %8469 = vmatprep.subr.bf16.mxu0 0
        %8470 = vmatpush1.bf16.msra.mxu0 %v7863
        %8471 = vmatprep.subr.bf16.mxu0 0
        %8472 = vmatpush1.bf16.msra.mxu0 %v7864
        %8473 = vmatprep.subr.bf16.mxu0 0
        %8474 = vmatpush1.bf16.msra.mxu0 %v7865
        %8475 = vmatprep.subr.bf16.mxu0 0
        %8476 = vmatpush1.bf16.msra.mxu0 %v7866
        %8477 = vmatprep.subr.bf16.mxu0 0
        %8478 = vmatpush1.bf16.msra.mxu0 %v7867
        %8479 = vmatprep.subr.bf16.mxu0 0
        %8480 = vmatpush1.bf16.msra.mxu0 %v7868
        %8481 = vmatprep.subr.bf16.mxu0 0
        %8482 = vmatpush1.bf16.msra.mxu0 %v7869
        %8483 = vmatprep.mubr.bf16.mxu0 %v6920
        %8484 = vmatmul.mubr.bf16.gmra.mrb[0].mxu0 %v6919
        %v8485 = vpop.f32.mrb[0].mxu0
        %v8486 = vadd.f32 %v8389, %v8485
        %v8487 = vpop.f32.mrb[0].mxu0
        %v8488 = vpop.f32.mrb[0].mxu0
        %v8489 = vadd.f32 %v8392, %v8488
        %v8490 = vpop.f32.mrb[0].mxu0
        %8491 = vmatprep.mubr.bf16.mxu0 %v6932
        %8492 = vmatmul.mubr.bf16.gmra.mrb[0].mxu0 %v6931
        %v8493 = vpop.f32.mrb[0].mxu0
        %v8494 = vadd.f32 %v8397, %v8493
        %v8495 = vpop.f32.mrb[0].mxu0
        %v8496 = vpop.f32.mrb[0].mxu0
        %v8497 = vadd.f32 %v8400, %v8496
        %v8498 = vpop.f32.mrb[0].mxu0
        %8499 = vmatprep.mubr.bf16.mxu0 %v6944
        %8500 = vmatmul.mubr.bf16.gmra.mrb[0].mxu0 %v6943
        %v8501 = vpop.f32.mrb[0].mxu0
        %v8502 = vadd.f32 %v8405, %v8501
        %v8503 = vpop.f32.mrb[0].mxu0
        %v8504 = vpop.f32.mrb[0].mxu0
        %v8505 = vadd.f32 %v8408, %v8504
        %v8506 = vpop.f32.mrb[0].mxu0
        %8507 = vmatprep.mubr.bf16.mxu0 %v6956
        %8508 = vmatmul.mubr.bf16.gmra.mrb[0].mxu0 %v6955
        %v8509 = vpop.f32.mrb[0].mxu0
        %v8510 = vadd.f32 %v8413, %v8509
        %v8511 = vpop.f32.mrb[0].mxu0
        %v8512 = vpop.f32.mrb[0].mxu0
        %v8513 = vadd.f32 %v8416, %v8512
        %v8514 = vpop.f32.mrb[0].mxu0
        %8515 = vmatprep.mubr.bf16.mxu0 %v6968
        %8516 = vmatmul.mubr.bf16.gmra.mrb[0].mxu0 %v6967
        %v8517 = vpop.f32.mrb[0].mxu0
        %v8518 = vadd.f32 %v8421, %v8517
        %v8519 = vpop.f32.mrb[0].mxu0
        %v8520 = vpop.f32.mrb[0].mxu0
        %v8521 = vadd.f32 %v8424, %v8520
        %v8522 = vpop.f32.mrb[0].mxu0
        %8523 = vmatprep.mubr.bf16.mxu0 %v6980
        %8524 = vmatmul.mubr.bf16.gmra.mrb[0].mxu0 %v6979
        %v8525 = vpop.f32.mrb[0].mxu0
        %v8526 = vadd.f32 %v8429, %v8525
        %v8527 = vpop.f32.mrb[0].mxu0
        %v8528 = vpop.f32.mrb[0].mxu0
        %v8529 = vadd.f32 %v8432, %v8528
        %v8530 = vpop.f32.mrb[0].mxu0
        %8531 = vmatprep.mubr.bf16.mxu0 %v7184
        %8532 = vmatmul.mubr.bf16.gmra.mrb[0].mxu0 %v7183
        %v8533 = vpop.f32.mrb[0].mxu0
        %v8534 = vadd.f32 %v8437, %v8533
        %v8535 = vpop.f32.mrb[0].mxu0
        %v8536 = vpop.f32.mrb[0].mxu0
        %v8537 = vadd.f32 %v8440, %v8536
        %v8538 = vpop.f32.mrb[0].mxu0
        %8539 = vmatprep.mubr.bf16.mxu0 %v7196
        %8540 = vmatmul.mubr.bf16.gmra.mrb[0].mxu0 %v7195
        %v8541 = vpop.f32.mrb[0].mxu0
        %v8542 = vadd.f32 %v8445, %v8541
        %v8543 = vpop.f32.mrb[0].mxu0
        %v8544 = vpop.f32.mrb[0].mxu0
        %v8545 = vadd.f32 %v8448, %v8544
        %v8546 = vpop.f32.mrb[0].mxu0
        %8547 = vdwg.mxu0
        %v8740 = vunpack.c.l.b16 %v6981
        %v8741 = vunpack.c.l.b16 %v6982
        %v8742 = vunpack.c.l.b16 %v6983
        %v8743 = vunpack.c.l.b16 %v6984
        %v8744 = vunpack.c.l.b16 %v6985
        %v8745 = vunpack.c.l.b16 %v6986
        %v8746 = vunpack.c.l.b16 %v6987
        %v8747 = vunpack.c.l.b16 %v6988
        %v8748 = vunpack.c.l.b16 %v6989
        %v8749 = vunpack.c.l.b16 %v6990
        %v8750 = vunpack.c.l.b16 %v6991
        %v8751 = vunpack.c.l.b16 %v6992
        %v8752 = vunpack.c.l.b16 %v6993
        %v8753 = vunpack.c.l.b16 %v6994
        %v8754 = vunpack.c.l.b16 %v6995
        %v8755 = vunpack.c.l.b16 %v6996
        %v8756 = vunpack.c.l.b16 %v6997
        %v8757 = vunpack.c.l.b16 %v6998
        %v8758 = vunpack.c.l.b16 %v6999
        %v8759 = vunpack.c.l.b16 %v7000
        %v8760 = vunpack.c.l.b16 %v7001
        %v8761 = vunpack.c.l.b16 %v7002
        %v8762 = vunpack.c.l.b16 %v7003
        %v8763 = vunpack.c.l.b16 %v7004
        %v8764 = vunpack.c.l.b16 %v7005
        %v8765 = vunpack.c.l.b16 %v7006
        %v8766 = vunpack.c.l.b16 %v7007
        %v8767 = vunpack.c.l.b16 %v7008
        %v8768 = vunpack.c.l.b16 %v7009
        %v8769 = vunpack.c.l.b16 %v7010
        %v8770 = vunpack.c.l.b16 %v7011
        %v8771 = vunpack.c.l.b16 %v7012
        %v8772 = vunpack.c.l.b16 %v7013
        %v8773 = vunpack.c.l.b16 %v7014
        %v8774 = vunpack.c.l.b16 %v7015
        %v8775 = vunpack.c.l.b16 %v7016
        %v8776 = vunpack.c.l.b16 %v7017
        %v8777 = vunpack.c.l.b16 %v7018
        %v8778 = vunpack.c.l.b16 %v7019
        %v8779 = vunpack.c.l.b16 %v7020
        %v8780 = vunpack.c.l.b16 %v7021
        %v8781 = vunpack.c.l.b16 %v7022
        %v8782 = vunpack.c.l.b16 %v7023
        %v8783 = vunpack.c.l.b16 %v7024
        %v8784 = vunpack.c.l.b16 %v7025
        %v8785 = vunpack.c.l.b16 %v7026
        %v8786 = vunpack.c.l.b16 %v7027
        %v8787 = vunpack.c.l.b16 %v7028
        %v8788 = vunpack.c.l.b16 %v7029
        %v8789 = vunpack.c.l.b16 %v7030
        %v8790 = vunpack.c.l.b16 %v7031
        %v8791 = vunpack.c.l.b16 %v7032
        %v8792 = vunpack.c.l.b16 %v7033
        %v8793 = vunpack.c.l.b16 %v7034
        %v8794 = vunpack.c.l.b16 %v7035
        %v8795 = vunpack.c.l.b16 %v7036
        %v8796 = vunpack.c.l.b16 %v7037
        %v8797 = vunpack.c.l.b16 %v7038
        %v8798 = vunpack.c.l.b16 %v7039
        %v8799 = vunpack.c.l.b16 %v7040
        %v8800 = vunpack.c.l.b16 %v7041
        %v8801 = vunpack.c.l.b16 %v7042
        %v8802 = vunpack.c.l.b16 %v7043
        %v8803 = vunpack.c.l.b16 %v7044
        %v8804 = vunpack.c.l.b16 %v7045
        %v8805 = vunpack.c.l.b16 %v7046
        %v8806 = vunpack.c.l.b16 %v7047
        %v8807 = vunpack.c.l.b16 %v7048
        %v8808 = vunpack.c.l.b16 %v7049
        %v8809 = vunpack.c.l.b16 %v7050
        %v8810 = vunpack.c.l.b16 %v7051
        %v8811 = vunpack.c.l.b16 %v7052
        %v8812 = vunpack.c.l.b16 %v7053
        %v8813 = vunpack.c.l.b16 %v7054
        %v8814 = vunpack.c.l.b16 %v7055
        %v8815 = vunpack.c.l.b16 %v7056
        %v8816 = vunpack.c.l.b16 %v7057
        %v8817 = vunpack.c.l.b16 %v7058
        %v8818 = vunpack.c.l.b16 %v7059
        %v8819 = vunpack.c.l.b16 %v7060
        %v8820 = vunpack.c.l.b16 %v7061
        %v8821 = vunpack.c.l.b16 %v7062
        %v8822 = vunpack.c.l.b16 %v7063
        %v8823 = vunpack.c.l.b16 %v7064
        %v8824 = vunpack.c.l.b16 %v7065
        %v8825 = vunpack.c.l.b16 %v7066
        %v8826 = vunpack.c.l.b16 %v7067
        %v8827 = vunpack.c.l.b16 %v7068
        %v8828 = vunpack.c.l.b16 %v7069
        %v8829 = vunpack.c.l.b16 %v7070
        %v8830 = vunpack.c.l.b16 %v7071
        %v8831 = vunpack.c.l.b16 %v7072
        %v8832 = vunpack.c.l.b16 %v7073
        %v8833 = vunpack.c.l.b16 %v7074
        %v8834 = vunpack.c.l.b16 %v7075
        %v8835 = vunpack.c.l.b16 %v7076
        %v8836 = vunpack.c.l.b16 %v7077
        %v8837 = vunpack.c.l.b16 %v7078
        %v8838 = vunpack.c.l.b16 %v7079
        %v8839 = vunpack.c.l.b16 %v7080
        %v8840 = vunpack.c.l.b16 %v7081
        %v8841 = vunpack.c.l.b16 %v7082
        %v8842 = vunpack.c.l.b16 %v7083
        %v8843 = vunpack.c.l.b16 %v7084
        %v8844 = vunpack.c.l.b16 %v7085
        %v8845 = vunpack.c.l.b16 %v7086
        %v8846 = vunpack.c.l.b16 %v7087
        %v8847 = vunpack.c.l.b16 %v7088
        %v8848 = vunpack.c.l.b16 %v7089
        %v8849 = vunpack.c.l.b16 %v7090
        %v8850 = vunpack.c.l.b16 %v7091
        %v8851 = vunpack.c.l.b16 %v7092
        %v8852 = vunpack.c.l.b16 %v7093
        %v8853 = vunpack.c.l.b16 %v7094
        %v8854 = vunpack.c.l.b16 %v7095
        %v8855 = vunpack.c.l.b16 %v7096
        %v8856 = vunpack.c.l.b16 %v7097
        %v8857 = vunpack.c.l.b16 %v7098
        %v8858 = vunpack.c.l.b16 %v7099
        %v8859 = vunpack.c.l.b16 %v7100
        %v8860 = vunpack.c.l.b16 %v7101
        %v8861 = vunpack.c.l.b16 %v7102
        %v8862 = vunpack.c.l.b16 %v7103
        %v8863 = vunpack.c.l.b16 %v7104
        %v8864 = vunpack.c.l.b16 %v7105
        %v8865 = vunpack.c.l.b16 %v7106
        %v8866 = vunpack.c.l.b16 %v7107
        %v8867 = vunpack.c.l.b16 %v7108
        %v8868 = vunpack.c.l.b16 %v7109
        %v8869 = vunpack.c.l.b16 %v7110
        %v8870 = vunpack.c.l.b16 %v7111
        %v8871 = vunpack.c.l.b16 %v7112
        %v8872 = vunpack.c.l.b16 %v7113
        %v8873 = vunpack.c.l.b16 %v7114
        %v8874 = vunpack.c.l.b16 %v7115
        %v8875 = vunpack.c.l.b16 %v7116
        %v8876 = vunpack.c.l.b16 %v7117
        %v8877 = vunpack.c.l.b16 %v7118
        %v8878 = vunpack.c.l.b16 %v7119
        %v8879 = vunpack.c.l.b16 %v7120
        %v8880 = vunpack.c.l.b16 %v7121
        %v8881 = vunpack.c.l.b16 %v7122
        %v8882 = vunpack.c.l.b16 %v7123
        %v8883 = vunpack.c.l.b16 %v7124
        %v8884 = vunpack.c.l.b16 %v7125
        %v8885 = vunpack.c.l.b16 %v7126
        %v8886 = vunpack.c.l.b16 %v7127
        %v8887 = vunpack.c.l.b16 %v7128
        %v8888 = vunpack.c.l.b16 %v7129
        %v8889 = vunpack.c.l.b16 %v7130
        %v8890 = vunpack.c.l.b16 %v7131
        %v8891 = vunpack.c.l.b16 %v7132
        %v8892 = vunpack.c.l.b16 %v7133
        %v8893 = vunpack.c.l.b16 %v7134
        %v8894 = vunpack.c.l.b16 %v7135
        %v8895 = vunpack.c.l.b16 %v7136
        %v8896 = vunpack.c.l.b16 %v7137
        %v8897 = vunpack.c.l.b16 %v7138
        %v8898 = vunpack.c.l.b16 %v7139
        %v8899 = vunpack.c.l.b16 %v7140
        %v8900 = vunpack.c.l.b16 %v7141
        %v8901 = vunpack.c.l.b16 %v7142
        %v8902 = vunpack.c.l.b16 %v7143
        %v8903 = vunpack.c.l.b16 %v7144
        %v8904 = vunpack.c.l.b16 %v7145
        %v8905 = vunpack.c.l.b16 %v7146
        %v8906 = vunpack.c.l.b16 %v7147
        %v8907 = vunpack.c.l.b16 %v7148
        %v8908 = vunpack.c.l.b16 %v7149
        %v8909 = vunpack.c.l.b16 %v7150
        %v8910 = vunpack.c.l.b16 %v7151
        %v8911 = vunpack.c.l.b16 %v7152
        %v8912 = vunpack.c.l.b16 %v7153
        %v8913 = vunpack.c.l.b16 %v7154
        %v8914 = vunpack.c.l.b16 %v7155
        %v8915 = vunpack.c.l.b16 %v7156
        %v8916 = vunpack.c.l.b16 %v7157
        %v8917 = vunpack.c.l.b16 %v7158
        %v8918 = vunpack.c.l.b16 %v7159
        %v8919 = vunpack.c.l.b16 %v7160
        %v8920 = vunpack.c.l.b16 %v7161
        %v8921 = vunpack.c.l.b16 %v7162
        %v8922 = vunpack.c.l.b16 %v7163
        %v8923 = vunpack.c.l.b16 %v7164
        %v8924 = vunpack.c.l.b16 %v7165
        %v8925 = vunpack.c.l.b16 %v7166
        %v8926 = vunpack.c.l.b16 %v7167
        %v8927 = vunpack.c.l.b16 %v7168
        %v8928 = vunpack.c.l.b16 %v7169
        %v8929 = vunpack.c.l.b16 %v7170
        %v8930 = vunpack.c.l.b16 %v7171
        %v8931 = vunpack.c.l.b16 %v7172
        %v8932 = vpack.c.b16 %v8741, %v8740
        %v8933 = vpack.c.b16 %v8743, %v8742
        %v8934 = vpack.c.b16 %v8745, %v8744
        %v8935 = vpack.c.b16 %v8747, %v8746
        %v8936 = vpack.c.b16 %v8749, %v8748
        %v8937 = vpack.c.b16 %v8751, %v8750
        %v8938 = vpack.c.b16 %v8753, %v8752
        %v8939 = vpack.c.b16 %v8755, %v8754
        %v8940 = vpack.c.b16 %v8757, %v8756
        %v8941 = vpack.c.b16 %v8759, %v8758
        %v8942 = vpack.c.b16 %v8761, %v8760
        %v8943 = vpack.c.b16 %v8763, %v8762
        %v8944 = vpack.c.b16 %v8765, %v8764
        %v8945 = vpack.c.b16 %v8767, %v8766
        %v8946 = vpack.c.b16 %v8769, %v8768
        %v8947 = vpack.c.b16 %v8771, %v8770
        %v8948 = vpack.c.b16 %v8773, %v8772
        %v8949 = vpack.c.b16 %v8775, %v8774
        %v8950 = vpack.c.b16 %v8777, %v8776
        %v8951 = vpack.c.b16 %v8779, %v8778
        %v8952 = vpack.c.b16 %v8781, %v8780
        %v8953 = vpack.c.b16 %v8783, %v8782
        %v8954 = vpack.c.b16 %v8785, %v8784
        %v8955 = vpack.c.b16 %v8787, %v8786
        %v8956 = vpack.c.b16 %v8789, %v8788
        %v8957 = vpack.c.b16 %v8791, %v8790
        %v8958 = vpack.c.b16 %v8793, %v8792
        %v8959 = vpack.c.b16 %v8795, %v8794
        %v8960 = vpack.c.b16 %v8797, %v8796
        %v8961 = vpack.c.b16 %v8799, %v8798
        %v8962 = vpack.c.b16 %v8801, %v8800
        %v8963 = vpack.c.b16 %v8803, %v8802
        %v8964 = vpack.c.b16 %v8805, %v8804
        %v8965 = vpack.c.b16 %v8807, %v8806
        %v8966 = vpack.c.b16 %v8809, %v8808
        %v8967 = vpack.c.b16 %v8811, %v8810
        %v8968 = vpack.c.b16 %v8813, %v8812
        %v8969 = vpack.c.b16 %v8815, %v8814
        %v8970 = vpack.c.b16 %v8817, %v8816
        %v8971 = vpack.c.b16 %v8819, %v8818
        %v8972 = vpack.c.b16 %v8821, %v8820
        %v8973 = vpack.c.b16 %v8823, %v8822
        %v8974 = vpack.c.b16 %v8825, %v8824
        %v8975 = vpack.c.b16 %v8827, %v8826
        %v8976 = vpack.c.b16 %v8829, %v8828
        %v8977 = vpack.c.b16 %v8831, %v8830
        %v8978 = vpack.c.b16 %v8833, %v8832
        %v8979 = vpack.c.b16 %v8835, %v8834
        %v8980 = vpack.c.b16 %v8837, %v8836
        %v8981 = vpack.c.b16 %v8839, %v8838
        %v8982 = vpack.c.b16 %v8841, %v8840
        %v8983 = vpack.c.b16 %v8843, %v8842
        %v8984 = vpack.c.b16 %v8845, %v8844
        %v8985 = vpack.c.b16 %v8847, %v8846
        %v8986 = vpack.c.b16 %v8849, %v8848
        %v8987 = vpack.c.b16 %v8851, %v8850
        %v8988 = vpack.c.b16 %v8853, %v8852
        %v8989 = vpack.c.b16 %v8855, %v8854
        %v8990 = vpack.c.b16 %v8857, %v8856
        %v8991 = vpack.c.b16 %v8859, %v8858
        %v8992 = vpack.c.b16 %v8861, %v8860
        %v8993 = vpack.c.b16 %v8863, %v8862
        %v8994 = vpack.c.b16 %v8865, %v8864
        %v8995 = vpack.c.b16 %v8867, %v8866
        %v8996 = vpack.c.b16 %v8869, %v8868
        %v8997 = vpack.c.b16 %v8871, %v8870
        %v8998 = vpack.c.b16 %v8873, %v8872
        %v8999 = vpack.c.b16 %v8875, %v8874
        %v9000 = vpack.c.b16 %v8877, %v8876
        %v9001 = vpack.c.b16 %v8879, %v8878
        %v9002 = vpack.c.b16 %v8881, %v8880
        %v9003 = vpack.c.b16 %v8883, %v8882
        %v9004 = vpack.c.b16 %v8885, %v8884
        %v9005 = vpack.c.b16 %v8887, %v8886
        %v9006 = vpack.c.b16 %v8889, %v8888
        %v9007 = vpack.c.b16 %v8891, %v8890
        %v9008 = vpack.c.b16 %v8893, %v8892
        %v9009 = vpack.c.b16 %v8895, %v8894
        %v9010 = vpack.c.b16 %v8897, %v8896
        %v9011 = vpack.c.b16 %v8899, %v8898
        %v9012 = vpack.c.b16 %v8901, %v8900
        %v9013 = vpack.c.b16 %v8903, %v8902
        %v9014 = vpack.c.b16 %v8905, %v8904
        %v9015 = vpack.c.b16 %v8907, %v8906
        %v9016 = vpack.c.b16 %v8909, %v8908
        %v9017 = vpack.c.b16 %v8911, %v8910
        %v9018 = vpack.c.b16 %v8913, %v8912
        %v9019 = vpack.c.b16 %v8915, %v8914
        %v9020 = vpack.c.b16 %v8917, %v8916
        %v9021 = vpack.c.b16 %v8919, %v8918
        %v9022 = vpack.c.b16 %v8921, %v8920
        %v9023 = vpack.c.b16 %v8923, %v8922
        %v9024 = vpack.c.b16 %v8925, %v8924
        %v9025 = vpack.c.b16 %v8927, %v8926
        %v9026 = vpack.c.b16 %v8929, %v8928
        %v9027 = vpack.c.b16 %v8931, %v8930
        %9124 = vmatprep.subr.bf16.mxu0 0
        %9125 = vmatpush1.bf16.msra.mxu0 %v8932
        %9126 = vmatprep.subr.bf16.mxu0 0
        %9127 = vmatpush1.bf16.msra.mxu0 %v8933
        %9128 = vmatprep.subr.bf16.mxu0 0
        %9129 = vmatpush1.bf16.msra.mxu0 %v8934
        %9130 = vmatprep.subr.bf16.mxu0 0
        %9131 = vmatpush1.bf16.msra.mxu0 %v8935
        %9132 = vmatprep.subr.bf16.mxu0 0
        %9133 = vmatpush1.bf16.msra.mxu0 %v8936
        %9134 = vmatprep.subr.bf16.mxu0 0
        %9135 = vmatpush1.bf16.msra.mxu0 %v8937
        %9136 = vmatprep.subr.bf16.mxu0 0
        %9137 = vmatpush1.bf16.msra.mxu0 %v8938
        %9138 = vmatprep.subr.bf16.mxu0 0
        %9139 = vmatpush1.bf16.msra.mxu0 %v8939
        %9140 = vmatprep.subr.bf16.mxu0 0
        %9141 = vmatpush1.bf16.msra.mxu0 %v8940
        %9142 = vmatprep.subr.bf16.mxu0 0
        %9143 = vmatpush1.bf16.msra.mxu0 %v8941
        %9144 = vmatprep.subr.bf16.mxu0 0
        %9145 = vmatpush1.bf16.msra.mxu0 %v8942
        %9146 = vmatprep.subr.bf16.mxu0 0
        %9147 = vmatpush1.bf16.msra.mxu0 %v8943
        %9148 = vmatprep.subr.bf16.mxu0 0
        %9149 = vmatpush1.bf16.msra.mxu0 %v8944
        %9150 = vmatprep.subr.bf16.mxu0 0
        %9151 = vmatpush1.bf16.msra.mxu0 %v8945
        %9152 = vmatprep.subr.bf16.mxu0 0
        %9153 = vmatpush1.bf16.msra.mxu0 %v8946
        %9154 = vmatprep.subr.bf16.mxu0 0
        %9155 = vmatpush1.bf16.msra.mxu0 %v8947
        %9156 = vmatprep.mubr.bf16.mxu0 %v6886
        %9157 = vmatmul.mubr.bf16.gmra.mrb[0].mxu0 %v6885
        %v9158 = vpop.f32.mrb[0].mxu0
        %v9159 = vadd.f32 %v8486, %v9158
        %v9160 = vpop.f32.mrb[0].mxu0
        %v9161 = vpop.f32.mrb[0].mxu0
        %v9162 = vadd.f32 %v8489, %v9161
        %v9163 = vpop.f32.mrb[0].mxu0
        %9164 = vmatprep.mubr.bf16.mxu0 %v6898
        %9165 = vmatmul.mubr.bf16.gmra.mrb[0].mxu0 %v6897
        %v9166 = vpop.f32.mrb[0].mxu0
        %v9167 = vadd.f32 %v8494, %v9166
        %v9168 = vpop.f32.mrb[0].mxu0
        %v9169 = vpop.f32.mrb[0].mxu0
        %v9170 = vadd.f32 %v8497, %v9169
        %v9171 = vpop.f32.mrb[0].mxu0
        %9172 = vmatprep.mubr.bf16.mxu0 %v6910
        %9173 = vmatmul.mubr.bf16.gmra.mrb[0].mxu0 %v6909
        %v9174 = vpop.f32.mrb[0].mxu0
        %v9175 = vadd.f32 %v8502, %v9174
        %v9176 = vpop.f32.mrb[0].mxu0
        %v9177 = vpop.f32.mrb[0].mxu0
        %v9178 = vadd.f32 %v8505, %v9177
        %v9179 = vpop.f32.mrb[0].mxu0
        %9180 = vmatprep.mubr.bf16.mxu0 %v6922
        %9181 = vmatmul.mubr.bf16.gmra.mrb[0].mxu0 %v6921
        %v9182 = vpop.f32.mrb[0].mxu0
        %v9183 = vadd.f32 %v8510, %v9182
        %v9184 = vpop.f32.mrb[0].mxu0
        %v9185 = vpop.f32.mrb[0].mxu0
        %v9186 = vadd.f32 %v8513, %v9185
        %v9187 = vpop.f32.mrb[0].mxu0
        %9188 = vmatprep.mubr.bf16.mxu0 %v6934
        %9189 = vmatmul.mubr.bf16.gmra.mrb[0].mxu0 %v6933
        %v9190 = vpop.f32.mrb[0].mxu0
        %v9191 = vadd.f32 %v8518, %v9190
        %v9192 = vpop.f32.mrb[0].mxu0
        %v9193 = vpop.f32.mrb[0].mxu0
        %v9194 = vadd.f32 %v8521, %v9193
        %v9195 = vpop.f32.mrb[0].mxu0
        %9196 = vmatprep.mubr.bf16.mxu0 %v6946
        %9197 = vmatmul.mubr.bf16.gmra.mrb[0].mxu0 %v6945
        %v9198 = vpop.f32.mrb[0].mxu0
        %v9199 = vadd.f32 %v8526, %v9198
        %v9200 = vpop.f32.mrb[0].mxu0
        %v9201 = vpop.f32.mrb[0].mxu0
        %v9202 = vadd.f32 %v8529, %v9201
        %v9203 = vpop.f32.mrb[0].mxu0
        %9204 = vmatprep.mubr.bf16.mxu0 %v6958
        %9205 = vmatmul.mubr.bf16.gmra.mrb[0].mxu0 %v6957
        %v9206 = vpop.f32.mrb[0].mxu0
        %v9207 = vadd.f32 %v8534, %v9206
        %v9208 = vpop.f32.mrb[0].mxu0
        %v9209 = vpop.f32.mrb[0].mxu0
        %v9210 = vadd.f32 %v8537, %v9209
        %v9211 = vpop.f32.mrb[0].mxu0
        %9212 = vmatprep.mubr.bf16.mxu0 %v6970
        %9213 = vmatmul.mubr.bf16.gmra.mrb[0].mxu0 %v6969
        %v9214 = vpop.f32.mrb[0].mxu0
        %v9215 = vadd.f32 %v8542, %v9214
        %v9216 = vpop.f32.mrb[0].mxu0
        %v9217 = vpop.f32.mrb[0].mxu0
        %v9218 = vadd.f32 %v8545, %v9217
        %v9219 = vpop.f32.mrb[0].mxu0
        %9220 = vdwg.mxu0
        %9221 = vmatprep.subr.bf16.mxu0 0
        %9222 = vmatpush1.bf16.msra.mxu0 %v8948
        %9223 = vmatprep.subr.bf16.mxu0 0
        %9224 = vmatpush1.bf16.msra.mxu0 %v8949
        %9225 = vmatprep.subr.bf16.mxu0 0
        %9226 = vmatpush1.bf16.msra.mxu0 %v8950
        %9227 = vmatprep.subr.bf16.mxu0 0
        %9228 = vmatpush1.bf16.msra.mxu0 %v8951
        %9229 = vmatprep.subr.bf16.mxu0 0
        %9230 = vmatpush1.bf16.msra.mxu0 %v8952
        %9231 = vmatprep.subr.bf16.mxu0 0
        %9232 = vmatpush1.bf16.msra.mxu0 %v8953
        %9233 = vmatprep.subr.bf16.mxu0 0
        %9234 = vmatpush1.bf16.msra.mxu0 %v8954
        %9235 = vmatprep.subr.bf16.mxu0 0
        %9236 = vmatpush1.bf16.msra.mxu0 %v8955
        %9237 = vmatprep.subr.bf16.mxu0 0
        %9238 = vmatpush1.bf16.msra.mxu0 %v8956
        %9239 = vmatprep.subr.bf16.mxu0 0
        %9240 = vmatpush1.bf16.msra.mxu0 %v8957
        %9241 = vmatprep.subr.bf16.mxu0 0
        %9242 = vmatpush1.bf16.msra.mxu0 %v8958
        %9243 = vmatprep.subr.bf16.mxu0 0
        %9244 = vmatpush1.bf16.msra.mxu0 %v8959
        %9245 = vmatprep.subr.bf16.mxu0 0
        %9246 = vmatpush1.bf16.msra.mxu0 %v8960
        %9247 = vmatprep.subr.bf16.mxu0 0
        %9248 = vmatpush1.bf16.msra.mxu0 %v8961
        %9249 = vmatprep.subr.bf16.mxu0 0
        %9250 = vmatpush1.bf16.msra.mxu0 %v8962
        %9251 = vmatprep.subr.bf16.mxu0 0
        %9252 = vmatpush1.bf16.msra.mxu0 %v8963
        %9253 = vmatprep.mubr.bf16.mxu0 %v6888
        %9254 = vmatmul.mubr.bf16.gmra.mrb[0].mxu0 %v6887
        %v9255 = vpop.f32.mrb[0].mxu0
        %v9256 = vadd.f32 %v9159, %v9255
        %v9257 = vpop.f32.mrb[0].mxu0
        %v9258 = vpop.f32.mrb[0].mxu0
        %v9259 = vadd.f32 %v9162, %v9258
        %v9260 = vpop.f32.mrb[0].mxu0
        %9261 = vmatprep.mubr.bf16.mxu0 %v6900
        %9262 = vmatmul.mubr.bf16.gmra.mrb[0].mxu0 %v6899
        %v9263 = vpop.f32.mrb[0].mxu0
        %v9264 = vadd.f32 %v9167, %v9263
        %v9265 = vpop.f32.mrb[0].mxu0
        %v9266 = vpop.f32.mrb[0].mxu0
        %v9267 = vadd.f32 %v9170, %v9266
        %v9268 = vpop.f32.mrb[0].mxu0
        %9269 = vmatprep.mubr.bf16.mxu0 %v6912
        %9270 = vmatmul.mubr.bf16.gmra.mrb[0].mxu0 %v6911
        %v9271 = vpop.f32.mrb[0].mxu0
        %v9272 = vadd.f32 %v9175, %v9271
        %v9273 = vpop.f32.mrb[0].mxu0
        %v9274 = vpop.f32.mrb[0].mxu0
        %v9275 = vadd.f32 %v9178, %v9274
        %v9276 = vpop.f32.mrb[0].mxu0
        %9277 = vmatprep.mubr.bf16.mxu0 %v6924
        %9278 = vmatmul.mubr.bf16.gmra.mrb[0].mxu0 %v6923
        %v9279 = vpop.f32.mrb[0].mxu0
        %v9280 = vadd.f32 %v9183, %v9279
        %v9281 = vpop.f32.mrb[0].mxu0
        %v9282 = vpop.f32.mrb[0].mxu0
        %v9283 = vadd.f32 %v9186, %v9282
        %v9284 = vpop.f32.mrb[0].mxu0
        %9285 = vmatprep.mubr.bf16.mxu0 %v6936
        %9286 = vmatmul.mubr.bf16.gmra.mrb[0].mxu0 %v6935
        %v9287 = vpop.f32.mrb[0].mxu0
        %v9288 = vadd.f32 %v9191, %v9287
        %v9289 = vpop.f32.mrb[0].mxu0
        %v9290 = vpop.f32.mrb[0].mxu0
        %v9291 = vadd.f32 %v9194, %v9290
        %v9292 = vpop.f32.mrb[0].mxu0
        %9293 = vmatprep.mubr.bf16.mxu0 %v6948
        %9294 = vmatmul.mubr.bf16.gmra.mrb[0].mxu0 %v6947
        %v9295 = vpop.f32.mrb[0].mxu0
        %v9296 = vadd.f32 %v9199, %v9295
        %v9297 = vpop.f32.mrb[0].mxu0
        %v9298 = vpop.f32.mrb[0].mxu0
        %v9299 = vadd.f32 %v9202, %v9298
        %v9300 = vpop.f32.mrb[0].mxu0
        %9301 = vmatprep.mubr.bf16.mxu0 %v6960
        %9302 = vmatmul.mubr.bf16.gmra.mrb[0].mxu0 %v6959
        %v9303 = vpop.f32.mrb[0].mxu0
        %v9304 = vadd.f32 %v9207, %v9303
        %v9305 = vpop.f32.mrb[0].mxu0
        %v9306 = vpop.f32.mrb[0].mxu0
        %v9307 = vadd.f32 %v9210, %v9306
        %v9308 = vpop.f32.mrb[0].mxu0
        %9309 = vmatprep.mubr.bf16.mxu0 %v6972
        %9310 = vmatmul.mubr.bf16.gmra.mrb[0].mxu0 %v6971
        %v9311 = vpop.f32.mrb[0].mxu0
        %v9312 = vadd.f32 %v9215, %v9311
        %v9313 = vpop.f32.mrb[0].mxu0
        %v9314 = vpop.f32.mrb[0].mxu0
        %v9315 = vadd.f32 %v9218, %v9314
        %v9316 = vpop.f32.mrb[0].mxu0
        %9317 = vdwg.mxu0
        %9318 = vmatprep.subr.bf16.mxu0 0
        %9319 = vmatpush1.bf16.msra.mxu0 %v8964
        %9320 = vmatprep.subr.bf16.mxu0 0
        %9321 = vmatpush1.bf16.msra.mxu0 %v8965
        %9322 = vmatprep.subr.bf16.mxu0 0
        %9323 = vmatpush1.bf16.msra.mxu0 %v8966
        %9324 = vmatprep.subr.bf16.mxu0 0
        %9325 = vmatpush1.bf16.msra.mxu0 %v8967
        %9326 = vmatprep.subr.bf16.mxu0 0
        %9327 = vmatpush1.bf16.msra.mxu0 %v8968
        %9328 = vmatprep.subr.bf16.mxu0 0
        %9329 = vmatpush1.bf16.msra.mxu0 %v8969
        %9330 = vmatprep.subr.bf16.mxu0 0
        %9331 = vmatpush1.bf16.msra.mxu0 %v8970
        %9332 = vmatprep.subr.bf16.mxu0 0
        %9333 = vmatpush1.bf16.msra.mxu0 %v8971
        %9334 = vmatprep.subr.bf16.mxu0 0
        %9335 = vmatpush1.bf16.msra.mxu0 %v8972
        %9336 = vmatprep.subr.bf16.mxu0 0
        %9337 = vmatpush1.bf16.msra.mxu0 %v8973
        %9338 = vmatprep.subr.bf16.mxu0 0
        %9339 = vmatpush1.bf16.msra.mxu0 %v8974
        %9340 = vmatprep.subr.bf16.mxu0 0
        %9341 = vmatpush1.bf16.msra.mxu0 %v8975
        %9342 = vmatprep.subr.bf16.mxu0 0
        %9343 = vmatpush1.bf16.msra.mxu0 %v8976
        %9344 = vmatprep.subr.bf16.mxu0 0
        %9345 = vmatpush1.bf16.msra.mxu0 %v8977
        %9346 = vmatprep.subr.bf16.mxu0 0
        %9347 = vmatpush1.bf16.msra.mxu0 %v8978
        %9348 = vmatprep.subr.bf16.mxu0 0
        %9349 = vmatpush1.bf16.msra.mxu0 %v8979
        %9350 = vmatprep.mubr.bf16.mxu0 %v6890
        %9351 = vmatmul.mubr.bf16.gmra.mrb[0].mxu0 %v6889
        %v9352 = vpop.f32.mrb[0].mxu0
        %v9353 = vadd.f32 %v9256, %v9352
        %v9354 = vpop.f32.mrb[0].mxu0
        %v9355 = vpop.f32.mrb[0].mxu0
        %v9356 = vadd.f32 %v9259, %v9355
        %v9357 = vpop.f32.mrb[0].mxu0
        %9358 = vmatprep.mubr.bf16.mxu0 %v6902
        %9359 = vmatmul.mubr.bf16.gmra.mrb[0].mxu0 %v6901
        %v9360 = vpop.f32.mrb[0].mxu0
        %v9361 = vadd.f32 %v9264, %v9360
        %v9362 = vpop.f32.mrb[0].mxu0
        %v9363 = vpop.f32.mrb[0].mxu0
        %v9364 = vadd.f32 %v9267, %v9363
        %v9365 = vpop.f32.mrb[0].mxu0
        %9366 = vmatprep.mubr.bf16.mxu0 %v6914
        %9367 = vmatmul.mubr.bf16.gmra.mrb[0].mxu0 %v6913
        %v9368 = vpop.f32.mrb[0].mxu0
        %v9369 = vadd.f32 %v9272, %v9368
        %v9370 = vpop.f32.mrb[0].mxu0
        %v9371 = vpop.f32.mrb[0].mxu0
        %v9372 = vadd.f32 %v9275, %v9371
        %v9373 = vpop.f32.mrb[0].mxu0
        %9374 = vmatprep.mubr.bf16.mxu0 %v6926
        %9375 = vmatmul.mubr.bf16.gmra.mrb[0].mxu0 %v6925
        %v9376 = vpop.f32.mrb[0].mxu0
        %v9377 = vadd.f32 %v9280, %v9376
        %v9378 = vpop.f32.mrb[0].mxu0
        %v9379 = vpop.f32.mrb[0].mxu0
        %v9380 = vadd.f32 %v9283, %v9379
        %v9381 = vpop.f32.mrb[0].mxu0
        %9382 = vmatprep.mubr.bf16.mxu0 %v6938
        %9383 = vmatmul.mubr.bf16.gmra.mrb[0].mxu0 %v6937
        %v9384 = vpop.f32.mrb[0].mxu0
        %v9385 = vadd.f32 %v9288, %v9384
        %v9386 = vpop.f32.mrb[0].mxu0
        %v9387 = vpop.f32.mrb[0].mxu0
        %v9388 = vadd.f32 %v9291, %v9387
        %v9389 = vpop.f32.mrb[0].mxu0
        %9390 = vmatprep.mubr.bf16.mxu0 %v6950
        %9391 = vmatmul.mubr.bf16.gmra.mrb[0].mxu0 %v6949
        %v9392 = vpop.f32.mrb[0].mxu0
        %v9393 = vadd.f32 %v9296, %v9392
        %v9394 = vpop.f32.mrb[0].mxu0
        %v9395 = vpop.f32.mrb[0].mxu0
        %v9396 = vadd.f32 %v9299, %v9395
        %v9397 = vpop.f32.mrb[0].mxu0
        %9398 = vmatprep.mubr.bf16.mxu0 %v6962
        %9399 = vmatmul.mubr.bf16.gmra.mrb[0].mxu0 %v6961
        %v9400 = vpop.f32.mrb[0].mxu0
        %v9401 = vadd.f32 %v9304, %v9400
        %v9402 = vpop.f32.mrb[0].mxu0
        %v9403 = vpop.f32.mrb[0].mxu0
        %v9404 = vadd.f32 %v9307, %v9403
        %v9405 = vpop.f32.mrb[0].mxu0
        %9406 = vmatprep.mubr.bf16.mxu0 %v6974
        %9407 = vmatmul.mubr.bf16.gmra.mrb[0].mxu0 %v6973
        %v9408 = vpop.f32.mrb[0].mxu0
        %v9409 = vadd.f32 %v9312, %v9408
        %v9410 = vpop.f32.mrb[0].mxu0
        %v9411 = vpop.f32.mrb[0].mxu0
        %v9412 = vadd.f32 %v9315, %v9411
        %v9413 = vpop.f32.mrb[0].mxu0
        %9414 = vdwg.mxu0
        %9415 = vmatprep.subr.bf16.mxu0 0
        %9416 = vmatpush1.bf16.msra.mxu0 %v8980
        %9417 = vmatprep.subr.bf16.mxu0 0
        %9418 = vmatpush1.bf16.msra.mxu0 %v8981
        %9419 = vmatprep.subr.bf16.mxu0 0
        %9420 = vmatpush1.bf16.msra.mxu0 %v8982
        %9421 = vmatprep.subr.bf16.mxu0 0
        %9422 = vmatpush1.bf16.msra.mxu0 %v8983
        %9423 = vmatprep.subr.bf16.mxu0 0
        %9424 = vmatpush1.bf16.msra.mxu0 %v8984
        %9425 = vmatprep.subr.bf16.mxu0 0
        %9426 = vmatpush1.bf16.msra.mxu0 %v8985
        %9427 = vmatprep.subr.bf16.mxu0 0
        %9428 = vmatpush1.bf16.msra.mxu0 %v8986
        %9429 = vmatprep.subr.bf16.mxu0 0
        %9430 = vmatpush1.bf16.msra.mxu0 %v8987
        %9431 = vmatprep.subr.bf16.mxu0 0
        %9432 = vmatpush1.bf16.msra.mxu0 %v8988
        %9433 = vmatprep.subr.bf16.mxu0 0
        %9434 = vmatpush1.bf16.msra.mxu0 %v8989
        %9435 = vmatprep.subr.bf16.mxu0 0
        %9436 = vmatpush1.bf16.msra.mxu0 %v8990
        %9437 = vmatprep.subr.bf16.mxu0 0
        %9438 = vmatpush1.bf16.msra.mxu0 %v8991
        %9439 = vmatprep.subr.bf16.mxu0 0
        %9440 = vmatpush1.bf16.msra.mxu0 %v8992
        %9441 = vmatprep.subr.bf16.mxu0 0
        %9442 = vmatpush1.bf16.msra.mxu0 %v8993
        %9443 = vmatprep.subr.bf16.mxu0 0
        %9444 = vmatpush1.bf16.msra.mxu0 %v8994
        %9445 = vmatprep.subr.bf16.mxu0 0
        %9446 = vmatpush1.bf16.msra.mxu0 %v8995
        %9447 = vmatprep.mubr.bf16.mxu0 %v6892
        %9448 = vmatmul.mubr.bf16.gmra.mrb[0].mxu0 %v6891
        %v9449 = vpop.f32.mrb[0].mxu0
        %v9450 = vadd.f32 %v9353, %v9449
        %v9451 = vpop.f32.mrb[0].mxu0
        %v9452 = vpop.f32.mrb[0].mxu0
        %v9453 = vadd.f32 %v9356, %v9452
        %v9454 = vpop.f32.mrb[0].mxu0
        %9455 = vmatprep.mubr.bf16.mxu0 %v6904
        %9456 = vmatmul.mubr.bf16.gmra.mrb[0].mxu0 %v6903
        %v9457 = vpop.f32.mrb[0].mxu0
        %v9458 = vadd.f32 %v9361, %v9457
        %v9459 = vpop.f32.mrb[0].mxu0
        %v9460 = vpop.f32.mrb[0].mxu0
        %v9461 = vadd.f32 %v9364, %v9460
        %v9462 = vpop.f32.mrb[0].mxu0
        %9463 = vmatprep.mubr.bf16.mxu0 %v6916
        %9464 = vmatmul.mubr.bf16.gmra.mrb[0].mxu0 %v6915
        %v9465 = vpop.f32.mrb[0].mxu0
        %v9466 = vadd.f32 %v9369, %v9465
        %v9467 = vpop.f32.mrb[0].mxu0
        %v9468 = vpop.f32.mrb[0].mxu0
        %v9469 = vadd.f32 %v9372, %v9468
        %v9470 = vpop.f32.mrb[0].mxu0
        %9471 = vmatprep.mubr.bf16.mxu0 %v6928
        %9472 = vmatmul.mubr.bf16.gmra.mrb[0].mxu0 %v6927
        %v9473 = vpop.f32.mrb[0].mxu0
        %v9474 = vadd.f32 %v9377, %v9473
        %v9475 = vpop.f32.mrb[0].mxu0
        %v9476 = vpop.f32.mrb[0].mxu0
        %v9477 = vadd.f32 %v9380, %v9476
        %v9478 = vpop.f32.mrb[0].mxu0
        %9479 = vmatprep.mubr.bf16.mxu0 %v6940
        %9480 = vmatmul.mubr.bf16.gmra.mrb[0].mxu0 %v6939
        %v9481 = vpop.f32.mrb[0].mxu0
        %v9482 = vadd.f32 %v9385, %v9481
        %v9483 = vpop.f32.mrb[0].mxu0
        %v9484 = vpop.f32.mrb[0].mxu0
        %v9485 = vadd.f32 %v9388, %v9484
        %v9486 = vpop.f32.mrb[0].mxu0
        %9487 = vmatprep.mubr.bf16.mxu0 %v6952
        %9488 = vmatmul.mubr.bf16.gmra.mrb[0].mxu0 %v6951
        %v9489 = vpop.f32.mrb[0].mxu0
        %v9490 = vadd.f32 %v9393, %v9489
        %v9491 = vpop.f32.mrb[0].mxu0
        %v9492 = vpop.f32.mrb[0].mxu0
        %v9493 = vadd.f32 %v9396, %v9492
        %v9494 = vpop.f32.mrb[0].mxu0
        %9495 = vmatprep.mubr.bf16.mxu0 %v6964
        %9496 = vmatmul.mubr.bf16.gmra.mrb[0].mxu0 %v6963
        %v9497 = vpop.f32.mrb[0].mxu0
        %v9498 = vadd.f32 %v9401, %v9497
        %v9499 = vpop.f32.mrb[0].mxu0
        %v9500 = vpop.f32.mrb[0].mxu0
        %v9501 = vadd.f32 %v9404, %v9500
        %v9502 = vpop.f32.mrb[0].mxu0
        %9503 = vmatprep.mubr.bf16.mxu0 %v6976
        %9504 = vmatmul.mubr.bf16.gmra.mrb[0].mxu0 %v6975
        %v9505 = vpop.f32.mrb[0].mxu0
        %v9506 = vadd.f32 %v9409, %v9505
        %v9507 = vpop.f32.mrb[0].mxu0
        %v9508 = vpop.f32.mrb[0].mxu0
        %v9509 = vadd.f32 %v9412, %v9508
        %v9510 = vpop.f32.mrb[0].mxu0
        %9511 = vdwg.mxu0
        %9512 = vmatprep.subr.bf16.mxu0 0
        %9513 = vmatpush1.bf16.msra.mxu0 %v8996
        %9514 = vmatprep.subr.bf16.mxu0 0
        %9515 = vmatpush1.bf16.msra.mxu0 %v8997
        %9516 = vmatprep.subr.bf16.mxu0 0
        %9517 = vmatpush1.bf16.msra.mxu0 %v8998
        %9518 = vmatprep.subr.bf16.mxu0 0
        %9519 = vmatpush1.bf16.msra.mxu0 %v8999
        %9520 = vmatprep.subr.bf16.mxu0 0
        %9521 = vmatpush1.bf16.msra.mxu0 %v9000
        %9522 = vmatprep.subr.bf16.mxu0 0
        %9523 = vmatpush1.bf16.msra.mxu0 %v9001
        %9524 = vmatprep.subr.bf16.mxu0 0
        %9525 = vmatpush1.bf16.msra.mxu0 %v9002
        %9526 = vmatprep.subr.bf16.mxu0 0
        %9527 = vmatpush1.bf16.msra.mxu0 %v9003
        %9528 = vmatprep.subr.bf16.mxu0 0
        %9529 = vmatpush1.bf16.msra.mxu0 %v9004
        %9530 = vmatprep.subr.bf16.mxu0 0
        %9531 = vmatpush1.bf16.msra.mxu0 %v9005
        %9532 = vmatprep.subr.bf16.mxu0 0
        %9533 = vmatpush1.bf16.msra.mxu0 %v9006
        %9534 = vmatprep.subr.bf16.mxu0 0
        %9535 = vmatpush1.bf16.msra.mxu0 %v9007
        %9536 = vmatprep.subr.bf16.mxu0 0
        %9537 = vmatpush1.bf16.msra.mxu0 %v9008
        %9538 = vmatprep.subr.bf16.mxu0 0
        %9539 = vmatpush1.bf16.msra.mxu0 %v9009
        %9540 = vmatprep.subr.bf16.mxu0 0
        %9541 = vmatpush1.bf16.msra.mxu0 %v9010
        %9542 = vmatprep.subr.bf16.mxu0 0
        %9543 = vmatpush1.bf16.msra.mxu0 %v9011
        %9544 = vmatprep.mubr.bf16.mxu0 %v6894
        %9545 = vmatmul.mubr.bf16.gmra.mrb[0].mxu0 %v6893
        %v9546 = vpop.f32.mrb[0].mxu0
        %v9547 = vadd.f32 %v9450, %v9546
        %v9548 = vpop.f32.mrb[0].mxu0
        %v9549 = vpop.f32.mrb[0].mxu0
        %v9550 = vadd.f32 %v9453, %v9549
        %v9551 = vpop.f32.mrb[0].mxu0
        %9552 = vmatprep.mubr.bf16.mxu0 %v6906
        %9553 = vmatmul.mubr.bf16.gmra.mrb[0].mxu0 %v6905
        %v9554 = vpop.f32.mrb[0].mxu0
        %v9555 = vadd.f32 %v9458, %v9554
        %v9556 = vpop.f32.mrb[0].mxu0
        %v9557 = vpop.f32.mrb[0].mxu0
        %v9558 = vadd.f32 %v9461, %v9557
        %v9559 = vpop.f32.mrb[0].mxu0
        %9560 = vmatprep.mubr.bf16.mxu0 %v6918
        %9561 = vmatmul.mubr.bf16.gmra.mrb[0].mxu0 %v6917
        %v9562 = vpop.f32.mrb[0].mxu0
        %v9563 = vadd.f32 %v9466, %v9562
        %v9564 = vpop.f32.mrb[0].mxu0
        %v9565 = vpop.f32.mrb[0].mxu0
        %v9566 = vadd.f32 %v9469, %v9565
        %v9567 = vpop.f32.mrb[0].mxu0
        %9568 = vmatprep.mubr.bf16.mxu0 %v6930
        %9569 = vmatmul.mubr.bf16.gmra.mrb[0].mxu0 %v6929
        %v9570 = vpop.f32.mrb[0].mxu0
        %v9571 = vadd.f32 %v9474, %v9570
        %v9572 = vpop.f32.mrb[0].mxu0
        %v9573 = vpop.f32.mrb[0].mxu0
        %v9574 = vadd.f32 %v9477, %v9573
        %v9575 = vpop.f32.mrb[0].mxu0
        %9576 = vmatprep.mubr.bf16.mxu0 %v6942
        %9577 = vmatmul.mubr.bf16.gmra.mrb[0].mxu0 %v6941
        %v9578 = vpop.f32.mrb[0].mxu0
        %v9579 = vadd.f32 %v9482, %v9578
        %v9580 = vpop.f32.mrb[0].mxu0
        %v9581 = vpop.f32.mrb[0].mxu0
        %v9582 = vadd.f32 %v9485, %v9581
        %v9583 = vpop.f32.mrb[0].mxu0
        %9584 = vmatprep.mubr.bf16.mxu0 %v6954
        %9585 = vmatmul.mubr.bf16.gmra.mrb[0].mxu0 %v6953
        %v9586 = vpop.f32.mrb[0].mxu0
        %v9587 = vadd.f32 %v9490, %v9586
        %v9588 = vpop.f32.mrb[0].mxu0
        %v9589 = vpop.f32.mrb[0].mxu0
        %v9590 = vadd.f32 %v9493, %v9589
        %v9591 = vpop.f32.mrb[0].mxu0
        %9592 = vmatprep.mubr.bf16.mxu0 %v6966
        %9593 = vmatmul.mubr.bf16.gmra.mrb[0].mxu0 %v6965
        %v9594 = vpop.f32.mrb[0].mxu0
        %v9595 = vadd.f32 %v9498, %v9594
        %v9596 = vpop.f32.mrb[0].mxu0
        %v9597 = vpop.f32.mrb[0].mxu0
        %v9598 = vadd.f32 %v9501, %v9597
        %v9599 = vpop.f32.mrb[0].mxu0
        %9600 = vmatprep.mubr.bf16.mxu0 %v6978
        %9601 = vmatmul.mubr.bf16.gmra.mrb[0].mxu0 %v6977
        %v9602 = vpop.f32.mrb[0].mxu0
        %v9603 = vadd.f32 %v9506, %v9602
        %v9604 = vpop.f32.mrb[0].mxu0
        %v9605 = vpop.f32.mrb[0].mxu0
        %v9606 = vadd.f32 %v9509, %v9605
        %v9607 = vpop.f32.mrb[0].mxu0
        %9608 = vdwg.mxu0
        %9609 = vmatprep.subr.bf16.mxu0 0
        %9610 = vmatpush1.bf16.msra.mxu0 %v9012
        %9611 = vmatprep.subr.bf16.mxu0 0
        %9612 = vmatpush1.bf16.msra.mxu0 %v9013
        %9613 = vmatprep.subr.bf16.mxu0 0
        %9614 = vmatpush1.bf16.msra.mxu0 %v9014
        %9615 = vmatprep.subr.bf16.mxu0 0
        %9616 = vmatpush1.bf16.msra.mxu0 %v9015
        %9617 = vmatprep.subr.bf16.mxu0 0
        %9618 = vmatpush1.bf16.msra.mxu0 %v9016
        %9619 = vmatprep.subr.bf16.mxu0 0
        %9620 = vmatpush1.bf16.msra.mxu0 %v9017
        %9621 = vmatprep.subr.bf16.mxu0 0
        %9622 = vmatpush1.bf16.msra.mxu0 %v9018
        %9623 = vmatprep.subr.bf16.mxu0 0
        %9624 = vmatpush1.bf16.msra.mxu0 %v9019
        %9625 = vmatprep.subr.bf16.mxu0 0
        %9626 = vmatpush1.bf16.msra.mxu0 %v9020
        %9627 = vmatprep.subr.bf16.mxu0 0
        %9628 = vmatpush1.bf16.msra.mxu0 %v9021
        %9629 = vmatprep.subr.bf16.mxu0 0
        %9630 = vmatpush1.bf16.msra.mxu0 %v9022
        %9631 = vmatprep.subr.bf16.mxu0 0
        %9632 = vmatpush1.bf16.msra.mxu0 %v9023
        %9633 = vmatprep.subr.bf16.mxu0 0
        %9634 = vmatpush1.bf16.msra.mxu0 %v9024
        %9635 = vmatprep.subr.bf16.mxu0 0
        %9636 = vmatpush1.bf16.msra.mxu0 %v9025
        %9637 = vmatprep.subr.bf16.mxu0 0
        %9638 = vmatpush1.bf16.msra.mxu0 %v9026
        %9639 = vmatprep.subr.bf16.mxu0 0
        %9640 = vmatpush1.bf16.msra.mxu0 %v9027
        %9641 = vmatprep.mubr.bf16.mxu0 %v6896
        %9642 = vmatmul.mubr.bf16.gmra.mrb[0].mxu0 %v6895
        %v9643 = vpop.f32.mrb[0].mxu0
        %v9644 = vadd.f32 %v9547, %v9643
        %v9645 = vpop.f32.mrb[0].mxu0
        %v9646 = vpop.f32.mrb[0].mxu0
        %v9647 = vadd.f32 %v9550, %v9646
        %v9648 = vpop.f32.mrb[0].mxu0
        %9649 = vmatprep.mubr.bf16.mxu0 %v6908
        %9650 = vmatmul.mubr.bf16.gmra.mrb[0].mxu0 %v6907
        %v9651 = vpop.f32.mrb[0].mxu0
        %v9652 = vadd.f32 %v9555, %v9651
        %v9653 = vpop.f32.mrb[0].mxu0
        %v9654 = vpop.f32.mrb[0].mxu0
        %v9655 = vadd.f32 %v9558, %v9654
        %v9656 = vpop.f32.mrb[0].mxu0
        %9657 = vmatprep.mubr.bf16.mxu0 %v6920
        %9658 = vmatmul.mubr.bf16.gmra.mrb[0].mxu0 %v6919
        %v9659 = vpop.f32.mrb[0].mxu0
        %v9660 = vadd.f32 %v9563, %v9659
        %v9661 = vpop.f32.mrb[0].mxu0
        %v9662 = vpop.f32.mrb[0].mxu0
        %v9663 = vadd.f32 %v9566, %v9662
        %v9664 = vpop.f32.mrb[0].mxu0
        %9665 = vmatprep.mubr.bf16.mxu0 %v6932
        %9666 = vmatmul.mubr.bf16.gmra.mrb[0].mxu0 %v6931
        %v9667 = vpop.f32.mrb[0].mxu0
        %v9668 = vadd.f32 %v9571, %v9667
        %v9669 = vpop.f32.mrb[0].mxu0
        %v9670 = vpop.f32.mrb[0].mxu0
        %v9671 = vadd.f32 %v9574, %v9670
        %v9672 = vpop.f32.mrb[0].mxu0
        %9673 = vmatprep.mubr.bf16.mxu0 %v6944
        %9674 = vmatmul.mubr.bf16.gmra.mrb[0].mxu0 %v6943
        %v9675 = vpop.f32.mrb[0].mxu0
        %v9676 = vadd.f32 %v9579, %v9675
        %v9677 = vpop.f32.mrb[0].mxu0
        %v9678 = vpop.f32.mrb[0].mxu0
        %v9679 = vadd.f32 %v9582, %v9678
        %v9680 = vpop.f32.mrb[0].mxu0
        %9681 = vmatprep.mubr.bf16.mxu0 %v6956
        %9682 = vmatmul.mubr.bf16.gmra.mrb[0].mxu0 %v6955
        %v9683 = vpop.f32.mrb[0].mxu0
        %v9684 = vadd.f32 %v9587, %v9683
        %v9685 = vpop.f32.mrb[0].mxu0
        %v9686 = vpop.f32.mrb[0].mxu0
        %v9687 = vadd.f32 %v9590, %v9686
        %v9688 = vpop.f32.mrb[0].mxu0
        %9689 = vmatprep.mubr.bf16.mxu0 %v6968
        %9690 = vmatmul.mubr.bf16.gmra.mrb[0].mxu0 %v6967
        %v9691 = vpop.f32.mrb[0].mxu0
        %v9692 = vadd.f32 %v9595, %v9691
        %v9693 = vpop.f32.mrb[0].mxu0
        %v9694 = vpop.f32.mrb[0].mxu0
        %v9695 = vadd.f32 %v9598, %v9694
        %v9696 = vpop.f32.mrb[0].mxu0
        %9697 = vmatprep.mubr.bf16.mxu0 %v6980
        %9698 = vmatmul.mubr.bf16.gmra.mrb[0].mxu0 %v6979
        %v9699 = vpop.f32.mrb[0].mxu0
        %v9700 = vadd.f32 %v9603, %v9699
        %v9701 = vpop.f32.mrb[0].mxu0
        %v9702 = vpop.f32.mrb[0].mxu0
        %v9703 = vadd.f32 %v9606, %v9702
        %v9704 = vpop.f32.mrb[0].mxu0
        %9705 = vdwg.mxu0
        %v9706 = vld [vmem:[#allocation2 + $0x180] sm:$0xff]
        %v9707 = vld [vmem:[#allocation2 + $0x188] sm:$0xff]
        %v9708 = vld [vmem:[#allocation2 + $0x190] sm:$0xff]
        %v9709 = vld [vmem:[#allocation2 + $0x198] sm:$0xff]
        %v9710 = vld [vmem:[#allocation2 + $0x1a0] sm:$0xff]
        %v9711 = vld [vmem:[#allocation2 + $0x1a8] sm:$0xff]
        %v9712 = vld [vmem:[#allocation2 + $0x1b0] sm:$0xff]
        %v9713 = vld [vmem:[#allocation2 + $0x1b8] sm:$0xff]
        %v9714 = vld [vmem:[#allocation2 + $0x1c0] sm:$0xff]
        %v9715 = vld [vmem:[#allocation2 + $0x1c8] sm:$0xff]
        %v9716 = vld [vmem:[#allocation2 + $0x1d0] sm:$0xff]
        %v9717 = vld [vmem:[#allocation2 + $0x1d8] sm:$0xff]
        %v9718 = vld [vmem:[#allocation2 + $0x1e0] sm:$0xff]
        %v9719 = vld [vmem:[#allocation2 + $0x1e8] sm:$0xff]
        %v9720 = vld [vmem:[#allocation2 + $0x1f0] sm:$0xff]
        %v9721 = vld [vmem:[#allocation2 + $0x1f8] sm:$0xff]
        %v9722 = vld [vmem:[#allocation2 + $0x200] sm:$0xff]
        %v9723 = vld [vmem:[#allocation2 + $0x208] sm:$0xff]
        %v9724 = vld [vmem:[#allocation2 + $0x210] sm:$0xff]
        %v9725 = vld [vmem:[#allocation2 + $0x218] sm:$0xff]
        %v9726 = vld [vmem:[#allocation2 + $0x220] sm:$0xff]
        %v9727 = vld [vmem:[#allocation2 + $0x228] sm:$0xff]
        %v9728 = vld [vmem:[#allocation2 + $0x230] sm:$0xff]
        %v9729 = vld [vmem:[#allocation2 + $0x238] sm:$0xff]
        %v9730 = vld [vmem:[#allocation2 + $0x240] sm:$0xff]
        %v9731 = vld [vmem:[#allocation2 + $0x248] sm:$0xff]
        %v9732 = vld [vmem:[#allocation2 + $0x250] sm:$0xff]
        %v9733 = vld [vmem:[#allocation2 + $0x258] sm:$0xff]
        %v9734 = vld [vmem:[#allocation2 + $0x260] sm:$0xff]
        %v9735 = vld [vmem:[#allocation2 + $0x268] sm:$0xff]
        %v9736 = vld [vmem:[#allocation2 + $0x270] sm:$0xff]
        %v9737 = vld [vmem:[#allocation2 + $0x278] sm:$0xff]
        %v9738 = vld [vmem:[#allocation2 + $0x280] sm:$0xff]
        %v9739 = vld [vmem:[#allocation2 + $0x288] sm:$0xff]
        %v9740 = vld [vmem:[#allocation2 + $0x290] sm:$0xff]
        %v9741 = vld [vmem:[#allocation2 + $0x298] sm:$0xff]
        %v9742 = vld [vmem:[#allocation2 + $0x2a0] sm:$0xff]
        %v9743 = vld [vmem:[#allocation2 + $0x2a8] sm:$0xff]
        %v9744 = vld [vmem:[#allocation2 + $0x2b0] sm:$0xff]
        %v9745 = vld [vmem:[#allocation2 + $0x2b8] sm:$0xff]
        %v9746 = vld [vmem:[#allocation2 + $0x2c0] sm:$0xff]
        %v9747 = vld [vmem:[#allocation2 + $0x2c8] sm:$0xff]
        %v9748 = vld [vmem:[#allocation2 + $0x2d0] sm:$0xff]
        %v9749 = vld [vmem:[#allocation2 + $0x2d8] sm:$0xff]
        %v9750 = vld [vmem:[#allocation2 + $0x2e0] sm:$0xff]
        %v9751 = vld [vmem:[#allocation2 + $0x2e8] sm:$0xff]
        %v9752 = vld [vmem:[#allocation2 + $0x2f0] sm:$0xff]
        %v9753 = vld [vmem:[#allocation2 + $0x2f8] sm:$0xff]
        %v9754 = vld [vmem:[#allocation2 + $0x300] sm:$0xff]
        %v9755 = vld [vmem:[#allocation2 + $0x308] sm:$0xff]
        %v9756 = vld [vmem:[#allocation2 + $0x310] sm:$0xff]
        %v9757 = vld [vmem:[#allocation2 + $0x318] sm:$0xff]
        %v9758 = vld [vmem:[#allocation2 + $0x320] sm:$0xff]
        %v9759 = vld [vmem:[#allocation2 + $0x328] sm:$0xff]
        %v9760 = vld [vmem:[#allocation2 + $0x330] sm:$0xff]
        %v9761 = vld [vmem:[#allocation2 + $0x338] sm:$0xff]
        %v9762 = vld [vmem:[#allocation2 + $0x340] sm:$0xff]
        %v9763 = vld [vmem:[#allocation2 + $0x348] sm:$0xff]
        %v9764 = vld [vmem:[#allocation2 + $0x350] sm:$0xff]
        %v9765 = vld [vmem:[#allocation2 + $0x358] sm:$0xff]
        %v9766 = vld [vmem:[#allocation2 + $0x360] sm:$0xff]
        %v9767 = vld [vmem:[#allocation2 + $0x368] sm:$0xff]
        %v9768 = vld [vmem:[#allocation2 + $0x370] sm:$0xff]
        %v9769 = vld [vmem:[#allocation2 + $0x378] sm:$0xff]
        %v9770 = vld [vmem:[#allocation2 + $0x380] sm:$0xff]
        %v9771 = vld [vmem:[#allocation2 + $0x388] sm:$0xff]
        %v9772 = vld [vmem:[#allocation2 + $0x390] sm:$0xff]
        %v9773 = vld [vmem:[#allocation2 + $0x398] sm:$0xff]
        %v9774 = vld [vmem:[#allocation2 + $0x3a0] sm:$0xff]
        %v9775 = vld [vmem:[#allocation2 + $0x3a8] sm:$0xff]
        %v9776 = vld [vmem:[#allocation2 + $0x3b0] sm:$0xff]
        %v9777 = vld [vmem:[#allocation2 + $0x3b8] sm:$0xff]
        %v9778 = vld [vmem:[#allocation2 + $0x3c0] sm:$0xff]
        %v9779 = vld [vmem:[#allocation2 + $0x3c8] sm:$0xff]
        %v9780 = vld [vmem:[#allocation2 + $0x3d0] sm:$0xff]
        %v9781 = vld [vmem:[#allocation2 + $0x3d8] sm:$0xff]
        %v9782 = vld [vmem:[#allocation2 + $0x3e0] sm:$0xff]
        %v9783 = vld [vmem:[#allocation2 + $0x3e8] sm:$0xff]
        %v9784 = vld [vmem:[#allocation2 + $0x3f0] sm:$0xff]
        %v9785 = vld [vmem:[#allocation2 + $0x3f8] sm:$0xff]
        %v9786 = vld [vmem:[#allocation2 + $0x400] sm:$0xff]
        %v9787 = vld [vmem:[#allocation2 + $0x408] sm:$0xff]
        %v9788 = vld [vmem:[#allocation2 + $0x410] sm:$0xff]
        %v9789 = vld [vmem:[#allocation2 + $0x418] sm:$0xff]
        %v9790 = vld [vmem:[#allocation2 + $0x420] sm:$0xff]
        %v9791 = vld [vmem:[#allocation2 + $0x428] sm:$0xff]
        %v9792 = vld [vmem:[#allocation2 + $0x430] sm:$0xff]
        %v9793 = vld [vmem:[#allocation2 + $0x438] sm:$0xff]
        %v9794 = vld [vmem:[#allocation2 + $0x440] sm:$0xff]
        %v9795 = vld [vmem:[#allocation2 + $0x448] sm:$0xff]
        %v9796 = vld [vmem:[#allocation2 + $0x450] sm:$0xff]
        %v9797 = vld [vmem:[#allocation2 + $0x458] sm:$0xff]
        %v9798 = vld [vmem:[#allocation2 + $0x460] sm:$0xff]
        %v9799 = vld [vmem:[#allocation2 + $0x468] sm:$0xff]
        %v9800 = vld [vmem:[#allocation2 + $0x470] sm:$0xff]
        %v9801 = vld [vmem:[#allocation2 + $0x478] sm:$0xff]
        %s9802 = scalar_lea.vmem %s3, 1536
        %v9803 = vld [vmem:[%s9802] sm:$0xf]
        %v9804 = vld [vmem:[%s9802 + $0x4] sm:$0xf]
        %v9805 = vld [vmem:[%s9802 + $0x8] sm:$0xf]
        %v9806 = vld [vmem:[%s9802 + $0xc] sm:$0xf]
        %v9807 = vld [vmem:[%s9802 + $0x10] sm:$0xf]
        %v9808 = vld [vmem:[%s9802 + $0x14] sm:$0xf]
        %v9809 = vld [vmem:[%s9802 + $0x18] sm:$0xf]
        %v9810 = vld [vmem:[%s9802 + $0x1c] sm:$0xf]
        %v9811 = vld [vmem:[%s9802 + $0x20] sm:$0xf]
        %v9812 = vld [vmem:[%s9802 + $0x24] sm:$0xf]
        %v9813 = vld [vmem:[%s9802 + $0x28] sm:$0xf]
        %v9814 = vld [vmem:[%s9802 + $0x2c] sm:$0xf]
        %v9815 = vld [vmem:[%s9802 + $0x30] sm:$0xf]
        %v9816 = vld [vmem:[%s9802 + $0x34] sm:$0xf]
        %v9817 = vld [vmem:[%s9802 + $0x38] sm:$0xf]
        %v9818 = vld [vmem:[%s9802 + $0x3c] sm:$0xf]
        %v9819 = vld [vmem:[%s9802 + $0x40] sm:$0xf]
        %v9820 = vld [vmem:[%s9802 + $0x44] sm:$0xf]
        %v9821 = vld [vmem:[%s9802 + $0x48] sm:$0xf]
        %v9822 = vld [vmem:[%s9802 + $0x4c] sm:$0xf]
        %v9823 = vld [vmem:[%s9802 + $0x50] sm:$0xf]
        %v9824 = vld [vmem:[%s9802 + $0x54] sm:$0xf]
        %v9825 = vld [vmem:[%s9802 + $0x58] sm:$0xf]
        %v9826 = vld [vmem:[%s9802 + $0x5c] sm:$0xf]
        %v9827 = vld [vmem:[%s9802 + $0x60] sm:$0xf]
        %v9828 = vld [vmem:[%s9802 + $0x64] sm:$0xf]
        %v9829 = vld [vmem:[%s9802 + $0x68] sm:$0xf]
        %v9830 = vld [vmem:[%s9802 + $0x6c] sm:$0xf]
        %v9831 = vld [vmem:[%s9802 + $0x70] sm:$0xf]
        %v9832 = vld [vmem:[%s9802 + $0x74] sm:$0xf]
        %v9833 = vld [vmem:[%s9802 + $0x78] sm:$0xf]
        %v9834 = vld [vmem:[%s9802 + $0x7c] sm:$0xf]
        %v9835 = vld [vmem:[%s9802 + $0x80] sm:$0xf]
        %v9836 = vld [vmem:[%s9802 + $0x84] sm:$0xf]
        %v9837 = vld [vmem:[%s9802 + $0x88] sm:$0xf]
        %v9838 = vld [vmem:[%s9802 + $0x8c] sm:$0xf]
        %v9839 = vld [vmem:[%s9802 + $0x90] sm:$0xf]
        %v9840 = vld [vmem:[%s9802 + $0x94] sm:$0xf]
        %v9841 = vld [vmem:[%s9802 + $0x98] sm:$0xf]
        %v9842 = vld [vmem:[%s9802 + $0x9c] sm:$0xf]
        %v9843 = vld [vmem:[%s9802 + $0xa0] sm:$0xf]
        %v9844 = vld [vmem:[%s9802 + $0xa4] sm:$0xf]
        %v9845 = vld [vmem:[%s9802 + $0xa8] sm:$0xf]
        %v9846 = vld [vmem:[%s9802 + $0xac] sm:$0xf]
        %v9847 = vld [vmem:[%s9802 + $0xb0] sm:$0xf]
        %v9848 = vld [vmem:[%s9802 + $0xb4] sm:$0xf]
        %v9849 = vld [vmem:[%s9802 + $0xb8] sm:$0xf]
        %v9850 = vld [vmem:[%s9802 + $0xbc] sm:$0xf]
        %v9851 = vld [vmem:[%s9802 + $0xc0] sm:$0xf]
        %v9852 = vld [vmem:[%s9802 + $0xc4] sm:$0xf]
        %v9853 = vld [vmem:[%s9802 + $0xc8] sm:$0xf]
        %v9854 = vld [vmem:[%s9802 + $0xcc] sm:$0xf]
        %v9855 = vld [vmem:[%s9802 + $0xd0] sm:$0xf]
        %v9856 = vld [vmem:[%s9802 + $0xd4] sm:$0xf]
        %v9857 = vld [vmem:[%s9802 + $0xd8] sm:$0xf]
        %v9858 = vld [vmem:[%s9802 + $0xdc] sm:$0xf]
        %v9859 = vld [vmem:[%s9802 + $0xe0] sm:$0xf]
        %v9860 = vld [vmem:[%s9802 + $0xe4] sm:$0xf]
        %v9861 = vld [vmem:[%s9802 + $0xe8] sm:$0xf]
        %v9862 = vld [vmem:[%s9802 + $0xec] sm:$0xf]
        %v9863 = vld [vmem:[%s9802 + $0xf0] sm:$0xf]
        %v9864 = vld [vmem:[%s9802 + $0xf4] sm:$0xf]
        %v9865 = vld [vmem:[%s9802 + $0xf8] sm:$0xf]
        %v9866 = vld [vmem:[%s9802 + $0xfc] sm:$0xf]
        %v9867 = vld [vmem:[%s9802 + $0x100] sm:$0xf]
        %v9868 = vld [vmem:[%s9802 + $0x104] sm:$0xf]
        %v9869 = vld [vmem:[%s9802 + $0x108] sm:$0xf]
        %v9870 = vld [vmem:[%s9802 + $0x10c] sm:$0xf]
        %v9871 = vld [vmem:[%s9802 + $0x110] sm:$0xf]
        %v9872 = vld [vmem:[%s9802 + $0x114] sm:$0xf]
        %v9873 = vld [vmem:[%s9802 + $0x118] sm:$0xf]
        %v9874 = vld [vmem:[%s9802 + $0x11c] sm:$0xf]
        %v9875 = vld [vmem:[%s9802 + $0x120] sm:$0xf]
        %v9876 = vld [vmem:[%s9802 + $0x124] sm:$0xf]
        %v9877 = vld [vmem:[%s9802 + $0x128] sm:$0xf]
        %v9878 = vld [vmem:[%s9802 + $0x12c] sm:$0xf]
        %v9879 = vld [vmem:[%s9802 + $0x130] sm:$0xf]
        %v9880 = vld [vmem:[%s9802 + $0x134] sm:$0xf]
        %v9881 = vld [vmem:[%s9802 + $0x138] sm:$0xf]
        %v9882 = vld [vmem:[%s9802 + $0x13c] sm:$0xf]
        %v9883 = vld [vmem:[%s9802 + $0x140] sm:$0xf]
        %v9884 = vld [vmem:[%s9802 + $0x144] sm:$0xf]
        %v9885 = vld [vmem:[%s9802 + $0x148] sm:$0xf]
        %v9886 = vld [vmem:[%s9802 + $0x14c] sm:$0xf]
        %v9887 = vld [vmem:[%s9802 + $0x150] sm:$0xf]
        %v9888 = vld [vmem:[%s9802 + $0x154] sm:$0xf]
        %v9889 = vld [vmem:[%s9802 + $0x158] sm:$0xf]
        %v9890 = vld [vmem:[%s9802 + $0x15c] sm:$0xf]
        %v9891 = vld [vmem:[%s9802 + $0x160] sm:$0xf]
        %v9892 = vld [vmem:[%s9802 + $0x164] sm:$0xf]
        %v9893 = vld [vmem:[%s9802 + $0x168] sm:$0xf]
        %v9894 = vld [vmem:[%s9802 + $0x16c] sm:$0xf]
        %v9895 = vld [vmem:[%s9802 + $0x170] sm:$0xf]
        %v9896 = vld [vmem:[%s9802 + $0x174] sm:$0xf]
        %v9897 = vld [vmem:[%s9802 + $0x178] sm:$0xf]
        %v9898 = vld [vmem:[%s9802 + $0x17c] sm:$0xf]
        %v9899 = vld [vmem:[%s9802 + $0x180] sm:$0xf]
        %v9900 = vld [vmem:[%s9802 + $0x184] sm:$0xf]
        %v9901 = vld [vmem:[%s9802 + $0x188] sm:$0xf]
        %v9902 = vld [vmem:[%s9802 + $0x18c] sm:$0xf]
        %v9903 = vld [vmem:[%s9802 + $0x190] sm:$0xf]
        %v9904 = vld [vmem:[%s9802 + $0x194] sm:$0xf]
        %v9905 = vld [vmem:[%s9802 + $0x198] sm:$0xf]
        %v9906 = vld [vmem:[%s9802 + $0x19c] sm:$0xf]
        %v9907 = vld [vmem:[%s9802 + $0x1a0] sm:$0xf]
        %v9908 = vld [vmem:[%s9802 + $0x1a4] sm:$0xf]
        %v9909 = vld [vmem:[%s9802 + $0x1a8] sm:$0xf]
        %v9910 = vld [vmem:[%s9802 + $0x1ac] sm:$0xf]
        %v9911 = vld [vmem:[%s9802 + $0x1b0] sm:$0xf]
        %v9912 = vld [vmem:[%s9802 + $0x1b4] sm:$0xf]
        %v9913 = vld [vmem:[%s9802 + $0x1b8] sm:$0xf]
        %v9914 = vld [vmem:[%s9802 + $0x1bc] sm:$0xf]
        %v9915 = vld [vmem:[%s9802 + $0x1c0] sm:$0xf]
        %v9916 = vld [vmem:[%s9802 + $0x1c4] sm:$0xf]
        %v9917 = vld [vmem:[%s9802 + $0x1c8] sm:$0xf]
        %v9918 = vld [vmem:[%s9802 + $0x1cc] sm:$0xf]
        %v9919 = vld [vmem:[%s9802 + $0x1d0] sm:$0xf]
        %v9920 = vld [vmem:[%s9802 + $0x1d4] sm:$0xf]
        %v9921 = vld [vmem:[%s9802 + $0x1d8] sm:$0xf]
        %v9922 = vld [vmem:[%s9802 + $0x1dc] sm:$0xf]
        %v9923 = vld [vmem:[%s9802 + $0x1e0] sm:$0xf]
        %v9924 = vld [vmem:[%s9802 + $0x1e4] sm:$0xf]
        %v9925 = vld [vmem:[%s9802 + $0x1e8] sm:$0xf]
        %v9926 = vld [vmem:[%s9802 + $0x1ec] sm:$0xf]
        %v9927 = vld [vmem:[%s9802 + $0x1f0] sm:$0xf]
        %v9928 = vld [vmem:[%s9802 + $0x1f4] sm:$0xf]
        %v9929 = vld [vmem:[%s9802 + $0x1f8] sm:$0xf]
        %v9930 = vld [vmem:[%s9802 + $0x1fc] sm:$0xf]
        %v9931 = vld [vmem:[%s9802 + $0x200] sm:$0xf]
        %v9932 = vld [vmem:[%s9802 + $0x204] sm:$0xf]
        %v9933 = vld [vmem:[%s9802 + $0x208] sm:$0xf]
        %v9934 = vld [vmem:[%s9802 + $0x20c] sm:$0xf]
        %v9935 = vld [vmem:[%s9802 + $0x210] sm:$0xf]
        %v9936 = vld [vmem:[%s9802 + $0x214] sm:$0xf]
        %v9937 = vld [vmem:[%s9802 + $0x218] sm:$0xf]
        %v9938 = vld [vmem:[%s9802 + $0x21c] sm:$0xf]
        %v9939 = vld [vmem:[%s9802 + $0x220] sm:$0xf]
        %v9940 = vld [vmem:[%s9802 + $0x224] sm:$0xf]
        %v9941 = vld [vmem:[%s9802 + $0x228] sm:$0xf]
        %v9942 = vld [vmem:[%s9802 + $0x22c] sm:$0xf]
        %v9943 = vld [vmem:[%s9802 + $0x230] sm:$0xf]
        %v9944 = vld [vmem:[%s9802 + $0x234] sm:$0xf]
        %v9945 = vld [vmem:[%s9802 + $0x238] sm:$0xf]
        %v9946 = vld [vmem:[%s9802 + $0x23c] sm:$0xf]
        %v9947 = vld [vmem:[%s9802 + $0x240] sm:$0xf]
        %v9948 = vld [vmem:[%s9802 + $0x244] sm:$0xf]
        %v9949 = vld [vmem:[%s9802 + $0x248] sm:$0xf]
        %v9950 = vld [vmem:[%s9802 + $0x24c] sm:$0xf]
        %v9951 = vld [vmem:[%s9802 + $0x250] sm:$0xf]
        %v9952 = vld [vmem:[%s9802 + $0x254] sm:$0xf]
        %v9953 = vld [vmem:[%s9802 + $0x258] sm:$0xf]
        %v9954 = vld [vmem:[%s9802 + $0x25c] sm:$0xf]
        %v9955 = vld [vmem:[%s9802 + $0x260] sm:$0xf]
        %v9956 = vld [vmem:[%s9802 + $0x264] sm:$0xf]
        %v9957 = vld [vmem:[%s9802 + $0x268] sm:$0xf]
        %v9958 = vld [vmem:[%s9802 + $0x26c] sm:$0xf]
        %v9959 = vld [vmem:[%s9802 + $0x270] sm:$0xf]
        %v9960 = vld [vmem:[%s9802 + $0x274] sm:$0xf]
        %v9961 = vld [vmem:[%s9802 + $0x278] sm:$0xf]
        %v9962 = vld [vmem:[%s9802 + $0x27c] sm:$0xf]
        %v9963 = vld [vmem:[%s9802 + $0x280] sm:$0xf]
        %v9964 = vld [vmem:[%s9802 + $0x284] sm:$0xf]
        %v9965 = vld [vmem:[%s9802 + $0x288] sm:$0xf]
        %v9966 = vld [vmem:[%s9802 + $0x28c] sm:$0xf]
        %v9967 = vld [vmem:[%s9802 + $0x290] sm:$0xf]
        %v9968 = vld [vmem:[%s9802 + $0x294] sm:$0xf]
        %v9969 = vld [vmem:[%s9802 + $0x298] sm:$0xf]
        %v9970 = vld [vmem:[%s9802 + $0x29c] sm:$0xf]
        %v9971 = vld [vmem:[%s9802 + $0x2a0] sm:$0xf]
        %v9972 = vld [vmem:[%s9802 + $0x2a4] sm:$0xf]
        %v9973 = vld [vmem:[%s9802 + $0x2a8] sm:$0xf]
        %v9974 = vld [vmem:[%s9802 + $0x2ac] sm:$0xf]
        %v9975 = vld [vmem:[%s9802 + $0x2b0] sm:$0xf]
        %v9976 = vld [vmem:[%s9802 + $0x2b4] sm:$0xf]
        %v9977 = vld [vmem:[%s9802 + $0x2b8] sm:$0xf]
        %v9978 = vld [vmem:[%s9802 + $0x2bc] sm:$0xf]
        %v9979 = vld [vmem:[%s9802 + $0x2c0] sm:$0xf]
        %v9980 = vld [vmem:[%s9802 + $0x2c4] sm:$0xf]
        %v9981 = vld [vmem:[%s9802 + $0x2c8] sm:$0xf]
        %v9982 = vld [vmem:[%s9802 + $0x2cc] sm:$0xf]
        %v9983 = vld [vmem:[%s9802 + $0x2d0] sm:$0xf]
        %v9984 = vld [vmem:[%s9802 + $0x2d4] sm:$0xf]
        %v9985 = vld [vmem:[%s9802 + $0x2d8] sm:$0xf]
        %v9986 = vld [vmem:[%s9802 + $0x2dc] sm:$0xf]
        %v9987 = vld [vmem:[%s9802 + $0x2e0] sm:$0xf]
        %v9988 = vld [vmem:[%s9802 + $0x2e4] sm:$0xf]
        %v9989 = vld [vmem:[%s9802 + $0x2e8] sm:$0xf]
        %v9990 = vld [vmem:[%s9802 + $0x2ec] sm:$0xf]
        %v9991 = vld [vmem:[%s9802 + $0x2f0] sm:$0xf]
        %v9992 = vld [vmem:[%s9802 + $0x2f4] sm:$0xf]
        %v9993 = vld [vmem:[%s9802 + $0x2f8] sm:$0xf]
        %v9994 = vld [vmem:[%s9802 + $0x2fc] sm:$0xf]
        %v10187 = vunpack.c.l.b16 %v9803
        %v10188 = vunpack.c.l.b16 %v9804
        %v10189 = vunpack.c.l.b16 %v9805
        %v10190 = vunpack.c.l.b16 %v9806
        %v10191 = vunpack.c.l.b16 %v9807
        %v10192 = vunpack.c.l.b16 %v9808
        %v10193 = vunpack.c.l.b16 %v9809
        %v10194 = vunpack.c.l.b16 %v9810
        %v10195 = vunpack.c.l.b16 %v9811
        %v10196 = vunpack.c.l.b16 %v9812
        %v10197 = vunpack.c.l.b16 %v9813
        %v10198 = vunpack.c.l.b16 %v9814
        %v10199 = vunpack.c.l.b16 %v9815
        %v10200 = vunpack.c.l.b16 %v9816
        %v10201 = vunpack.c.l.b16 %v9817
        %v10202 = vunpack.c.l.b16 %v9818
        %v10203 = vunpack.c.l.b16 %v9819
        %v10204 = vunpack.c.l.b16 %v9820
        %v10205 = vunpack.c.l.b16 %v9821
        %v10206 = vunpack.c.l.b16 %v9822
        %v10207 = vunpack.c.l.b16 %v9823
        %v10208 = vunpack.c.l.b16 %v9824
        %v10209 = vunpack.c.l.b16 %v9825
        %v10210 = vunpack.c.l.b16 %v9826
        %v10211 = vunpack.c.l.b16 %v9827
        %v10212 = vunpack.c.l.b16 %v9828
        %v10213 = vunpack.c.l.b16 %v9829
        %v10214 = vunpack.c.l.b16 %v9830
        %v10215 = vunpack.c.l.b16 %v9831
        %v10216 = vunpack.c.l.b16 %v9832
        %v10217 = vunpack.c.l.b16 %v9833
        %v10218 = vunpack.c.l.b16 %v9834
        %v10219 = vunpack.c.l.b16 %v9835
        %v10220 = vunpack.c.l.b16 %v9836
        %v10221 = vunpack.c.l.b16 %v9837
        %v10222 = vunpack.c.l.b16 %v9838
        %v10223 = vunpack.c.l.b16 %v9839
        %v10224 = vunpack.c.l.b16 %v9840
        %v10225 = vunpack.c.l.b16 %v9841
        %v10226 = vunpack.c.l.b16 %v9842
        %v10227 = vunpack.c.l.b16 %v9843
        %v10228 = vunpack.c.l.b16 %v9844
        %v10229 = vunpack.c.l.b16 %v9845
        %v10230 = vunpack.c.l.b16 %v9846
        %v10231 = vunpack.c.l.b16 %v9847
        %v10232 = vunpack.c.l.b16 %v9848
        %v10233 = vunpack.c.l.b16 %v9849
        %v10234 = vunpack.c.l.b16 %v9850
        %v10235 = vunpack.c.l.b16 %v9851
        %v10236 = vunpack.c.l.b16 %v9852
        %v10237 = vunpack.c.l.b16 %v9853
        %v10238 = vunpack.c.l.b16 %v9854
        %v10239 = vunpack.c.l.b16 %v9855
        %v10240 = vunpack.c.l.b16 %v9856
        %v10241 = vunpack.c.l.b16 %v9857
        %v10242 = vunpack.c.l.b16 %v9858
        %v10243 = vunpack.c.l.b16 %v9859
        %v10244 = vunpack.c.l.b16 %v9860
        %v10245 = vunpack.c.l.b16 %v9861
        %v10246 = vunpack.c.l.b16 %v9862
        %v10247 = vunpack.c.l.b16 %v9863
        %v10248 = vunpack.c.l.b16 %v9864
        %v10249 = vunpack.c.l.b16 %v9865
        %v10250 = vunpack.c.l.b16 %v9866
        %v10251 = vunpack.c.l.b16 %v9867
        %v10252 = vunpack.c.l.b16 %v9868
        %v10253 = vunpack.c.l.b16 %v9869
        %v10254 = vunpack.c.l.b16 %v9870
        %v10255 = vunpack.c.l.b16 %v9871
        %v10256 = vunpack.c.l.b16 %v9872
        %v10257 = vunpack.c.l.b16 %v9873
        %v10258 = vunpack.c.l.b16 %v9874
        %v10259 = vunpack.c.l.b16 %v9875
        %v10260 = vunpack.c.l.b16 %v9876
        %v10261 = vunpack.c.l.b16 %v9877
        %v10262 = vunpack.c.l.b16 %v9878
        %v10263 = vunpack.c.l.b16 %v9879
        %v10264 = vunpack.c.l.b16 %v9880
        %v10265 = vunpack.c.l.b16 %v9881
        %v10266 = vunpack.c.l.b16 %v9882
        %v10267 = vunpack.c.l.b16 %v9883
        %v10268 = vunpack.c.l.b16 %v9884
        %v10269 = vunpack.c.l.b16 %v9885
        %v10270 = vunpack.c.l.b16 %v9886
        %v10271 = vunpack.c.l.b16 %v9887
        %v10272 = vunpack.c.l.b16 %v9888
        %v10273 = vunpack.c.l.b16 %v9889
        %v10274 = vunpack.c.l.b16 %v9890
        %v10275 = vunpack.c.l.b16 %v9891
        %v10276 = vunpack.c.l.b16 %v9892
        %v10277 = vunpack.c.l.b16 %v9893
        %v10278 = vunpack.c.l.b16 %v9894
        %v10279 = vunpack.c.l.b16 %v9895
        %v10280 = vunpack.c.l.b16 %v9896
        %v10281 = vunpack.c.l.b16 %v9897
        %v10282 = vunpack.c.l.b16 %v9898
        %v10283 = vunpack.c.l.b16 %v9899
        %v10284 = vunpack.c.l.b16 %v9900
        %v10285 = vunpack.c.l.b16 %v9901
        %v10286 = vunpack.c.l.b16 %v9902
        %v10287 = vunpack.c.l.b16 %v9903
        %v10288 = vunpack.c.l.b16 %v9904
        %v10289 = vunpack.c.l.b16 %v9905
        %v10290 = vunpack.c.l.b16 %v9906
        %v10291 = vunpack.c.l.b16 %v9907
        %v10292 = vunpack.c.l.b16 %v9908
        %v10293 = vunpack.c.l.b16 %v9909
        %v10294 = vunpack.c.l.b16 %v9910
        %v10295 = vunpack.c.l.b16 %v9911
        %v10296 = vunpack.c.l.b16 %v9912
        %v10297 = vunpack.c.l.b16 %v9913
        %v10298 = vunpack.c.l.b16 %v9914
        %v10299 = vunpack.c.l.b16 %v9915
        %v10300 = vunpack.c.l.b16 %v9916
        %v10301 = vunpack.c.l.b16 %v9917
        %v10302 = vunpack.c.l.b16 %v9918
        %v10303 = vunpack.c.l.b16 %v9919
        %v10304 = vunpack.c.l.b16 %v9920
        %v10305 = vunpack.c.l.b16 %v9921
        %v10306 = vunpack.c.l.b16 %v9922
        %v10307 = vunpack.c.l.b16 %v9923
        %v10308 = vunpack.c.l.b16 %v9924
        %v10309 = vunpack.c.l.b16 %v9925
        %v10310 = vunpack.c.l.b16 %v9926
        %v10311 = vunpack.c.l.b16 %v9927
        %v10312 = vunpack.c.l.b16 %v9928
        %v10313 = vunpack.c.l.b16 %v9929
        %v10314 = vunpack.c.l.b16 %v9930
        %v10315 = vunpack.c.l.b16 %v9931
        %v10316 = vunpack.c.l.b16 %v9932
        %v10317 = vunpack.c.l.b16 %v9933
        %v10318 = vunpack.c.l.b16 %v9934
        %v10319 = vunpack.c.l.b16 %v9935
        %v10320 = vunpack.c.l.b16 %v9936
        %v10321 = vunpack.c.l.b16 %v9937
        %v10322 = vunpack.c.l.b16 %v9938
        %v10323 = vunpack.c.l.b16 %v9939
        %v10324 = vunpack.c.l.b16 %v9940
        %v10325 = vunpack.c.l.b16 %v9941
        %v10326 = vunpack.c.l.b16 %v9942
        %v10327 = vunpack.c.l.b16 %v9943
        %v10328 = vunpack.c.l.b16 %v9944
        %v10329 = vunpack.c.l.b16 %v9945
        %v10330 = vunpack.c.l.b16 %v9946
        %v10331 = vunpack.c.l.b16 %v9947
        %v10332 = vunpack.c.l.b16 %v9948
        %v10333 = vunpack.c.l.b16 %v9949
        %v10334 = vunpack.c.l.b16 %v9950
        %v10335 = vunpack.c.l.b16 %v9951
        %v10336 = vunpack.c.l.b16 %v9952
        %v10337 = vunpack.c.l.b16 %v9953
        %v10338 = vunpack.c.l.b16 %v9954
        %v10339 = vunpack.c.l.b16 %v9955
        %v10340 = vunpack.c.l.b16 %v9956
        %v10341 = vunpack.c.l.b16 %v9957
        %v10342 = vunpack.c.l.b16 %v9958
        %v10343 = vunpack.c.l.b16 %v9959
        %v10344 = vunpack.c.l.b16 %v9960
        %v10345 = vunpack.c.l.b16 %v9961
        %v10346 = vunpack.c.l.b16 %v9962
        %v10347 = vunpack.c.l.b16 %v9963
        %v10348 = vunpack.c.l.b16 %v9964
        %v10349 = vunpack.c.l.b16 %v9965
        %v10350 = vunpack.c.l.b16 %v9966
        %v10351 = vunpack.c.l.b16 %v9967
        %v10352 = vunpack.c.l.b16 %v9968
        %v10353 = vunpack.c.l.b16 %v9969
        %v10354 = vunpack.c.l.b16 %v9970
        %v10355 = vunpack.c.l.b16 %v9971
        %v10356 = vunpack.c.l.b16 %v9972
        %v10357 = vunpack.c.l.b16 %v9973
        %v10358 = vunpack.c.l.b16 %v9974
        %v10359 = vunpack.c.l.b16 %v9975
        %v10360 = vunpack.c.l.b16 %v9976
        %v10361 = vunpack.c.l.b16 %v9977
        %v10362 = vunpack.c.l.b16 %v9978
        %v10363 = vunpack.c.l.b16 %v9979
        %v10364 = vunpack.c.l.b16 %v9980
        %v10365 = vunpack.c.l.b16 %v9981
        %v10366 = vunpack.c.l.b16 %v9982
        %v10367 = vunpack.c.l.b16 %v9983
        %v10368 = vunpack.c.l.b16 %v9984
        %v10369 = vunpack.c.l.b16 %v9985
        %v10370 = vunpack.c.l.b16 %v9986
        %v10371 = vunpack.c.l.b16 %v9987
        %v10372 = vunpack.c.l.b16 %v9988
        %v10373 = vunpack.c.l.b16 %v9989
        %v10374 = vunpack.c.l.b16 %v9990
        %v10375 = vunpack.c.l.b16 %v9991
        %v10376 = vunpack.c.l.b16 %v9992
        %v10377 = vunpack.c.l.b16 %v9993
        %v10378 = vunpack.c.l.b16 %v9994
        %v10379 = vpack.c.b16 %v10188, %v10187
        %v10380 = vpack.c.b16 %v10190, %v10189
        %v10381 = vpack.c.b16 %v10192, %v10191
        %v10382 = vpack.c.b16 %v10194, %v10193
        %v10383 = vpack.c.b16 %v10196, %v10195
        %v10384 = vpack.c.b16 %v10198, %v10197
        %v10385 = vpack.c.b16 %v10200, %v10199
        %v10386 = vpack.c.b16 %v10202, %v10201
        %v10387 = vpack.c.b16 %v10204, %v10203
        %v10388 = vpack.c.b16 %v10206, %v10205
        %v10389 = vpack.c.b16 %v10208, %v10207
        %v10390 = vpack.c.b16 %v10210, %v10209
        %v10391 = vpack.c.b16 %v10212, %v10211
        %v10392 = vpack.c.b16 %v10214, %v10213
        %v10393 = vpack.c.b16 %v10216, %v10215
        %v10394 = vpack.c.b16 %v10218, %v10217
        %v10395 = vpack.c.b16 %v10220, %v10219
        %v10396 = vpack.c.b16 %v10222, %v10221
        %v10397 = vpack.c.b16 %v10224, %v10223
        %v10398 = vpack.c.b16 %v10226, %v10225
        %v10399 = vpack.c.b16 %v10228, %v10227
        %v10400 = vpack.c.b16 %v10230, %v10229
        %v10401 = vpack.c.b16 %v10232, %v10231
        %v10402 = vpack.c.b16 %v10234, %v10233
        %v10403 = vpack.c.b16 %v10236, %v10235
        %v10404 = vpack.c.b16 %v10238, %v10237
        %v10405 = vpack.c.b16 %v10240, %v10239
        %v10406 = vpack.c.b16 %v10242, %v10241
        %v10407 = vpack.c.b16 %v10244, %v10243
        %v10408 = vpack.c.b16 %v10246, %v10245
        %v10409 = vpack.c.b16 %v10248, %v10247
        %v10410 = vpack.c.b16 %v10250, %v10249
        %v10411 = vpack.c.b16 %v10252, %v10251
        %v10412 = vpack.c.b16 %v10254, %v10253
        %v10413 = vpack.c.b16 %v10256, %v10255
        %v10414 = vpack.c.b16 %v10258, %v10257
        %v10415 = vpack.c.b16 %v10260, %v10259
        %v10416 = vpack.c.b16 %v10262, %v10261
        %v10417 = vpack.c.b16 %v10264, %v10263
        %v10418 = vpack.c.b16 %v10266, %v10265
        %v10419 = vpack.c.b16 %v10268, %v10267
        %v10420 = vpack.c.b16 %v10270, %v10269
        %v10421 = vpack.c.b16 %v10272, %v10271
        %v10422 = vpack.c.b16 %v10274, %v10273
        %v10423 = vpack.c.b16 %v10276, %v10275
        %v10424 = vpack.c.b16 %v10278, %v10277
        %v10425 = vpack.c.b16 %v10280, %v10279
        %v10426 = vpack.c.b16 %v10282, %v10281
        %v10427 = vpack.c.b16 %v10284, %v10283
        %v10428 = vpack.c.b16 %v10286, %v10285
        %v10429 = vpack.c.b16 %v10288, %v10287
        %v10430 = vpack.c.b16 %v10290, %v10289
        %v10431 = vpack.c.b16 %v10292, %v10291
        %v10432 = vpack.c.b16 %v10294, %v10293
        %v10433 = vpack.c.b16 %v10296, %v10295
        %v10434 = vpack.c.b16 %v10298, %v10297
        %v10435 = vpack.c.b16 %v10300, %v10299
        %v10436 = vpack.c.b16 %v10302, %v10301
        %v10437 = vpack.c.b16 %v10304, %v10303
        %v10438 = vpack.c.b16 %v10306, %v10305
        %v10439 = vpack.c.b16 %v10308, %v10307
        %v10440 = vpack.c.b16 %v10310, %v10309
        %v10441 = vpack.c.b16 %v10312, %v10311
        %v10442 = vpack.c.b16 %v10314, %v10313
        %v10443 = vpack.c.b16 %v10316, %v10315
        %v10444 = vpack.c.b16 %v10318, %v10317
        %v10445 = vpack.c.b16 %v10320, %v10319
        %v10446 = vpack.c.b16 %v10322, %v10321
        %v10447 = vpack.c.b16 %v10324, %v10323
        %v10448 = vpack.c.b16 %v10326, %v10325
        %v10449 = vpack.c.b16 %v10328, %v10327
        %v10450 = vpack.c.b16 %v10330, %v10329
        %v10451 = vpack.c.b16 %v10332, %v10331
        %v10452 = vpack.c.b16 %v10334, %v10333
        %v10453 = vpack.c.b16 %v10336, %v10335
        %v10454 = vpack.c.b16 %v10338, %v10337
        %v10455 = vpack.c.b16 %v10340, %v10339
        %v10456 = vpack.c.b16 %v10342, %v10341
        %v10457 = vpack.c.b16 %v10344, %v10343
        %v10458 = vpack.c.b16 %v10346, %v10345
        %v10459 = vpack.c.b16 %v10348, %v10347
        %v10460 = vpack.c.b16 %v10350, %v10349
        %v10461 = vpack.c.b16 %v10352, %v10351
        %v10462 = vpack.c.b16 %v10354, %v10353
        %v10463 = vpack.c.b16 %v10356, %v10355
        %v10464 = vpack.c.b16 %v10358, %v10357
        %v10465 = vpack.c.b16 %v10360, %v10359
        %v10466 = vpack.c.b16 %v10362, %v10361
        %v10467 = vpack.c.b16 %v10364, %v10363
        %v10468 = vpack.c.b16 %v10366, %v10365
        %v10469 = vpack.c.b16 %v10368, %v10367
        %v10470 = vpack.c.b16 %v10370, %v10369
        %v10471 = vpack.c.b16 %v10372, %v10371
        %v10472 = vpack.c.b16 %v10374, %v10373
        %v10473 = vpack.c.b16 %v10376, %v10375
        %v10474 = vpack.c.b16 %v10378, %v10377
        %10571 = vmatprep.subr.bf16.mxu0 0
        %10572 = vmatpush1.bf16.msra.mxu0 %v10379
        %10573 = vmatprep.subr.bf16.mxu0 0
        %10574 = vmatpush1.bf16.msra.mxu0 %v10380
        %10575 = vmatprep.subr.bf16.mxu0 0
        %10576 = vmatpush1.bf16.msra.mxu0 %v10381
        %10577 = vmatprep.subr.bf16.mxu0 0
        %10578 = vmatpush1.bf16.msra.mxu0 %v10382
        %10579 = vmatprep.subr.bf16.mxu0 0
        %10580 = vmatpush1.bf16.msra.mxu0 %v10383
        %10581 = vmatprep.subr.bf16.mxu0 0
        %10582 = vmatpush1.bf16.msra.mxu0 %v10384
        %10583 = vmatprep.subr.bf16.mxu0 0
        %10584 = vmatpush1.bf16.msra.mxu0 %v10385
        %10585 = vmatprep.subr.bf16.mxu0 0
        %10586 = vmatpush1.bf16.msra.mxu0 %v10386
        %10587 = vmatprep.subr.bf16.mxu0 0
        %10588 = vmatpush1.bf16.msra.mxu0 %v10387
        %10589 = vmatprep.subr.bf16.mxu0 0
        %10590 = vmatpush1.bf16.msra.mxu0 %v10388
        %10591 = vmatprep.subr.bf16.mxu0 0
        %10592 = vmatpush1.bf16.msra.mxu0 %v10389
        %10593 = vmatprep.subr.bf16.mxu0 0
        %10594 = vmatpush1.bf16.msra.mxu0 %v10390
        %10595 = vmatprep.subr.bf16.mxu0 0
        %10596 = vmatpush1.bf16.msra.mxu0 %v10391
        %10597 = vmatprep.subr.bf16.mxu0 0
        %10598 = vmatpush1.bf16.msra.mxu0 %v10392
        %10599 = vmatprep.subr.bf16.mxu0 0
        %10600 = vmatpush1.bf16.msra.mxu0 %v10393
        %10601 = vmatprep.subr.bf16.mxu0 0
        %10602 = vmatpush1.bf16.msra.mxu0 %v10394
        %10603 = vmatprep.mubr.bf16.mxu0 %v9707
        %10604 = vmatmul.mubr.bf16.gmra.mrb[0].mxu0 %v9706
        %v10605 = vpop.f32.mrb[0].mxu0
        %v10606 = vadd.f32 0.0, %v10605
        %v10607 = vpop.f32.mrb[0].mxu0
        %v10608 = vpop.f32.mrb[0].mxu0
        %v10609 = vadd.f32 0.0, %v10608
        %v10610 = vpop.f32.mrb[0].mxu0
        %10611 = vmatprep.mubr.bf16.mxu0 %v9719
        %10612 = vmatmul.mubr.bf16.gmra.mrb[0].mxu0 %v9718
        %v10613 = vpop.f32.mrb[0].mxu0
        %v10614 = vadd.f32 0.0, %v10613
        %v10615 = vpop.f32.mrb[0].mxu0
        %v10616 = vpop.f32.mrb[0].mxu0
        %v10617 = vadd.f32 0.0, %v10616
        %v10618 = vpop.f32.mrb[0].mxu0
        %10619 = vmatprep.mubr.bf16.mxu0 %v9731
        %10620 = vmatmul.mubr.bf16.gmra.mrb[0].mxu0 %v9730
        %v10621 = vpop.f32.mrb[0].mxu0
        %v10622 = vadd.f32 0.0, %v10621
        %v10623 = vpop.f32.mrb[0].mxu0
        %v10624 = vpop.f32.mrb[0].mxu0
        %v10625 = vadd.f32 0.0, %v10624
        %v10626 = vpop.f32.mrb[0].mxu0
        %10627 = vmatprep.mubr.bf16.mxu0 %v9743
        %10628 = vmatmul.mubr.bf16.gmra.mrb[0].mxu0 %v9742
        %v10629 = vpop.f32.mrb[0].mxu0
        %v10630 = vadd.f32 0.0, %v10629
        %v10631 = vpop.f32.mrb[0].mxu0
        %v10632 = vpop.f32.mrb[0].mxu0
        %v10633 = vadd.f32 0.0, %v10632
        %v10634 = vpop.f32.mrb[0].mxu0
        %10635 = vmatprep.mubr.bf16.mxu0 %v9755
        %10636 = vmatmul.mubr.bf16.gmra.mrb[0].mxu0 %v9754
        %v10637 = vpop.f32.mrb[0].mxu0
        %v10638 = vadd.f32 0.0, %v10637
        %v10639 = vpop.f32.mrb[0].mxu0
        %v10640 = vpop.f32.mrb[0].mxu0
        %v10641 = vadd.f32 0.0, %v10640
        %v10642 = vpop.f32.mrb[0].mxu0
        %10643 = vmatprep.mubr.bf16.mxu0 %v9767
        %10644 = vmatmul.mubr.bf16.gmra.mrb[0].mxu0 %v9766
        %v10645 = vpop.f32.mrb[0].mxu0
        %v10646 = vadd.f32 0.0, %v10645
        %v10647 = vpop.f32.mrb[0].mxu0
        %v10648 = vpop.f32.mrb[0].mxu0
        %v10649 = vadd.f32 0.0, %v10648
        %v10650 = vpop.f32.mrb[0].mxu0
        %10651 = vmatprep.mubr.bf16.mxu0 %v9779
        %10652 = vmatmul.mubr.bf16.gmra.mrb[0].mxu0 %v9778
        %v10653 = vpop.f32.mrb[0].mxu0
        %v10654 = vadd.f32 0.0, %v10653
        %v10655 = vpop.f32.mrb[0].mxu0
        %v10656 = vpop.f32.mrb[0].mxu0
        %v10657 = vadd.f32 0.0, %v10656
        %v10658 = vpop.f32.mrb[0].mxu0
        %10659 = vmatprep.mubr.bf16.mxu0 %v9791
        %10660 = vmatmul.mubr.bf16.gmra.mrb[0].mxu0 %v9790
        %v10661 = vpop.f32.mrb[0].mxu0
        %v10662 = vadd.f32 0.0, %v10661
        %v10663 = vpop.f32.mrb[0].mxu0
        %v10664 = vpop.f32.mrb[0].mxu0
        %v10665 = vadd.f32 0.0, %v10664
        %v10666 = vpop.f32.mrb[0].mxu0
        %10667 = vdwg.mxu0
        %10668 = vmatprep.subr.bf16.mxu0 0
        %10669 = vmatpush1.bf16.msra.mxu0 %v10395
        %10670 = vmatprep.subr.bf16.mxu0 0
        %10671 = vmatpush1.bf16.msra.mxu0 %v10396
        %10672 = vmatprep.subr.bf16.mxu0 0
        %10673 = vmatpush1.bf16.msra.mxu0 %v10397
        %10674 = vmatprep.subr.bf16.mxu0 0
        %10675 = vmatpush1.bf16.msra.mxu0 %v10398
        %10676 = vmatprep.subr.bf16.mxu0 0
        %10677 = vmatpush1.bf16.msra.mxu0 %v10399
        %10678 = vmatprep.subr.bf16.mxu0 0
        %10679 = vmatpush1.bf16.msra.mxu0 %v10400
        %10680 = vmatprep.subr.bf16.mxu0 0
        %10681 = vmatpush1.bf16.msra.mxu0 %v10401
        %10682 = vmatprep.subr.bf16.mxu0 0
        %10683 = vmatpush1.bf16.msra.mxu0 %v10402
        %10684 = vmatprep.subr.bf16.mxu0 0
        %10685 = vmatpush1.bf16.msra.mxu0 %v10403
        %10686 = vmatprep.subr.bf16.mxu0 0
        %10687 = vmatpush1.bf16.msra.mxu0 %v10404
        %10688 = vmatprep.subr.bf16.mxu0 0
        %10689 = vmatpush1.bf16.msra.mxu0 %v10405
        %10690 = vmatprep.subr.bf16.mxu0 0
        %10691 = vmatpush1.bf16.msra.mxu0 %v10406
        %10692 = vmatprep.subr.bf16.mxu0 0
        %10693 = vmatpush1.bf16.msra.mxu0 %v10407
        %10694 = vmatprep.subr.bf16.mxu0 0
        %10695 = vmatpush1.bf16.msra.mxu0 %v10408
        %10696 = vmatprep.subr.bf16.mxu0 0
        %10697 = vmatpush1.bf16.msra.mxu0 %v10409
        %10698 = vmatprep.subr.bf16.mxu0 0
        %10699 = vmatpush1.bf16.msra.mxu0 %v10410
        %10700 = vmatprep.mubr.bf16.mxu0 %v9709
        %10701 = vmatmul.mubr.bf16.gmra.mrb[0].mxu0 %v9708
        %v10702 = vpop.f32.mrb[0].mxu0
        %v10703 = vadd.f32 %v10606, %v10702
        %v10704 = vpop.f32.mrb[0].mxu0
        %v10705 = vpop.f32.mrb[0].mxu0
        %v10706 = vadd.f32 %v10609, %v10705
        %v10707 = vpop.f32.mrb[0].mxu0
        %10708 = vmatprep.mubr.bf16.mxu0 %v9721
        %10709 = vmatmul.mubr.bf16.gmra.mrb[0].mxu0 %v9720
        %v10710 = vpop.f32.mrb[0].mxu0
        %v10711 = vadd.f32 %v10614, %v10710
        %v10712 = vpop.f32.mrb[0].mxu0
        %v10713 = vpop.f32.mrb[0].mxu0
        %v10714 = vadd.f32 %v10617, %v10713
        %v10715 = vpop.f32.mrb[0].mxu0
        %10716 = vmatprep.mubr.bf16.mxu0 %v9733
        %10717 = vmatmul.mubr.bf16.gmra.mrb[0].mxu0 %v9732
        %v10718 = vpop.f32.mrb[0].mxu0
        %v10719 = vadd.f32 %v10622, %v10718
        %v10720 = vpop.f32.mrb[0].mxu0
        %v10721 = vpop.f32.mrb[0].mxu0
        %v10722 = vadd.f32 %v10625, %v10721
        %v10723 = vpop.f32.mrb[0].mxu0
        %10724 = vmatprep.mubr.bf16.mxu0 %v9745
        %10725 = vmatmul.mubr.bf16.gmra.mrb[0].mxu0 %v9744
        %v10726 = vpop.f32.mrb[0].mxu0
        %v10727 = vadd.f32 %v10630, %v10726
        %v10728 = vpop.f32.mrb[0].mxu0
        %v10729 = vpop.f32.mrb[0].mxu0
        %v10730 = vadd.f32 %v10633, %v10729
        %v10731 = vpop.f32.mrb[0].mxu0
        %10732 = vmatprep.mubr.bf16.mxu0 %v9757
        %10733 = vmatmul.mubr.bf16.gmra.mrb[0].mxu0 %v9756
        %v10734 = vpop.f32.mrb[0].mxu0
        %v10735 = vadd.f32 %v10638, %v10734
        %v10736 = vpop.f32.mrb[0].mxu0
        %v10737 = vpop.f32.mrb[0].mxu0
        %v10738 = vadd.f32 %v10641, %v10737
        %v10739 = vpop.f32.mrb[0].mxu0
        %10740 = vmatprep.mubr.bf16.mxu0 %v9769
        %10741 = vmatmul.mubr.bf16.gmra.mrb[0].mxu0 %v9768
        %v10742 = vpop.f32.mrb[0].mxu0
        %v10743 = vadd.f32 %v10646, %v10742
        %v10744 = vpop.f32.mrb[0].mxu0
        %v10745 = vpop.f32.mrb[0].mxu0
        %v10746 = vadd.f32 %v10649, %v10745
        %v10747 = vpop.f32.mrb[0].mxu0
        %10748 = vmatprep.mubr.bf16.mxu0 %v9781
        %10749 = vmatmul.mubr.bf16.gmra.mrb[0].mxu0 %v9780
        %v10750 = vpop.f32.mrb[0].mxu0
        %v10751 = vadd.f32 %v10654, %v10750
        %v10752 = vpop.f32.mrb[0].mxu0
        %v10753 = vpop.f32.mrb[0].mxu0
        %v10754 = vadd.f32 %v10657, %v10753
        %v10755 = vpop.f32.mrb[0].mxu0
        %10756 = vmatprep.mubr.bf16.mxu0 %v9793
        %10757 = vmatmul.mubr.bf16.gmra.mrb[0].mxu0 %v9792
        %v10758 = vpop.f32.mrb[0].mxu0
        %v10759 = vadd.f32 %v10662, %v10758
        %v10760 = vpop.f32.mrb[0].mxu0
        %v10761 = vpop.f32.mrb[0].mxu0
        %v10762 = vadd.f32 %v10665, %v10761
        %v10763 = vpop.f32.mrb[0].mxu0
        %10764 = vdwg.mxu0
        %10765 = vmatprep.subr.bf16.mxu0 0
        %10766 = vmatpush1.bf16.msra.mxu0 %v10411
        %10767 = vmatprep.subr.bf16.mxu0 0
        %10768 = vmatpush1.bf16.msra.mxu0 %v10412
        %10769 = vmatprep.subr.bf16.mxu0 0
        %10770 = vmatpush1.bf16.msra.mxu0 %v10413
        %10771 = vmatprep.subr.bf16.mxu0 0
        %10772 = vmatpush1.bf16.msra.mxu0 %v10414
        %10773 = vmatprep.subr.bf16.mxu0 0
        %10774 = vmatpush1.bf16.msra.mxu0 %v10415
        %10775 = vmatprep.subr.bf16.mxu0 0
        %10776 = vmatpush1.bf16.msra.mxu0 %v10416
        %10777 = vmatprep.subr.bf16.mxu0 0
        %10778 = vmatpush1.bf16.msra.mxu0 %v10417
        %10779 = vmatprep.subr.bf16.mxu0 0
        %10780 = vmatpush1.bf16.msra.mxu0 %v10418
        %10781 = vmatprep.subr.bf16.mxu0 0
        %10782 = vmatpush1.bf16.msra.mxu0 %v10419
        %10783 = vmatprep.subr.bf16.mxu0 0
        %10784 = vmatpush1.bf16.msra.mxu0 %v10420
        %10785 = vmatprep.subr.bf16.mxu0 0
        %10786 = vmatpush1.bf16.msra.mxu0 %v10421
        %10787 = vmatprep.subr.bf16.mxu0 0
        %10788 = vmatpush1.bf16.msra.mxu0 %v10422
        %10789 = vmatprep.subr.bf16.mxu0 0
        %10790 = vmatpush1.bf16.msra.mxu0 %v10423
        %10791 = vmatprep.subr.bf16.mxu0 0
        %10792 = vmatpush1.bf16.msra.mxu0 %v10424
        %10793 = vmatprep.subr.bf16.mxu0 0
        %10794 = vmatpush1.bf16.msra.mxu0 %v10425
        %10795 = vmatprep.subr.bf16.mxu0 0
        %10796 = vmatpush1.bf16.msra.mxu0 %v10426
        %10797 = vmatprep.mubr.bf16.mxu0 %v9711
        %10798 = vmatmul.mubr.bf16.gmra.mrb[0].mxu0 %v9710
        %v10799 = vpop.f32.mrb[0].mxu0
        %v10800 = vadd.f32 %v10703, %v10799
        %v10801 = vpop.f32.mrb[0].mxu0
        %v10802 = vpop.f32.mrb[0].mxu0
        %v10803 = vadd.f32 %v10706, %v10802
        %v10804 = vpop.f32.mrb[0].mxu0
        %10805 = vmatprep.mubr.bf16.mxu0 %v9723
        %10806 = vmatmul.mubr.bf16.gmra.mrb[0].mxu0 %v9722
        %v10807 = vpop.f32.mrb[0].mxu0
        %v10808 = vadd.f32 %v10711, %v10807
        %v10809 = vpop.f32.mrb[0].mxu0
        %v10810 = vpop.f32.mrb[0].mxu0
        %v10811 = vadd.f32 %v10714, %v10810
        %v10812 = vpop.f32.mrb[0].mxu0
        %10813 = vmatprep.mubr.bf16.mxu0 %v9735
        %10814 = vmatmul.mubr.bf16.gmra.mrb[0].mxu0 %v9734
        %v10815 = vpop.f32.mrb[0].mxu0
        %v10816 = vadd.f32 %v10719, %v10815
        %v10817 = vpop.f32.mrb[0].mxu0
        %v10818 = vpop.f32.mrb[0].mxu0
        %v10819 = vadd.f32 %v10722, %v10818
        %v10820 = vpop.f32.mrb[0].mxu0
        %10821 = vmatprep.mubr.bf16.mxu0 %v9747
        %10822 = vmatmul.mubr.bf16.gmra.mrb[0].mxu0 %v9746
        %v10823 = vpop.f32.mrb[0].mxu0
        %v10824 = vadd.f32 %v10727, %v10823
        %v10825 = vpop.f32.mrb[0].mxu0
        %v10826 = vpop.f32.mrb[0].mxu0
        %v10827 = vadd.f32 %v10730, %v10826
        %v10828 = vpop.f32.mrb[0].mxu0
        %10829 = vmatprep.mubr.bf16.mxu0 %v9759
        %10830 = vmatmul.mubr.bf16.gmra.mrb[0].mxu0 %v9758
        %v10831 = vpop.f32.mrb[0].mxu0
        %v10832 = vadd.f32 %v10735, %v10831
        %v10833 = vpop.f32.mrb[0].mxu0
        %v10834 = vpop.f32.mrb[0].mxu0
        %v10835 = vadd.f32 %v10738, %v10834
        %v10836 = vpop.f32.mrb[0].mxu0
        %10837 = vmatprep.mubr.bf16.mxu0 %v9771
        %10838 = vmatmul.mubr.bf16.gmra.mrb[0].mxu0 %v9770
        %v10839 = vpop.f32.mrb[0].mxu0
        %v10840 = vadd.f32 %v10743, %v10839
        %v10841 = vpop.f32.mrb[0].mxu0
        %v10842 = vpop.f32.mrb[0].mxu0
        %v10843 = vadd.f32 %v10746, %v10842
        %v10844 = vpop.f32.mrb[0].mxu0
        %10845 = vmatprep.mubr.bf16.mxu0 %v9783
        %10846 = vmatmul.mubr.bf16.gmra.mrb[0].mxu0 %v9782
        %v10847 = vpop.f32.mrb[0].mxu0
        %v10848 = vadd.f32 %v10751, %v10847
        %v10849 = vpop.f32.mrb[0].mxu0
        %v10850 = vpop.f32.mrb[0].mxu0
        %v10851 = vadd.f32 %v10754, %v10850
        %v10852 = vpop.f32.mrb[0].mxu0
        %10853 = vmatprep.mubr.bf16.mxu0 %v9795
        %10854 = vmatmul.mubr.bf16.gmra.mrb[0].mxu0 %v9794
        %v10855 = vpop.f32.mrb[0].mxu0
        %v10856 = vadd.f32 %v10759, %v10855
        %v10857 = vpop.f32.mrb[0].mxu0
        %v10858 = vpop.f32.mrb[0].mxu0
        %v10859 = vadd.f32 %v10762, %v10858
        %v10860 = vpop.f32.mrb[0].mxu0
        %10861 = vdwg.mxu0
        %10862 = vmatprep.subr.bf16.mxu0 0
        %10863 = vmatpush1.bf16.msra.mxu0 %v10427
        %10864 = vmatprep.subr.bf16.mxu0 0
        %10865 = vmatpush1.bf16.msra.mxu0 %v10428
        %10866 = vmatprep.subr.bf16.mxu0 0
        %10867 = vmatpush1.bf16.msra.mxu0 %v10429
        %10868 = vmatprep.subr.bf16.mxu0 0
        %10869 = vmatpush1.bf16.msra.mxu0 %v10430
        %10870 = vmatprep.subr.bf16.mxu0 0
        %10871 = vmatpush1.bf16.msra.mxu0 %v10431
        %10872 = vmatprep.subr.bf16.mxu0 0
        %10873 = vmatpush1.bf16.msra.mxu0 %v10432
        %10874 = vmatprep.subr.bf16.mxu0 0
        %10875 = vmatpush1.bf16.msra.mxu0 %v10433
        %10876 = vmatprep.subr.bf16.mxu0 0
        %10877 = vmatpush1.bf16.msra.mxu0 %v10434
        %10878 = vmatprep.subr.bf16.mxu0 0
        %10879 = vmatpush1.bf16.msra.mxu0 %v10435
        %10880 = vmatprep.subr.bf16.mxu0 0
        %10881 = vmatpush1.bf16.msra.mxu0 %v10436
        %10882 = vmatprep.subr.bf16.mxu0 0
        %10883 = vmatpush1.bf16.msra.mxu0 %v10437
        %10884 = vmatprep.subr.bf16.mxu0 0
        %10885 = vmatpush1.bf16.msra.mxu0 %v10438
        %10886 = vmatprep.subr.bf16.mxu0 0
        %10887 = vmatpush1.bf16.msra.mxu0 %v10439
        %10888 = vmatprep.subr.bf16.mxu0 0
        %10889 = vmatpush1.bf16.msra.mxu0 %v10440
        %10890 = vmatprep.subr.bf16.mxu0 0
        %10891 = vmatpush1.bf16.msra.mxu0 %v10441
        %10892 = vmatprep.subr.bf16.mxu0 0
        %10893 = vmatpush1.bf16.msra.mxu0 %v10442
        %10894 = vmatprep.mubr.bf16.mxu0 %v9713
        %10895 = vmatmul.mubr.bf16.gmra.mrb[0].mxu0 %v9712
        %v10896 = vpop.f32.mrb[0].mxu0
        %v10897 = vadd.f32 %v10800, %v10896
        %v10898 = vpop.f32.mrb[0].mxu0
        %v10899 = vpop.f32.mrb[0].mxu0
        %v10900 = vadd.f32 %v10803, %v10899
        %v10901 = vpop.f32.mrb[0].mxu0
        %10902 = vmatprep.mubr.bf16.mxu0 %v9725
        %10903 = vmatmul.mubr.bf16.gmra.mrb[0].mxu0 %v9724
        %v10904 = vpop.f32.mrb[0].mxu0
        %v10905 = vadd.f32 %v10808, %v10904
        %v10906 = vpop.f32.mrb[0].mxu0
        %v10907 = vpop.f32.mrb[0].mxu0
        %v10908 = vadd.f32 %v10811, %v10907
        %v10909 = vpop.f32.mrb[0].mxu0
        %10910 = vmatprep.mubr.bf16.mxu0 %v9737
        %10911 = vmatmul.mubr.bf16.gmra.mrb[0].mxu0 %v9736
        %v10912 = vpop.f32.mrb[0].mxu0
        %v10913 = vadd.f32 %v10816, %v10912
        %v10914 = vpop.f32.mrb[0].mxu0
        %v10915 = vpop.f32.mrb[0].mxu0
        %v10916 = vadd.f32 %v10819, %v10915
        %v10917 = vpop.f32.mrb[0].mxu0
        %10918 = vmatprep.mubr.bf16.mxu0 %v9749
        %10919 = vmatmul.mubr.bf16.gmra.mrb[0].mxu0 %v9748
        %v10920 = vpop.f32.mrb[0].mxu0
        %v10921 = vadd.f32 %v10824, %v10920
        %v10922 = vpop.f32.mrb[0].mxu0
        %v10923 = vpop.f32.mrb[0].mxu0
        %v10924 = vadd.f32 %v10827, %v10923
        %v10925 = vpop.f32.mrb[0].mxu0
        %10926 = vmatprep.mubr.bf16.mxu0 %v9761
        %10927 = vmatmul.mubr.bf16.gmra.mrb[0].mxu0 %v9760
        %v10928 = vpop.f32.mrb[0].mxu0
        %v10929 = vadd.f32 %v10832, %v10928
        %v10930 = vpop.f32.mrb[0].mxu0
        %v10931 = vpop.f32.mrb[0].mxu0
        %v10932 = vadd.f32 %v10835, %v10931
        %v10933 = vpop.f32.mrb[0].mxu0
        %10934 = vmatprep.mubr.bf16.mxu0 %v9773
        %10935 = vmatmul.mubr.bf16.gmra.mrb[0].mxu0 %v9772
        %v10936 = vpop.f32.mrb[0].mxu0
        %v10937 = vadd.f32 %v10840, %v10936
        %v10938 = vpop.f32.mrb[0].mxu0
        %v10939 = vpop.f32.mrb[0].mxu0
        %v10940 = vadd.f32 %v10843, %v10939
        %v10941 = vpop.f32.mrb[0].mxu0
        %10942 = vmatprep.mubr.bf16.mxu0 %v9785
        %10943 = vmatmul.mubr.bf16.gmra.mrb[0].mxu0 %v9784
        %v10944 = vpop.f32.mrb[0].mxu0
        %v10945 = vadd.f32 %v10848, %v10944
        %v10946 = vpop.f32.mrb[0].mxu0
        %v10947 = vpop.f32.mrb[0].mxu0
        %v10948 = vadd.f32 %v10851, %v10947
        %v10949 = vpop.f32.mrb[0].mxu0
        %10950 = vmatprep.mubr.bf16.mxu0 %v9797
        %10951 = vmatmul.mubr.bf16.gmra.mrb[0].mxu0 %v9796
        %v10952 = vpop.f32.mrb[0].mxu0
        %v10953 = vadd.f32 %v10856, %v10952
        %v10954 = vpop.f32.mrb[0].mxu0
        %v10955 = vpop.f32.mrb[0].mxu0
        %v10956 = vadd.f32 %v10859, %v10955
        %v10957 = vpop.f32.mrb[0].mxu0
        %10958 = vdwg.mxu0
        %10959 = vmatprep.subr.bf16.mxu0 0
        %10960 = vmatpush1.bf16.msra.mxu0 %v10443
        %10961 = vmatprep.subr.bf16.mxu0 0
        %10962 = vmatpush1.bf16.msra.mxu0 %v10444
        %10963 = vmatprep.subr.bf16.mxu0 0
        %10964 = vmatpush1.bf16.msra.mxu0 %v10445
        %10965 = vmatprep.subr.bf16.mxu0 0
        %10966 = vmatpush1.bf16.msra.mxu0 %v10446
        %10967 = vmatprep.subr.bf16.mxu0 0
        %10968 = vmatpush1.bf16.msra.mxu0 %v10447
        %10969 = vmatprep.subr.bf16.mxu0 0
        %10970 = vmatpush1.bf16.msra.mxu0 %v10448
        %10971 = vmatprep.subr.bf16.mxu0 0
        %10972 = vmatpush1.bf16.msra.mxu0 %v10449
        %10973 = vmatprep.subr.bf16.mxu0 0
        %10974 = vmatpush1.bf16.msra.mxu0 %v10450
        %10975 = vmatprep.subr.bf16.mxu0 0
        %10976 = vmatpush1.bf16.msra.mxu0 %v10451
        %10977 = vmatprep.subr.bf16.mxu0 0
        %10978 = vmatpush1.bf16.msra.mxu0 %v10452
        %10979 = vmatprep.subr.bf16.mxu0 0
        %10980 = vmatpush1.bf16.msra.mxu0 %v10453
        %10981 = vmatprep.subr.bf16.mxu0 0
        %10982 = vmatpush1.bf16.msra.mxu0 %v10454
        %10983 = vmatprep.subr.bf16.mxu0 0
        %10984 = vmatpush1.bf16.msra.mxu0 %v10455
        %10985 = vmatprep.subr.bf16.mxu0 0
        %10986 = vmatpush1.bf16.msra.mxu0 %v10456
        %10987 = vmatprep.subr.bf16.mxu0 0
        %10988 = vmatpush1.bf16.msra.mxu0 %v10457
        %10989 = vmatprep.subr.bf16.mxu0 0
        %10990 = vmatpush1.bf16.msra.mxu0 %v10458
        %10991 = vmatprep.mubr.bf16.mxu0 %v9715
        %10992 = vmatmul.mubr.bf16.gmra.mrb[0].mxu0 %v9714
        %v10993 = vpop.f32.mrb[0].mxu0
        %v10994 = vadd.f32 %v10897, %v10993
        %v10995 = vpop.f32.mrb[0].mxu0
        %v10996 = vpop.f32.mrb[0].mxu0
        %v10997 = vadd.f32 %v10900, %v10996
        %v10998 = vpop.f32.mrb[0].mxu0
        %10999 = vmatprep.mubr.bf16.mxu0 %v9727
        %11000 = vmatmul.mubr.bf16.gmra.mrb[0].mxu0 %v9726
        %v11001 = vpop.f32.mrb[0].mxu0
        %v11002 = vadd.f32 %v10905, %v11001
        %v11003 = vpop.f32.mrb[0].mxu0
        %v11004 = vpop.f32.mrb[0].mxu0
        %v11005 = vadd.f32 %v10908, %v11004
        %v11006 = vpop.f32.mrb[0].mxu0
        %11007 = vmatprep.mubr.bf16.mxu0 %v9739
        %11008 = vmatmul.mubr.bf16.gmra.mrb[0].mxu0 %v9738
        %v11009 = vpop.f32.mrb[0].mxu0
        %v11010 = vadd.f32 %v10913, %v11009
        %v11011 = vpop.f32.mrb[0].mxu0
        %v11012 = vpop.f32.mrb[0].mxu0
        %v11013 = vadd.f32 %v10916, %v11012
        %v11014 = vpop.f32.mrb[0].mxu0
        %11015 = vmatprep.mubr.bf16.mxu0 %v9751
        %11016 = vmatmul.mubr.bf16.gmra.mrb[0].mxu0 %v9750
        %v11017 = vpop.f32.mrb[0].mxu0
        %v11018 = vadd.f32 %v10921, %v11017
        %v11019 = vpop.f32.mrb[0].mxu0
        %v11020 = vpop.f32.mrb[0].mxu0
        %v11021 = vadd.f32 %v10924, %v11020
        %v11022 = vpop.f32.mrb[0].mxu0
        %11023 = vmatprep.mubr.bf16.mxu0 %v9763
        %11024 = vmatmul.mubr.bf16.gmra.mrb[0].mxu0 %v9762
        %v11025 = vpop.f32.mrb[0].mxu0
        %v11026 = vadd.f32 %v10929, %v11025
        %v11027 = vpop.f32.mrb[0].mxu0
        %v11028 = vpop.f32.mrb[0].mxu0
        %v11029 = vadd.f32 %v10932, %v11028
        %v11030 = vpop.f32.mrb[0].mxu0
        %11031 = vmatprep.mubr.bf16.mxu0 %v9775
        %11032 = vmatmul.mubr.bf16.gmra.mrb[0].mxu0 %v9774
        %v11033 = vpop.f32.mrb[0].mxu0
        %v11034 = vadd.f32 %v10937, %v11033
        %v11035 = vpop.f32.mrb[0].mxu0
        %v11036 = vpop.f32.mrb[0].mxu0
        %v11037 = vadd.f32 %v10940, %v11036
        %v11038 = vpop.f32.mrb[0].mxu0
        %11039 = vmatprep.mubr.bf16.mxu0 %v9787
        %11040 = vmatmul.mubr.bf16.gmra.mrb[0].mxu0 %v9786
        %v11041 = vpop.f32.mrb[0].mxu0
        %v11042 = vadd.f32 %v10945, %v11041
        %v11043 = vpop.f32.mrb[0].mxu0
        %v11044 = vpop.f32.mrb[0].mxu0
        %v11045 = vadd.f32 %v10948, %v11044
        %v11046 = vpop.f32.mrb[0].mxu0
        %11047 = vmatprep.mubr.bf16.mxu0 %v9799
        %11048 = vmatmul.mubr.bf16.gmra.mrb[0].mxu0 %v9798
        %v11049 = vpop.f32.mrb[0].mxu0
        %v11050 = vadd.f32 %v10953, %v11049
        %v11051 = vpop.f32.mrb[0].mxu0
        %v11052 = vpop.f32.mrb[0].mxu0
        %v11053 = vadd.f32 %v10956, %v11052
        %v11054 = vpop.f32.mrb[0].mxu0
        %11055 = vdwg.mxu0
        %11056 = vmatprep.subr.bf16.mxu0 0
        %11057 = vmatpush1.bf16.msra.mxu0 %v10459
        %11058 = vmatprep.subr.bf16.mxu0 0
        %11059 = vmatpush1.bf16.msra.mxu0 %v10460
        %11060 = vmatprep.subr.bf16.mxu0 0
        %11061 = vmatpush1.bf16.msra.mxu0 %v10461
        %11062 = vmatprep.subr.bf16.mxu0 0
        %11063 = vmatpush1.bf16.msra.mxu0 %v10462
        %11064 = vmatprep.subr.bf16.mxu0 0
        %11065 = vmatpush1.bf16.msra.mxu0 %v10463
        %11066 = vmatprep.subr.bf16.mxu0 0
        %11067 = vmatpush1.bf16.msra.mxu0 %v10464
        %11068 = vmatprep.subr.bf16.mxu0 0
        %11069 = vmatpush1.bf16.msra.mxu0 %v10465
        %11070 = vmatprep.subr.bf16.mxu0 0
        %11071 = vmatpush1.bf16.msra.mxu0 %v10466
        %11072 = vmatprep.subr.bf16.mxu0 0
        %11073 = vmatpush1.bf16.msra.mxu0 %v10467
        %11074 = vmatprep.subr.bf16.mxu0 0
        %11075 = vmatpush1.bf16.msra.mxu0 %v10468
        %11076 = vmatprep.subr.bf16.mxu0 0
        %11077 = vmatpush1.bf16.msra.mxu0 %v10469
        %11078 = vmatprep.subr.bf16.mxu0 0
        %11079 = vmatpush1.bf16.msra.mxu0 %v10470
        %11080 = vmatprep.subr.bf16.mxu0 0
        %11081 = vmatpush1.bf16.msra.mxu0 %v10471
        %11082 = vmatprep.subr.bf16.mxu0 0
        %11083 = vmatpush1.bf16.msra.mxu0 %v10472
        %11084 = vmatprep.subr.bf16.mxu0 0
        %11085 = vmatpush1.bf16.msra.mxu0 %v10473
        %11086 = vmatprep.subr.bf16.mxu0 0
        %11087 = vmatpush1.bf16.msra.mxu0 %v10474
        %11088 = vmatprep.mubr.bf16.mxu0 %v9717
        %11089 = vmatmul.mubr.bf16.gmra.mrb[0].mxu0 %v9716
        %v11090 = vpop.f32.mrb[0].mxu0
        %v11091 = vadd.f32 %v10994, %v11090
        %v11092 = vpop.f32.mrb[0].mxu0
        %v11093 = vpop.f32.mrb[0].mxu0
        %v11094 = vadd.f32 %v10997, %v11093
        %v11095 = vpop.f32.mrb[0].mxu0
        %11096 = vmatprep.mubr.bf16.mxu0 %v9729
        %11097 = vmatmul.mubr.bf16.gmra.mrb[0].mxu0 %v9728
        %v11098 = vpop.f32.mrb[0].mxu0
        %v11099 = vadd.f32 %v11002, %v11098
        %v11100 = vpop.f32.mrb[0].mxu0
        %v11101 = vpop.f32.mrb[0].mxu0
        %v11102 = vadd.f32 %v11005, %v11101
        %v11103 = vpop.f32.mrb[0].mxu0
        %11104 = vmatprep.mubr.bf16.mxu0 %v9741
        %11105 = vmatmul.mubr.bf16.gmra.mrb[0].mxu0 %v9740
        %v11106 = vpop.f32.mrb[0].mxu0
        %v11107 = vadd.f32 %v11010, %v11106
        %v11108 = vpop.f32.mrb[0].mxu0
        %v11109 = vpop.f32.mrb[0].mxu0
        %v11110 = vadd.f32 %v11013, %v11109
        %v11111 = vpop.f32.mrb[0].mxu0
        %11112 = vmatprep.mubr.bf16.mxu0 %v9753
        %11113 = vmatmul.mubr.bf16.gmra.mrb[0].mxu0 %v9752
        %v11114 = vpop.f32.mrb[0].mxu0
        %v11115 = vadd.f32 %v11018, %v11114
        %v11116 = vpop.f32.mrb[0].mxu0
        %v11117 = vpop.f32.mrb[0].mxu0
        %v11118 = vadd.f32 %v11021, %v11117
        %v11119 = vpop.f32.mrb[0].mxu0
        %11120 = vmatprep.mubr.bf16.mxu0 %v9765
        %11121 = vmatmul.mubr.bf16.gmra.mrb[0].mxu0 %v9764
        %v11122 = vpop.f32.mrb[0].mxu0
        %v11123 = vadd.f32 %v11026, %v11122
        %v11124 = vpop.f32.mrb[0].mxu0
        %v11125 = vpop.f32.mrb[0].mxu0
        %v11126 = vadd.f32 %v11029, %v11125
        %v11127 = vpop.f32.mrb[0].mxu0
        %11128 = vmatprep.mubr.bf16.mxu0 %v9777
        %11129 = vmatmul.mubr.bf16.gmra.mrb[0].mxu0 %v9776
        %v11130 = vpop.f32.mrb[0].mxu0
        %v11131 = vadd.f32 %v11034, %v11130
        %v11132 = vpop.f32.mrb[0].mxu0
        %v11133 = vpop.f32.mrb[0].mxu0
        %v11134 = vadd.f32 %v11037, %v11133
        %v11135 = vpop.f32.mrb[0].mxu0
        %11136 = vmatprep.mubr.bf16.mxu0 %v9789
        %11137 = vmatmul.mubr.bf16.gmra.mrb[0].mxu0 %v9788
        %v11138 = vpop.f32.mrb[0].mxu0
        %v11139 = vadd.f32 %v11042, %v11138
        %v11140 = vpop.f32.mrb[0].mxu0
        %v11141 = vpop.f32.mrb[0].mxu0
        %v11142 = vadd.f32 %v11045, %v11141
        %v11143 = vpop.f32.mrb[0].mxu0
        %11144 = vmatprep.mubr.bf16.mxu0 %v9801
        %11145 = vmatmul.mubr.bf16.gmra.mrb[0].mxu0 %v9800
        %v11146 = vpop.f32.mrb[0].mxu0
        %v11147 = vadd.f32 %v11050, %v11146
        %v11148 = vpop.f32.mrb[0].mxu0
        %v11149 = vpop.f32.mrb[0].mxu0
        %v11150 = vadd.f32 %v11053, %v11149
        %v11151 = vpop.f32.mrb[0].mxu0
        %11152 = vdwg.mxu0
        %v11153 = vadd.f32 %v9644, %v11091
        %v11154 = vadd.f32 %v9647, %v11094
        %v11155 = vadd.f32 %v9652, %v11099
        %v11156 = vadd.f32 %v9655, %v11102
        %v11157 = vadd.f32 %v9660, %v11107
        %v11158 = vadd.f32 %v9663, %v11110
        %v11159 = vadd.f32 %v9668, %v11115
        %v11160 = vadd.f32 %v9671, %v11118
        %v11161 = vadd.f32 %v9676, %v11123
        %v11162 = vadd.f32 %v9679, %v11126
        %v11163 = vadd.f32 %v9684, %v11131
        %v11164 = vadd.f32 %v9687, %v11134
        %v11165 = vadd.f32 %v9692, %v11139
        %v11166 = vadd.f32 %v9695, %v11142
        %v11167 = vadd.f32 %v9700, %v11147
        %v11168 = vadd.f32 %v9703, %v11150
        %11185 = vrot.lane.b32.xlu0 %v11153, 64
        %v11186 = vpop.permute.xlu0 %11185
        %11187 = vrot.lane.b32.xlu0 %v11154, 64
        %v11188 = vpop.permute.xlu0 %11187
        %11189 = vrot.lane.b32.xlu0 %v11155, 64
        %v11190 = vpop.permute.xlu0 %11189
        %11191 = vrot.lane.b32.xlu0 %v11156, 64
        %v11192 = vpop.permute.xlu0 %11191
        %11193 = vrot.lane.b32.xlu0 %v11157, 64
        %v11194 = vpop.permute.xlu0 %11193
        %11195 = vrot.lane.b32.xlu0 %v11158, 64
        %v11196 = vpop.permute.xlu0 %11195
        %11197 = vrot.lane.b32.xlu0 %v11159, 64
        %v11198 = vpop.permute.xlu0 %11197
        %11199 = vrot.lane.b32.xlu0 %v11160, 64
        %v11200 = vpop.permute.xlu0 %11199
        %11201 = vrot.lane.b32.xlu0 %v11161, 64
        %v11202 = vpop.permute.xlu0 %11201
        %11203 = vrot.lane.b32.xlu0 %v11162, 64
        %v11204 = vpop.permute.xlu0 %11203
        %11205 = vrot.lane.b32.xlu0 %v11163, 64
        %v11206 = vpop.permute.xlu0 %11205
        %11207 = vrot.lane.b32.xlu0 %v11164, 64
        %v11208 = vpop.permute.xlu0 %11207
        %11209 = vrot.lane.b32.xlu0 %v11165, 64
        %v11210 = vpop.permute.xlu0 %11209
        %11211 = vrot.lane.b32.xlu0 %v11166, 64
        %v11212 = vpop.permute.xlu0 %11211
        %11213 = vrot.lane.b32.xlu0 %v11167, 64
        %v11214 = vpop.permute.xlu0 %11213
        %11215 = vrot.lane.b32.xlu0 %v11168, 64
        %v11216 = vpop.permute.xlu0 %11215
        %v11233 = vmax.f32 %v11153, %v11186
        %v11234 = vmax.f32 %v11154, %v11188
        %v11235 = vmax.f32 %v11155, %v11190
        %v11236 = vmax.f32 %v11156, %v11192
        %v11237 = vmax.f32 %v11157, %v11194
        %v11238 = vmax.f32 %v11158, %v11196
        %v11239 = vmax.f32 %v11159, %v11198
        %v11240 = vmax.f32 %v11160, %v11200
        %v11241 = vmax.f32 %v11161, %v11202
        %v11242 = vmax.f32 %v11162, %v11204
        %v11243 = vmax.f32 %v11163, %v11206
        %v11244 = vmax.f32 %v11164, %v11208
        %v11245 = vmax.f32 %v11165, %v11210
        %v11246 = vmax.f32 %v11166, %v11212
        %v11247 = vmax.f32 %v11167, %v11214
        %v11248 = vmax.f32 %v11168, %v11216
        %v11249 = vmax.f32 %v11233, %v11237
        %v11250 = vmax.f32 %v11234, %v11238
        %v11251 = vmax.f32 %v11235, %v11239
        %v11252 = vmax.f32 %v11236, %v11240
        %v11253 = vld [vmem:[%s4] sm:$0x1]
        %v11255 = vlaneseq
        %v11256 = vshrl.u32 %v11255, 7
        %v11257 = vsub.s32 0, %v11256
        %v11258 = vrot.slane %v11253, %v11257
        %v11260 = vadd.f32 %v11249, %v11258
        %v11261 = vadd.f32 %v11250, %v11258
        %v11262 = vadd.f32 %v11251, %v11258
        %v11263 = vadd.f32 %v11252, %v11258
        %v11264 = vmax.f32 %v11260, 0.0
        %v11265 = vmax.f32 %v11261, 0.0
        %v11266 = vmax.f32 %v11262, 0.0
        %v11267 = vmax.f32 %v11263, 0.0
        %v11268 = vmax.f32 %v11241, %v11245
        %v11269 = vmax.f32 %v11242, %v11246
        %v11270 = vmax.f32 %v11243, %v11247
        %v11271 = vmax.f32 %v11244, %v11248
        %v11272 = vadd.f32 %v11268, %v11258
        %v11273 = vadd.f32 %v11269, %v11258
        %v11274 = vadd.f32 %v11270, %v11258
        %v11275 = vadd.f32 %v11271, %v11258
        %v11276 = vmax.f32 %v11272, 0.0
        %v11277 = vmax.f32 %v11273, 0.0
        %v11278 = vmax.f32 %v11274, 0.0
        %v11279 = vmax.f32 %v11275, 0.0
        %11284 = vrot.lane.b32.xlu0 %v11276, 64
        %v11285 = vpop.permute.xlu0 %11284
        %11286 = vrot.lane.b32.xlu0 %v11277, 64
        %v11287 = vpop.permute.xlu0 %11286
        %11288 = vrot.lane.b32.xlu0 %v11278, 64
        %v11289 = vpop.permute.xlu0 %11288
        %11290 = vrot.lane.b32.xlu0 %v11279, 64
        %v11291 = vpop.permute.xlu0 %11290
        %vm11296 = vcmask 523264
        %v11297 = vsel %vm11296, %v11264, %v11285
        %v11298 = vsel %vm11296, %v11265, %v11287
        %v11299 = vsel %vm11296, %v11266, %v11289
        %v11300 = vsel %vm11296, %v11267, %v11291
        %11301 = vst [vmem:[%s454] sm:$0xff] %v11297
        %11302 = vst [vmem:[%s454 + $0x8] sm:$0xff] %v11298
        %11303 = vst [vmem:[%s454 + $0x10] sm:$0xff] %v11299
        %11304 = vst [vmem:[%s454 + $0x18] sm:$0xff] %v11300
        %s11305 = smul.u32 4, %s16
        %p11306 = scmp.lt.s32.totalorder %s11305, 7
        %s11307 = scalar_select %p11306, %s11305, 7
        %s11308 = smul.addr %s11307, 8
        %s11309 = scalar_lea.vmem %s5, %s11308
        // Predicated region
        $region82: #{lenet_apply.1} parent=76 // pred_check
          %p11310 = pneg %p144
        $region83: #{lenet_apply.1} parent=76 // pred_check_branch
          %11312 = sbr.rel (%p11310) target = $region85
        $region84: #{lenet_apply.1} parent=76 // pred_region
          %s11313 = smul.u32 4, %s16
        $region85: #{lenet_apply.1} parent=76 // pred_fallthru
          _
      $region77: #{lenet_apply.1} parent=5 // pred_fallthru
        _
      %p11314 = scmp.le.s32.totalorder 2, %s11
      // Predicated region
      $region86: #{lenet_apply.1} parent=5 // pred_check
        %p11315 = pneg %p11314
      $region87: #{lenet_apply.1} parent=5 // pred_check_branch
        %11317 = sbr.rel (%p11315) target = $region89
      $region88: #{lenet_apply.1} parent=5 // pred_region
        %s11318 = ssub.s32 %s11, 2
        // Predicated region
        $region90: #{lenet_apply.1} parent=88 // pred_check
          %p11319 = pneg %p150
        $region91: #{lenet_apply.1} parent=88 // pred_check_branch
          %11321 = sbr.rel (%p11319) target = $region93
        $region92: #{lenet_apply.1} parent=88 // pred_region
          %s11322 = smul.u32 4, %s17
          %p11323 = scmp.lt.s32.totalorder %s11322, 7
          %s11324 = scalar_select %p11323, %s11322, 7
          %s11325 = smul.addr %s11324, 8
          %s11326 = scalar_lea.vmem %s5, %s11325
        $region93: #{lenet_apply.1} parent=88 // pred_fallthru
          _
      $region89: #{lenet_apply.1} parent=5 // pred_fallthru
        _
    $region6: #{lenet_apply.1} parent=1 // loop_footer
      %s15 = sadd.s32 1, %s11
    $region7: #{lenet_apply.1} parent=1 // loop_footer_branch
      %10 = sbr.rel target = $region3
    $region8: #{lenet_apply.1} parent=1 // loop_exit
      _

</llo_original>
